<compile_context>
chip_gen: v5e
topology: v5e:2x2
jax: 0.10.0
libtpu: 0.0.40
codegen_flags: <defaults>
</compile_context>

<pallas_src>
import functools
import math

import jax
import jax.numpy as jnp
from jax.experimental import pallas as pl
from jax.experimental.pallas import tpu as pltpu


# ----------------------------------------------------------------------------
# Pallas kernel: one fused (fwd + bwd) BiLSTM layer; one TIME CHUNK per grid
# step.  Per chunk:
#   1. pre-gates = X_chunk @ W_ih + b, computed in-kernel as one MXU GEMM per
#      direction (M = Tc*B) into VMEM scratch (never touches HBM),
#   2. the serial recurrence runs over the chunk, carrying (h, c) for both
#      directions in VMEM scratch across grid steps.  Forward walks chunk c
#      (t ascending); backward walks chunk C-1-c (t descending).
# ----------------------------------------------------------------------------
def _bilstm_chunk_kernel(tok_ref, xf_ref, xb_ref,
                         wih_f_ref, wih_b_ref, whh_f_ref, whh_b_ref,
                         bias_f_ref, bias_b_ref,
                         out_f_ref, out_b_ref,
                         pre_f, pre_b, h_f, c_f, h_b, c_b,
                         *, time_chunk, unroll):
    c = pl.program_id(0)
    n_chunks = pl.num_programs(0)
    Tc = time_chunk
    B, H = h_f.shape

    @pl.when(c == 0)
    def _():
        h_f[...] = jnp.zeros_like(h_f)
        c_f[...] = jnp.zeros_like(c_f)
        h_b[...] = jnp.zeros_like(h_b)
        c_b[...] = jnp.zeros_like(c_b)

    # ---- fused input projection: one (Tc*B, in)@(in, 4H) GEMM per direction.
    # Operands may be bf16 (caller's choice); accumulation + scratch are f32.
    pre_f[...] = (jnp.dot(xf_ref[...], wih_f_ref[...],
                          preferred_element_type=jnp.float32)
                  + bias_f_ref[...])
    pre_b[...] = (jnp.dot(xb_ref[...], wih_b_ref[...],
                          preferred_element_type=jnp.float32)
                  + bias_b_ref[...])

    tok = tok_ref[...]                       # (B, 1) int32 sequence lengths
    w_f = whh_f_ref[...]                     # (H, 4H) recurrent weights
    w_b = whh_b_ref[...]
    mm_dtype = w_f.dtype

    def sigmoid(x):                          # one EUP tanh instead of exp+div
        return 0.5 * jnp.tanh(0.5 * x) + 0.5

    def lstm_cell(pre, h, cc, w_hh):
        g = pre + jnp.dot(h.astype(mm_dtype), w_hh,
                          preferred_element_type=jnp.float32)
        i_g = sigmoid(g[:, 0 * H:1 * H])
        f_g = sigmoid(g[:, 1 * H:2 * H])
        g_g = jnp.tanh(g[:, 2 * H:3 * H])
        o_g = sigmoid(g[:, 3 * H:4 * H])
        c_new = f_g * cc + i_g * g_g
        h_new = o_g * jnp.tanh(c_new)
        return h_new, c_new

    def step(j, carry):
        # ---- forward direction: global time c*Tc + j ----
        row = pl.multiple_of(j * B, B)
        t_f = c * Tc + j
        hn, cn = lstm_cell(pre_f[pl.ds(row, B), :], h_f[...], c_f[...], w_f)
        m = jnp.broadcast_to(t_f < tok, (B, H))          # hoisted; reused 3x
        h_f[...] = jnp.where(m, hn, h_f[...])            # freeze state past len
        c_f[...] = jnp.where(m, cn, c_f[...])
        out_f_ref[pl.ds(row, B), :] = jnp.where(m, hn, 0.0)

        # ---- backward direction: local step Tc-1-j of chunk C-1-c ----
        jb = Tc - 1 - j
        rowb = pl.multiple_of(jb * B, B)
        t_b = (n_chunks - 1 - c) * Tc + jb
        hn, cn = lstm_cell(pre_b[pl.ds(rowb, B), :], h_b[...], c_b[...], w_b)
        m = jnp.broadcast_to(t_b < tok, (B, H))
        h_b[...] = jnp.where(m, hn, h_b[...])
        c_b[...] = jnp.where(m, cn, c_b[...])
        out_b_ref[pl.ds(rowb, B), :] = jnp.where(m, hn, 0.0)
        return carry

    jax.lax.fori_loop(0, Tc, step, 0, unroll=unroll)


# ----------------------------------------------------------------------------
# VMEM block math (for Tc selection and vmem_limit_bytes)
# ----------------------------------------------------------------------------
def _layer_vmem_bytes(Tc, B, in_size, H, x_item, w_item):
    acts = 2 * 2 * Tc * B * in_size * x_item        # xf/xb blocks, double-buffered
    outs = 2 * 2 * Tc * B * H * 4                   # out_f/out_b, double-buffered
    wts = 2 * 2 * (in_size + H) * 4 * H * w_item    # W_ih + W_hh per direction
    bias = 2 * 2 * 4 * H * 4
    scr = 2 * Tc * B * 4 * H * 4 + 4 * B * H * 4    # pre-gate + (h, c) scratch
    return acts + outs + wts + bias + scr + 2 * B * 4


def _vmem_capacity_bytes():
    try:
        return int(pltpu.get_tpu_info().vmem_capacity_bytes)
    except Exception:
        return 64 * 1024 * 1024                     # conservative (v7x per-TC)


# ----------------------------------------------------------------------------
# One fused bidirectional LSTM layer (single pallas_call)
# ----------------------------------------------------------------------------
def _bilstm_layer(tok_pad, x, w_ih_f, w_ih_b, w_hh_f, w_hh_b, b_f, b_b, *,
                  time_chunk, unroll, vmem_limit_bytes):
    T_pad, B_pad, IN = x.shape
    H = w_hh_f.shape[0]
    Tc = time_chunk
    assert T_pad % Tc == 0
    C = T_pad // Tc
    G4 = 4 * H
    TB = Tc * B_pad

    # Free re-view (identical row-major HBM layout): one lane-dense 2-D slab
    # per chunk so the kernel never reshapes a VMEM value.
    xr = x.reshape(C, TB, IN)

    const2 = lambda c: (0, 0)
    fwd3 = lambda c: (c, 0, 0)
    bwd3 = lambda c: (C - 1 - c, 0, 0)

    kernel = functools.partial(_bilstm_chunk_kernel, time_chunk=Tc,
                               unroll=unroll)
    out_f, out_b = pl.pallas_call(
        kernel,
        out_shape=(jax.ShapeDtypeStruct((C, TB, H), jnp.float32),
                   jax.ShapeDtypeStruct((C, TB, H), jnp.float32)),
        grid_spec=pltpu.PrefetchScalarGridSpec(
            num_scalar_prefetch=0,
            grid=(C,),
            in_specs=[
                pl.BlockSpec((B_pad, 1), const2),        # tok_len
                pl.BlockSpec((None, TB, IN), fwd3),      # X, forward chunks
                pl.BlockSpec((None, TB, IN), bwd3),      # X, backward chunks
                pl.BlockSpec((IN, G4), const2),          # W_ih fwd
                pl.BlockSpec((IN, G4), const2),          # W_ih bwd
                pl.BlockSpec((H, G4), const2),           # W_hh fwd
                pl.BlockSpec((H, G4), const2),           # W_hh bwd
                pl.BlockSpec((1, G4), const2),           # bias fwd (b_ih+b_hh)
                pl.BlockSpec((1, G4), const2),           # bias bwd
            ],
            out_specs=[
                pl.BlockSpec((None, TB, H), fwd3),
                pl.BlockSpec((None, TB, H), bwd3),
            ],
            scratch_shapes=[
                pltpu.VMEM((TB, G4), jnp.float32),       # pre-gates fwd
                pltpu.VMEM((TB, G4), jnp.float32),       # pre-gates bwd
                pltpu.VMEM((B_pad, H), jnp.float32),     # h fwd
                pltpu.VMEM((B_pad, H), jnp.float32),     # c fwd
                pltpu.VMEM((B_pad, H), jnp.float32),     # h bwd
                pltpu.VMEM((B_pad, H), jnp.float32),     # c bwd
            ],
        ),
        compiler_params=pltpu.CompilerParams(
            dimension_semantics=("arbitrary",),
            vmem_limit_bytes=vmem_limit_bytes),
    )(tok_pad, xr, xr, w_ih_f, w_ih_b, w_hh_f, w_hh_b, b_f, b_b)

    return out_f.reshape(T_pad, B_pad, H), out_b.reshape(T_pad, B_pad, H)


# ----------------------------------------------------------------------------
# AugmentedLSTMCRF.forward  (embedder output -> BiLSTM stack output)
# ----------------------------------------------------------------------------
def augmented_lstm_crf_forward(batch_embed, tok_len, lstm_layers, *,
                               time_chunk=None, use_bf16=True):
    """batch_embed: (B, T, E) float32 embedder output; tok_len: (B,) lengths.
    Returns layer_output: (B, T, 2*H) — same as the module's forward()."""
    if not lstm_layers:                      # lstm_nb_layers == 0
        return batch_embed

    B, T, E = batch_embed.shape
    H = lstm_layers[0]["w_hh_f"].shape[0]
    max_in = max(E, 2 * H) if len(lstm_layers) > 1 else E

    mm_dtype = jnp.bfloat16 if use_bf16 else jnp.float32
    x_item = jnp.dtype(mm_dtype).itemsize
    w_item = x_item

    B_pad = max(8, pl.cdiv(B, 8) * 8)        # sublane-dense batch tile

    # --- generation-aware chunk size: biggest Tc whose working set fits VMEM.
    vmem_cap = _vmem_capacity_bytes()
    budget = int(0.70 * vmem_cap)
    if time_chunk is None:
        Tc = 1
        for cand in (128, 64, 32, 16, 8, 4, 2, 1):
            if cand > T:
                continue
            if _layer_vmem_bytes(cand, B_pad, max_in, H, x_item, w_item) <= budget:
                Tc = cand
                break
    else:
        Tc = max(1, min(time_chunk, T))
    T_pad = pl.cdiv(T, Tc) * Tc

    # --- partial unroll when the per-step live set is large (spill avoidance)
    step_live_bytes = 2 * B_pad * 4 * H * 4
    if step_live_bytes <= 96 * 1024:
        unroll = True
    else:
        unroll = next(d for d in (4, 2, 1) if Tc % d == 0)

    # time-major, padded; matmul-operand stream in mm_dtype (state stays f32)
    x = jnp.transpose(batch_embed, (1, 0, 2)).astype(jnp.float32)
    x = jnp.pad(x, ((0, T_pad - T), (0, B_pad - B), (0, 0))).astype(mm_dtype)
    tok_pad = jnp.pad(tok_len.astype(jnp.int32), (0, B_pad - B))
    tok_pad = tok_pad.reshape(B_pad, 1)

    out_f = out_b = None
    for li, p in enumerate(lstm_layers):
        in_size = x.shape[-1]
        need = _layer_vmem_bytes(Tc, B_pad, in_size, H, x_item, w_item)
        vmem_limit = min(max(int(need * 1.25) + (4 << 20), 32 << 20),
                         max(32 << 20, int(0.94 * vmem_cap)))

        out_f, out_b = _bilstm_layer(
            tok_pad, x,
            p["w_ih_f"].astype(mm_dtype), p["w_ih_b"].astype(mm_dtype),
            p["w_hh_f"].astype(mm_dtype), p["w_hh_b"].astype(mm_dtype),
            p["b_f"].astype(jnp.float32), p["b_b"].astype(jnp.float32),
            time_chunk=Tc, unroll=unroll, vmem_limit_bytes=vmem_limit)

        if li + 1 < len(lstm_layers):
            # next layer's input: [h_fwd | h_bwd]; only this matmul-operand
            # stream is cast to the compute dtype, outputs stay f32.
            x = jnp.concatenate([out_f, out_b], axis=-1).astype(mm_dtype)

    y = jnp.concatenate([out_f, out_b], axis=-1)              # (T_pad,B_pad,2H)
    return jnp.transpose(y, (1, 0, 2))[:B, :T]                # (B, T, 2H)


# ----------------------------------------------------------------------------
# Pure-JAX reference (lax.scan) for correctness checking
# ----------------------------------------------------------------------------
def _lstm_direction_ref(x_tbe, m_tb1, w_ih_t, w_hh_t, bias, *, reverse):
    T, B, _ = x_tbe.shape
    H = w_hh_t.shape[0]
    idxs = jnp.arange(T)
    if reverse:
        idxs = idxs[::-1]

    def step(carry, t):
        h, c = carry
        xt, mt = x_tbe[t], m_tb1[t]
        g = xt @ w_ih_t + h @ w_hh_t + bias[0]
        i_g = jax.nn.sigmoid(g[:, :H])
        f_g = jax.nn.sigmoid(g[:, H:2 * H])
        g_g = jnp.tanh(g[:, 2 * H:3 * H])
        o_g = jax.nn.sigmoid(g[:, 3 * H:])
        c_new = f_g * c + i_g * g_g
        h_new = o_g * jnp.tanh(c_new)
        h2 = mt * h_new + (1.0 - mt) * h
        c2 = mt * c_new + (1.0 - mt) * c
        return (h2, c2), mt * h_new

    init = (jnp.zeros((B, H), jnp.float32), jnp.zeros((B, H), jnp.float32))
    _, outs = jax.lax.scan(step, init, idxs)
    return jnp.zeros((T, B, H), jnp.float32).at[idxs].set(outs)


def forward_ref(batch_embed, tok_len, lstm_layers):
    B, T, E = batch_embed.shape
    mask = (jnp.arange(T)[None, :] < tok_len[:, None]).astype(jnp.float32)
    x = jnp.transpose(batch_embed, (1, 0, 2))
    m = jnp.transpose(mask, (1, 0))[:, :, None]
    layer_in = x
    for p in lstm_layers:
        fwd = _lstm_direction_ref(layer_in, m, p["w_ih_f"], p["w_hh_f"],
                                  p["b_f"], reverse=False)
        bwd = _lstm_direction_ref(layer_in, m, p["w_ih_b"], p["w_hh_b"],
                                  p["b_b"], reverse=True)
        layer_in = jnp.concatenate([fwd, bwd], axis=-1)
    return jnp.transpose(layer_in, (1, 0, 2))


# ----------------------------------------------------------------------------
# Deterministic parameter init (PyTorch LSTM default: U(-1/sqrt(H), 1/sqrt(H)))
# ----------------------------------------------------------------------------
def init_lstm_stack(key, nb_layers, embedding_input_size, lstm_hidden_size):
    E, H = embedding_input_size, lstm_hidden_size
    bound = 1.0 / math.sqrt(H)
    u = lambda k, s: jax.random.uniform(k, s, jnp.float32, -bound, bound)

    layers = []
    in_size = E
    for _ in range(nb_layers):
        key, *ks = jax.random.split(key, 9)
        layers.append(dict(
            w_ih_f=u(ks[0], (in_size, 4 * H)),
            w_hh_f=u(ks[1], (H, 4 * H)),
            b_f=u(ks[2], (1, 4 * H)) + u(ks[3], (1, 4 * H)),
            w_ih_b=u(ks[4], (in_size, 4 * H)),
            w_hh_b=u(ks[5], (H, 4 * H)),
            b_b=u(ks[6], (1, 4 * H)) + u(ks[7], (1, 4 * H)),
        ))
        in_size = 2 * H
    return layers


if __name__ == "__main__":
    # Small, module-consistent shapes
    B, T = 2, 8
    embedding_input_size = 32
    lstm_hidden_size = 32
    lstm_nb_layers = 2

    key = jax.random.PRNGKey(0)
    k_embed, k_params = jax.random.split(key)

    batch_embed = jax.random.normal(
        k_embed, (B, T, embedding_input_size), jnp.float32)   # embedder output
    tok_len = jnp.array([T, 5], jnp.int32)                     # variable lengths

    lstm_layers = init_lstm_stack(
        k_params, lstm_nb_layers, embedding_input_size, lstm_hidden_size)

    ref = jax.block_until_ready(forward_ref(batch_embed, tok_len, lstm_layers))

    # f32 MXU-operand path — tight check vs. pure-JAX reference
    fwd_f32 = jax.jit(functools.partial(augmented_lstm_crf_forward,
                                        use_bf16=False))
    out_f32 = jax.block_until_ready(fwd_f32(batch_embed, tok_len, lstm_layers))
    assert out_f32.shape == (B, T, 2 * lstm_hidden_size)
    assert jnp.max(jnp.abs(out_f32 - ref)) < 1e-4, "f32 path mismatch vs ref"

    # bf16 MXU-operand path (f32 state/accumulation) — loose check
    fwd_bf16 = jax.jit(functools.partial(augmented_lstm_crf_forward,
                                         use_bf16=True))
    out_bf16 = jax.block_until_ready(fwd_bf16(batch_embed, tok_len, lstm_layers))
    assert out_bf16.shape == (B, T, 2 * lstm_hidden_size)
    assert jnp.max(jnp.abs(out_bf16 - ref)) < 5e-2, "bf16 path mismatch vs ref"

    print("KERNEL_OK")
</pallas_src>

<mosaic_0001>
module attributes {stable_mosaic.version = 11 : i64} {
  func.func @_bilstm_chunk_kernel(%arg0: i32, %arg1: memref<8x1xi32, #tpu.memory_space<vmem>>, %arg2: memref<1x64x32xf32, #tpu.memory_space<vmem>>, %arg3: memref<1x64x32xf32, #tpu.memory_space<vmem>>, %arg4: memref<32x128xf32, #tpu.memory_space<vmem>>, %arg5: memref<32x128xf32, #tpu.memory_space<vmem>>, %arg6: memref<32x128xf32, #tpu.memory_space<vmem>>, %arg7: memref<32x128xf32, #tpu.memory_space<vmem>>, %arg8: memref<1x128xf32, #tpu.memory_space<vmem>>, %arg9: memref<1x128xf32, #tpu.memory_space<vmem>>, %arg10: memref<1x64x32xf32, #tpu.memory_space<vmem>>, %arg11: memref<1x64x32xf32, #tpu.memory_space<vmem>>, %arg12: memref<64x128xf32, #tpu.memory_space<vmem>>, %arg13: memref<64x128xf32, #tpu.memory_space<vmem>>, %arg14: memref<8x32xf32, #tpu.memory_space<vmem>>, %arg15: memref<8x32xf32, #tpu.memory_space<vmem>>, %arg16: memref<8x32xf32, #tpu.memory_space<vmem>>, %arg17: memref<8x32xf32, #tpu.memory_space<vmem>>) attributes {dimension_semantics = [#tpu.dimension_semantics<arbitrary>], iteration_bounds = array<i64: 1>, scalar_prefetch = 0 : i64, scratch_operands = 6 : i64, tpu.core_type = #tpu.core_type<tc>, window_params = [{pipeline_mode = #tpu.pipeline_mode<synchronous>, transform_indices = @transform_0, window_bounds = array<i64: 8, 1>}, {transform_indices = @transform_1, window_bounds = array<i64: 1, 64, 32>}, {transform_indices = @transform_2, window_bounds = array<i64: 1, 64, 32>}, {pipeline_mode = #tpu.pipeline_mode<synchronous>, transform_indices = @transform_3, window_bounds = array<i64: 32, 128>}, {pipeline_mode = #tpu.pipeline_mode<synchronous>, transform_indices = @transform_4, window_bounds = array<i64: 32, 128>}, {pipeline_mode = #tpu.pipeline_mode<synchronous>, transform_indices = @transform_5, window_bounds = array<i64: 32, 128>}, {pipeline_mode = #tpu.pipeline_mode<synchronous>, transform_indices = @transform_6, window_bounds = array<i64: 32, 128>}, {pipeline_mode = #tpu.pipeline_mode<synchronous>, transform_indices = @transform_7, window_bounds = array<i64: 1, 128>}, {pipeline_mode = #tpu.pipeline_mode<synchronous>, transform_indices = @transform_8, window_bounds = array<i64: 1, 128>}, {transform_indices = @transform_9, window_bounds = array<i64: 1, 64, 32>}, {transform_indices = @transform_10, window_bounds = array<i64: 1, 64, 32>}]} {
    %c0_i32 = arith.constant 0 : i32
    %0 = arith.cmpi eq, %arg0, %c0_i32 : i32
    %1 = arith.extui %0 : i1 to i32
    %c0_i32_0 = arith.constant 0 : i32
    %2 = arith.cmpi ne, %1, %c0_i32_0 : i32
    scf.if %2 {
      %cst_490 = arith.constant 0.000000e+00 : f32
      %950 = vector.broadcast %cst_490 : f32 to vector<8x32xf32>
      %c0_491 = arith.constant 0 : index
      %c0_492 = arith.constant 0 : index
      %951 = vector.load %arg14[%c0_491, %c0_492] : memref<8x32xf32, #tpu.memory_space<vmem>>, vector<8x32xf32>
      tpu.vector_store %arg14[%c0_491, %c0_492], %950 {strides = array<i32>} : memref<8x32xf32, #tpu.memory_space<vmem>>, vector<8x32xf32>,
      %cst_493 = arith.constant 0.000000e+00 : f32
      %952 = vector.broadcast %cst_493 : f32 to vector<8x32xf32>
      %c0_494 = arith.constant 0 : index
      %c0_495 = arith.constant 0 : index
      %953 = vector.load %arg15[%c0_494, %c0_495] : memref<8x32xf32, #tpu.memory_space<vmem>>, vector<8x32xf32>
      tpu.vector_store %arg15[%c0_494, %c0_495], %952 {strides = array<i32>} : memref<8x32xf32, #tpu.memory_space<vmem>>, vector<8x32xf32>,
      %cst_496 = arith.constant 0.000000e+00 : f32
      %954 = vector.broadcast %cst_496 : f32 to vector<8x32xf32>
      %c0_497 = arith.constant 0 : index
      %c0_498 = arith.constant 0 : index
      %955 = vector.load %arg16[%c0_497, %c0_498] : memref<8x32xf32, #tpu.memory_space<vmem>>, vector<8x32xf32>
      tpu.vector_store %arg16[%c0_497, %c0_498], %954 {strides = array<i32>} : memref<8x32xf32, #tpu.memory_space<vmem>>, vector<8x32xf32>,
      %cst_499 = arith.constant 0.000000e+00 : f32
      %956 = vector.broadcast %cst_499 : f32 to vector<8x32xf32>
      %c0_500 = arith.constant 0 : index
      %c0_501 = arith.constant 0 : index
      %957 = vector.load %arg17[%c0_500, %c0_501] : memref<8x32xf32, #tpu.memory_space<vmem>>, vector<8x32xf32>
      tpu.vector_store %arg17[%c0_500, %c0_501], %956 {strides = array<i32>} : memref<8x32xf32, #tpu.memory_space<vmem>>, vector<8x32xf32>,
    } else {
    }
    %c0 = arith.constant 0 : index
    %c0_1 = arith.constant 0 : index
    %c0_2 = arith.constant 0 : index
    %3 = vector.load %arg2[%c0, %c0_1, %c0_2] : memref<1x64x32xf32, #tpu.memory_space<vmem>>, vector<1x64x32xf32>
    %4 = vector.shape_cast %3 : vector<1x64x32xf32> to vector<64x32xf32>
    %c0_3 = arith.constant 0 : index
    %c0_4 = arith.constant 0 : index
    %5 = vector.load %arg4[%c0_3, %c0_4] : memref<32x128xf32, #tpu.memory_space<vmem>>, vector<32x128xf32>
    %cst = arith.constant dense<0.000000e+00> : vector<64x128xf32>
    %6 = tpu.matmul %4, %5, %cst {dimension_numbers = #tpu.dot_dimension_numbers<[1], [0], [0], [1], [0, 0, 1, 1], [], []>} : vector<64x32xf32>, vector<32x128xf32>, vector<64x128xf32> -> vector<64x128xf32>
    %c0_5 = arith.constant 0 : index
    %c0_6 = arith.constant 0 : index
    %7 = vector.load %arg8[%c0_5, %c0_6] : memref<1x128xf32, #tpu.memory_space<vmem>>, vector<1x128xf32>
    %8 = vector.broadcast %7 : vector<1x128xf32> to vector<64x128xf32>
    %9 = arith.addf %6, %8 : vector<64x128xf32>
    %c0_7 = arith.constant 0 : index
    %c0_8 = arith.constant 0 : index
    %10 = vector.load %arg12[%c0_7, %c0_8] : memref<64x128xf32, #tpu.memory_space<vmem>>, vector<64x128xf32>
    tpu.vector_store %arg12[%c0_7, %c0_8], %9 {strides = array<i32>} : memref<64x128xf32, #tpu.memory_space<vmem>>, vector<64x128xf32>,
    %c0_9 = arith.constant 0 : index
    %c0_10 = arith.constant 0 : index
    %c0_11 = arith.constant 0 : index
    %11 = vector.load %arg3[%c0_9, %c0_10, %c0_11] : memref<1x64x32xf32, #tpu.memory_space<vmem>>, vector<1x64x32xf32>
    %12 = vector.shape_cast %11 : vector<1x64x32xf32> to vector<64x32xf32>
    %c0_12 = arith.constant 0 : index
    %c0_13 = arith.constant 0 : index
    %13 = vector.load %arg5[%c0_12, %c0_13] : memref<32x128xf32, #tpu.memory_space<vmem>>, vector<32x128xf32>
    %cst_14 = arith.constant dense<0.000000e+00> : vector<64x128xf32>
    %14 = tpu.matmul %12, %13, %cst_14 {dimension_numbers = #tpu.dot_dimension_numbers<[1], [0], [0], [1], [0, 0, 1, 1], [], []>} : vector<64x32xf32>, vector<32x128xf32>, vector<64x128xf32> -> vector<64x128xf32>
    %c0_15 = arith.constant 0 : index
    %c0_16 = arith.constant 0 : index
    %15 = vector.load %arg9[%c0_15, %c0_16] : memref<1x128xf32, #tpu.memory_space<vmem>>, vector<1x128xf32>
    %16 = vector.broadcast %15 : vector<1x128xf32> to vector<64x128xf32>
    %17 = arith.addf %14, %16 : vector<64x128xf32>
    %c0_17 = arith.constant 0 : index
    %c0_18 = arith.constant 0 : index
    %18 = vector.load %arg13[%c0_17, %c0_18] : memref<64x128xf32, #tpu.memory_space<vmem>>, vector<64x128xf32>
    tpu.vector_store %arg13[%c0_17, %c0_18], %17 {strides = array<i32>} : memref<64x128xf32, #tpu.memory_space<vmem>>, vector<64x128xf32>,
    %c0_19 = arith.constant 0 : index
    %c0_20 = arith.constant 0 : index
    %19 = vector.load %arg1[%c0_19, %c0_20] : memref<8x1xi32, #tpu.memory_space<vmem>>, vector<8x1xi32>
    %c0_21 = arith.constant 0 : index
    %c0_22 = arith.constant 0 : index
    %20 = vector.load %arg6[%c0_21, %c0_22] : memref<32x128xf32, #tpu.memory_space<vmem>>, vector<32x128xf32>
    %c0_23 = arith.constant 0 : index
    %c0_24 = arith.constant 0 : index
    %21 = vector.load %arg7[%c0_23, %c0_24] : memref<32x128xf32, #tpu.memory_space<vmem>>, vector<32x128xf32>
    %c0_i32_25 = arith.constant 0 : i32
    %c8_i32 = arith.constant 8 : i32
    %22 = arith.muli %c0_i32_25, %c8_i32 : i32
    %23 = tpu.assume_multiple %22, 8 : i32
    %c8_i32_26 = arith.constant 8 : i32
    %24 = arith.muli %arg0, %c8_i32_26 : i32
    %25 = arith.addi %24, %c0_i32_25 : i32
    %26 = arith.index_cast %23 : i32 to index
    %c0_27 = arith.constant 0 : index
    %27 = vector.load %arg12[%26, %c0_27] : memref<64x128xf32, #tpu.memory_space<vmem>>, vector<8x128xf32>
    %c0_28 = arith.constant 0 : index
    %c0_29 = arith.constant 0 : index
    %28 = vector.load %arg14[%c0_28, %c0_29] : memref<8x32xf32, #tpu.memory_space<vmem>>, vector<8x32xf32>
    %c0_30 = arith.constant 0 : index
    %c0_31 = arith.constant 0 : index
    %29 = vector.load %arg15[%c0_30, %c0_31] : memref<8x32xf32, #tpu.memory_space<vmem>>, vector<8x32xf32>
    %cst_32 = arith.constant dense<0.000000e+00> : vector<8x128xf32>
    %30 = tpu.matmul %28, %20, %cst_32 {dimension_numbers = #tpu.dot_dimension_numbers<[1], [0], [0], [1], [0, 0, 1, 1], [], []>} : vector<8x32xf32>, vector<32x128xf32>, vector<8x128xf32> -> vector<8x128xf32>
    %31 = arith.addf %27, %30 : vector<8x128xf32>
    %32 = vector.extract_strided_slice %31 {offsets = [0, 0], sizes = [8, 32], strides = [1, 1]} : vector<8x128xf32> to vector<8x32xf32>
    %cst_33 = arith.constant 5.000000e-01 : f32
    %33 = vector.broadcast %cst_33 : f32 to vector<8x32xf32>
    %34 = arith.mulf %33, %32 : vector<8x32xf32>
    %35 = math.tanh %34 : vector<8x32xf32>
    %cst_34 = arith.constant 5.000000e-01 : f32
    %36 = vector.broadcast %cst_34 : f32 to vector<8x32xf32>
    %37 = arith.mulf %36, %35 : vector<8x32xf32>
    %cst_35 = arith.constant 5.000000e-01 : f32
    %38 = vector.broadcast %cst_35 : f32 to vector<8x32xf32>
    %39 = arith.addf %37, %38 : vector<8x32xf32>
    %40 = vector.extract_strided_slice %31 {offsets = [0, 32], sizes = [8, 32], strides = [1, 1]} : vector<8x128xf32> to vector<8x32xf32>
    %cst_36 = arith.constant 5.000000e-01 : f32
    %41 = vector.broadcast %cst_36 : f32 to vector<8x32xf32>
    %42 = arith.mulf %41, %40 : vector<8x32xf32>
    %43 = math.tanh %42 : vector<8x32xf32>
    %cst_37 = arith.constant 5.000000e-01 : f32
    %44 = vector.broadcast %cst_37 : f32 to vector<8x32xf32>
    %45 = arith.mulf %44, %43 : vector<8x32xf32>
    %cst_38 = arith.constant 5.000000e-01 : f32
    %46 = vector.broadcast %cst_38 : f32 to vector<8x32xf32>
    %47 = arith.addf %45, %46 : vector<8x32xf32>
    %48 = vector.extract_strided_slice %31 {offsets = [0, 64], sizes = [8, 32], strides = [1, 1]} : vector<8x128xf32> to vector<8x32xf32>
    %49 = math.tanh %48 : vector<8x32xf32>
    %50 = vector.extract_strided_slice %31 {offsets = [0, 96], sizes = [8, 32], strides = [1, 1]} : vector<8x128xf32> to vector<8x32xf32>
    %cst_39 = arith.constant 5.000000e-01 : f32
    %51 = vector.broadcast %cst_39 : f32 to vector<8x32xf32>
    %52 = arith.mulf %51, %50 : vector<8x32xf32>
    %53 = math.tanh %52 : vector<8x32xf32>
    %cst_40 = arith.constant 5.000000e-01 : f32
    %54 = vector.broadcast %cst_40 : f32 to vector<8x32xf32>
    %55 = arith.mulf %54, %53 : vector<8x32xf32>
    %cst_41 = arith.constant 5.000000e-01 : f32
    %56 = vector.broadcast %cst_41 : f32 to vector<8x32xf32>
    %57 = arith.addf %55, %56 : vector<8x32xf32>
    %58 = arith.mulf %47, %29 : vector<8x32xf32>
    %59 = arith.mulf %39, %49 : vector<8x32xf32>
    %60 = arith.addf %58, %59 : vector<8x32xf32>
    %61 = math.tanh %60 : vector<8x32xf32>
    %62 = arith.mulf %57, %61 : vector<8x32xf32>
    %63 = vector.broadcast %25 : i32 to vector<8x1xi32>
    %64 = arith.cmpi slt, %63, %19 : vector<8x1xi32>
    %65 = vector.shape_cast %64 : vector<8x1xi1> to vector<8x1xi1>
    %66 = vector.broadcast %65 : vector<8x1xi1> to vector<8x32xi1>
    %c0_42 = arith.constant 0 : index
    %c0_43 = arith.constant 0 : index
    %67 = vector.load %arg14[%c0_42, %c0_43] : memref<8x32xf32, #tpu.memory_space<vmem>>, vector<8x32xf32>
    %68 = arith.select %66, %62, %67 : vector<8x32xi1>, vector<8x32xf32>
    %c0_44 = arith.constant 0 : index
    %c0_45 = arith.constant 0 : index
    %69 = vector.load %arg14[%c0_44, %c0_45] : memref<8x32xf32, #tpu.memory_space<vmem>>, vector<8x32xf32>
    tpu.vector_store %arg14[%c0_44, %c0_45], %68 {strides = array<i32>} : memref<8x32xf32, #tpu.memory_space<vmem>>, vector<8x32xf32>,
    %c0_46 = arith.constant 0 : index
    %c0_47 = arith.constant 0 : index
    %70 = vector.load %arg15[%c0_46, %c0_47] : memref<8x32xf32, #tpu.memory_space<vmem>>, vector<8x32xf32>
    %71 = arith.select %66, %60, %70 : vector<8x32xi1>, vector<8x32xf32>
    %c0_48 = arith.constant 0 : index
    %c0_49 = arith.constant 0 : index
    %72 = vector.load %arg15[%c0_48, %c0_49] : memref<8x32xf32, #tpu.memory_space<vmem>>, vector<8x32xf32>
    tpu.vector_store %arg15[%c0_48, %c0_49], %71 {strides = array<i32>} : memref<8x32xf32, #tpu.memory_space<vmem>>, vector<8x32xf32>,
    %cst_50 = arith.constant 0.000000e+00 : f32
    %73 = vector.broadcast %cst_50 : f32 to vector<8x32xf32>
    %74 = arith.select %66, %62, %73 : vector<8x32xi1>, vector<8x32xf32>
    %c0_51 = arith.constant 0 : index
    %75 = arith.index_cast %23 : i32 to index
    %c0_52 = arith.constant 0 : index
    %76 = vector.load %arg10[%c0_51, %75, %c0_52] : memref<1x64x32xf32, #tpu.memory_space<vmem>>, vector<1x8x32xf32>
    %77 = vector.shape_cast %76 : vector<1x8x32xf32> to vector<8x32xf32>
    %78 = vector.shape_cast %74 : vector<8x32xf32> to vector<1x8x32xf32>
    tpu.vector_store %arg10[%c0_51, %75, %c0_52], %78 {strides = array<i32>} : memref<1x64x32xf32, #tpu.memory_space<vmem>>, vector<1x8x32xf32>,
    %c7_i32 = arith.constant 7 : i32
    %79 = arith.subi %c7_i32, %c0_i32_25 : i32
    %c8_i32_53 = arith.constant 8 : i32
    %80 = arith.muli %79, %c8_i32_53 : i32
    %81 = tpu.assume_multiple %80, 8 : i32
    %c0_i32_54 = arith.constant 0 : i32
    %82 = arith.subi %c0_i32_54, %arg0 : i32
    %c8_i32_55 = arith.constant 8 : i32
    %83 = arith.muli %82, %c8_i32_55 : i32
    %84 = arith.addi %83, %79 : i32
    %85 = arith.index_cast %81 : i32 to index
    %c0_56 = arith.constant 0 : index
    %86 = vector.load %arg13[%85, %c0_56] : memref<64x128xf32, #tpu.memory_space<vmem>>, vector<8x128xf32>
    %c0_57 = arith.constant 0 : index
    %c0_58 = arith.constant 0 : index
    %87 = vector.load %arg16[%c0_57, %c0_58] : memref<8x32xf32, #tpu.memory_space<vmem>>, vector<8x32xf32>
    %c0_59 = arith.constant 0 : index
    %c0_60 = arith.constant 0 : index
    %88 = vector.load %arg17[%c0_59, %c0_60] : memref<8x32xf32, #tpu.memory_space<vmem>>, vector<8x32xf32>
    %cst_61 = arith.constant dense<0.000000e+00> : vector<8x128xf32>
    %89 = tpu.matmul %87, %21, %cst_61 {dimension_numbers = #tpu.dot_dimension_numbers<[1], [0], [0], [1], [0, 0, 1, 1], [], []>} : vector<8x32xf32>, vector<32x128xf32>, vector<8x128xf32> -> vector<8x128xf32>
    %90 = arith.addf %86, %89 : vector<8x128xf32>
    %91 = vector.extract_strided_slice %90 {offsets = [0, 0], sizes = [8, 32], strides = [1, 1]} : vector<8x128xf32> to vector<8x32xf32>
    %cst_62 = arith.constant 5.000000e-01 : f32
    %92 = vector.broadcast %cst_62 : f32 to vector<8x32xf32>
    %93 = arith.mulf %92, %91 : vector<8x32xf32>
    %94 = math.tanh %93 : vector<8x32xf32>
    %cst_63 = arith.constant 5.000000e-01 : f32
    %95 = vector.broadcast %cst_63 : f32 to vector<8x32xf32>
    %96 = arith.mulf %95, %94 : vector<8x32xf32>
    %cst_64 = arith.constant 5.000000e-01 : f32
    %97 = vector.broadcast %cst_64 : f32 to vector<8x32xf32>
    %98 = arith.addf %96, %97 : vector<8x32xf32>
    %99 = vector.extract_strided_slice %90 {offsets = [0, 32], sizes = [8, 32], strides = [1, 1]} : vector<8x128xf32> to vector<8x32xf32>
    %cst_65 = arith.constant 5.000000e-01 : f32
    %100 = vector.broadcast %cst_65 : f32 to vector<8x32xf32>
    %101 = arith.mulf %100, %99 : vector<8x32xf32>
    %102 = math.tanh %101 : vector<8x32xf32>
    %cst_66 = arith.constant 5.000000e-01 : f32
    %103 = vector.broadcast %cst_66 : f32 to vector<8x32xf32>
    %104 = arith.mulf %103, %102 : vector<8x32xf32>
    %cst_67 = arith.constant 5.000000e-01 : f32
    %105 = vector.broadcast %cst_67 : f32 to vector<8x32xf32>
    %106 = arith.addf %104, %105 : vector<8x32xf32>
    %107 = vector.extract_strided_slice %90 {offsets = [0, 64], sizes = [8, 32], strides = [1, 1]} : vector<8x128xf32> to vector<8x32xf32>
    %108 = math.tanh %107 : vector<8x32xf32>
    %109 = vector.extract_strided_slice %90 {offsets = [0, 96], sizes = [8, 32], strides = [1, 1]} : vector<8x128xf32> to vector<8x32xf32>
    %cst_68 = arith.constant 5.000000e-01 : f32
    %110 = vector.broadcast %cst_68 : f32 to vector<8x32xf32>
    %111 = arith.mulf %110, %109 : vector<8x32xf32>
    %112 = math.tanh %111 : vector<8x32xf32>
    %cst_69 = arith.constant 5.000000e-01 : f32
    %113 = vector.broadcast %cst_69 : f32 to vector<8x32xf32>
    %114 = arith.mulf %113, %112 : vector<8x32xf32>
    %cst_70 = arith.constant 5.000000e-01 : f32
    %115 = vector.broadcast %cst_70 : f32 to vector<8x32xf32>
    %116 = arith.addf %114, %115 : vector<8x32xf32>
    %117 = arith.mulf %106, %88 : vector<8x32xf32>
    %118 = arith.mulf %98, %108 : vector<8x32xf32>
    %119 = arith.addf %117, %118 : vector<8x32xf32>
    %120 = math.tanh %119 : vector<8x32xf32>
    %121 = arith.mulf %116, %120 : vector<8x32xf32>
    %122 = vector.broadcast %84 : i32 to vector<8x1xi32>
    %123 = arith.cmpi slt, %122, %19 : vector<8x1xi32>
    %124 = vector.shape_cast %123 : vector<8x1xi1> to vector<8x1xi1>
    %125 = vector.broadcast %124 : vector<8x1xi1> to vector<8x32xi1>
    %c0_71 = arith.constant 0 : index
    %c0_72 = arith.constant 0 : index
    %126 = vector.load %arg16[%c0_71, %c0_72] : memref<8x32xf32, #tpu.memory_space<vmem>>, vector<8x32xf32>
    %127 = arith.select %125, %121, %126 : vector<8x32xi1>, vector<8x32xf32>
    %c0_73 = arith.constant 0 : index
    %c0_74 = arith.constant 0 : index
    %128 = vector.load %arg16[%c0_73, %c0_74] : memref<8x32xf32, #tpu.memory_space<vmem>>, vector<8x32xf32>
    tpu.vector_store %arg16[%c0_73, %c0_74], %127 {strides = array<i32>} : memref<8x32xf32, #tpu.memory_space<vmem>>, vector<8x32xf32>,
    %c0_75 = arith.constant 0 : index
    %c0_76 = arith.constant 0 : index
    %129 = vector.load %arg17[%c0_75, %c0_76] : memref<8x32xf32, #tpu.memory_space<vmem>>, vector<8x32xf32>
    %130 = arith.select %125, %119, %129 : vector<8x32xi1>, vector<8x32xf32>
    %c0_77 = arith.constant 0 : index
    %c0_78 = arith.constant 0 : index
    %131 = vector.load %arg17[%c0_77, %c0_78] : memref<8x32xf32, #tpu.memory_space<vmem>>, vector<8x32xf32>
    tpu.vector_store %arg17[%c0_77, %c0_78], %130 {strides = array<i32>} : memref<8x32xf32, #tpu.memory_space<vmem>>, vector<8x32xf32>,
    %cst_79 = arith.constant 0.000000e+00 : f32
    %132 = vector.broadcast %cst_79 : f32 to vector<8x32xf32>
    %133 = arith.select %125, %121, %132 : vector<8x32xi1>, vector<8x32xf32>
    %c0_80 = arith.constant 0 : index
    %134 = arith.index_cast %81 : i32 to index
    %c0_81 = arith.constant 0 : index
    %135 = vector.load %arg11[%c0_80, %134, %c0_81] : memref<1x64x32xf32, #tpu.memory_space<vmem>>, vector<1x8x32xf32>
    %136 = vector.shape_cast %135 : vector<1x8x32xf32> to vector<8x32xf32>
    %137 = vector.shape_cast %133 : vector<8x32xf32> to vector<1x8x32xf32>
    tpu.vector_store %arg11[%c0_80, %134, %c0_81], %137 {strides = array<i32>} : memref<1x64x32xf32, #tpu.memory_space<vmem>>, vector<1x8x32xf32>,
    %c1_i32 = arith.constant 1 : i32
    %c8_i32_82 = arith.constant 8 : i32
    %138 = arith.muli %c1_i32, %c8_i32_82 : i32
    %139 = tpu.assume_multiple %138, 8 : i32
    %c8_i32_83 = arith.constant 8 : i32
    %140 = arith.muli %arg0, %c8_i32_83 : i32
    %141 = arith.addi %140, %c1_i32 : i32
    %142 = arith.index_cast %139 : i32 to index
    %c0_84 = arith.constant 0 : index
    %143 = vector.load %arg12[%142, %c0_84] : memref<64x128xf32, #tpu.memory_space<vmem>>, vector<8x128xf32>
    %c0_85 = arith.constant 0 : index
    %c0_86 = arith.constant 0 : index
    %144 = vector.load %arg14[%c0_85, %c0_86] : memref<8x32xf32, #tpu.memory_space<vmem>>, vector<8x32xf32>
    %c0_87 = arith.constant 0 : index
    %c0_88 = arith.constant 0 : index
    %145 = vector.load %arg15[%c0_87, %c0_88] : memref<8x32xf32, #tpu.memory_space<vmem>>, vector<8x32xf32>
    %cst_89 = arith.constant dense<0.000000e+00> : vector<8x128xf32>
    %146 = tpu.matmul %144, %20, %cst_89 {dimension_numbers = #tpu.dot_dimension_numbers<[1], [0], [0], [1], [0, 0, 1, 1], [], []>} : vector<8x32xf32>, vector<32x128xf32>, vector<8x128xf32> -> vector<8x128xf32>
    %147 = arith.addf %143, %146 : vector<8x128xf32>
    %148 = vector.extract_strided_slice %147 {offsets = [0, 0], sizes = [8, 32], strides = [1, 1]} : vector<8x128xf32> to vector<8x32xf32>
    %cst_90 = arith.constant 5.000000e-01 : f32
    %149 = vector.broadcast %cst_90 : f32 to vector<8x32xf32>
    %150 = arith.mulf %149, %148 : vector<8x32xf32>
    %151 = math.tanh %150 : vector<8x32xf32>
    %cst_91 = arith.constant 5.000000e-01 : f32
    %152 = vector.broadcast %cst_91 : f32 to vector<8x32xf32>
    %153 = arith.mulf %152, %151 : vector<8x32xf32>
    %cst_92 = arith.constant 5.000000e-01 : f32
    %154 = vector.broadcast %cst_92 : f32 to vector<8x32xf32>
    %155 = arith.addf %153, %154 : vector<8x32xf32>
    %156 = vector.extract_strided_slice %147 {offsets = [0, 32], sizes = [8, 32], strides = [1, 1]} : vector<8x128xf32> to vector<8x32xf32>
    %cst_93 = arith.constant 5.000000e-01 : f32
    %157 = vector.broadcast %cst_93 : f32 to vector<8x32xf32>
    %158 = arith.mulf %157, %156 : vector<8x32xf32>
    %159 = math.tanh %158 : vector<8x32xf32>
    %cst_94 = arith.constant 5.000000e-01 : f32
    %160 = vector.broadcast %cst_94 : f32 to vector<8x32xf32>
    %161 = arith.mulf %160, %159 : vector<8x32xf32>
    %cst_95 = arith.constant 5.000000e-01 : f32
    %162 = vector.broadcast %cst_95 : f32 to vector<8x32xf32>
    %163 = arith.addf %161, %162 : vector<8x32xf32>
    %164 = vector.extract_strided_slice %147 {offsets = [0, 64], sizes = [8, 32], strides = [1, 1]} : vector<8x128xf32> to vector<8x32xf32>
    %165 = math.tanh %164 : vector<8x32xf32>
    %166 = vector.extract_strided_slice %147 {offsets = [0, 96], sizes = [8, 32], strides = [1, 1]} : vector<8x128xf32> to vector<8x32xf32>
    %cst_96 = arith.constant 5.000000e-01 : f32
    %167 = vector.broadcast %cst_96 : f32 to vector<8x32xf32>
    %168 = arith.mulf %167, %166 : vector<8x32xf32>
    %169 = math.tanh %168 : vector<8x32xf32>
    %cst_97 = arith.constant 5.000000e-01 : f32
    %170 = vector.broadcast %cst_97 : f32 to vector<8x32xf32>
    %171 = arith.mulf %170, %169 : vector<8x32xf32>
    %cst_98 = arith.constant 5.000000e-01 : f32
    %172 = vector.broadcast %cst_98 : f32 to vector<8x32xf32>
    %173 = arith.addf %171, %172 : vector<8x32xf32>
    %174 = arith.mulf %163, %145 : vector<8x32xf32>
    %175 = arith.mulf %155, %165 : vector<8x32xf32>
    %176 = arith.addf %174, %175 : vector<8x32xf32>
    %177 = math.tanh %176 : vector<8x32xf32>
    %178 = arith.mulf %173, %177 : vector<8x32xf32>
    %179 = vector.broadcast %141 : i32 to vector<8x1xi32>
    %180 = arith.cmpi slt, %179, %19 : vector<8x1xi32>
    %181 = vector.shape_cast %180 : vector<8x1xi1> to vector<8x1xi1>
    %182 = vector.broadcast %181 : vector<8x1xi1> to vector<8x32xi1>
    %c0_99 = arith.constant 0 : index
    %c0_100 = arith.constant 0 : index
    %183 = vector.load %arg14[%c0_99, %c0_100] : memref<8x32xf32, #tpu.memory_space<vmem>>, vector<8x32xf32>
    %184 = arith.select %182, %178, %183 : vector<8x32xi1>, vector<8x32xf32>
    %c0_101 = arith.constant 0 : index
    %c0_102 = arith.constant 0 : index
    %185 = vector.load %arg14[%c0_101, %c0_102] : memref<8x32xf32, #tpu.memory_space<vmem>>, vector<8x32xf32>
    tpu.vector_store %arg14[%c0_101, %c0_102], %184 {strides = array<i32>} : memref<8x32xf32, #tpu.memory_space<vmem>>, vector<8x32xf32>,
    %c0_103 = arith.constant 0 : index
    %c0_104 = arith.constant 0 : index
    %186 = vector.load %arg15[%c0_103, %c0_104] : memref<8x32xf32, #tpu.memory_space<vmem>>, vector<8x32xf32>
    %187 = arith.select %182, %176, %186 : vector<8x32xi1>, vector<8x32xf32>
    %c0_105 = arith.constant 0 : index
    %c0_106 = arith.constant 0 : index
    %188 = vector.load %arg15[%c0_105, %c0_106] : memref<8x32xf32, #tpu.memory_space<vmem>>, vector<8x32xf32>
    tpu.vector_store %arg15[%c0_105, %c0_106], %187 {strides = array<i32>} : memref<8x32xf32, #tpu.memory_space<vmem>>, vector<8x32xf32>,
    %cst_107 = arith.constant 0.000000e+00 : f32
    %189 = vector.broadcast %cst_107 : f32 to vector<8x32xf32>
    %190 = arith.select %182, %178, %189 : vector<8x32xi1>, vector<8x32xf32>
    %c0_108 = arith.constant 0 : index
    %191 = arith.index_cast %139 : i32 to index
    %c0_109 = arith.constant 0 : index
    %192 = vector.load %arg10[%c0_108, %191, %c0_109] : memref<1x64x32xf32, #tpu.memory_space<vmem>>, vector<1x8x32xf32>
    %193 = vector.shape_cast %192 : vector<1x8x32xf32> to vector<8x32xf32>
    %194 = vector.shape_cast %190 : vector<8x32xf32> to vector<1x8x32xf32>
    tpu.vector_store %arg10[%c0_108, %191, %c0_109], %194 {strides = array<i32>} : memref<1x64x32xf32, #tpu.memory_space<vmem>>, vector<1x8x32xf32>,
    %c7_i32_110 = arith.constant 7 : i32
    %195 = arith.subi %c7_i32_110, %c1_i32 : i32
    %c8_i32_111 = arith.constant 8 : i32
    %196 = arith.muli %195, %c8_i32_111 : i32
    %197 = tpu.assume_multiple %196, 8 : i32
    %c0_i32_112 = arith.constant 0 : i32
    %198 = arith.subi %c0_i32_112, %arg0 : i32
    %c8_i32_113 = arith.constant 8 : i32
    %199 = arith.muli %198, %c8_i32_113 : i32
    %200 = arith.addi %199, %195 : i32
    %201 = arith.index_cast %197 : i32 to index
    %c0_114 = arith.constant 0 : index
    %202 = vector.load %arg13[%201, %c0_114] : memref<64x128xf32, #tpu.memory_space<vmem>>, vector<8x128xf32>
    %c0_115 = arith.constant 0 : index
    %c0_116 = arith.constant 0 : index
    %203 = vector.load %arg16[%c0_115, %c0_116] : memref<8x32xf32, #tpu.memory_space<vmem>>, vector<8x32xf32>
    %c0_117 = arith.constant 0 : index
    %c0_118 = arith.constant 0 : index
    %204 = vector.load %arg17[%c0_117, %c0_118] : memref<8x32xf32, #tpu.memory_space<vmem>>, vector<8x32xf32>
    %cst_119 = arith.constant dense<0.000000e+00> : vector<8x128xf32>
    %205 = tpu.matmul %203, %21, %cst_119 {dimension_numbers = #tpu.dot_dimension_numbers<[1], [0], [0], [1], [0, 0, 1, 1], [], []>} : vector<8x32xf32>, vector<32x128xf32>, vector<8x128xf32> -> vector<8x128xf32>
    %206 = arith.addf %202, %205 : vector<8x128xf32>
    %207 = vector.extract_strided_slice %206 {offsets = [0, 0], sizes = [8, 32], strides = [1, 1]} : vector<8x128xf32> to vector<8x32xf32>
    %cst_120 = arith.constant 5.000000e-01 : f32
    %208 = vector.broadcast %cst_120 : f32 to vector<8x32xf32>
    %209 = arith.mulf %208, %207 : vector<8x32xf32>
    %210 = math.tanh %209 : vector<8x32xf32>
    %cst_121 = arith.constant 5.000000e-01 : f32
    %211 = vector.broadcast %cst_121 : f32 to vector<8x32xf32>
    %212 = arith.mulf %211, %210 : vector<8x32xf32>
    %cst_122 = arith.constant 5.000000e-01 : f32
    %213 = vector.broadcast %cst_122 : f32 to vector<8x32xf32>
    %214 = arith.addf %212, %213 : vector<8x32xf32>
    %215 = vector.extract_strided_slice %206 {offsets = [0, 32], sizes = [8, 32], strides = [1, 1]} : vector<8x128xf32> to vector<8x32xf32>
    %cst_123 = arith.constant 5.000000e-01 : f32
    %216 = vector.broadcast %cst_123 : f32 to vector<8x32xf32>
    %217 = arith.mulf %216, %215 : vector<8x32xf32>
    %218 = math.tanh %217 : vector<8x32xf32>
    %cst_124 = arith.constant 5.000000e-01 : f32
    %219 = vector.broadcast %cst_124 : f32 to vector<8x32xf32>
    %220 = arith.mulf %219, %218 : vector<8x32xf32>
    %cst_125 = arith.constant 5.000000e-01 : f32
    %221 = vector.broadcast %cst_125 : f32 to vector<8x32xf32>
    %222 = arith.addf %220, %221 : vector<8x32xf32>
    %223 = vector.extract_strided_slice %206 {offsets = [0, 64], sizes = [8, 32], strides = [1, 1]} : vector<8x128xf32> to vector<8x32xf32>
    %224 = math.tanh %223 : vector<8x32xf32>
    %225 = vector.extract_strided_slice %206 {offsets = [0, 96], sizes = [8, 32], strides = [1, 1]} : vector<8x128xf32> to vector<8x32xf32>
    %cst_126 = arith.constant 5.000000e-01 : f32
    %226 = vector.broadcast %cst_126 : f32 to vector<8x32xf32>
    %227 = arith.mulf %226, %225 : vector<8x32xf32>
    %228 = math.tanh %227 : vector<8x32xf32>
    %cst_127 = arith.constant 5.000000e-01 : f32
    %229 = vector.broadcast %cst_127 : f32 to vector<8x32xf32>
    %230 = arith.mulf %229, %228 : vector<8x32xf32>
    %cst_128 = arith.constant 5.000000e-01 : f32
    %231 = vector.broadcast %cst_128 : f32 to vector<8x32xf32>
    %232 = arith.addf %230, %231 : vector<8x32xf32>
    %233 = arith.mulf %222, %204 : vector<8x32xf32>
    %234 = arith.mulf %214, %224 : vector<8x32xf32>
    %235 = arith.addf %233, %234 : vector<8x32xf32>
    %236 = math.tanh %235 : vector<8x32xf32>
    %237 = arith.mulf %232, %236 : vector<8x32xf32>
    %238 = vector.broadcast %200 : i32 to vector<8x1xi32>
    %239 = arith.cmpi slt, %238, %19 : vector<8x1xi32>
    %240 = vector.shape_cast %239 : vector<8x1xi1> to vector<8x1xi1>
    %241 = vector.broadcast %240 : vector<8x1xi1> to vector<8x32xi1>
    %c0_129 = arith.constant 0 : index
    %c0_130 = arith.constant 0 : index
    %242 = vector.load %arg16[%c0_129, %c0_130] : memref<8x32xf32, #tpu.memory_space<vmem>>, vector<8x32xf32>
    %243 = arith.select %241, %237, %242 : vector<8x32xi1>, vector<8x32xf32>
    %c0_131 = arith.constant 0 : index
    %c0_132 = arith.constant 0 : index
    %244 = vector.load %arg16[%c0_131, %c0_132] : memref<8x32xf32, #tpu.memory_space<vmem>>, vector<8x32xf32>
    tpu.vector_store %arg16[%c0_131, %c0_132], %243 {strides = array<i32>} : memref<8x32xf32, #tpu.memory_space<vmem>>, vector<8x32xf32>,
    %c0_133 = arith.constant 0 : index
    %c0_134 = arith.constant 0 : index
    %245 = vector.load %arg17[%c0_133, %c0_134] : memref<8x32xf32, #tpu.memory_space<vmem>>, vector<8x32xf32>
    %246 = arith.select %241, %235, %245 : vector<8x32xi1>, vector<8x32xf32>
    %c0_135 = arith.constant 0 : index
    %c0_136 = arith.constant 0 : index
    %247 = vector.load %arg17[%c0_135, %c0_136] : memref<8x32xf32, #tpu.memory_space<vmem>>, vector<8x32xf32>
    tpu.vector_store %arg17[%c0_135, %c0_136], %246 {strides = array<i32>} : memref<8x32xf32, #tpu.memory_space<vmem>>, vector<8x32xf32>,
    %cst_137 = arith.constant 0.000000e+00 : f32
    %248 = vector.broadcast %cst_137 : f32 to vector<8x32xf32>
    %249 = arith.select %241, %237, %248 : vector<8x32xi1>, vector<8x32xf32>
    %c0_138 = arith.constant 0 : index
    %250 = arith.index_cast %197 : i32 to index
    %c0_139 = arith.constant 0 : index
    %251 = vector.load %arg11[%c0_138, %250, %c0_139] : memref<1x64x32xf32, #tpu.memory_space<vmem>>, vector<1x8x32xf32>
    %252 = vector.shape_cast %251 : vector<1x8x32xf32> to vector<8x32xf32>
    %253 = vector.shape_cast %249 : vector<8x32xf32> to vector<1x8x32xf32>
    tpu.vector_store %arg11[%c0_138, %250, %c0_139], %253 {strides = array<i32>} : memref<1x64x32xf32, #tpu.memory_space<vmem>>, vector<1x8x32xf32>,
    %c2_i32 = arith.constant 2 : i32
    %c8_i32_140 = arith.constant 8 : i32
    %254 = arith.muli %c2_i32, %c8_i32_140 : i32
    %255 = tpu.assume_multiple %254, 8 : i32
    %c8_i32_141 = arith.constant 8 : i32
    %256 = arith.muli %arg0, %c8_i32_141 : i32
    %257 = arith.addi %256, %c2_i32 : i32
    %258 = arith.index_cast %255 : i32 to index
    %c0_142 = arith.constant 0 : index
    %259 = vector.load %arg12[%258, %c0_142] : memref<64x128xf32, #tpu.memory_space<vmem>>, vector<8x128xf32>
    %c0_143 = arith.constant 0 : index
    %c0_144 = arith.constant 0 : index
    %260 = vector.load %arg14[%c0_143, %c0_144] : memref<8x32xf32, #tpu.memory_space<vmem>>, vector<8x32xf32>
    %c0_145 = arith.constant 0 : index
    %c0_146 = arith.constant 0 : index
    %261 = vector.load %arg15[%c0_145, %c0_146] : memref<8x32xf32, #tpu.memory_space<vmem>>, vector<8x32xf32>
    %cst_147 = arith.constant dense<0.000000e+00> : vector<8x128xf32>
    %262 = tpu.matmul %260, %20, %cst_147 {dimension_numbers = #tpu.dot_dimension_numbers<[1], [0], [0], [1], [0, 0, 1, 1], [], []>} : vector<8x32xf32>, vector<32x128xf32>, vector<8x128xf32> -> vector<8x128xf32>
    %263 = arith.addf %259, %262 : vector<8x128xf32>
    %264 = vector.extract_strided_slice %263 {offsets = [0, 0], sizes = [8, 32], strides = [1, 1]} : vector<8x128xf32> to vector<8x32xf32>
    %cst_148 = arith.constant 5.000000e-01 : f32
    %265 = vector.broadcast %cst_148 : f32 to vector<8x32xf32>
    %266 = arith.mulf %265, %264 : vector<8x32xf32>
    %267 = math.tanh %266 : vector<8x32xf32>
    %cst_149 = arith.constant 5.000000e-01 : f32
    %268 = vector.broadcast %cst_149 : f32 to vector<8x32xf32>
    %269 = arith.mulf %268, %267 : vector<8x32xf32>
    %cst_150 = arith.constant 5.000000e-01 : f32
    %270 = vector.broadcast %cst_150 : f32 to vector<8x32xf32>
    %271 = arith.addf %269, %270 : vector<8x32xf32>
    %272 = vector.extract_strided_slice %263 {offsets = [0, 32], sizes = [8, 32], strides = [1, 1]} : vector<8x128xf32> to vector<8x32xf32>
    %cst_151 = arith.constant 5.000000e-01 : f32
    %273 = vector.broadcast %cst_151 : f32 to vector<8x32xf32>
    %274 = arith.mulf %273, %272 : vector<8x32xf32>
    %275 = math.tanh %274 : vector<8x32xf32>
    %cst_152 = arith.constant 5.000000e-01 : f32
    %276 = vector.broadcast %cst_152 : f32 to vector<8x32xf32>
    %277 = arith.mulf %276, %275 : vector<8x32xf32>
    %cst_153 = arith.constant 5.000000e-01 : f32
    %278 = vector.broadcast %cst_153 : f32 to vector<8x32xf32>
    %279 = arith.addf %277, %278 : vector<8x32xf32>
    %280 = vector.extract_strided_slice %263 {offsets = [0, 64], sizes = [8, 32], strides = [1, 1]} : vector<8x128xf32> to vector<8x32xf32>
    %281 = math.tanh %280 : vector<8x32xf32>
    %282 = vector.extract_strided_slice %263 {offsets = [0, 96], sizes = [8, 32], strides = [1, 1]} : vector<8x128xf32> to vector<8x32xf32>
    %cst_154 = arith.constant 5.000000e-01 : f32
    %283 = vector.broadcast %cst_154 : f32 to vector<8x32xf32>
    %284 = arith.mulf %283, %282 : vector<8x32xf32>
    %285 = math.tanh %284 : vector<8x32xf32>
    %cst_155 = arith.constant 5.000000e-01 : f32
    %286 = vector.broadcast %cst_155 : f32 to vector<8x32xf32>
    %287 = arith.mulf %286, %285 : vector<8x32xf32>
    %cst_156 = arith.constant 5.000000e-01 : f32
    %288 = vector.broadcast %cst_156 : f32 to vector<8x32xf32>
    %289 = arith.addf %287, %288 : vector<8x32xf32>
    %290 = arith.mulf %279, %261 : vector<8x32xf32>
    %291 = arith.mulf %271, %281 : vector<8x32xf32>
    %292 = arith.addf %290, %291 : vector<8x32xf32>
    %293 = math.tanh %292 : vector<8x32xf32>
    %294 = arith.mulf %289, %293 : vector<8x32xf32>
    %295 = vector.broadcast %257 : i32 to vector<8x1xi32>
    %296 = arith.cmpi slt, %295, %19 : vector<8x1xi32>
    %297 = vector.shape_cast %296 : vector<8x1xi1> to vector<8x1xi1>
    %298 = vector.broadcast %297 : vector<8x1xi1> to vector<8x32xi1>
    %c0_157 = arith.constant 0 : index
    %c0_158 = arith.constant 0 : index
    %299 = vector.load %arg14[%c0_157, %c0_158] : memref<8x32xf32, #tpu.memory_space<vmem>>, vector<8x32xf32>
    %300 = arith.select %298, %294, %299 : vector<8x32xi1>, vector<8x32xf32>
    %c0_159 = arith.constant 0 : index
    %c0_160 = arith.constant 0 : index
    %301 = vector.load %arg14[%c0_159, %c0_160] : memref<8x32xf32, #tpu.memory_space<vmem>>, vector<8x32xf32>
    tpu.vector_store %arg14[%c0_159, %c0_160], %300 {strides = array<i32>} : memref<8x32xf32, #tpu.memory_space<vmem>>, vector<8x32xf32>,
    %c0_161 = arith.constant 0 : index
    %c0_162 = arith.constant 0 : index
    %302 = vector.load %arg15[%c0_161, %c0_162] : memref<8x32xf32, #tpu.memory_space<vmem>>, vector<8x32xf32>
    %303 = arith.select %298, %292, %302 : vector<8x32xi1>, vector<8x32xf32>
    %c0_163 = arith.constant 0 : index
    %c0_164 = arith.constant 0 : index
    %304 = vector.load %arg15[%c0_163, %c0_164] : memref<8x32xf32, #tpu.memory_space<vmem>>, vector<8x32xf32>
    tpu.vector_store %arg15[%c0_163, %c0_164], %303 {strides = array<i32>} : memref<8x32xf32, #tpu.memory_space<vmem>>, vector<8x32xf32>,
    %cst_165 = arith.constant 0.000000e+00 : f32
    %305 = vector.broadcast %cst_165 : f32 to vector<8x32xf32>
    %306 = arith.select %298, %294, %305 : vector<8x32xi1>, vector<8x32xf32>
    %c0_166 = arith.constant 0 : index
    %307 = arith.index_cast %255 : i32 to index
    %c0_167 = arith.constant 0 : index
    %308 = vector.load %arg10[%c0_166, %307, %c0_167] : memref<1x64x32xf32, #tpu.memory_space<vmem>>, vector<1x8x32xf32>
    %309 = vector.shape_cast %308 : vector<1x8x32xf32> to vector<8x32xf32>
    %310 = vector.shape_cast %306 : vector<8x32xf32> to vector<1x8x32xf32>
    tpu.vector_store %arg10[%c0_166, %307, %c0_167], %310 {strides = array<i32>} : memref<1x64x32xf32, #tpu.memory_space<vmem>>, vector<1x8x32xf32>,
    %c7_i32_168 = arith.constant 7 : i32
    %311 = arith.subi %c7_i32_168, %c2_i32 : i32
    %c8_i32_169 = arith.constant 8 : i32
    %312 = arith.muli %311, %c8_i32_169 : i32
    %313 = tpu.assume_multiple %312, 8 : i32
    %c0_i32_170 = arith.constant 0 : i32
    %314 = arith.subi %c0_i32_170, %arg0 : i32
    %c8_i32_171 = arith.constant 8 : i32
    %315 = arith.muli %314, %c8_i32_171 : i32
    %316 = arith.addi %315, %311 : i32
    %317 = arith.index_cast %313 : i32 to index
    %c0_172 = arith.constant 0 : index
    %318 = vector.load %arg13[%317, %c0_172] : memref<64x128xf32, #tpu.memory_space<vmem>>, vector<8x128xf32>
    %c0_173 = arith.constant 0 : index
    %c0_174 = arith.constant 0 : index
    %319 = vector.load %arg16[%c0_173, %c0_174] : memref<8x32xf32, #tpu.memory_space<vmem>>, vector<8x32xf32>
    %c0_175 = arith.constant 0 : index
    %c0_176 = arith.constant 0 : index
    %320 = vector.load %arg17[%c0_175, %c0_176] : memref<8x32xf32, #tpu.memory_space<vmem>>, vector<8x32xf32>
    %cst_177 = arith.constant dense<0.000000e+00> : vector<8x128xf32>
    %321 = tpu.matmul %319, %21, %cst_177 {dimension_numbers = #tpu.dot_dimension_numbers<[1], [0], [0], [1], [0, 0, 1, 1], [], []>} : vector<8x32xf32>, vector<32x128xf32>, vector<8x128xf32> -> vector<8x128xf32>
    %322 = arith.addf %318, %321 : vector<8x128xf32>
    %323 = vector.extract_strided_slice %322 {offsets = [0, 0], sizes = [8, 32], strides = [1, 1]} : vector<8x128xf32> to vector<8x32xf32>
    %cst_178 = arith.constant 5.000000e-01 : f32
    %324 = vector.broadcast %cst_178 : f32 to vector<8x32xf32>
    %325 = arith.mulf %324, %323 : vector<8x32xf32>
    %326 = math.tanh %325 : vector<8x32xf32>
    %cst_179 = arith.constant 5.000000e-01 : f32
    %327 = vector.broadcast %cst_179 : f32 to vector<8x32xf32>
    %328 = arith.mulf %327, %326 : vector<8x32xf32>
    %cst_180 = arith.constant 5.000000e-01 : f32
    %329 = vector.broadcast %cst_180 : f32 to vector<8x32xf32>
    %330 = arith.addf %328, %329 : vector<8x32xf32>
    %331 = vector.extract_strided_slice %322 {offsets = [0, 32], sizes = [8, 32], strides = [1, 1]} : vector<8x128xf32> to vector<8x32xf32>
    %cst_181 = arith.constant 5.000000e-01 : f32
    %332 = vector.broadcast %cst_181 : f32 to vector<8x32xf32>
    %333 = arith.mulf %332, %331 : vector<8x32xf32>
    %334 = math.tanh %333 : vector<8x32xf32>
    %cst_182 = arith.constant 5.000000e-01 : f32
    %335 = vector.broadcast %cst_182 : f32 to vector<8x32xf32>
    %336 = arith.mulf %335, %334 : vector<8x32xf32>
    %cst_183 = arith.constant 5.000000e-01 : f32
    %337 = vector.broadcast %cst_183 : f32 to vector<8x32xf32>
    %338 = arith.addf %336, %337 : vector<8x32xf32>
    %339 = vector.extract_strided_slice %322 {offsets = [0, 64], sizes = [8, 32], strides = [1, 1]} : vector<8x128xf32> to vector<8x32xf32>
    %340 = math.tanh %339 : vector<8x32xf32>
    %341 = vector.extract_strided_slice %322 {offsets = [0, 96], sizes = [8, 32], strides = [1, 1]} : vector<8x128xf32> to vector<8x32xf32>
    %cst_184 = arith.constant 5.000000e-01 : f32
    %342 = vector.broadcast %cst_184 : f32 to vector<8x32xf32>
    %343 = arith.mulf %342, %341 : vector<8x32xf32>
    %344 = math.tanh %343 : vector<8x32xf32>
    %cst_185 = arith.constant 5.000000e-01 : f32
    %345 = vector.broadcast %cst_185 : f32 to vector<8x32xf32>
    %346 = arith.mulf %345, %344 : vector<8x32xf32>
    %cst_186 = arith.constant 5.000000e-01 : f32
    %347 = vector.broadcast %cst_186 : f32 to vector<8x32xf32>
    %348 = arith.addf %346, %347 : vector<8x32xf32>
    %349 = arith.mulf %338, %320 : vector<8x32xf32>
    %350 = arith.mulf %330, %340 : vector<8x32xf32>
    %351 = arith.addf %349, %350 : vector<8x32xf32>
    %352 = math.tanh %351 : vector<8x32xf32>
    %353 = arith.mulf %348, %352 : vector<8x32xf32>
    %354 = vector.broadcast %316 : i32 to vector<8x1xi32>
    %355 = arith.cmpi slt, %354, %19 : vector<8x1xi32>
    %356 = vector.shape_cast %355 : vector<8x1xi1> to vector<8x1xi1>
    %357 = vector.broadcast %356 : vector<8x1xi1> to vector<8x32xi1>
    %c0_187 = arith.constant 0 : index
    %c0_188 = arith.constant 0 : index
    %358 = vector.load %arg16[%c0_187, %c0_188] : memref<8x32xf32, #tpu.memory_space<vmem>>, vector<8x32xf32>
    %359 = arith.select %357, %353, %358 : vector<8x32xi1>, vector<8x32xf32>
    %c0_189 = arith.constant 0 : index
    %c0_190 = arith.constant 0 : index
    %360 = vector.load %arg16[%c0_189, %c0_190] : memref<8x32xf32, #tpu.memory_space<vmem>>, vector<8x32xf32>
    tpu.vector_store %arg16[%c0_189, %c0_190], %359 {strides = array<i32>} : memref<8x32xf32, #tpu.memory_space<vmem>>, vector<8x32xf32>,
    %c0_191 = arith.constant 0 : index
    %c0_192 = arith.constant 0 : index
    %361 = vector.load %arg17[%c0_191, %c0_192] : memref<8x32xf32, #tpu.memory_space<vmem>>, vector<8x32xf32>
    %362 = arith.select %357, %351, %361 : vector<8x32xi1>, vector<8x32xf32>
    %c0_193 = arith.constant 0 : index
    %c0_194 = arith.constant 0 : index
    %363 = vector.load %arg17[%c0_193, %c0_194] : memref<8x32xf32, #tpu.memory_space<vmem>>, vector<8x32xf32>
    tpu.vector_store %arg17[%c0_193, %c0_194], %362 {strides = array<i32>} : memref<8x32xf32, #tpu.memory_space<vmem>>, vector<8x32xf32>,
    %cst_195 = arith.constant 0.000000e+00 : f32
    %364 = vector.broadcast %cst_195 : f32 to vector<8x32xf32>
    %365 = arith.select %357, %353, %364 : vector<8x32xi1>, vector<8x32xf32>
    %c0_196 = arith.constant 0 : index
    %366 = arith.index_cast %313 : i32 to index
    %c0_197 = arith.constant 0 : index
    %367 = vector.load %arg11[%c0_196, %366, %c0_197] : memref<1x64x32xf32, #tpu.memory_space<vmem>>, vector<1x8x32xf32>
    %368 = vector.shape_cast %367 : vector<1x8x32xf32> to vector<8x32xf32>
    %369 = vector.shape_cast %365 : vector<8x32xf32> to vector<1x8x32xf32>
    tpu.vector_store %arg11[%c0_196, %366, %c0_197], %369 {strides = array<i32>} : memref<1x64x32xf32, #tpu.memory_space<vmem>>, vector<1x8x32xf32>,
    %c3_i32 = arith.constant 3 : i32
    %c8_i32_198 = arith.constant 8 : i32
    %370 = arith.muli %c3_i32, %c8_i32_198 : i32
    %371 = tpu.assume_multiple %370, 8 : i32
    %c8_i32_199 = arith.constant 8 : i32
    %372 = arith.muli %arg0, %c8_i32_199 : i32
    %373 = arith.addi %372, %c3_i32 : i32
    %374 = arith.index_cast %371 : i32 to index
    %c0_200 = arith.constant 0 : index
    %375 = vector.load %arg12[%374, %c0_200] : memref<64x128xf32, #tpu.memory_space<vmem>>, vector<8x128xf32>
    %c0_201 = arith.constant 0 : index
    %c0_202 = arith.constant 0 : index
    %376 = vector.load %arg14[%c0_201, %c0_202] : memref<8x32xf32, #tpu.memory_space<vmem>>, vector<8x32xf32>
    %c0_203 = arith.constant 0 : index
    %c0_204 = arith.constant 0 : index
    %377 = vector.load %arg15[%c0_203, %c0_204] : memref<8x32xf32, #tpu.memory_space<vmem>>, vector<8x32xf32>
    %cst_205 = arith.constant dense<0.000000e+00> : vector<8x128xf32>
    %378 = tpu.matmul %376, %20, %cst_205 {dimension_numbers = #tpu.dot_dimension_numbers<[1], [0], [0], [1], [0, 0, 1, 1], [], []>} : vector<8x32xf32>, vector<32x128xf32>, vector<8x128xf32> -> vector<8x128xf32>
    %379 = arith.addf %375, %378 : vector<8x128xf32>
    %380 = vector.extract_strided_slice %379 {offsets = [0, 0], sizes = [8, 32], strides = [1, 1]} : vector<8x128xf32> to vector<8x32xf32>
    %cst_206 = arith.constant 5.000000e-01 : f32
    %381 = vector.broadcast %cst_206 : f32 to vector<8x32xf32>
    %382 = arith.mulf %381, %380 : vector<8x32xf32>
    %383 = math.tanh %382 : vector<8x32xf32>
    %cst_207 = arith.constant 5.000000e-01 : f32
    %384 = vector.broadcast %cst_207 : f32 to vector<8x32xf32>
    %385 = arith.mulf %384, %383 : vector<8x32xf32>
    %cst_208 = arith.constant 5.000000e-01 : f32
    %386 = vector.broadcast %cst_208 : f32 to vector<8x32xf32>
    %387 = arith.addf %385, %386 : vector<8x32xf32>
    %388 = vector.extract_strided_slice %379 {offsets = [0, 32], sizes = [8, 32], strides = [1, 1]} : vector<8x128xf32> to vector<8x32xf32>
    %cst_209 = arith.constant 5.000000e-01 : f32
    %389 = vector.broadcast %cst_209 : f32 to vector<8x32xf32>
    %390 = arith.mulf %389, %388 : vector<8x32xf32>
    %391 = math.tanh %390 : vector<8x32xf32>
    %cst_210 = arith.constant 5.000000e-01 : f32
    %392 = vector.broadcast %cst_210 : f32 to vector<8x32xf32>
    %393 = arith.mulf %392, %391 : vector<8x32xf32>
    %cst_211 = arith.constant 5.000000e-01 : f32
    %394 = vector.broadcast %cst_211 : f32 to vector<8x32xf32>
    %395 = arith.addf %393, %394 : vector<8x32xf32>
    %396 = vector.extract_strided_slice %379 {offsets = [0, 64], sizes = [8, 32], strides = [1, 1]} : vector<8x128xf32> to vector<8x32xf32>
    %397 = math.tanh %396 : vector<8x32xf32>
    %398 = vector.extract_strided_slice %379 {offsets = [0, 96], sizes = [8, 32], strides = [1, 1]} : vector<8x128xf32> to vector<8x32xf32>
    %cst_212 = arith.constant 5.000000e-01 : f32
    %399 = vector.broadcast %cst_212 : f32 to vector<8x32xf32>
    %400 = arith.mulf %399, %398 : vector<8x32xf32>
    %401 = math.tanh %400 : vector<8x32xf32>
    %cst_213 = arith.constant 5.000000e-01 : f32
    %402 = vector.broadcast %cst_213 : f32 to vector<8x32xf32>
    %403 = arith.mulf %402, %401 : vector<8x32xf32>
    %cst_214 = arith.constant 5.000000e-01 : f32
    %404 = vector.broadcast %cst_214 : f32 to vector<8x32xf32>
    %405 = arith.addf %403, %404 : vector<8x32xf32>
    %406 = arith.mulf %395, %377 : vector<8x32xf32>
    %407 = arith.mulf %387, %397 : vector<8x32xf32>
    %408 = arith.addf %406, %407 : vector<8x32xf32>
    %409 = math.tanh %408 : vector<8x32xf32>
    %410 = arith.mulf %405, %409 : vector<8x32xf32>
    %411 = vector.broadcast %373 : i32 to vector<8x1xi32>
    %412 = arith.cmpi slt, %411, %19 : vector<8x1xi32>
    %413 = vector.shape_cast %412 : vector<8x1xi1> to vector<8x1xi1>
    %414 = vector.broadcast %413 : vector<8x1xi1> to vector<8x32xi1>
    %c0_215 = arith.constant 0 : index
    %c0_216 = arith.constant 0 : index
    %415 = vector.load %arg14[%c0_215, %c0_216] : memref<8x32xf32, #tpu.memory_space<vmem>>, vector<8x32xf32>
    %416 = arith.select %414, %410, %415 : vector<8x32xi1>, vector<8x32xf32>
    %c0_217 = arith.constant 0 : index
    %c0_218 = arith.constant 0 : index
    %417 = vector.load %arg14[%c0_217, %c0_218] : memref<8x32xf32, #tpu.memory_space<vmem>>, vector<8x32xf32>
    tpu.vector_store %arg14[%c0_217, %c0_218], %416 {strides = array<i32>} : memref<8x32xf32, #tpu.memory_space<vmem>>, vector<8x32xf32>,
    %c0_219 = arith.constant 0 : index
    %c0_220 = arith.constant 0 : index
    %418 = vector.load %arg15[%c0_219, %c0_220] : memref<8x32xf32, #tpu.memory_space<vmem>>, vector<8x32xf32>
    %419 = arith.select %414, %408, %418 : vector<8x32xi1>, vector<8x32xf32>
    %c0_221 = arith.constant 0 : index
    %c0_222 = arith.constant 0 : index
    %420 = vector.load %arg15[%c0_221, %c0_222] : memref<8x32xf32, #tpu.memory_space<vmem>>, vector<8x32xf32>
    tpu.vector_store %arg15[%c0_221, %c0_222], %419 {strides = array<i32>} : memref<8x32xf32, #tpu.memory_space<vmem>>, vector<8x32xf32>,
    %cst_223 = arith.constant 0.000000e+00 : f32
    %421 = vector.broadcast %cst_223 : f32 to vector<8x32xf32>
    %422 = arith.select %414, %410, %421 : vector<8x32xi1>, vector<8x32xf32>
    %c0_224 = arith.constant 0 : index
    %423 = arith.index_cast %371 : i32 to index
    %c0_225 = arith.constant 0 : index
    %424 = vector.load %arg10[%c0_224, %423, %c0_225] : memref<1x64x32xf32, #tpu.memory_space<vmem>>, vector<1x8x32xf32>
    %425 = vector.shape_cast %424 : vector<1x8x32xf32> to vector<8x32xf32>
    %426 = vector.shape_cast %422 : vector<8x32xf32> to vector<1x8x32xf32>
    tpu.vector_store %arg10[%c0_224, %423, %c0_225], %426 {strides = array<i32>} : memref<1x64x32xf32, #tpu.memory_space<vmem>>, vector<1x8x32xf32>,
    %c7_i32_226 = arith.constant 7 : i32
    %427 = arith.subi %c7_i32_226, %c3_i32 : i32
    %c8_i32_227 = arith.constant 8 : i32
    %428 = arith.muli %427, %c8_i32_227 : i32
    %429 = tpu.assume_multiple %428, 8 : i32
    %c0_i32_228 = arith.constant 0 : i32
    %430 = arith.subi %c0_i32_228, %arg0 : i32
    %c8_i32_229 = arith.constant 8 : i32
    %431 = arith.muli %430, %c8_i32_229 : i32
    %432 = arith.addi %431, %427 : i32
    %433 = arith.index_cast %429 : i32 to index
    %c0_230 = arith.constant 0 : index
    %434 = vector.load %arg13[%433, %c0_230] : memref<64x128xf32, #tpu.memory_space<vmem>>, vector<8x128xf32>
    %c0_231 = arith.constant 0 : index
    %c0_232 = arith.constant 0 : index
    %435 = vector.load %arg16[%c0_231, %c0_232] : memref<8x32xf32, #tpu.memory_space<vmem>>, vector<8x32xf32>
    %c0_233 = arith.constant 0 : index
    %c0_234 = arith.constant 0 : index
    %436 = vector.load %arg17[%c0_233, %c0_234] : memref<8x32xf32, #tpu.memory_space<vmem>>, vector<8x32xf32>
    %cst_235 = arith.constant dense<0.000000e+00> : vector<8x128xf32>
    %437 = tpu.matmul %435, %21, %cst_235 {dimension_numbers = #tpu.dot_dimension_numbers<[1], [0], [0], [1], [0, 0, 1, 1], [], []>} : vector<8x32xf32>, vector<32x128xf32>, vector<8x128xf32> -> vector<8x128xf32>
    %438 = arith.addf %434, %437 : vector<8x128xf32>
    %439 = vector.extract_strided_slice %438 {offsets = [0, 0], sizes = [8, 32], strides = [1, 1]} : vector<8x128xf32> to vector<8x32xf32>
    %cst_236 = arith.constant 5.000000e-01 : f32
    %440 = vector.broadcast %cst_236 : f32 to vector<8x32xf32>
    %441 = arith.mulf %440, %439 : vector<8x32xf32>
    %442 = math.tanh %441 : vector<8x32xf32>
    %cst_237 = arith.constant 5.000000e-01 : f32
    %443 = vector.broadcast %cst_237 : f32 to vector<8x32xf32>
    %444 = arith.mulf %443, %442 : vector<8x32xf32>
    %cst_238 = arith.constant 5.000000e-01 : f32
    %445 = vector.broadcast %cst_238 : f32 to vector<8x32xf32>
    %446 = arith.addf %444, %445 : vector<8x32xf32>
    %447 = vector.extract_strided_slice %438 {offsets = [0, 32], sizes = [8, 32], strides = [1, 1]} : vector<8x128xf32> to vector<8x32xf32>
    %cst_239 = arith.constant 5.000000e-01 : f32
    %448 = vector.broadcast %cst_239 : f32 to vector<8x32xf32>
    %449 = arith.mulf %448, %447 : vector<8x32xf32>
    %450 = math.tanh %449 : vector<8x32xf32>
    %cst_240 = arith.constant 5.000000e-01 : f32
    %451 = vector.broadcast %cst_240 : f32 to vector<8x32xf32>
    %452 = arith.mulf %451, %450 : vector<8x32xf32>
    %cst_241 = arith.constant 5.000000e-01 : f32
    %453 = vector.broadcast %cst_241 : f32 to vector<8x32xf32>
    %454 = arith.addf %452, %453 : vector<8x32xf32>
    %455 = vector.extract_strided_slice %438 {offsets = [0, 64], sizes = [8, 32], strides = [1, 1]} : vector<8x128xf32> to vector<8x32xf32>
    %456 = math.tanh %455 : vector<8x32xf32>
    %457 = vector.extract_strided_slice %438 {offsets = [0, 96], sizes = [8, 32], strides = [1, 1]} : vector<8x128xf32> to vector<8x32xf32>
    %cst_242 = arith.constant 5.000000e-01 : f32
    %458 = vector.broadcast %cst_242 : f32 to vector<8x32xf32>
    %459 = arith.mulf %458, %457 : vector<8x32xf32>
    %460 = math.tanh %459 : vector<8x32xf32>
    %cst_243 = arith.constant 5.000000e-01 : f32
    %461 = vector.broadcast %cst_243 : f32 to vector<8x32xf32>
    %462 = arith.mulf %461, %460 : vector<8x32xf32>
    %cst_244 = arith.constant 5.000000e-01 : f32
    %463 = vector.broadcast %cst_244 : f32 to vector<8x32xf32>
    %464 = arith.addf %462, %463 : vector<8x32xf32>
    %465 = arith.mulf %454, %436 : vector<8x32xf32>
    %466 = arith.mulf %446, %456 : vector<8x32xf32>
    %467 = arith.addf %465, %466 : vector<8x32xf32>
    %468 = math.tanh %467 : vector<8x32xf32>
    %469 = arith.mulf %464, %468 : vector<8x32xf32>
    %470 = vector.broadcast %432 : i32 to vector<8x1xi32>
    %471 = arith.cmpi slt, %470, %19 : vector<8x1xi32>
    %472 = vector.shape_cast %471 : vector<8x1xi1> to vector<8x1xi1>
    %473 = vector.broadcast %472 : vector<8x1xi1> to vector<8x32xi1>
    %c0_245 = arith.constant 0 : index
    %c0_246 = arith.constant 0 : index
    %474 = vector.load %arg16[%c0_245, %c0_246] : memref<8x32xf32, #tpu.memory_space<vmem>>, vector<8x32xf32>
    %475 = arith.select %473, %469, %474 : vector<8x32xi1>, vector<8x32xf32>
    %c0_247 = arith.constant 0 : index
    %c0_248 = arith.constant 0 : index
    %476 = vector.load %arg16[%c0_247, %c0_248] : memref<8x32xf32, #tpu.memory_space<vmem>>, vector<8x32xf32>
    tpu.vector_store %arg16[%c0_247, %c0_248], %475 {strides = array<i32>} : memref<8x32xf32, #tpu.memory_space<vmem>>, vector<8x32xf32>,
    %c0_249 = arith.constant 0 : index
    %c0_250 = arith.constant 0 : index
    %477 = vector.load %arg17[%c0_249, %c0_250] : memref<8x32xf32, #tpu.memory_space<vmem>>, vector<8x32xf32>
    %478 = arith.select %473, %467, %477 : vector<8x32xi1>, vector<8x32xf32>
    %c0_251 = arith.constant 0 : index
    %c0_252 = arith.constant 0 : index
    %479 = vector.load %arg17[%c0_251, %c0_252] : memref<8x32xf32, #tpu.memory_space<vmem>>, vector<8x32xf32>
    tpu.vector_store %arg17[%c0_251, %c0_252], %478 {strides = array<i32>} : memref<8x32xf32, #tpu.memory_space<vmem>>, vector<8x32xf32>,
    %cst_253 = arith.constant 0.000000e+00 : f32
    %480 = vector.broadcast %cst_253 : f32 to vector<8x32xf32>
    %481 = arith.select %473, %469, %480 : vector<8x32xi1>, vector<8x32xf32>
    %c0_254 = arith.constant 0 : index
    %482 = arith.index_cast %429 : i32 to index
    %c0_255 = arith.constant 0 : index
    %483 = vector.load %arg11[%c0_254, %482, %c0_255] : memref<1x64x32xf32, #tpu.memory_space<vmem>>, vector<1x8x32xf32>
    %484 = vector.shape_cast %483 : vector<1x8x32xf32> to vector<8x32xf32>
    %485 = vector.shape_cast %481 : vector<8x32xf32> to vector<1x8x32xf32>
    tpu.vector_store %arg11[%c0_254, %482, %c0_255], %485 {strides = array<i32>} : memref<1x64x32xf32, #tpu.memory_space<vmem>>, vector<1x8x32xf32>,
    %c4_i32 = arith.constant 4 : i32
    %c8_i32_256 = arith.constant 8 : i32
    %486 = arith.muli %c4_i32, %c8_i32_256 : i32
    %487 = tpu.assume_multiple %486, 8 : i32
    %c8_i32_257 = arith.constant 8 : i32
    %488 = arith.muli %arg0, %c8_i32_257 : i32
    %489 = arith.addi %488, %c4_i32 : i32
    %490 = arith.index_cast %487 : i32 to index
    %c0_258 = arith.constant 0 : index
    %491 = vector.load %arg12[%490, %c0_258] : memref<64x128xf32, #tpu.memory_space<vmem>>, vector<8x128xf32>
    %c0_259 = arith.constant 0 : index
    %c0_260 = arith.constant 0 : index
    %492 = vector.load %arg14[%c0_259, %c0_260] : memref<8x32xf32, #tpu.memory_space<vmem>>, vector<8x32xf32>
    %c0_261 = arith.constant 0 : index
    %c0_262 = arith.constant 0 : index
    %493 = vector.load %arg15[%c0_261, %c0_262] : memref<8x32xf32, #tpu.memory_space<vmem>>, vector<8x32xf32>
    %cst_263 = arith.constant dense<0.000000e+00> : vector<8x128xf32>
    %494 = tpu.matmul %492, %20, %cst_263 {dimension_numbers = #tpu.dot_dimension_numbers<[1], [0], [0], [1], [0, 0, 1, 1], [], []>} : vector<8x32xf32>, vector<32x128xf32>, vector<8x128xf32> -> vector<8x128xf32>
    %495 = arith.addf %491, %494 : vector<8x128xf32>
    %496 = vector.extract_strided_slice %495 {offsets = [0, 0], sizes = [8, 32], strides = [1, 1]} : vector<8x128xf32> to vector<8x32xf32>
    %cst_264 = arith.constant 5.000000e-01 : f32
    %497 = vector.broadcast %cst_264 : f32 to vector<8x32xf32>
    %498 = arith.mulf %497, %496 : vector<8x32xf32>
    %499 = math.tanh %498 : vector<8x32xf32>
    %cst_265 = arith.constant 5.000000e-01 : f32
    %500 = vector.broadcast %cst_265 : f32 to vector<8x32xf32>
    %501 = arith.mulf %500, %499 : vector<8x32xf32>
    %cst_266 = arith.constant 5.000000e-01 : f32
    %502 = vector.broadcast %cst_266 : f32 to vector<8x32xf32>
    %503 = arith.addf %501, %502 : vector<8x32xf32>
    %504 = vector.extract_strided_slice %495 {offsets = [0, 32], sizes = [8, 32], strides = [1, 1]} : vector<8x128xf32> to vector<8x32xf32>
    %cst_267 = arith.constant 5.000000e-01 : f32
    %505 = vector.broadcast %cst_267 : f32 to vector<8x32xf32>
    %506 = arith.mulf %505, %504 : vector<8x32xf32>
    %507 = math.tanh %506 : vector<8x32xf32>
    %cst_268 = arith.constant 5.000000e-01 : f32
    %508 = vector.broadcast %cst_268 : f32 to vector<8x32xf32>
    %509 = arith.mulf %508, %507 : vector<8x32xf32>
    %cst_269 = arith.constant 5.000000e-01 : f32
    %510 = vector.broadcast %cst_269 : f32 to vector<8x32xf32>
    %511 = arith.addf %509, %510 : vector<8x32xf32>
    %512 = vector.extract_strided_slice %495 {offsets = [0, 64], sizes = [8, 32], strides = [1, 1]} : vector<8x128xf32> to vector<8x32xf32>
    %513 = math.tanh %512 : vector<8x32xf32>
    %514 = vector.extract_strided_slice %495 {offsets = [0, 96], sizes = [8, 32], strides = [1, 1]} : vector<8x128xf32> to vector<8x32xf32>
    %cst_270 = arith.constant 5.000000e-01 : f32
    %515 = vector.broadcast %cst_270 : f32 to vector<8x32xf32>
    %516 = arith.mulf %515, %514 : vector<8x32xf32>
    %517 = math.tanh %516 : vector<8x32xf32>
    %cst_271 = arith.constant 5.000000e-01 : f32
    %518 = vector.broadcast %cst_271 : f32 to vector<8x32xf32>
    %519 = arith.mulf %518, %517 : vector<8x32xf32>
    %cst_272 = arith.constant 5.000000e-01 : f32
    %520 = vector.broadcast %cst_272 : f32 to vector<8x32xf32>
    %521 = arith.addf %519, %520 : vector<8x32xf32>
    %522 = arith.mulf %511, %493 : vector<8x32xf32>
    %523 = arith.mulf %503, %513 : vector<8x32xf32>
    %524 = arith.addf %522, %523 : vector<8x32xf32>
    %525 = math.tanh %524 : vector<8x32xf32>
    %526 = arith.mulf %521, %525 : vector<8x32xf32>
    %527 = vector.broadcast %489 : i32 to vector<8x1xi32>
    %528 = arith.cmpi slt, %527, %19 : vector<8x1xi32>
    %529 = vector.shape_cast %528 : vector<8x1xi1> to vector<8x1xi1>
    %530 = vector.broadcast %529 : vector<8x1xi1> to vector<8x32xi1>
    %c0_273 = arith.constant 0 : index
    %c0_274 = arith.constant 0 : index
    %531 = vector.load %arg14[%c0_273, %c0_274] : memref<8x32xf32, #tpu.memory_space<vmem>>, vector<8x32xf32>
    %532 = arith.select %530, %526, %531 : vector<8x32xi1>, vector<8x32xf32>
    %c0_275 = arith.constant 0 : index
    %c0_276 = arith.constant 0 : index
    %533 = vector.load %arg14[%c0_275, %c0_276] : memref<8x32xf32, #tpu.memory_space<vmem>>, vector<8x32xf32>
    tpu.vector_store %arg14[%c0_275, %c0_276], %532 {strides = array<i32>} : memref<8x32xf32, #tpu.memory_space<vmem>>, vector<8x32xf32>,
    %c0_277 = arith.constant 0 : index
    %c0_278 = arith.constant 0 : index
    %534 = vector.load %arg15[%c0_277, %c0_278] : memref<8x32xf32, #tpu.memory_space<vmem>>, vector<8x32xf32>
    %535 = arith.select %530, %524, %534 : vector<8x32xi1>, vector<8x32xf32>
    %c0_279 = arith.constant 0 : index
    %c0_280 = arith.constant 0 : index
    %536 = vector.load %arg15[%c0_279, %c0_280] : memref<8x32xf32, #tpu.memory_space<vmem>>, vector<8x32xf32>
    tpu.vector_store %arg15[%c0_279, %c0_280], %535 {strides = array<i32>} : memref<8x32xf32, #tpu.memory_space<vmem>>, vector<8x32xf32>,
    %cst_281 = arith.constant 0.000000e+00 : f32
    %537 = vector.broadcast %cst_281 : f32 to vector<8x32xf32>
    %538 = arith.select %530, %526, %537 : vector<8x32xi1>, vector<8x32xf32>
    %c0_282 = arith.constant 0 : index
    %539 = arith.index_cast %487 : i32 to index
    %c0_283 = arith.constant 0 : index
    %540 = vector.load %arg10[%c0_282, %539, %c0_283] : memref<1x64x32xf32, #tpu.memory_space<vmem>>, vector<1x8x32xf32>
    %541 = vector.shape_cast %540 : vector<1x8x32xf32> to vector<8x32xf32>
    %542 = vector.shape_cast %538 : vector<8x32xf32> to vector<1x8x32xf32>
    tpu.vector_store %arg10[%c0_282, %539, %c0_283], %542 {strides = array<i32>} : memref<1x64x32xf32, #tpu.memory_space<vmem>>, vector<1x8x32xf32>,
    %c7_i32_284 = arith.constant 7 : i32
    %543 = arith.subi %c7_i32_284, %c4_i32 : i32
    %c8_i32_285 = arith.constant 8 : i32
    %544 = arith.muli %543, %c8_i32_285 : i32
    %545 = tpu.assume_multiple %544, 8 : i32
    %c0_i32_286 = arith.constant 0 : i32
    %546 = arith.subi %c0_i32_286, %arg0 : i32
    %c8_i32_287 = arith.constant 8 : i32
    %547 = arith.muli %546, %c8_i32_287 : i32
    %548 = arith.addi %547, %543 : i32
    %549 = arith.index_cast %545 : i32 to index
    %c0_288 = arith.constant 0 : index
    %550 = vector.load %arg13[%549, %c0_288] : memref<64x128xf32, #tpu.memory_space<vmem>>, vector<8x128xf32>
    %c0_289 = arith.constant 0 : index
    %c0_290 = arith.constant 0 : index
    %551 = vector.load %arg16[%c0_289, %c0_290] : memref<8x32xf32, #tpu.memory_space<vmem>>, vector<8x32xf32>
    %c0_291 = arith.constant 0 : index
    %c0_292 = arith.constant 0 : index
    %552 = vector.load %arg17[%c0_291, %c0_292] : memref<8x32xf32, #tpu.memory_space<vmem>>, vector<8x32xf32>
    %cst_293 = arith.constant dense<0.000000e+00> : vector<8x128xf32>
    %553 = tpu.matmul %551, %21, %cst_293 {dimension_numbers = #tpu.dot_dimension_numbers<[1], [0], [0], [1], [0, 0, 1, 1], [], []>} : vector<8x32xf32>, vector<32x128xf32>, vector<8x128xf32> -> vector<8x128xf32>
    %554 = arith.addf %550, %553 : vector<8x128xf32>
    %555 = vector.extract_strided_slice %554 {offsets = [0, 0], sizes = [8, 32], strides = [1, 1]} : vector<8x128xf32> to vector<8x32xf32>
    %cst_294 = arith.constant 5.000000e-01 : f32
    %556 = vector.broadcast %cst_294 : f32 to vector<8x32xf32>
    %557 = arith.mulf %556, %555 : vector<8x32xf32>
    %558 = math.tanh %557 : vector<8x32xf32>
    %cst_295 = arith.constant 5.000000e-01 : f32
    %559 = vector.broadcast %cst_295 : f32 to vector<8x32xf32>
    %560 = arith.mulf %559, %558 : vector<8x32xf32>
    %cst_296 = arith.constant 5.000000e-01 : f32
    %561 = vector.broadcast %cst_296 : f32 to vector<8x32xf32>
    %562 = arith.addf %560, %561 : vector<8x32xf32>
    %563 = vector.extract_strided_slice %554 {offsets = [0, 32], sizes = [8, 32], strides = [1, 1]} : vector<8x128xf32> to vector<8x32xf32>
    %cst_297 = arith.constant 5.000000e-01 : f32
    %564 = vector.broadcast %cst_297 : f32 to vector<8x32xf32>
    %565 = arith.mulf %564, %563 : vector<8x32xf32>
    %566 = math.tanh %565 : vector<8x32xf32>
    %cst_298 = arith.constant 5.000000e-01 : f32
    %567 = vector.broadcast %cst_298 : f32 to vector<8x32xf32>
    %568 = arith.mulf %567, %566 : vector<8x32xf32>
    %cst_299 = arith.constant 5.000000e-01 : f32
    %569 = vector.broadcast %cst_299 : f32 to vector<8x32xf32>
    %570 = arith.addf %568, %569 : vector<8x32xf32>
    %571 = vector.extract_strided_slice %554 {offsets = [0, 64], sizes = [8, 32], strides = [1, 1]} : vector<8x128xf32> to vector<8x32xf32>
    %572 = math.tanh %571 : vector<8x32xf32>
    %573 = vector.extract_strided_slice %554 {offsets = [0, 96], sizes = [8, 32], strides = [1, 1]} : vector<8x128xf32> to vector<8x32xf32>
    %cst_300 = arith.constant 5.000000e-01 : f32
    %574 = vector.broadcast %cst_300 : f32 to vector<8x32xf32>
    %575 = arith.mulf %574, %573 : vector<8x32xf32>
    %576 = math.tanh %575 : vector<8x32xf32>
    %cst_301 = arith.constant 5.000000e-01 : f32
    %577 = vector.broadcast %cst_301 : f32 to vector<8x32xf32>
    %578 = arith.mulf %577, %576 : vector<8x32xf32>
    %cst_302 = arith.constant 5.000000e-01 : f32
    %579 = vector.broadcast %cst_302 : f32 to vector<8x32xf32>
    %580 = arith.addf %578, %579 : vector<8x32xf32>
    %581 = arith.mulf %570, %552 : vector<8x32xf32>
    %582 = arith.mulf %562, %572 : vector<8x32xf32>
    %583 = arith.addf %581, %582 : vector<8x32xf32>
    %584 = math.tanh %583 : vector<8x32xf32>
    %585 = arith.mulf %580, %584 : vector<8x32xf32>
    %586 = vector.broadcast %548 : i32 to vector<8x1xi32>
    %587 = arith.cmpi slt, %586, %19 : vector<8x1xi32>
    %588 = vector.shape_cast %587 : vector<8x1xi1> to vector<8x1xi1>
    %589 = vector.broadcast %588 : vector<8x1xi1> to vector<8x32xi1>
    %c0_303 = arith.constant 0 : index
    %c0_304 = arith.constant 0 : index
    %590 = vector.load %arg16[%c0_303, %c0_304] : memref<8x32xf32, #tpu.memory_space<vmem>>, vector<8x32xf32>
    %591 = arith.select %589, %585, %590 : vector<8x32xi1>, vector<8x32xf32>
    %c0_305 = arith.constant 0 : index
    %c0_306 = arith.constant 0 : index
    %592 = vector.load %arg16[%c0_305, %c0_306] : memref<8x32xf32, #tpu.memory_space<vmem>>, vector<8x32xf32>
    tpu.vector_store %arg16[%c0_305, %c0_306], %591 {strides = array<i32>} : memref<8x32xf32, #tpu.memory_space<vmem>>, vector<8x32xf32>,
    %c0_307 = arith.constant 0 : index
    %c0_308 = arith.constant 0 : index
    %593 = vector.load %arg17[%c0_307, %c0_308] : memref<8x32xf32, #tpu.memory_space<vmem>>, vector<8x32xf32>
    %594 = arith.select %589, %583, %593 : vector<8x32xi1>, vector<8x32xf32>
    %c0_309 = arith.constant 0 : index
    %c0_310 = arith.constant 0 : index
    %595 = vector.load %arg17[%c0_309, %c0_310] : memref<8x32xf32, #tpu.memory_space<vmem>>, vector<8x32xf32>
    tpu.vector_store %arg17[%c0_309, %c0_310], %594 {strides = array<i32>} : memref<8x32xf32, #tpu.memory_space<vmem>>, vector<8x32xf32>,
    %cst_311 = arith.constant 0.000000e+00 : f32
    %596 = vector.broadcast %cst_311 : f32 to vector<8x32xf32>
    %597 = arith.select %589, %585, %596 : vector<8x32xi1>, vector<8x32xf32>
    %c0_312 = arith.constant 0 : index
    %598 = arith.index_cast %545 : i32 to index
    %c0_313 = arith.constant 0 : index
    %599 = vector.load %arg11[%c0_312, %598, %c0_313] : memref<1x64x32xf32, #tpu.memory_space<vmem>>, vector<1x8x32xf32>
    %600 = vector.shape_cast %599 : vector<1x8x32xf32> to vector<8x32xf32>
    %601 = vector.shape_cast %597 : vector<8x32xf32> to vector<1x8x32xf32>
    tpu.vector_store %arg11[%c0_312, %598, %c0_313], %601 {strides = array<i32>} : memref<1x64x32xf32, #tpu.memory_space<vmem>>, vector<1x8x32xf32>,
    %c5_i32 = arith.constant 5 : i32
    %c8_i32_314 = arith.constant 8 : i32
    %602 = arith.muli %c5_i32, %c8_i32_314 : i32
    %603 = tpu.assume_multiple %602, 8 : i32
    %c8_i32_315 = arith.constant 8 : i32
    %604 = arith.muli %arg0, %c8_i32_315 : i32
    %605 = arith.addi %604, %c5_i32 : i32
    %606 = arith.index_cast %603 : i32 to index
    %c0_316 = arith.constant 0 : index
    %607 = vector.load %arg12[%606, %c0_316] : memref<64x128xf32, #tpu.memory_space<vmem>>, vector<8x128xf32>
    %c0_317 = arith.constant 0 : index
    %c0_318 = arith.constant 0 : index
    %608 = vector.load %arg14[%c0_317, %c0_318] : memref<8x32xf32, #tpu.memory_space<vmem>>, vector<8x32xf32>
    %c0_319 = arith.constant 0 : index
    %c0_320 = arith.constant 0 : index
    %609 = vector.load %arg15[%c0_319, %c0_320] : memref<8x32xf32, #tpu.memory_space<vmem>>, vector<8x32xf32>
    %cst_321 = arith.constant dense<0.000000e+00> : vector<8x128xf32>
    %610 = tpu.matmul %608, %20, %cst_321 {dimension_numbers = #tpu.dot_dimension_numbers<[1], [0], [0], [1], [0, 0, 1, 1], [], []>} : vector<8x32xf32>, vector<32x128xf32>, vector<8x128xf32> -> vector<8x128xf32>
    %611 = arith.addf %607, %610 : vector<8x128xf32>
    %612 = vector.extract_strided_slice %611 {offsets = [0, 0], sizes = [8, 32], strides = [1, 1]} : vector<8x128xf32> to vector<8x32xf32>
    %cst_322 = arith.constant 5.000000e-01 : f32
    %613 = vector.broadcast %cst_322 : f32 to vector<8x32xf32>
    %614 = arith.mulf %613, %612 : vector<8x32xf32>
    %615 = math.tanh %614 : vector<8x32xf32>
    %cst_323 = arith.constant 5.000000e-01 : f32
    %616 = vector.broadcast %cst_323 : f32 to vector<8x32xf32>
    %617 = arith.mulf %616, %615 : vector<8x32xf32>
    %cst_324 = arith.constant 5.000000e-01 : f32
    %618 = vector.broadcast %cst_324 : f32 to vector<8x32xf32>
    %619 = arith.addf %617, %618 : vector<8x32xf32>
    %620 = vector.extract_strided_slice %611 {offsets = [0, 32], sizes = [8, 32], strides = [1, 1]} : vector<8x128xf32> to vector<8x32xf32>
    %cst_325 = arith.constant 5.000000e-01 : f32
    %621 = vector.broadcast %cst_325 : f32 to vector<8x32xf32>
    %622 = arith.mulf %621, %620 : vector<8x32xf32>
    %623 = math.tanh %622 : vector<8x32xf32>
    %cst_326 = arith.constant 5.000000e-01 : f32
    %624 = vector.broadcast %cst_326 : f32 to vector<8x32xf32>
    %625 = arith.mulf %624, %623 : vector<8x32xf32>
    %cst_327 = arith.constant 5.000000e-01 : f32
    %626 = vector.broadcast %cst_327 : f32 to vector<8x32xf32>
    %627 = arith.addf %625, %626 : vector<8x32xf32>
    %628 = vector.extract_strided_slice %611 {offsets = [0, 64], sizes = [8, 32], strides = [1, 1]} : vector<8x128xf32> to vector<8x32xf32>
    %629 = math.tanh %628 : vector<8x32xf32>
    %630 = vector.extract_strided_slice %611 {offsets = [0, 96], sizes = [8, 32], strides = [1, 1]} : vector<8x128xf32> to vector<8x32xf32>
    %cst_328 = arith.constant 5.000000e-01 : f32
    %631 = vector.broadcast %cst_328 : f32 to vector<8x32xf32>
    %632 = arith.mulf %631, %630 : vector<8x32xf32>
    %633 = math.tanh %632 : vector<8x32xf32>
    %cst_329 = arith.constant 5.000000e-01 : f32
    %634 = vector.broadcast %cst_329 : f32 to vector<8x32xf32>
    %635 = arith.mulf %634, %633 : vector<8x32xf32>
    %cst_330 = arith.constant 5.000000e-01 : f32
    %636 = vector.broadcast %cst_330 : f32 to vector<8x32xf32>
    %637 = arith.addf %635, %636 : vector<8x32xf32>
    %638 = arith.mulf %627, %609 : vector<8x32xf32>
    %639 = arith.mulf %619, %629 : vector<8x32xf32>
    %640 = arith.addf %638, %639 : vector<8x32xf32>
    %641 = math.tanh %640 : vector<8x32xf32>
    %642 = arith.mulf %637, %641 : vector<8x32xf32>
    %643 = vector.broadcast %605 : i32 to vector<8x1xi32>
    %644 = arith.cmpi slt, %643, %19 : vector<8x1xi32>
    %645 = vector.shape_cast %644 : vector<8x1xi1> to vector<8x1xi1>
    %646 = vector.broadcast %645 : vector<8x1xi1> to vector<8x32xi1>
    %c0_331 = arith.constant 0 : index
    %c0_332 = arith.constant 0 : index
    %647 = vector.load %arg14[%c0_331, %c0_332] : memref<8x32xf32, #tpu.memory_space<vmem>>, vector<8x32xf32>
    %648 = arith.select %646, %642, %647 : vector<8x32xi1>, vector<8x32xf32>
    %c0_333 = arith.constant 0 : index
    %c0_334 = arith.constant 0 : index
    %649 = vector.load %arg14[%c0_333, %c0_334] : memref<8x32xf32, #tpu.memory_space<vmem>>, vector<8x32xf32>
    tpu.vector_store %arg14[%c0_333, %c0_334], %648 {strides = array<i32>} : memref<8x32xf32, #tpu.memory_space<vmem>>, vector<8x32xf32>,
    %c0_335 = arith.constant 0 : index
    %c0_336 = arith.constant 0 : index
    %650 = vector.load %arg15[%c0_335, %c0_336] : memref<8x32xf32, #tpu.memory_space<vmem>>, vector<8x32xf32>
    %651 = arith.select %646, %640, %650 : vector<8x32xi1>, vector<8x32xf32>
    %c0_337 = arith.constant 0 : index
    %c0_338 = arith.constant 0 : index
    %652 = vector.load %arg15[%c0_337, %c0_338] : memref<8x32xf32, #tpu.memory_space<vmem>>, vector<8x32xf32>
    tpu.vector_store %arg15[%c0_337, %c0_338], %651 {strides = array<i32>} : memref<8x32xf32, #tpu.memory_space<vmem>>, vector<8x32xf32>,
    %cst_339 = arith.constant 0.000000e+00 : f32
    %653 = vector.broadcast %cst_339 : f32 to vector<8x32xf32>
    %654 = arith.select %646, %642, %653 : vector<8x32xi1>, vector<8x32xf32>
    %c0_340 = arith.constant 0 : index
    %655 = arith.index_cast %603 : i32 to index
    %c0_341 = arith.constant 0 : index
    %656 = vector.load %arg10[%c0_340, %655, %c0_341] : memref<1x64x32xf32, #tpu.memory_space<vmem>>, vector<1x8x32xf32>
    %657 = vector.shape_cast %656 : vector<1x8x32xf32> to vector<8x32xf32>
    %658 = vector.shape_cast %654 : vector<8x32xf32> to vector<1x8x32xf32>
    tpu.vector_store %arg10[%c0_340, %655, %c0_341], %658 {strides = array<i32>} : memref<1x64x32xf32, #tpu.memory_space<vmem>>, vector<1x8x32xf32>,
    %c7_i32_342 = arith.constant 7 : i32
    %659 = arith.subi %c7_i32_342, %c5_i32 : i32
    %c8_i32_343 = arith.constant 8 : i32
    %660 = arith.muli %659, %c8_i32_343 : i32
    %661 = tpu.assume_multiple %660, 8 : i32
    %c0_i32_344 = arith.constant 0 : i32
    %662 = arith.subi %c0_i32_344, %arg0 : i32
    %c8_i32_345 = arith.constant 8 : i32
    %663 = arith.muli %662, %c8_i32_345 : i32
    %664 = arith.addi %663, %659 : i32
    %665 = arith.index_cast %661 : i32 to index
    %c0_346 = arith.constant 0 : index
    %666 = vector.load %arg13[%665, %c0_346] : memref<64x128xf32, #tpu.memory_space<vmem>>, vector<8x128xf32>
    %c0_347 = arith.constant 0 : index
    %c0_348 = arith.constant 0 : index
    %667 = vector.load %arg16[%c0_347, %c0_348] : memref<8x32xf32, #tpu.memory_space<vmem>>, vector<8x32xf32>
    %c0_349 = arith.constant 0 : index
    %c0_350 = arith.constant 0 : index
    %668 = vector.load %arg17[%c0_349, %c0_350] : memref<8x32xf32, #tpu.memory_space<vmem>>, vector<8x32xf32>
    %cst_351 = arith.constant dense<0.000000e+00> : vector<8x128xf32>
    %669 = tpu.matmul %667, %21, %cst_351 {dimension_numbers = #tpu.dot_dimension_numbers<[1], [0], [0], [1], [0, 0, 1, 1], [], []>} : vector<8x32xf32>, vector<32x128xf32>, vector<8x128xf32> -> vector<8x128xf32>
    %670 = arith.addf %666, %669 : vector<8x128xf32>
    %671 = vector.extract_strided_slice %670 {offsets = [0, 0], sizes = [8, 32], strides = [1, 1]} : vector<8x128xf32> to vector<8x32xf32>
    %cst_352 = arith.constant 5.000000e-01 : f32
    %672 = vector.broadcast %cst_352 : f32 to vector<8x32xf32>
    %673 = arith.mulf %672, %671 : vector<8x32xf32>
    %674 = math.tanh %673 : vector<8x32xf32>
    %cst_353 = arith.constant 5.000000e-01 : f32
    %675 = vector.broadcast %cst_353 : f32 to vector<8x32xf32>
    %676 = arith.mulf %675, %674 : vector<8x32xf32>
    %cst_354 = arith.constant 5.000000e-01 : f32
    %677 = vector.broadcast %cst_354 : f32 to vector<8x32xf32>
    %678 = arith.addf %676, %677 : vector<8x32xf32>
    %679 = vector.extract_strided_slice %670 {offsets = [0, 32], sizes = [8, 32], strides = [1, 1]} : vector<8x128xf32> to vector<8x32xf32>
    %cst_355 = arith.constant 5.000000e-01 : f32
    %680 = vector.broadcast %cst_355 : f32 to vector<8x32xf32>
    %681 = arith.mulf %680, %679 : vector<8x32xf32>
    %682 = math.tanh %681 : vector<8x32xf32>
    %cst_356 = arith.constant 5.000000e-01 : f32
    %683 = vector.broadcast %cst_356 : f32 to vector<8x32xf32>
    %684 = arith.mulf %683, %682 : vector<8x32xf32>
    %cst_357 = arith.constant 5.000000e-01 : f32
    %685 = vector.broadcast %cst_357 : f32 to vector<8x32xf32>
    %686 = arith.addf %684, %685 : vector<8x32xf32>
    %687 = vector.extract_strided_slice %670 {offsets = [0, 64], sizes = [8, 32], strides = [1, 1]} : vector<8x128xf32> to vector<8x32xf32>
    %688 = math.tanh %687 : vector<8x32xf32>
    %689 = vector.extract_strided_slice %670 {offsets = [0, 96], sizes = [8, 32], strides = [1, 1]} : vector<8x128xf32> to vector<8x32xf32>
    %cst_358 = arith.constant 5.000000e-01 : f32
    %690 = vector.broadcast %cst_358 : f32 to vector<8x32xf32>
    %691 = arith.mulf %690, %689 : vector<8x32xf32>
    %692 = math.tanh %691 : vector<8x32xf32>
    %cst_359 = arith.constant 5.000000e-01 : f32
    %693 = vector.broadcast %cst_359 : f32 to vector<8x32xf32>
    %694 = arith.mulf %693, %692 : vector<8x32xf32>
    %cst_360 = arith.constant 5.000000e-01 : f32
    %695 = vector.broadcast %cst_360 : f32 to vector<8x32xf32>
    %696 = arith.addf %694, %695 : vector<8x32xf32>
    %697 = arith.mulf %686, %668 : vector<8x32xf32>
    %698 = arith.mulf %678, %688 : vector<8x32xf32>
    %699 = arith.addf %697, %698 : vector<8x32xf32>
    %700 = math.tanh %699 : vector<8x32xf32>
    %701 = arith.mulf %696, %700 : vector<8x32xf32>
    %702 = vector.broadcast %664 : i32 to vector<8x1xi32>
    %703 = arith.cmpi slt, %702, %19 : vector<8x1xi32>
    %704 = vector.shape_cast %703 : vector<8x1xi1> to vector<8x1xi1>
    %705 = vector.broadcast %704 : vector<8x1xi1> to vector<8x32xi1>
    %c0_361 = arith.constant 0 : index
    %c0_362 = arith.constant 0 : index
    %706 = vector.load %arg16[%c0_361, %c0_362] : memref<8x32xf32, #tpu.memory_space<vmem>>, vector<8x32xf32>
    %707 = arith.select %705, %701, %706 : vector<8x32xi1>, vector<8x32xf32>
    %c0_363 = arith.constant 0 : index
    %c0_364 = arith.constant 0 : index
    %708 = vector.load %arg16[%c0_363, %c0_364] : memref<8x32xf32, #tpu.memory_space<vmem>>, vector<8x32xf32>
    tpu.vector_store %arg16[%c0_363, %c0_364], %707 {strides = array<i32>} : memref<8x32xf32, #tpu.memory_space<vmem>>, vector<8x32xf32>,
    %c0_365 = arith.constant 0 : index
    %c0_366 = arith.constant 0 : index
    %709 = vector.load %arg17[%c0_365, %c0_366] : memref<8x32xf32, #tpu.memory_space<vmem>>, vector<8x32xf32>
    %710 = arith.select %705, %699, %709 : vector<8x32xi1>, vector<8x32xf32>
    %c0_367 = arith.constant 0 : index
    %c0_368 = arith.constant 0 : index
    %711 = vector.load %arg17[%c0_367, %c0_368] : memref<8x32xf32, #tpu.memory_space<vmem>>, vector<8x32xf32>
    tpu.vector_store %arg17[%c0_367, %c0_368], %710 {strides = array<i32>} : memref<8x32xf32, #tpu.memory_space<vmem>>, vector<8x32xf32>,
    %cst_369 = arith.constant 0.000000e+00 : f32
    %712 = vector.broadcast %cst_369 : f32 to vector<8x32xf32>
    %713 = arith.select %705, %701, %712 : vector<8x32xi1>, vector<8x32xf32>
    %c0_370 = arith.constant 0 : index
    %714 = arith.index_cast %661 : i32 to index
    %c0_371 = arith.constant 0 : index
    %715 = vector.load %arg11[%c0_370, %714, %c0_371] : memref<1x64x32xf32, #tpu.memory_space<vmem>>, vector<1x8x32xf32>
    %716 = vector.shape_cast %715 : vector<1x8x32xf32> to vector<8x32xf32>
    %717 = vector.shape_cast %713 : vector<8x32xf32> to vector<1x8x32xf32>
    tpu.vector_store %arg11[%c0_370, %714, %c0_371], %717 {strides = array<i32>} : memref<1x64x32xf32, #tpu.memory_space<vmem>>, vector<1x8x32xf32>,
    %c6_i32 = arith.constant 6 : i32
    %c8_i32_372 = arith.constant 8 : i32
    %718 = arith.muli %c6_i32, %c8_i32_372 : i32
    %719 = tpu.assume_multiple %718, 8 : i32
    %c8_i32_373 = arith.constant 8 : i32
    %720 = arith.muli %arg0, %c8_i32_373 : i32
    %721 = arith.addi %720, %c6_i32 : i32
    %722 = arith.index_cast %719 : i32 to index
    %c0_374 = arith.constant 0 : index
    %723 = vector.load %arg12[%722, %c0_374] : memref<64x128xf32, #tpu.memory_space<vmem>>, vector<8x128xf32>
    %c0_375 = arith.constant 0 : index
    %c0_376 = arith.constant 0 : index
    %724 = vector.load %arg14[%c0_375, %c0_376] : memref<8x32xf32, #tpu.memory_space<vmem>>, vector<8x32xf32>
    %c0_377 = arith.constant 0 : index
    %c0_378 = arith.constant 0 : index
    %725 = vector.load %arg15[%c0_377, %c0_378] : memref<8x32xf32, #tpu.memory_space<vmem>>, vector<8x32xf32>
    %cst_379 = arith.constant dense<0.000000e+00> : vector<8x128xf32>
    %726 = tpu.matmul %724, %20, %cst_379 {dimension_numbers = #tpu.dot_dimension_numbers<[1], [0], [0], [1], [0, 0, 1, 1], [], []>} : vector<8x32xf32>, vector<32x128xf32>, vector<8x128xf32> -> vector<8x128xf32>
    %727 = arith.addf %723, %726 : vector<8x128xf32>
    %728 = vector.extract_strided_slice %727 {offsets = [0, 0], sizes = [8, 32], strides = [1, 1]} : vector<8x128xf32> to vector<8x32xf32>
    %cst_380 = arith.constant 5.000000e-01 : f32
    %729 = vector.broadcast %cst_380 : f32 to vector<8x32xf32>
    %730 = arith.mulf %729, %728 : vector<8x32xf32>
    %731 = math.tanh %730 : vector<8x32xf32>
    %cst_381 = arith.constant 5.000000e-01 : f32
    %732 = vector.broadcast %cst_381 : f32 to vector<8x32xf32>
    %733 = arith.mulf %732, %731 : vector<8x32xf32>
    %cst_382 = arith.constant 5.000000e-01 : f32
    %734 = vector.broadcast %cst_382 : f32 to vector<8x32xf32>
    %735 = arith.addf %733, %734 : vector<8x32xf32>
    %736 = vector.extract_strided_slice %727 {offsets = [0, 32], sizes = [8, 32], strides = [1, 1]} : vector<8x128xf32> to vector<8x32xf32>
    %cst_383 = arith.constant 5.000000e-01 : f32
    %737 = vector.broadcast %cst_383 : f32 to vector<8x32xf32>
    %738 = arith.mulf %737, %736 : vector<8x32xf32>
    %739 = math.tanh %738 : vector<8x32xf32>
    %cst_384 = arith.constant 5.000000e-01 : f32
    %740 = vector.broadcast %cst_384 : f32 to vector<8x32xf32>
    %741 = arith.mulf %740, %739 : vector<8x32xf32>
    %cst_385 = arith.constant 5.000000e-01 : f32
    %742 = vector.broadcast %cst_385 : f32 to vector<8x32xf32>
    %743 = arith.addf %741, %742 : vector<8x32xf32>
    %744 = vector.extract_strided_slice %727 {offsets = [0, 64], sizes = [8, 32], strides = [1, 1]} : vector<8x128xf32> to vector<8x32xf32>
    %745 = math.tanh %744 : vector<8x32xf32>
    %746 = vector.extract_strided_slice %727 {offsets = [0, 96], sizes = [8, 32], strides = [1, 1]} : vector<8x128xf32> to vector<8x32xf32>
    %cst_386 = arith.constant 5.000000e-01 : f32
    %747 = vector.broadcast %cst_386 : f32 to vector<8x32xf32>
    %748 = arith.mulf %747, %746 : vector<8x32xf32>
    %749 = math.tanh %748 : vector<8x32xf32>
    %cst_387 = arith.constant 5.000000e-01 : f32
    %750 = vector.broadcast %cst_387 : f32 to vector<8x32xf32>
    %751 = arith.mulf %750, %749 : vector<8x32xf32>
    %cst_388 = arith.constant 5.000000e-01 : f32
    %752 = vector.broadcast %cst_388 : f32 to vector<8x32xf32>
    %753 = arith.addf %751, %752 : vector<8x32xf32>
    %754 = arith.mulf %743, %725 : vector<8x32xf32>
    %755 = arith.mulf %735, %745 : vector<8x32xf32>
    %756 = arith.addf %754, %755 : vector<8x32xf32>
    %757 = math.tanh %756 : vector<8x32xf32>
    %758 = arith.mulf %753, %757 : vector<8x32xf32>
    %759 = vector.broadcast %721 : i32 to vector<8x1xi32>
    %760 = arith.cmpi slt, %759, %19 : vector<8x1xi32>
    %761 = vector.shape_cast %760 : vector<8x1xi1> to vector<8x1xi1>
    %762 = vector.broadcast %761 : vector<8x1xi1> to vector<8x32xi1>
    %c0_389 = arith.constant 0 : index
    %c0_390 = arith.constant 0 : index
    %763 = vector.load %arg14[%c0_389, %c0_390] : memref<8x32xf32, #tpu.memory_space<vmem>>, vector<8x32xf32>
    %764 = arith.select %762, %758, %763 : vector<8x32xi1>, vector<8x32xf32>
    %c0_391 = arith.constant 0 : index
    %c0_392 = arith.constant 0 : index
    %765 = vector.load %arg14[%c0_391, %c0_392] : memref<8x32xf32, #tpu.memory_space<vmem>>, vector<8x32xf32>
    tpu.vector_store %arg14[%c0_391, %c0_392], %764 {strides = array<i32>} : memref<8x32xf32, #tpu.memory_space<vmem>>, vector<8x32xf32>,
    %c0_393 = arith.constant 0 : index
    %c0_394 = arith.constant 0 : index
    %766 = vector.load %arg15[%c0_393, %c0_394] : memref<8x32xf32, #tpu.memory_space<vmem>>, vector<8x32xf32>
    %767 = arith.select %762, %756, %766 : vector<8x32xi1>, vector<8x32xf32>
    %c0_395 = arith.constant 0 : index
    %c0_396 = arith.constant 0 : index
    %768 = vector.load %arg15[%c0_395, %c0_396] : memref<8x32xf32, #tpu.memory_space<vmem>>, vector<8x32xf32>
    tpu.vector_store %arg15[%c0_395, %c0_396], %767 {strides = array<i32>} : memref<8x32xf32, #tpu.memory_space<vmem>>, vector<8x32xf32>,
    %cst_397 = arith.constant 0.000000e+00 : f32
    %769 = vector.broadcast %cst_397 : f32 to vector<8x32xf32>
    %770 = arith.select %762, %758, %769 : vector<8x32xi1>, vector<8x32xf32>
    %c0_398 = arith.constant 0 : index
    %771 = arith.index_cast %719 : i32 to index
    %c0_399 = arith.constant 0 : index
    %772 = vector.load %arg10[%c0_398, %771, %c0_399] : memref<1x64x32xf32, #tpu.memory_space<vmem>>, vector<1x8x32xf32>
    %773 = vector.shape_cast %772 : vector<1x8x32xf32> to vector<8x32xf32>
    %774 = vector.shape_cast %770 : vector<8x32xf32> to vector<1x8x32xf32>
    tpu.vector_store %arg10[%c0_398, %771, %c0_399], %774 {strides = array<i32>} : memref<1x64x32xf32, #tpu.memory_space<vmem>>, vector<1x8x32xf32>,
    %c7_i32_400 = arith.constant 7 : i32
    %775 = arith.subi %c7_i32_400, %c6_i32 : i32
    %c8_i32_401 = arith.constant 8 : i32
    %776 = arith.muli %775, %c8_i32_401 : i32
    %777 = tpu.assume_multiple %776, 8 : i32
    %c0_i32_402 = arith.constant 0 : i32
    %778 = arith.subi %c0_i32_402, %arg0 : i32
    %c8_i32_403 = arith.constant 8 : i32
    %779 = arith.muli %778, %c8_i32_403 : i32
    %780 = arith.addi %779, %775 : i32
    %781 = arith.index_cast %777 : i32 to index
    %c0_404 = arith.constant 0 : index
    %782 = vector.load %arg13[%781, %c0_404] : memref<64x128xf32, #tpu.memory_space<vmem>>, vector<8x128xf32>
    %c0_405 = arith.constant 0 : index
    %c0_406 = arith.constant 0 : index
    %783 = vector.load %arg16[%c0_405, %c0_406] : memref<8x32xf32, #tpu.memory_space<vmem>>, vector<8x32xf32>
    %c0_407 = arith.constant 0 : index
    %c0_408 = arith.constant 0 : index
    %784 = vector.load %arg17[%c0_407, %c0_408] : memref<8x32xf32, #tpu.memory_space<vmem>>, vector<8x32xf32>
    %cst_409 = arith.constant dense<0.000000e+00> : vector<8x128xf32>
    %785 = tpu.matmul %783, %21, %cst_409 {dimension_numbers = #tpu.dot_dimension_numbers<[1], [0], [0], [1], [0, 0, 1, 1], [], []>} : vector<8x32xf32>, vector<32x128xf32>, vector<8x128xf32> -> vector<8x128xf32>
    %786 = arith.addf %782, %785 : vector<8x128xf32>
    %787 = vector.extract_strided_slice %786 {offsets = [0, 0], sizes = [8, 32], strides = [1, 1]} : vector<8x128xf32> to vector<8x32xf32>
    %cst_410 = arith.constant 5.000000e-01 : f32
    %788 = vector.broadcast %cst_410 : f32 to vector<8x32xf32>
    %789 = arith.mulf %788, %787 : vector<8x32xf32>
    %790 = math.tanh %789 : vector<8x32xf32>
    %cst_411 = arith.constant 5.000000e-01 : f32
    %791 = vector.broadcast %cst_411 : f32 to vector<8x32xf32>
    %792 = arith.mulf %791, %790 : vector<8x32xf32>
    %cst_412 = arith.constant 5.000000e-01 : f32
    %793 = vector.broadcast %cst_412 : f32 to vector<8x32xf32>
    %794 = arith.addf %792, %793 : vector<8x32xf32>
    %795 = vector.extract_strided_slice %786 {offsets = [0, 32], sizes = [8, 32], strides = [1, 1]} : vector<8x128xf32> to vector<8x32xf32>
    %cst_413 = arith.constant 5.000000e-01 : f32
    %796 = vector.broadcast %cst_413 : f32 to vector<8x32xf32>
    %797 = arith.mulf %796, %795 : vector<8x32xf32>
    %798 = math.tanh %797 : vector<8x32xf32>
    %cst_414 = arith.constant 5.000000e-01 : f32
    %799 = vector.broadcast %cst_414 : f32 to vector<8x32xf32>
    %800 = arith.mulf %799, %798 : vector<8x32xf32>
    %cst_415 = arith.constant 5.000000e-01 : f32
    %801 = vector.broadcast %cst_415 : f32 to vector<8x32xf32>
    %802 = arith.addf %800, %801 : vector<8x32xf32>
    %803 = vector.extract_strided_slice %786 {offsets = [0, 64], sizes = [8, 32], strides = [1, 1]} : vector<8x128xf32> to vector<8x32xf32>
    %804 = math.tanh %803 : vector<8x32xf32>
    %805 = vector.extract_strided_slice %786 {offsets = [0, 96], sizes = [8, 32], strides = [1, 1]} : vector<8x128xf32> to vector<8x32xf32>
    %cst_416 = arith.constant 5.000000e-01 : f32
    %806 = vector.broadcast %cst_416 : f32 to vector<8x32xf32>
    %807 = arith.mulf %806, %805 : vector<8x32xf32>
    %808 = math.tanh %807 : vector<8x32xf32>
    %cst_417 = arith.constant 5.000000e-01 : f32
    %809 = vector.broadcast %cst_417 : f32 to vector<8x32xf32>
    %810 = arith.mulf %809, %808 : vector<8x32xf32>
    %cst_418 = arith.constant 5.000000e-01 : f32
    %811 = vector.broadcast %cst_418 : f32 to vector<8x32xf32>
    %812 = arith.addf %810, %811 : vector<8x32xf32>
    %813 = arith.mulf %802, %784 : vector<8x32xf32>
    %814 = arith.mulf %794, %804 : vector<8x32xf32>
    %815 = arith.addf %813, %814 : vector<8x32xf32>
    %816 = math.tanh %815 : vector<8x32xf32>
    %817 = arith.mulf %812, %816 : vector<8x32xf32>
    %818 = vector.broadcast %780 : i32 to vector<8x1xi32>
    %819 = arith.cmpi slt, %818, %19 : vector<8x1xi32>
    %820 = vector.shape_cast %819 : vector<8x1xi1> to vector<8x1xi1>
    %821 = vector.broadcast %820 : vector<8x1xi1> to vector<8x32xi1>
    %c0_419 = arith.constant 0 : index
    %c0_420 = arith.constant 0 : index
    %822 = vector.load %arg16[%c0_419, %c0_420] : memref<8x32xf32, #tpu.memory_space<vmem>>, vector<8x32xf32>
    %823 = arith.select %821, %817, %822 : vector<8x32xi1>, vector<8x32xf32>
    %c0_421 = arith.constant 0 : index
    %c0_422 = arith.constant 0 : index
    %824 = vector.load %arg16[%c0_421, %c0_422] : memref<8x32xf32, #tpu.memory_space<vmem>>, vector<8x32xf32>
    tpu.vector_store %arg16[%c0_421, %c0_422], %823 {strides = array<i32>} : memref<8x32xf32, #tpu.memory_space<vmem>>, vector<8x32xf32>,
    %c0_423 = arith.constant 0 : index
    %c0_424 = arith.constant 0 : index
    %825 = vector.load %arg17[%c0_423, %c0_424] : memref<8x32xf32, #tpu.memory_space<vmem>>, vector<8x32xf32>
    %826 = arith.select %821, %815, %825 : vector<8x32xi1>, vector<8x32xf32>
    %c0_425 = arith.constant 0 : index
    %c0_426 = arith.constant 0 : index
    %827 = vector.load %arg17[%c0_425, %c0_426] : memref<8x32xf32, #tpu.memory_space<vmem>>, vector<8x32xf32>
    tpu.vector_store %arg17[%c0_425, %c0_426], %826 {strides = array<i32>} : memref<8x32xf32, #tpu.memory_space<vmem>>, vector<8x32xf32>,
    %cst_427 = arith.constant 0.000000e+00 : f32
    %828 = vector.broadcast %cst_427 : f32 to vector<8x32xf32>
    %829 = arith.select %821, %817, %828 : vector<8x32xi1>, vector<8x32xf32>
    %c0_428 = arith.constant 0 : index
    %830 = arith.index_cast %777 : i32 to index
    %c0_429 = arith.constant 0 : index
    %831 = vector.load %arg11[%c0_428, %830, %c0_429] : memref<1x64x32xf32, #tpu.memory_space<vmem>>, vector<1x8x32xf32>
    %832 = vector.shape_cast %831 : vector<1x8x32xf32> to vector<8x32xf32>
    %833 = vector.shape_cast %829 : vector<8x32xf32> to vector<1x8x32xf32>
    tpu.vector_store %arg11[%c0_428, %830, %c0_429], %833 {strides = array<i32>} : memref<1x64x32xf32, #tpu.memory_space<vmem>>, vector<1x8x32xf32>,
    %c7_i32_430 = arith.constant 7 : i32
    %c8_i32_431 = arith.constant 8 : i32
    %834 = arith.muli %c7_i32_430, %c8_i32_431 : i32
    %835 = tpu.assume_multiple %834, 8 : i32
    %c8_i32_432 = arith.constant 8 : i32
    %836 = arith.muli %arg0, %c8_i32_432 : i32
    %837 = arith.addi %836, %c7_i32_430 : i32
    %838 = arith.index_cast %835 : i32 to index
    %c0_433 = arith.constant 0 : index
    %839 = vector.load %arg12[%838, %c0_433] : memref<64x128xf32, #tpu.memory_space<vmem>>, vector<8x128xf32>
    %c0_434 = arith.constant 0 : index
    %c0_435 = arith.constant 0 : index
    %840 = vector.load %arg14[%c0_434, %c0_435] : memref<8x32xf32, #tpu.memory_space<vmem>>, vector<8x32xf32>
    %c0_436 = arith.constant 0 : index
    %c0_437 = arith.constant 0 : index
    %841 = vector.load %arg15[%c0_436, %c0_437] : memref<8x32xf32, #tpu.memory_space<vmem>>, vector<8x32xf32>
    %cst_438 = arith.constant dense<0.000000e+00> : vector<8x128xf32>
    %842 = tpu.matmul %840, %20, %cst_438 {dimension_numbers = #tpu.dot_dimension_numbers<[1], [0], [0], [1], [0, 0, 1, 1], [], []>} : vector<8x32xf32>, vector<32x128xf32>, vector<8x128xf32> -> vector<8x128xf32>
    %843 = arith.addf %839, %842 : vector<8x128xf32>
    %844 = vector.extract_strided_slice %843 {offsets = [0, 0], sizes = [8, 32], strides = [1, 1]} : vector<8x128xf32> to vector<8x32xf32>
    %cst_439 = arith.constant 5.000000e-01 : f32
    %845 = vector.broadcast %cst_439 : f32 to vector<8x32xf32>
    %846 = arith.mulf %845, %844 : vector<8x32xf32>
    %847 = math.tanh %846 : vector<8x32xf32>
    %cst_440 = arith.constant 5.000000e-01 : f32
    %848 = vector.broadcast %cst_440 : f32 to vector<8x32xf32>
    %849 = arith.mulf %848, %847 : vector<8x32xf32>
    %cst_441 = arith.constant 5.000000e-01 : f32
    %850 = vector.broadcast %cst_441 : f32 to vector<8x32xf32>
    %851 = arith.addf %849, %850 : vector<8x32xf32>
    %852 = vector.extract_strided_slice %843 {offsets = [0, 32], sizes = [8, 32], strides = [1, 1]} : vector<8x128xf32> to vector<8x32xf32>
    %cst_442 = arith.constant 5.000000e-01 : f32
    %853 = vector.broadcast %cst_442 : f32 to vector<8x32xf32>
    %854 = arith.mulf %853, %852 : vector<8x32xf32>
    %855 = math.tanh %854 : vector<8x32xf32>
    %cst_443 = arith.constant 5.000000e-01 : f32
    %856 = vector.broadcast %cst_443 : f32 to vector<8x32xf32>
    %857 = arith.mulf %856, %855 : vector<8x32xf32>
    %cst_444 = arith.constant 5.000000e-01 : f32
    %858 = vector.broadcast %cst_444 : f32 to vector<8x32xf32>
    %859 = arith.addf %857, %858 : vector<8x32xf32>
    %860 = vector.extract_strided_slice %843 {offsets = [0, 64], sizes = [8, 32], strides = [1, 1]} : vector<8x128xf32> to vector<8x32xf32>
    %861 = math.tanh %860 : vector<8x32xf32>
    %862 = vector.extract_strided_slice %843 {offsets = [0, 96], sizes = [8, 32], strides = [1, 1]} : vector<8x128xf32> to vector<8x32xf32>
    %cst_445 = arith.constant 5.000000e-01 : f32
    %863 = vector.broadcast %cst_445 : f32 to vector<8x32xf32>
    %864 = arith.mulf %863, %862 : vector<8x32xf32>
    %865 = math.tanh %864 : vector<8x32xf32>
    %cst_446 = arith.constant 5.000000e-01 : f32
    %866 = vector.broadcast %cst_446 : f32 to vector<8x32xf32>
    %867 = arith.mulf %866, %865 : vector<8x32xf32>
    %cst_447 = arith.constant 5.000000e-01 : f32
    %868 = vector.broadcast %cst_447 : f32 to vector<8x32xf32>
    %869 = arith.addf %867, %868 : vector<8x32xf32>
    %870 = arith.mulf %859, %841 : vector<8x32xf32>
    %871 = arith.mulf %851, %861 : vector<8x32xf32>
    %872 = arith.addf %870, %871 : vector<8x32xf32>
    %873 = math.tanh %872 : vector<8x32xf32>
    %874 = arith.mulf %869, %873 : vector<8x32xf32>
    %875 = vector.broadcast %837 : i32 to vector<8x1xi32>
    %876 = arith.cmpi slt, %875, %19 : vector<8x1xi32>
    %877 = vector.shape_cast %876 : vector<8x1xi1> to vector<8x1xi1>
    %878 = vector.broadcast %877 : vector<8x1xi1> to vector<8x32xi1>
    %c0_448 = arith.constant 0 : index
    %c0_449 = arith.constant 0 : index
    %879 = vector.load %arg14[%c0_448, %c0_449] : memref<8x32xf32, #tpu.memory_space<vmem>>, vector<8x32xf32>
    %880 = arith.select %878, %874, %879 : vector<8x32xi1>, vector<8x32xf32>
    %c0_450 = arith.constant 0 : index
    %c0_451 = arith.constant 0 : index
    %881 = vector.load %arg14[%c0_450, %c0_451] : memref<8x32xf32, #tpu.memory_space<vmem>>, vector<8x32xf32>
    tpu.vector_store %arg14[%c0_450, %c0_451], %880 {strides = array<i32>} : memref<8x32xf32, #tpu.memory_space<vmem>>, vector<8x32xf32>,
    %c0_452 = arith.constant 0 : index
    %c0_453 = arith.constant 0 : index
    %882 = vector.load %arg15[%c0_452, %c0_453] : memref<8x32xf32, #tpu.memory_space<vmem>>, vector<8x32xf32>
    %883 = arith.select %878, %872, %882 : vector<8x32xi1>, vector<8x32xf32>
    %c0_454 = arith.constant 0 : index
    %c0_455 = arith.constant 0 : index
    %884 = vector.load %arg15[%c0_454, %c0_455] : memref<8x32xf32, #tpu.memory_space<vmem>>, vector<8x32xf32>
    tpu.vector_store %arg15[%c0_454, %c0_455], %883 {strides = array<i32>} : memref<8x32xf32, #tpu.memory_space<vmem>>, vector<8x32xf32>,
    %cst_456 = arith.constant 0.000000e+00 : f32
    %885 = vector.broadcast %cst_456 : f32 to vector<8x32xf32>
    %886 = arith.select %878, %874, %885 : vector<8x32xi1>, vector<8x32xf32>
    %c0_457 = arith.constant 0 : index
    %887 = arith.index_cast %835 : i32 to index
    %c0_458 = arith.constant 0 : index
    %888 = vector.load %arg10[%c0_457, %887, %c0_458] : memref<1x64x32xf32, #tpu.memory_space<vmem>>, vector<1x8x32xf32>
    %889 = vector.shape_cast %888 : vector<1x8x32xf32> to vector<8x32xf32>
    %890 = vector.shape_cast %886 : vector<8x32xf32> to vector<1x8x32xf32>
    tpu.vector_store %arg10[%c0_457, %887, %c0_458], %890 {strides = array<i32>} : memref<1x64x32xf32, #tpu.memory_space<vmem>>, vector<1x8x32xf32>,
    %c7_i32_459 = arith.constant 7 : i32
    %891 = arith.subi %c7_i32_459, %c7_i32_430 : i32
    %c8_i32_460 = arith.constant 8 : i32
    %892 = arith.muli %891, %c8_i32_460 : i32
    %893 = tpu.assume_multiple %892, 8 : i32
    %c0_i32_461 = arith.constant 0 : i32
    %894 = arith.subi %c0_i32_461, %arg0 : i32
    %c8_i32_462 = arith.constant 8 : i32
    %895 = arith.muli %894, %c8_i32_462 : i32
    %896 = arith.addi %895, %891 : i32
    %897 = arith.index_cast %893 : i32 to index
    %c0_463 = arith.constant 0 : index
    %898 = vector.load %arg13[%897, %c0_463] : memref<64x128xf32, #tpu.memory_space<vmem>>, vector<8x128xf32>
    %c0_464 = arith.constant 0 : index
    %c0_465 = arith.constant 0 : index
    %899 = vector.load %arg16[%c0_464, %c0_465] : memref<8x32xf32, #tpu.memory_space<vmem>>, vector<8x32xf32>
    %c0_466 = arith.constant 0 : index
    %c0_467 = arith.constant 0 : index
    %900 = vector.load %arg17[%c0_466, %c0_467] : memref<8x32xf32, #tpu.memory_space<vmem>>, vector<8x32xf32>
    %cst_468 = arith.constant dense<0.000000e+00> : vector<8x128xf32>
    %901 = tpu.matmul %899, %21, %cst_468 {dimension_numbers = #tpu.dot_dimension_numbers<[1], [0], [0], [1], [0, 0, 1, 1], [], []>} : vector<8x32xf32>, vector<32x128xf32>, vector<8x128xf32> -> vector<8x128xf32>
    %902 = arith.addf %898, %901 : vector<8x128xf32>
    %903 = vector.extract_strided_slice %902 {offsets = [0, 0], sizes = [8, 32], strides = [1, 1]} : vector<8x128xf32> to vector<8x32xf32>
    %cst_469 = arith.constant 5.000000e-01 : f32
    %904 = vector.broadcast %cst_469 : f32 to vector<8x32xf32>
    %905 = arith.mulf %904, %903 : vector<8x32xf32>
    %906 = math.tanh %905 : vector<8x32xf32>
    %cst_470 = arith.constant 5.000000e-01 : f32
    %907 = vector.broadcast %cst_470 : f32 to vector<8x32xf32>
    %908 = arith.mulf %907, %906 : vector<8x32xf32>
    %cst_471 = arith.constant 5.000000e-01 : f32
    %909 = vector.broadcast %cst_471 : f32 to vector<8x32xf32>
    %910 = arith.addf %908, %909 : vector<8x32xf32>
    %911 = vector.extract_strided_slice %902 {offsets = [0, 32], sizes = [8, 32], strides = [1, 1]} : vector<8x128xf32> to vector<8x32xf32>
    %cst_472 = arith.constant 5.000000e-01 : f32
    %912 = vector.broadcast %cst_472 : f32 to vector<8x32xf32>
    %913 = arith.mulf %912, %911 : vector<8x32xf32>
    %914 = math.tanh %913 : vector<8x32xf32>
    %cst_473 = arith.constant 5.000000e-01 : f32
    %915 = vector.broadcast %cst_473 : f32 to vector<8x32xf32>
    %916 = arith.mulf %915, %914 : vector<8x32xf32>
    %cst_474 = arith.constant 5.000000e-01 : f32
    %917 = vector.broadcast %cst_474 : f32 to vector<8x32xf32>
    %918 = arith.addf %916, %917 : vector<8x32xf32>
    %919 = vector.extract_strided_slice %902 {offsets = [0, 64], sizes = [8, 32], strides = [1, 1]} : vector<8x128xf32> to vector<8x32xf32>
    %920 = math.tanh %919 : vector<8x32xf32>
    %921 = vector.extract_strided_slice %902 {offsets = [0, 96], sizes = [8, 32], strides = [1, 1]} : vector<8x128xf32> to vector<8x32xf32>
    %cst_475 = arith.constant 5.000000e-01 : f32
    %922 = vector.broadcast %cst_475 : f32 to vector<8x32xf32>
    %923 = arith.mulf %922, %921 : vector<8x32xf32>
    %924 = math.tanh %923 : vector<8x32xf32>
    %cst_476 = arith.constant 5.000000e-01 : f32
    %925 = vector.broadcast %cst_476 : f32 to vector<8x32xf32>
    %926 = arith.mulf %925, %924 : vector<8x32xf32>
    %cst_477 = arith.constant 5.000000e-01 : f32
    %927 = vector.broadcast %cst_477 : f32 to vector<8x32xf32>
    %928 = arith.addf %926, %927 : vector<8x32xf32>
    %929 = arith.mulf %918, %900 : vector<8x32xf32>
    %930 = arith.mulf %910, %920 : vector<8x32xf32>
    %931 = arith.addf %929, %930 : vector<8x32xf32>
    %932 = math.tanh %931 : vector<8x32xf32>
    %933 = arith.mulf %928, %932 : vector<8x32xf32>
    %934 = vector.broadcast %896 : i32 to vector<8x1xi32>
    %935 = arith.cmpi slt, %934, %19 : vector<8x1xi32>
    %936 = vector.shape_cast %935 : vector<8x1xi1> to vector<8x1xi1>
    %937 = vector.broadcast %936 : vector<8x1xi1> to vector<8x32xi1>
    %c0_478 = arith.constant 0 : index
    %c0_479 = arith.constant 0 : index
    %938 = vector.load %arg16[%c0_478, %c0_479] : memref<8x32xf32, #tpu.memory_space<vmem>>, vector<8x32xf32>
    %939 = arith.select %937, %933, %938 : vector<8x32xi1>, vector<8x32xf32>
    %c0_480 = arith.constant 0 : index
    %c0_481 = arith.constant 0 : index
    %940 = vector.load %arg16[%c0_480, %c0_481] : memref<8x32xf32, #tpu.memory_space<vmem>>, vector<8x32xf32>
    tpu.vector_store %arg16[%c0_480, %c0_481], %939 {strides = array<i32>} : memref<8x32xf32, #tpu.memory_space<vmem>>, vector<8x32xf32>,
    %c0_482 = arith.constant 0 : index
    %c0_483 = arith.constant 0 : index
    %941 = vector.load %arg17[%c0_482, %c0_483] : memref<8x32xf32, #tpu.memory_space<vmem>>, vector<8x32xf32>
    %942 = arith.select %937, %931, %941 : vector<8x32xi1>, vector<8x32xf32>
    %c0_484 = arith.constant 0 : index
    %c0_485 = arith.constant 0 : index
    %943 = vector.load %arg17[%c0_484, %c0_485] : memref<8x32xf32, #tpu.memory_space<vmem>>, vector<8x32xf32>
    tpu.vector_store %arg17[%c0_484, %c0_485], %942 {strides = array<i32>} : memref<8x32xf32, #tpu.memory_space<vmem>>, vector<8x32xf32>,
    %cst_486 = arith.constant 0.000000e+00 : f32
    %944 = vector.broadcast %cst_486 : f32 to vector<8x32xf32>
    %945 = arith.select %937, %933, %944 : vector<8x32xi1>, vector<8x32xf32>
    %c0_487 = arith.constant 0 : index
    %946 = arith.index_cast %893 : i32 to index
    %c0_488 = arith.constant 0 : index
    %947 = vector.load %arg11[%c0_487, %946, %c0_488] : memref<1x64x32xf32, #tpu.memory_space<vmem>>, vector<1x8x32xf32>
    %948 = vector.shape_cast %947 : vector<1x8x32xf32> to vector<8x32xf32>
    %949 = vector.shape_cast %945 : vector<8x32xf32> to vector<1x8x32xf32>
    tpu.vector_store %arg11[%c0_487, %946, %c0_488], %949 {strides = array<i32>} : memref<1x64x32xf32, #tpu.memory_space<vmem>>, vector<1x8x32xf32>,
    %c8_i32_489 = arith.constant 8 : i32
    return
  }
  func.func @transform_0(%arg0: i32) -> (i32, i32) {
    %c0_i32 = arith.constant 0 : i32
    %c0_i32_0 = arith.constant 0 : i32
    %c0_i32_1 = arith.constant 0 : i32
    return %c0_i32, %c0_i32_0 : i32, i32
  }
  func.func @transform_1(%arg0: i32) -> (i32, i32, i32) {
    %c0_i32 = arith.constant 0 : i32
    %c0_i32_0 = arith.constant 0 : i32
    %c0_i32_1 = arith.constant 0 : i32
    return %arg0, %c0_i32, %c0_i32_0 : i32, i32, i32
  }
  func.func @transform_2(%arg0: i32) -> (i32, i32, i32) {
    %c0_i32 = arith.constant 0 : i32
    %0 = arith.subi %c0_i32, %arg0 : i32
    %c0_i32_0 = arith.constant 0 : i32
    %c0_i32_1 = arith.constant 0 : i32
    %c0_i32_2 = arith.constant 0 : i32
    return %0, %c0_i32_0, %c0_i32_1 : i32, i32, i32
  }
  func.func @transform_3(%arg0: i32) -> (i32, i32) {
    %c0_i32 = arith.constant 0 : i32
    %c0_i32_0 = arith.constant 0 : i32
    %c0_i32_1 = arith.constant 0 : i32
    return %c0_i32, %c0_i32_0 : i32, i32
  }
  func.func @transform_4(%arg0: i32) -> (i32, i32) {
    %c0_i32 = arith.constant 0 : i32
    %c0_i32_0 = arith.constant 0 : i32
    %c0_i32_1 = arith.constant 0 : i32
    return %c0_i32, %c0_i32_0 : i32, i32
  }
  func.func @transform_5(%arg0: i32) -> (i32, i32) {
    %c0_i32 = arith.constant 0 : i32
    %c0_i32_0 = arith.constant 0 : i32
    %c0_i32_1 = arith.constant 0 : i32
    return %c0_i32, %c0_i32_0 : i32, i32
  }
  func.func @transform_6(%arg0: i32) -> (i32, i32) {
    %c0_i32 = arith.constant 0 : i32
    %c0_i32_0 = arith.constant 0 : i32
    %c0_i32_1 = arith.constant 0 : i32
    return %c0_i32, %c0_i32_0 : i32, i32
  }
  func.func @transform_7(%arg0: i32) -> (i32, i32) {
    %c0_i32 = arith.constant 0 : i32
    %c0_i32_0 = arith.constant 0 : i32
    %c0_i32_1 = arith.constant 0 : i32
    return %c0_i32, %c0_i32_0 : i32, i32
  }
  func.func @transform_8(%arg0: i32) -> (i32, i32) {
    %c0_i32 = arith.constant 0 : i32
    %c0_i32_0 = arith.constant 0 : i32
    %c0_i32_1 = arith.constant 0 : i32
    return %c0_i32, %c0_i32_0 : i32, i32
  }
  func.func @transform_9(%arg0: i32) -> (i32, i32, i32) {
    %c0_i32 = arith.constant 0 : i32
    %c0_i32_0 = arith.constant 0 : i32
    %c0_i32_1 = arith.constant 0 : i32
    return %arg0, %c0_i32, %c0_i32_0 : i32, i32, i32
  }
  func.func @transform_10(%arg0: i32) -> (i32, i32, i32) {
    %c0_i32 = arith.constant 0 : i32
    %0 = arith.subi %c0_i32, %arg0 : i32
    %c0_i32_0 = arith.constant 0 : i32
    %c0_i32_1 = arith.constant 0 : i32
    %c0_i32_2 = arith.constant 0 : i32
    return %0, %c0_i32_0, %c0_i32_1 : i32, i32, i32
  }
}

module attributes {stable_mosaic.version = 11 : i64} {
  func.func @_bilstm_chunk_kernel(%arg0: i32, %arg1: memref<8x1xi32, #tpu.memory_space<vmem>>, %arg2: memref<1x64x64xf32, #tpu.memory_space<vmem>>, %arg3: memref<1x64x64xf32, #tpu.memory_space<vmem>>, %arg4: memref<64x128xf32, #tpu.memory_space<vmem>>, %arg5: memref<64x128xf32, #tpu.memory_space<vmem>>, %arg6: memref<32x128xf32, #tpu.memory_space<vmem>>, %arg7: memref<32x128xf32, #tpu.memory_space<vmem>>, %arg8: memref<1x128xf32, #tpu.memory_space<vmem>>, %arg9: memref<1x128xf32, #tpu.memory_space<vmem>>, %arg10: memref<1x64x32xf32, #tpu.memory_space<vmem>>, %arg11: memref<1x64x32xf32, #tpu.memory_space<vmem>>, %arg12: memref<64x128xf32, #tpu.memory_space<vmem>>, %arg13: memref<64x128xf32, #tpu.memory_space<vmem>>, %arg14: memref<8x32xf32, #tpu.memory_space<vmem>>, %arg15: memref<8x32xf32, #tpu.memory_space<vmem>>, %arg16: memref<8x32xf32, #tpu.memory_space<vmem>>, %arg17: memref<8x32xf32, #tpu.memory_space<vmem>>) attributes {dimension_semantics = [#tpu.dimension_semantics<arbitrary>], iteration_bounds = array<i64: 1>, scalar_prefetch = 0 : i64, scratch_operands = 6 : i64, tpu.core_type = #tpu.core_type<tc>, window_params = [{pipeline_mode = #tpu.pipeline_mode<synchronous>, transform_indices = @transform_0, window_bounds = array<i64: 8, 1>}, {transform_indices = @transform_1, window_bounds = array<i64: 1, 64, 64>}, {transform_indices = @transform_2, window_bounds = array<i64: 1, 64, 64>}, {pipeline_mode = #tpu.pipeline_mode<synchronous>, transform_indices = @transform_3, window_bounds = array<i64: 64, 128>}, {pipeline_mode = #tpu.pipeline_mode<synchronous>, transform_indices = @transform_4, window_bounds = array<i64: 64, 128>}, {pipeline_mode = #tpu.pipeline_mode<synchronous>, transform_indices = @transform_5, window_bounds = array<i64: 32, 128>}, {pipeline_mode = #tpu.pipeline_mode<synchronous>, transform_indices = @transform_6, window_bounds = array<i64: 32, 128>}, {pipeline_mode = #tpu.pipeline_mode<synchronous>, transform_indices = @transform_7, window_bounds = array<i64: 1, 128>}, {pipeline_mode = #tpu.pipeline_mode<synchronous>, transform_indices = @transform_8, window_bounds = array<i64: 1, 128>}, {transform_indices = @transform_9, window_bounds = array<i64: 1, 64, 32>}, {transform_indices = @transform_10, window_bounds = array<i64: 1, 64, 32>}]} {
    %c0_i32 = arith.constant 0 : i32
    %0 = arith.cmpi eq, %arg0, %c0_i32 : i32
    %1 = arith.extui %0 : i1 to i32
    %c0_i32_0 = arith.constant 0 : i32
    %2 = arith.cmpi ne, %1, %c0_i32_0 : i32
    scf.if %2 {
      %cst_490 = arith.constant 0.000000e+00 : f32
      %950 = vector.broadcast %cst_490 : f32 to vector<8x32xf32>
      %c0_491 = arith.constant 0 : index
      %c0_492 = arith.constant 0 : index
      %951 = vector.load %arg14[%c0_491, %c0_492] : memref<8x32xf32, #tpu.memory_space<vmem>>, vector<8x32xf32>
      tpu.vector_store %arg14[%c0_491, %c0_492], %950 {strides = array<i32>} : memref<8x32xf32, #tpu.memory_space<vmem>>, vector<8x32xf32>,
      %cst_493 = arith.constant 0.000000e+00 : f32
      %952 = vector.broadcast %cst_493 : f32 to vector<8x32xf32>
      %c0_494 = arith.constant 0 : index
      %c0_495 = arith.constant 0 : index
      %953 = vector.load %arg15[%c0_494, %c0_495] : memref<8x32xf32, #tpu.memory_space<vmem>>, vector<8x32xf32>
      tpu.vector_store %arg15[%c0_494, %c0_495], %952 {strides = array<i32>} : memref<8x32xf32, #tpu.memory_space<vmem>>, vector<8x32xf32>,
      %cst_496 = arith.constant 0.000000e+00 : f32
      %954 = vector.broadcast %cst_496 : f32 to vector<8x32xf32>
      %c0_497 = arith.constant 0 : index
      %c0_498 = arith.constant 0 : index
      %955 = vector.load %arg16[%c0_497, %c0_498] : memref<8x32xf32, #tpu.memory_space<vmem>>, vector<8x32xf32>
      tpu.vector_store %arg16[%c0_497, %c0_498], %954 {strides = array<i32>} : memref<8x32xf32, #tpu.memory_space<vmem>>, vector<8x32xf32>,
      %cst_499 = arith.constant 0.000000e+00 : f32
      %956 = vector.broadcast %cst_499 : f32 to vector<8x32xf32>
      %c0_500 = arith.constant 0 : index
      %c0_501 = arith.constant 0 : index
      %957 = vector.load %arg17[%c0_500, %c0_501] : memref<8x32xf32, #tpu.memory_space<vmem>>, vector<8x32xf32>
      tpu.vector_store %arg17[%c0_500, %c0_501], %956 {strides = array<i32>} : memref<8x32xf32, #tpu.memory_space<vmem>>, vector<8x32xf32>,
    } else {
    }
    %c0 = arith.constant 0 : index
    %c0_1 = arith.constant 0 : index
    %c0_2 = arith.constant 0 : index
    %3 = vector.load %arg2[%c0, %c0_1, %c0_2] : memref<1x64x64xf32, #tpu.memory_space<vmem>>, vector<1x64x64xf32>
    %4 = vector.shape_cast %3 : vector<1x64x64xf32> to vector<64x64xf32>
    %c0_3 = arith.constant 0 : index
    %c0_4 = arith.constant 0 : index
    %5 = vector.load %arg4[%c0_3, %c0_4] : memref<64x128xf32, #tpu.memory_space<vmem>>, vector<64x128xf32>
    %cst = arith.constant dense<0.000000e+00> : vector<64x128xf32>
    %6 = tpu.matmul %4, %5, %cst {dimension_numbers = #tpu.dot_dimension_numbers<[1], [0], [0], [1], [0, 0, 1, 1], [], []>} : vector<64x64xf32>, vector<64x128xf32>, vector<64x128xf32> -> vector<64x128xf32>
    %c0_5 = arith.constant 0 : index
    %c0_6 = arith.constant 0 : index
    %7 = vector.load %arg8[%c0_5, %c0_6] : memref<1x128xf32, #tpu.memory_space<vmem>>, vector<1x128xf32>
    %8 = vector.broadcast %7 : vector<1x128xf32> to vector<64x128xf32>
    %9 = arith.addf %6, %8 : vector<64x128xf32>
    %c0_7 = arith.constant 0 : index
    %c0_8 = arith.constant 0 : index
    %10 = vector.load %arg12[%c0_7, %c0_8] : memref<64x128xf32, #tpu.memory_space<vmem>>, vector<64x128xf32>
    tpu.vector_store %arg12[%c0_7, %c0_8], %9 {strides = array<i32>} : memref<64x128xf32, #tpu.memory_space<vmem>>, vector<64x128xf32>,
    %c0_9 = arith.constant 0 : index
    %c0_10 = arith.constant 0 : index
    %c0_11 = arith.constant 0 : index
    %11 = vector.load %arg3[%c0_9, %c0_10, %c0_11] : memref<1x64x64xf32, #tpu.memory_space<vmem>>, vector<1x64x64xf32>
    %12 = vector.shape_cast %11 : vector<1x64x64xf32> to vector<64x64xf32>
    %c0_12 = arith.constant 0 : index
    %c0_13 = arith.constant 0 : index
    %13 = vector.load %arg5[%c0_12, %c0_13] : memref<64x128xf32, #tpu.memory_space<vmem>>, vector<64x128xf32>
    %cst_14 = arith.constant dense<0.000000e+00> : vector<64x128xf32>
    %14 = tpu.matmul %12, %13, %cst_14 {dimension_numbers = #tpu.dot_dimension_numbers<[1], [0], [0], [1], [0, 0, 1, 1], [], []>} : vector<64x64xf32>, vector<64x128xf32>, vector<64x128xf32> -> vector<64x128xf32>
    %c0_15 = arith.constant 0 : index
    %c0_16 = arith.constant 0 : index
    %15 = vector.load %arg9[%c0_15, %c0_16] : memref<1x128xf32, #tpu.memory_space<vmem>>, vector<1x128xf32>
    %16 = vector.broadcast %15 : vector<1x128xf32> to vector<64x128xf32>
    %17 = arith.addf %14, %16 : vector<64x128xf32>
    %c0_17 = arith.constant 0 : index
    %c0_18 = arith.constant 0 : index
    %18 = vector.load %arg13[%c0_17, %c0_18] : memref<64x128xf32, #tpu.memory_space<vmem>>, vector<64x128xf32>
    tpu.vector_store %arg13[%c0_17, %c0_18], %17 {strides = array<i32>} : memref<64x128xf32, #tpu.memory_space<vmem>>, vector<64x128xf32>,
    %c0_19 = arith.constant 0 : index
    %c0_20 = arith.constant 0 : index
    %19 = vector.load %arg1[%c0_19, %c0_20] : memref<8x1xi32, #tpu.memory_space<vmem>>, vector<8x1xi32>
    %c0_21 = arith.constant 0 : index
    %c0_22 = arith.constant 0 : index
    %20 = vector.load %arg6[%c0_21, %c0_22] : memref<32x128xf32, #tpu.memory_space<vmem>>, vector<32x128xf32>
    %c0_23 = arith.constant 0 : index
    %c0_24 = arith.constant 0 : index
    %21 = vector.load %arg7[%c0_23, %c0_24] : memref<32x128xf32, #tpu.memory_space<vmem>>, vector<32x128xf32>
    %c0_i32_25 = arith.constant 0 : i32
    %c8_i32 = arith.constant 8 : i32
    %22 = arith.muli %c0_i32_25, %c8_i32 : i32
    %23 = tpu.assume_multiple %22, 8 : i32
    %c8_i32_26 = arith.constant 8 : i32
    %24 = arith.muli %arg0, %c8_i32_26 : i32
    %25 = arith.addi %24, %c0_i32_25 : i32
    %26 = arith.index_cast %23 : i32 to index
    %c0_27 = arith.constant 0 : index
    %27 = vector.load %arg12[%26, %c0_27] : memref<64x128xf32, #tpu.memory_space<vmem>>, vector<8x128xf32>
    %c0_28 = arith.constant 0 : index
    %c0_29 = arith.constant 0 : index
    %28 = vector.load %arg14[%c0_28, %c0_29] : memref<8x32xf32, #tpu.memory_space<vmem>>, vector<8x32xf32>
    %c0_30 = arith.constant 0 : index
    %c0_31 = arith.constant 0 : index
    %29 = vector.load %arg15[%c0_30, %c0_31] : memref<8x32xf32, #tpu.memory_space<vmem>>, vector<8x32xf32>
    %cst_32 = arith.constant dense<0.000000e+00> : vector<8x128xf32>
    %30 = tpu.matmul %28, %20, %cst_32 {dimension_numbers = #tpu.dot_dimension_numbers<[1], [0], [0], [1], [0, 0, 1, 1], [], []>} : vector<8x32xf32>, vector<32x128xf32>, vector<8x128xf32> -> vector<8x128xf32>
    %31 = arith.addf %27, %30 : vector<8x128xf32>
    %32 = vector.extract_strided_slice %31 {offsets = [0, 0], sizes = [8, 32], strides = [1, 1]} : vector<8x128xf32> to vector<8x32xf32>
    %cst_33 = arith.constant 5.000000e-01 : f32
    %33 = vector.broadcast %cst_33 : f32 to vector<8x32xf32>
    %34 = arith.mulf %33, %32 : vector<8x32xf32>
    %35 = math.tanh %34 : vector<8x32xf32>
    %cst_34 = arith.constant 5.000000e-01 : f32
    %36 = vector.broadcast %cst_34 : f32 to vector<8x32xf32>
    %37 = arith.mulf %36, %35 : vector<8x32xf32>
    %cst_35 = arith.constant 5.000000e-01 : f32
    %38 = vector.broadcast %cst_35 : f32 to vector<8x32xf32>
    %39 = arith.addf %37, %38 : vector<8x32xf32>
    %40 = vector.extract_strided_slice %31 {offsets = [0, 32], sizes = [8, 32], strides = [1, 1]} : vector<8x128xf32> to vector<8x32xf32>
    %cst_36 = arith.constant 5.000000e-01 : f32
    %41 = vector.broadcast %cst_36 : f32 to vector<8x32xf32>
    %42 = arith.mulf %41, %40 : vector<8x32xf32>
    %43 = math.tanh %42 : vector<8x32xf32>
    %cst_37 = arith.constant 5.000000e-01 : f32
    %44 = vector.broadcast %cst_37 : f32 to vector<8x32xf32>
    %45 = arith.mulf %44, %43 : vector<8x32xf32>
    %cst_38 = arith.constant 5.000000e-01 : f32
    %46 = vector.broadcast %cst_38 : f32 to vector<8x32xf32>
    %47 = arith.addf %45, %46 : vector<8x32xf32>
    %48 = vector.extract_strided_slice %31 {offsets = [0, 64], sizes = [8, 32], strides = [1, 1]} : vector<8x128xf32> to vector<8x32xf32>
    %49 = math.tanh %48 : vector<8x32xf32>
    %50 = vector.extract_strided_slice %31 {offsets = [0, 96], sizes = [8, 32], strides = [1, 1]} : vector<8x128xf32> to vector<8x32xf32>
    %cst_39 = arith.constant 5.000000e-01 : f32
    %51 = vector.broadcast %cst_39 : f32 to vector<8x32xf32>
    %52 = arith.mulf %51, %50 : vector<8x32xf32>
    %53 = math.tanh %52 : vector<8x32xf32>
    %cst_40 = arith.constant 5.000000e-01 : f32
    %54 = vector.broadcast %cst_40 : f32 to vector<8x32xf32>
    %55 = arith.mulf %54, %53 : vector<8x32xf32>
    %cst_41 = arith.constant 5.000000e-01 : f32
    %56 = vector.broadcast %cst_41 : f32 to vector<8x32xf32>
    %57 = arith.addf %55, %56 : vector<8x32xf32>
    %58 = arith.mulf %47, %29 : vector<8x32xf32>
    %59 = arith.mulf %39, %49 : vector<8x32xf32>
    %60 = arith.addf %58, %59 : vector<8x32xf32>
    %61 = math.tanh %60 : vector<8x32xf32>
    %62 = arith.mulf %57, %61 : vector<8x32xf32>
    %63 = vector.broadcast %25 : i32 to vector<8x1xi32>
    %64 = arith.cmpi slt, %63, %19 : vector<8x1xi32>
    %65 = vector.shape_cast %64 : vector<8x1xi1> to vector<8x1xi1>
    %66 = vector.broadcast %65 : vector<8x1xi1> to vector<8x32xi1>
    %c0_42 = arith.constant 0 : index
    %c0_43 = arith.constant 0 : index
    %67 = vector.load %arg14[%c0_42, %c0_43] : memref<8x32xf32, #tpu.memory_space<vmem>>, vector<8x32xf32>
    %68 = arith.select %66, %62, %67 : vector<8x32xi1>, vector<8x32xf32>
    %c0_44 = arith.constant 0 : index
    %c0_45 = arith.constant 0 : index
    %69 = vector.load %arg14[%c0_44, %c0_45] : memref<8x32xf32, #tpu.memory_space<vmem>>, vector<8x32xf32>
    tpu.vector_store %arg14[%c0_44, %c0_45], %68 {strides = array<i32>} : memref<8x32xf32, #tpu.memory_space<vmem>>, vector<8x32xf32>,
    %c0_46 = arith.constant 0 : index
    %c0_47 = arith.constant 0 : index
    %70 = vector.load %arg15[%c0_46, %c0_47] : memref<8x32xf32, #tpu.memory_space<vmem>>, vector<8x32xf32>
    %71 = arith.select %66, %60, %70 : vector<8x32xi1>, vector<8x32xf32>
    %c0_48 = arith.constant 0 : index
    %c0_49 = arith.constant 0 : index
    %72 = vector.load %arg15[%c0_48, %c0_49] : memref<8x32xf32, #tpu.memory_space<vmem>>, vector<8x32xf32>
    tpu.vector_store %arg15[%c0_48, %c0_49], %71 {strides = array<i32>} : memref<8x32xf32, #tpu.memory_space<vmem>>, vector<8x32xf32>,
    %cst_50 = arith.constant 0.000000e+00 : f32
    %73 = vector.broadcast %cst_50 : f32 to vector<8x32xf32>
    %74 = arith.select %66, %62, %73 : vector<8x32xi1>, vector<8x32xf32>
    %c0_51 = arith.constant 0 : index
    %75 = arith.index_cast %23 : i32 to index
    %c0_52 = arith.constant 0 : index
    %76 = vector.load %arg10[%c0_51, %75, %c0_52] : memref<1x64x32xf32, #tpu.memory_space<vmem>>, vector<1x8x32xf32>
    %77 = vector.shape_cast %76 : vector<1x8x32xf32> to vector<8x32xf32>
    %78 = vector.shape_cast %74 : vector<8x32xf32> to vector<1x8x32xf32>
    tpu.vector_store %arg10[%c0_51, %75, %c0_52], %78 {strides = array<i32>} : memref<1x64x32xf32, #tpu.memory_space<vmem>>, vector<1x8x32xf32>,
    %c7_i32 = arith.constant 7 : i32
    %79 = arith.subi %c7_i32, %c0_i32_25 : i32
    %c8_i32_53 = arith.constant 8 : i32
    %80 = arith.muli %79, %c8_i32_53 : i32
    %81 = tpu.assume_multiple %80, 8 : i32
    %c0_i32_54 = arith.constant 0 : i32
    %82 = arith.subi %c0_i32_54, %arg0 : i32
    %c8_i32_55 = arith.constant 8 : i32
    %83 = arith.muli %82, %c8_i32_55 : i32
    %84 = arith.addi %83, %79 : i32
    %85 = arith.index_cast %81 : i32 to index
    %c0_56 = arith.constant 0 : index
    %86 = vector.load %arg13[%85, %c0_56] : memref<64x128xf32, #tpu.memory_space<vmem>>, vector<8x128xf32>
    %c0_57 = arith.constant 0 : index
    %c0_58 = arith.constant 0 : index
    %87 = vector.load %arg16[%c0_57, %c0_58] : memref<8x32xf32, #tpu.memory_space<vmem>>, vector<8x32xf32>
    %c0_59 = arith.constant 0 : index
    %c0_60 = arith.constant 0 : index
    %88 = vector.load %arg17[%c0_59, %c0_60] : memref<8x32xf32, #tpu.memory_space<vmem>>, vector<8x32xf32>
    %cst_61 = arith.constant dense<0.000000e+00> : vector<8x128xf32>
    %89 = tpu.matmul %87, %21, %cst_61 {dimension_numbers = #tpu.dot_dimension_numbers<[1], [0], [0], [1], [0, 0, 1, 1], [], []>} : vector<8x32xf32>, vector<32x128xf32>, vector<8x128xf32> -> vector<8x128xf32>
    %90 = arith.addf %86, %89 : vector<8x128xf32>
    %91 = vector.extract_strided_slice %90 {offsets = [0, 0], sizes = [8, 32], strides = [1, 1]} : vector<8x128xf32> to vector<8x32xf32>
    %cst_62 = arith.constant 5.000000e-01 : f32
    %92 = vector.broadcast %cst_62 : f32 to vector<8x32xf32>
    %93 = arith.mulf %92, %91 : vector<8x32xf32>
    %94 = math.tanh %93 : vector<8x32xf32>
    %cst_63 = arith.constant 5.000000e-01 : f32
    %95 = vector.broadcast %cst_63 : f32 to vector<8x32xf32>
    %96 = arith.mulf %95, %94 : vector<8x32xf32>
    %cst_64 = arith.constant 5.000000e-01 : f32
    %97 = vector.broadcast %cst_64 : f32 to vector<8x32xf32>
    %98 = arith.addf %96, %97 : vector<8x32xf32>
    %99 = vector.extract_strided_slice %90 {offsets = [0, 32], sizes = [8, 32], strides = [1, 1]} : vector<8x128xf32> to vector<8x32xf32>
    %cst_65 = arith.constant 5.000000e-01 : f32
    %100 = vector.broadcast %cst_65 : f32 to vector<8x32xf32>
    %101 = arith.mulf %100, %99 : vector<8x32xf32>
    %102 = math.tanh %101 : vector<8x32xf32>
    %cst_66 = arith.constant 5.000000e-01 : f32
    %103 = vector.broadcast %cst_66 : f32 to vector<8x32xf32>
    %104 = arith.mulf %103, %102 : vector<8x32xf32>
    %cst_67 = arith.constant 5.000000e-01 : f32
    %105 = vector.broadcast %cst_67 : f32 to vector<8x32xf32>
    %106 = arith.addf %104, %105 : vector<8x32xf32>
    %107 = vector.extract_strided_slice %90 {offsets = [0, 64], sizes = [8, 32], strides = [1, 1]} : vector<8x128xf32> to vector<8x32xf32>
    %108 = math.tanh %107 : vector<8x32xf32>
    %109 = vector.extract_strided_slice %90 {offsets = [0, 96], sizes = [8, 32], strides = [1, 1]} : vector<8x128xf32> to vector<8x32xf32>
    %cst_68 = arith.constant 5.000000e-01 : f32
    %110 = vector.broadcast %cst_68 : f32 to vector<8x32xf32>
    %111 = arith.mulf %110, %109 : vector<8x32xf32>
    %112 = math.tanh %111 : vector<8x32xf32>
    %cst_69 = arith.constant 5.000000e-01 : f32
    %113 = vector.broadcast %cst_69 : f32 to vector<8x32xf32>
    %114 = arith.mulf %113, %112 : vector<8x32xf32>
    %cst_70 = arith.constant 5.000000e-01 : f32
    %115 = vector.broadcast %cst_70 : f32 to vector<8x32xf32>
    %116 = arith.addf %114, %115 : vector<8x32xf32>
    %117 = arith.mulf %106, %88 : vector<8x32xf32>
    %118 = arith.mulf %98, %108 : vector<8x32xf32>
    %119 = arith.addf %117, %118 : vector<8x32xf32>
    %120 = math.tanh %119 : vector<8x32xf32>
    %121 = arith.mulf %116, %120 : vector<8x32xf32>
    %122 = vector.broadcast %84 : i32 to vector<8x1xi32>
    %123 = arith.cmpi slt, %122, %19 : vector<8x1xi32>
    %124 = vector.shape_cast %123 : vector<8x1xi1> to vector<8x1xi1>
    %125 = vector.broadcast %124 : vector<8x1xi1> to vector<8x32xi1>
    %c0_71 = arith.constant 0 : index
    %c0_72 = arith.constant 0 : index
    %126 = vector.load %arg16[%c0_71, %c0_72] : memref<8x32xf32, #tpu.memory_space<vmem>>, vector<8x32xf32>
    %127 = arith.select %125, %121, %126 : vector<8x32xi1>, vector<8x32xf32>
    %c0_73 = arith.constant 0 : index
    %c0_74 = arith.constant 0 : index
    %128 = vector.load %arg16[%c0_73, %c0_74] : memref<8x32xf32, #tpu.memory_space<vmem>>, vector<8x32xf32>
    tpu.vector_store %arg16[%c0_73, %c0_74], %127 {strides = array<i32>} : memref<8x32xf32, #tpu.memory_space<vmem>>, vector<8x32xf32>,
    %c0_75 = arith.constant 0 : index
    %c0_76 = arith.constant 0 : index
    %129 = vector.load %arg17[%c0_75, %c0_76] : memref<8x32xf32, #tpu.memory_space<vmem>>, vector<8x32xf32>
    %130 = arith.select %125, %119, %129 : vector<8x32xi1>, vector<8x32xf32>
    %c0_77 = arith.constant 0 : index
    %c0_78 = arith.constant 0 : index
    %131 = vector.load %arg17[%c0_77, %c0_78] : memref<8x32xf32, #tpu.memory_space<vmem>>, vector<8x32xf32>
    tpu.vector_store %arg17[%c0_77, %c0_78], %130 {strides = array<i32>} : memref<8x32xf32, #tpu.memory_space<vmem>>, vector<8x32xf32>,
    %cst_79 = arith.constant 0.000000e+00 : f32
    %132 = vector.broadcast %cst_79 : f32 to vector<8x32xf32>
    %133 = arith.select %125, %121, %132 : vector<8x32xi1>, vector<8x32xf32>
    %c0_80 = arith.constant 0 : index
    %134 = arith.index_cast %81 : i32 to index
    %c0_81 = arith.constant 0 : index
    %135 = vector.load %arg11[%c0_80, %134, %c0_81] : memref<1x64x32xf32, #tpu.memory_space<vmem>>, vector<1x8x32xf32>
    %136 = vector.shape_cast %135 : vector<1x8x32xf32> to vector<8x32xf32>
    %137 = vector.shape_cast %133 : vector<8x32xf32> to vector<1x8x32xf32>
    tpu.vector_store %arg11[%c0_80, %134, %c0_81], %137 {strides = array<i32>} : memref<1x64x32xf32, #tpu.memory_space<vmem>>, vector<1x8x32xf32>,
    %c1_i32 = arith.constant 1 : i32
    %c8_i32_82 = arith.constant 8 : i32
    %138 = arith.muli %c1_i32, %c8_i32_82 : i32
    %139 = tpu.assume_multiple %138, 8 : i32
    %c8_i32_83 = arith.constant 8 : i32
    %140 = arith.muli %arg0, %c8_i32_83 : i32
    %141 = arith.addi %140, %c1_i32 : i32
    %142 = arith.index_cast %139 : i32 to index
    %c0_84 = arith.constant 0 : index
    %143 = vector.load %arg12[%142, %c0_84] : memref<64x128xf32, #tpu.memory_space<vmem>>, vector<8x128xf32>
    %c0_85 = arith.constant 0 : index
    %c0_86 = arith.constant 0 : index
    %144 = vector.load %arg14[%c0_85, %c0_86] : memref<8x32xf32, #tpu.memory_space<vmem>>, vector<8x32xf32>
    %c0_87 = arith.constant 0 : index
    %c0_88 = arith.constant 0 : index
    %145 = vector.load %arg15[%c0_87, %c0_88] : memref<8x32xf32, #tpu.memory_space<vmem>>, vector<8x32xf32>
    %cst_89 = arith.constant dense<0.000000e+00> : vector<8x128xf32>
    %146 = tpu.matmul %144, %20, %cst_89 {dimension_numbers = #tpu.dot_dimension_numbers<[1], [0], [0], [1], [0, 0, 1, 1], [], []>} : vector<8x32xf32>, vector<32x128xf32>, vector<8x128xf32> -> vector<8x128xf32>
    %147 = arith.addf %143, %146 : vector<8x128xf32>
    %148 = vector.extract_strided_slice %147 {offsets = [0, 0], sizes = [8, 32], strides = [1, 1]} : vector<8x128xf32> to vector<8x32xf32>
    %cst_90 = arith.constant 5.000000e-01 : f32
    %149 = vector.broadcast %cst_90 : f32 to vector<8x32xf32>
    %150 = arith.mulf %149, %148 : vector<8x32xf32>
    %151 = math.tanh %150 : vector<8x32xf32>
    %cst_91 = arith.constant 5.000000e-01 : f32
    %152 = vector.broadcast %cst_91 : f32 to vector<8x32xf32>
    %153 = arith.mulf %152, %151 : vector<8x32xf32>
    %cst_92 = arith.constant 5.000000e-01 : f32
    %154 = vector.broadcast %cst_92 : f32 to vector<8x32xf32>
    %155 = arith.addf %153, %154 : vector<8x32xf32>
    %156 = vector.extract_strided_slice %147 {offsets = [0, 32], sizes = [8, 32], strides = [1, 1]} : vector<8x128xf32> to vector<8x32xf32>
    %cst_93 = arith.constant 5.000000e-01 : f32
    %157 = vector.broadcast %cst_93 : f32 to vector<8x32xf32>
    %158 = arith.mulf %157, %156 : vector<8x32xf32>
    %159 = math.tanh %158 : vector<8x32xf32>
    %cst_94 = arith.constant 5.000000e-01 : f32
    %160 = vector.broadcast %cst_94 : f32 to vector<8x32xf32>
    %161 = arith.mulf %160, %159 : vector<8x32xf32>
    %cst_95 = arith.constant 5.000000e-01 : f32
    %162 = vector.broadcast %cst_95 : f32 to vector<8x32xf32>
    %163 = arith.addf %161, %162 : vector<8x32xf32>
    %164 = vector.extract_strided_slice %147 {offsets = [0, 64], sizes = [8, 32], strides = [1, 1]} : vector<8x128xf32> to vector<8x32xf32>
    %165 = math.tanh %164 : vector<8x32xf32>
    %166 = vector.extract_strided_slice %147 {offsets = [0, 96], sizes = [8, 32], strides = [1, 1]} : vector<8x128xf32> to vector<8x32xf32>
    %cst_96 = arith.constant 5.000000e-01 : f32
    %167 = vector.broadcast %cst_96 : f32 to vector<8x32xf32>
    %168 = arith.mulf %167, %166 : vector<8x32xf32>
    %169 = math.tanh %168 : vector<8x32xf32>
    %cst_97 = arith.constant 5.000000e-01 : f32
    %170 = vector.broadcast %cst_97 : f32 to vector<8x32xf32>
    %171 = arith.mulf %170, %169 : vector<8x32xf32>
    %cst_98 = arith.constant 5.000000e-01 : f32
    %172 = vector.broadcast %cst_98 : f32 to vector<8x32xf32>
    %173 = arith.addf %171, %172 : vector<8x32xf32>
    %174 = arith.mulf %163, %145 : vector<8x32xf32>
    %175 = arith.mulf %155, %165 : vector<8x32xf32>
    %176 = arith.addf %174, %175 : vector<8x32xf32>
    %177 = math.tanh %176 : vector<8x32xf32>
    %178 = arith.mulf %173, %177 : vector<8x32xf32>
    %179 = vector.broadcast %141 : i32 to vector<8x1xi32>
    %180 = arith.cmpi slt, %179, %19 : vector<8x1xi32>
    %181 = vector.shape_cast %180 : vector<8x1xi1> to vector<8x1xi1>
    %182 = vector.broadcast %181 : vector<8x1xi1> to vector<8x32xi1>
    %c0_99 = arith.constant 0 : index
    %c0_100 = arith.constant 0 : index
    %183 = vector.load %arg14[%c0_99, %c0_100] : memref<8x32xf32, #tpu.memory_space<vmem>>, vector<8x32xf32>
    %184 = arith.select %182, %178, %183 : vector<8x32xi1>, vector<8x32xf32>
    %c0_101 = arith.constant 0 : index
    %c0_102 = arith.constant 0 : index
    %185 = vector.load %arg14[%c0_101, %c0_102] : memref<8x32xf32, #tpu.memory_space<vmem>>, vector<8x32xf32>
    tpu.vector_store %arg14[%c0_101, %c0_102], %184 {strides = array<i32>} : memref<8x32xf32, #tpu.memory_space<vmem>>, vector<8x32xf32>,
    %c0_103 = arith.constant 0 : index
    %c0_104 = arith.constant 0 : index
    %186 = vector.load %arg15[%c0_103, %c0_104] : memref<8x32xf32, #tpu.memory_space<vmem>>, vector<8x32xf32>
    %187 = arith.select %182, %176, %186 : vector<8x32xi1>, vector<8x32xf32>
    %c0_105 = arith.constant 0 : index
    %c0_106 = arith.constant 0 : index
    %188 = vector.load %arg15[%c0_105, %c0_106] : memref<8x32xf32, #tpu.memory_space<vmem>>, vector<8x32xf32>
    tpu.vector_store %arg15[%c0_105, %c0_106], %187 {strides = array<i32>} : memref<8x32xf32, #tpu.memory_space<vmem>>, vector<8x32xf32>,
    %cst_107 = arith.constant 0.000000e+00 : f32
    %189 = vector.broadcast %cst_107 : f32 to vector<8x32xf32>
    %190 = arith.select %182, %178, %189 : vector<8x32xi1>, vector<8x32xf32>
    %c0_108 = arith.constant 0 : index
    %191 = arith.index_cast %139 : i32 to index
    %c0_109 = arith.constant 0 : index
    %192 = vector.load %arg10[%c0_108, %191, %c0_109] : memref<1x64x32xf32, #tpu.memory_space<vmem>>, vector<1x8x32xf32>
    %193 = vector.shape_cast %192 : vector<1x8x32xf32> to vector<8x32xf32>
    %194 = vector.shape_cast %190 : vector<8x32xf32> to vector<1x8x32xf32>
    tpu.vector_store %arg10[%c0_108, %191, %c0_109], %194 {strides = array<i32>} : memref<1x64x32xf32, #tpu.memory_space<vmem>>, vector<1x8x32xf32>,
    %c7_i32_110 = arith.constant 7 : i32
    %195 = arith.subi %c7_i32_110, %c1_i32 : i32
    %c8_i32_111 = arith.constant 8 : i32
    %196 = arith.muli %195, %c8_i32_111 : i32
    %197 = tpu.assume_multiple %196, 8 : i32
    %c0_i32_112 = arith.constant 0 : i32
    %198 = arith.subi %c0_i32_112, %arg0 : i32
    %c8_i32_113 = arith.constant 8 : i32
    %199 = arith.muli %198, %c8_i32_113 : i32
    %200 = arith.addi %199, %195 : i32
    %201 = arith.index_cast %197 : i32 to index
    %c0_114 = arith.constant 0 : index
    %202 = vector.load %arg13[%201, %c0_114] : memref<64x128xf32, #tpu.memory_space<vmem>>, vector<8x128xf32>
    %c0_115 = arith.constant 0 : index
    %c0_116 = arith.constant 0 : index
    %203 = vector.load %arg16[%c0_115, %c0_116] : memref<8x32xf32, #tpu.memory_space<vmem>>, vector<8x32xf32>
    %c0_117 = arith.constant 0 : index
    %c0_118 = arith.constant 0 : index
    %204 = vector.load %arg17[%c0_117, %c0_118] : memref<8x32xf32, #tpu.memory_space<vmem>>, vector<8x32xf32>
    %cst_119 = arith.constant dense<0.000000e+00> : vector<8x128xf32>
    %205 = tpu.matmul %203, %21, %cst_119 {dimension_numbers = #tpu.dot_dimension_numbers<[1], [0], [0], [1], [0, 0, 1, 1], [], []>} : vector<8x32xf32>, vector<32x128xf32>, vector<8x128xf32> -> vector<8x128xf32>
    %206 = arith.addf %202, %205 : vector<8x128xf32>
    %207 = vector.extract_strided_slice %206 {offsets = [0, 0], sizes = [8, 32], strides = [1, 1]} : vector<8x128xf32> to vector<8x32xf32>
    %cst_120 = arith.constant 5.000000e-01 : f32
    %208 = vector.broadcast %cst_120 : f32 to vector<8x32xf32>
    %209 = arith.mulf %208, %207 : vector<8x32xf32>
    %210 = math.tanh %209 : vector<8x32xf32>
    %cst_121 = arith.constant 5.000000e-01 : f32
    %211 = vector.broadcast %cst_121 : f32 to vector<8x32xf32>
    %212 = arith.mulf %211, %210 : vector<8x32xf32>
    %cst_122 = arith.constant 5.000000e-01 : f32
    %213 = vector.broadcast %cst_122 : f32 to vector<8x32xf32>
    %214 = arith.addf %212, %213 : vector<8x32xf32>
    %215 = vector.extract_strided_slice %206 {offsets = [0, 32], sizes = [8, 32], strides = [1, 1]} : vector<8x128xf32> to vector<8x32xf32>
    %cst_123 = arith.constant 5.000000e-01 : f32
    %216 = vector.broadcast %cst_123 : f32 to vector<8x32xf32>
    %217 = arith.mulf %216, %215 : vector<8x32xf32>
    %218 = math.tanh %217 : vector<8x32xf32>
    %cst_124 = arith.constant 5.000000e-01 : f32
    %219 = vector.broadcast %cst_124 : f32 to vector<8x32xf32>
    %220 = arith.mulf %219, %218 : vector<8x32xf32>
    %cst_125 = arith.constant 5.000000e-01 : f32
    %221 = vector.broadcast %cst_125 : f32 to vector<8x32xf32>
    %222 = arith.addf %220, %221 : vector<8x32xf32>
    %223 = vector.extract_strided_slice %206 {offsets = [0, 64], sizes = [8, 32], strides = [1, 1]} : vector<8x128xf32> to vector<8x32xf32>
    %224 = math.tanh %223 : vector<8x32xf32>
    %225 = vector.extract_strided_slice %206 {offsets = [0, 96], sizes = [8, 32], strides = [1, 1]} : vector<8x128xf32> to vector<8x32xf32>
    %cst_126 = arith.constant 5.000000e-01 : f32
    %226 = vector.broadcast %cst_126 : f32 to vector<8x32xf32>
    %227 = arith.mulf %226, %225 : vector<8x32xf32>
    %228 = math.tanh %227 : vector<8x32xf32>
    %cst_127 = arith.constant 5.000000e-01 : f32
    %229 = vector.broadcast %cst_127 : f32 to vector<8x32xf32>
    %230 = arith.mulf %229, %228 : vector<8x32xf32>
    %cst_128 = arith.constant 5.000000e-01 : f32
    %231 = vector.broadcast %cst_128 : f32 to vector<8x32xf32>
    %232 = arith.addf %230, %231 : vector<8x32xf32>
    %233 = arith.mulf %222, %204 : vector<8x32xf32>
    %234 = arith.mulf %214, %224 : vector<8x32xf32>
    %235 = arith.addf %233, %234 : vector<8x32xf32>
    %236 = math.tanh %235 : vector<8x32xf32>
    %237 = arith.mulf %232, %236 : vector<8x32xf32>
    %238 = vector.broadcast %200 : i32 to vector<8x1xi32>
    %239 = arith.cmpi slt, %238, %19 : vector<8x1xi32>
    %240 = vector.shape_cast %239 : vector<8x1xi1> to vector<8x1xi1>
    %241 = vector.broadcast %240 : vector<8x1xi1> to vector<8x32xi1>
    %c0_129 = arith.constant 0 : index
    %c0_130 = arith.constant 0 : index
    %242 = vector.load %arg16[%c0_129, %c0_130] : memref<8x32xf32, #tpu.memory_space<vmem>>, vector<8x32xf32>
    %243 = arith.select %241, %237, %242 : vector<8x32xi1>, vector<8x32xf32>
    %c0_131 = arith.constant 0 : index
    %c0_132 = arith.constant 0 : index
    %244 = vector.load %arg16[%c0_131, %c0_132] : memref<8x32xf32, #tpu.memory_space<vmem>>, vector<8x32xf32>
    tpu.vector_store %arg16[%c0_131, %c0_132], %243 {strides = array<i32>} : memref<8x32xf32, #tpu.memory_space<vmem>>, vector<8x32xf32>,
    %c0_133 = arith.constant 0 : index
    %c0_134 = arith.constant 0 : index
    %245 = vector.load %arg17[%c0_133, %c0_134] : memref<8x32xf32, #tpu.memory_space<vmem>>, vector<8x32xf32>
    %246 = arith.select %241, %235, %245 : vector<8x32xi1>, vector<8x32xf32>
    %c0_135 = arith.constant 0 : index
    %c0_136 = arith.constant 0 : index
    %247 = vector.load %arg17[%c0_135, %c0_136] : memref<8x32xf32, #tpu.memory_space<vmem>>, vector<8x32xf32>
    tpu.vector_store %arg17[%c0_135, %c0_136], %246 {strides = array<i32>} : memref<8x32xf32, #tpu.memory_space<vmem>>, vector<8x32xf32>,
    %cst_137 = arith.constant 0.000000e+00 : f32
    %248 = vector.broadcast %cst_137 : f32 to vector<8x32xf32>
    %249 = arith.select %241, %237, %248 : vector<8x32xi1>, vector<8x32xf32>
    %c0_138 = arith.constant 0 : index
    %250 = arith.index_cast %197 : i32 to index
    %c0_139 = arith.constant 0 : index
    %251 = vector.load %arg11[%c0_138, %250, %c0_139] : memref<1x64x32xf32, #tpu.memory_space<vmem>>, vector<1x8x32xf32>
    %252 = vector.shape_cast %251 : vector<1x8x32xf32> to vector<8x32xf32>
    %253 = vector.shape_cast %249 : vector<8x32xf32> to vector<1x8x32xf32>
    tpu.vector_store %arg11[%c0_138, %250, %c0_139], %253 {strides = array<i32>} : memref<1x64x32xf32, #tpu.memory_space<vmem>>, vector<1x8x32xf32>,
    %c2_i32 = arith.constant 2 : i32
    %c8_i32_140 = arith.constant 8 : i32
    %254 = arith.muli %c2_i32, %c8_i32_140 : i32
    %255 = tpu.assume_multiple %254, 8 : i32
    %c8_i32_141 = arith.constant 8 : i32
    %256 = arith.muli %arg0, %c8_i32_141 : i32
    %257 = arith.addi %256, %c2_i32 : i32
    %258 = arith.index_cast %255 : i32 to index
    %c0_142 = arith.constant 0 : index
    %259 = vector.load %arg12[%258, %c0_142] : memref<64x128xf32, #tpu.memory_space<vmem>>, vector<8x128xf32>
    %c0_143 = arith.constant 0 : index
    %c0_144 = arith.constant 0 : index
    %260 = vector.load %arg14[%c0_143, %c0_144] : memref<8x32xf32, #tpu.memory_space<vmem>>, vector<8x32xf32>
    %c0_145 = arith.constant 0 : index
    %c0_146 = arith.constant 0 : index
    %261 = vector.load %arg15[%c0_145, %c0_146] : memref<8x32xf32, #tpu.memory_space<vmem>>, vector<8x32xf32>
    %cst_147 = arith.constant dense<0.000000e+00> : vector<8x128xf32>
    %262 = tpu.matmul %260, %20, %cst_147 {dimension_numbers = #tpu.dot_dimension_numbers<[1], [0], [0], [1], [0, 0, 1, 1], [], []>} : vector<8x32xf32>, vector<32x128xf32>, vector<8x128xf32> -> vector<8x128xf32>
    %263 = arith.addf %259, %262 : vector<8x128xf32>
    %264 = vector.extract_strided_slice %263 {offsets = [0, 0], sizes = [8, 32], strides = [1, 1]} : vector<8x128xf32> to vector<8x32xf32>
    %cst_148 = arith.constant 5.000000e-01 : f32
    %265 = vector.broadcast %cst_148 : f32 to vector<8x32xf32>
    %266 = arith.mulf %265, %264 : vector<8x32xf32>
    %267 = math.tanh %266 : vector<8x32xf32>
    %cst_149 = arith.constant 5.000000e-01 : f32
    %268 = vector.broadcast %cst_149 : f32 to vector<8x32xf32>
    %269 = arith.mulf %268, %267 : vector<8x32xf32>
    %cst_150 = arith.constant 5.000000e-01 : f32
    %270 = vector.broadcast %cst_150 : f32 to vector<8x32xf32>
    %271 = arith.addf %269, %270 : vector<8x32xf32>
    %272 = vector.extract_strided_slice %263 {offsets = [0, 32], sizes = [8, 32], strides = [1, 1]} : vector<8x128xf32> to vector<8x32xf32>
    %cst_151 = arith.constant 5.000000e-01 : f32
    %273 = vector.broadcast %cst_151 : f32 to vector<8x32xf32>
    %274 = arith.mulf %273, %272 : vector<8x32xf32>
    %275 = math.tanh %274 : vector<8x32xf32>
    %cst_152 = arith.constant 5.000000e-01 : f32
    %276 = vector.broadcast %cst_152 : f32 to vector<8x32xf32>
    %277 = arith.mulf %276, %275 : vector<8x32xf32>
    %cst_153 = arith.constant 5.000000e-01 : f32
    %278 = vector.broadcast %cst_153 : f32 to vector<8x32xf32>
    %279 = arith.addf %277, %278 : vector<8x32xf32>
    %280 = vector.extract_strided_slice %263 {offsets = [0, 64], sizes = [8, 32], strides = [1, 1]} : vector<8x128xf32> to vector<8x32xf32>
    %281 = math.tanh %280 : vector<8x32xf32>
    %282 = vector.extract_strided_slice %263 {offsets = [0, 96], sizes = [8, 32], strides = [1, 1]} : vector<8x128xf32> to vector<8x32xf32>
    %cst_154 = arith.constant 5.000000e-01 : f32
    %283 = vector.broadcast %cst_154 : f32 to vector<8x32xf32>
    %284 = arith.mulf %283, %282 : vector<8x32xf32>
    %285 = math.tanh %284 : vector<8x32xf32>
    %cst_155 = arith.constant 5.000000e-01 : f32
    %286 = vector.broadcast %cst_155 : f32 to vector<8x32xf32>
    %287 = arith.mulf %286, %285 : vector<8x32xf32>
    %cst_156 = arith.constant 5.000000e-01 : f32
    %288 = vector.broadcast %cst_156 : f32 to vector<8x32xf32>
    %289 = arith.addf %287, %288 : vector<8x32xf32>
    %290 = arith.mulf %279, %261 : vector<8x32xf32>
    %291 = arith.mulf %271, %281 : vector<8x32xf32>
    %292 = arith.addf %290, %291 : vector<8x32xf32>
    %293 = math.tanh %292 : vector<8x32xf32>
    %294 = arith.mulf %289, %293 : vector<8x32xf32>
    %295 = vector.broadcast %257 : i32 to vector<8x1xi32>
    %296 = arith.cmpi slt, %295, %19 : vector<8x1xi32>
    %297 = vector.shape_cast %296 : vector<8x1xi1> to vector<8x1xi1>
    %298 = vector.broadcast %297 : vector<8x1xi1> to vector<8x32xi1>
    %c0_157 = arith.constant 0 : index
    %c0_158 = arith.constant 0 : index
    %299 = vector.load %arg14[%c0_157, %c0_158] : memref<8x32xf32, #tpu.memory_space<vmem>>, vector<8x32xf32>
    %300 = arith.select %298, %294, %299 : vector<8x32xi1>, vector<8x32xf32>
    %c0_159 = arith.constant 0 : index
    %c0_160 = arith.constant 0 : index
    %301 = vector.load %arg14[%c0_159, %c0_160] : memref<8x32xf32, #tpu.memory_space<vmem>>, vector<8x32xf32>
    tpu.vector_store %arg14[%c0_159, %c0_160], %300 {strides = array<i32>} : memref<8x32xf32, #tpu.memory_space<vmem>>, vector<8x32xf32>,
    %c0_161 = arith.constant 0 : index
    %c0_162 = arith.constant 0 : index
    %302 = vector.load %arg15[%c0_161, %c0_162] : memref<8x32xf32, #tpu.memory_space<vmem>>, vector<8x32xf32>
    %303 = arith.select %298, %292, %302 : vector<8x32xi1>, vector<8x32xf32>
    %c0_163 = arith.constant 0 : index
    %c0_164 = arith.constant 0 : index
    %304 = vector.load %arg15[%c0_163, %c0_164] : memref<8x32xf32, #tpu.memory_space<vmem>>, vector<8x32xf32>
    tpu.vector_store %arg15[%c0_163, %c0_164], %303 {strides = array<i32>} : memref<8x32xf32, #tpu.memory_space<vmem>>, vector<8x32xf32>,
    %cst_165 = arith.constant 0.000000e+00 : f32
    %305 = vector.broadcast %cst_165 : f32 to vector<8x32xf32>
    %306 = arith.select %298, %294, %305 : vector<8x32xi1>, vector<8x32xf32>
    %c0_166 = arith.constant 0 : index
    %307 = arith.index_cast %255 : i32 to index
    %c0_167 = arith.constant 0 : index
    %308 = vector.load %arg10[%c0_166, %307, %c0_167] : memref<1x64x32xf32, #tpu.memory_space<vmem>>, vector<1x8x32xf32>
    %309 = vector.shape_cast %308 : vector<1x8x32xf32> to vector<8x32xf32>
    %310 = vector.shape_cast %306 : vector<8x32xf32> to vector<1x8x32xf32>
    tpu.vector_store %arg10[%c0_166, %307, %c0_167], %310 {strides = array<i32>} : memref<1x64x32xf32, #tpu.memory_space<vmem>>, vector<1x8x32xf32>,
    %c7_i32_168 = arith.constant 7 : i32
    %311 = arith.subi %c7_i32_168, %c2_i32 : i32
    %c8_i32_169 = arith.constant 8 : i32
    %312 = arith.muli %311, %c8_i32_169 : i32
    %313 = tpu.assume_multiple %312, 8 : i32
    %c0_i32_170 = arith.constant 0 : i32
    %314 = arith.subi %c0_i32_170, %arg0 : i32
    %c8_i32_171 = arith.constant 8 : i32
    %315 = arith.muli %314, %c8_i32_171 : i32
    %316 = arith.addi %315, %311 : i32
    %317 = arith.index_cast %313 : i32 to index
    %c0_172 = arith.constant 0 : index
    %318 = vector.load %arg13[%317, %c0_172] : memref<64x128xf32, #tpu.memory_space<vmem>>, vector<8x128xf32>
    %c0_173 = arith.constant 0 : index
    %c0_174 = arith.constant 0 : index
    %319 = vector.load %arg16[%c0_173, %c0_174] : memref<8x32xf32, #tpu.memory_space<vmem>>, vector<8x32xf32>
    %c0_175 = arith.constant 0 : index
    %c0_176 = arith.constant 0 : index
    %320 = vector.load %arg17[%c0_175, %c0_176] : memref<8x32xf32, #tpu.memory_space<vmem>>, vector<8x32xf32>
    %cst_177 = arith.constant dense<0.000000e+00> : vector<8x128xf32>
    %321 = tpu.matmul %319, %21, %cst_177 {dimension_numbers = #tpu.dot_dimension_numbers<[1], [0], [0], [1], [0, 0, 1, 1], [], []>} : vector<8x32xf32>, vector<32x128xf32>, vector<8x128xf32> -> vector<8x128xf32>
    %322 = arith.addf %318, %321 : vector<8x128xf32>
    %323 = vector.extract_strided_slice %322 {offsets = [0, 0], sizes = [8, 32], strides = [1, 1]} : vector<8x128xf32> to vector<8x32xf32>
    %cst_178 = arith.constant 5.000000e-01 : f32
    %324 = vector.broadcast %cst_178 : f32 to vector<8x32xf32>
    %325 = arith.mulf %324, %323 : vector<8x32xf32>
    %326 = math.tanh %325 : vector<8x32xf32>
    %cst_179 = arith.constant 5.000000e-01 : f32
    %327 = vector.broadcast %cst_179 : f32 to vector<8x32xf32>
    %328 = arith.mulf %327, %326 : vector<8x32xf32>
    %cst_180 = arith.constant 5.000000e-01 : f32
    %329 = vector.broadcast %cst_180 : f32 to vector<8x32xf32>
    %330 = arith.addf %328, %329 : vector<8x32xf32>
    %331 = vector.extract_strided_slice %322 {offsets = [0, 32], sizes = [8, 32], strides = [1, 1]} : vector<8x128xf32> to vector<8x32xf32>
    %cst_181 = arith.constant 5.000000e-01 : f32
    %332 = vector.broadcast %cst_181 : f32 to vector<8x32xf32>
    %333 = arith.mulf %332, %331 : vector<8x32xf32>
    %334 = math.tanh %333 : vector<8x32xf32>
    %cst_182 = arith.constant 5.000000e-01 : f32
    %335 = vector.broadcast %cst_182 : f32 to vector<8x32xf32>
    %336 = arith.mulf %335, %334 : vector<8x32xf32>
    %cst_183 = arith.constant 5.000000e-01 : f32
    %337 = vector.broadcast %cst_183 : f32 to vector<8x32xf32>
    %338 = arith.addf %336, %337 : vector<8x32xf32>
    %339 = vector.extract_strided_slice %322 {offsets = [0, 64], sizes = [8, 32], strides = [1, 1]} : vector<8x128xf32> to vector<8x32xf32>
    %340 = math.tanh %339 : vector<8x32xf32>
    %341 = vector.extract_strided_slice %322 {offsets = [0, 96], sizes = [8, 32], strides = [1, 1]} : vector<8x128xf32> to vector<8x32xf32>
    %cst_184 = arith.constant 5.000000e-01 : f32
    %342 = vector.broadcast %cst_184 : f32 to vector<8x32xf32>
    %343 = arith.mulf %342, %341 : vector<8x32xf32>
    %344 = math.tanh %343 : vector<8x32xf32>
    %cst_185 = arith.constant 5.000000e-01 : f32
    %345 = vector.broadcast %cst_185 : f32 to vector<8x32xf32>
    %346 = arith.mulf %345, %344 : vector<8x32xf32>
    %cst_186 = arith.constant 5.000000e-01 : f32
    %347 = vector.broadcast %cst_186 : f32 to vector<8x32xf32>
    %348 = arith.addf %346, %347 : vector<8x32xf32>
    %349 = arith.mulf %338, %320 : vector<8x32xf32>
    %350 = arith.mulf %330, %340 : vector<8x32xf32>
    %351 = arith.addf %349, %350 : vector<8x32xf32>
    %352 = math.tanh %351 : vector<8x32xf32>
    %353 = arith.mulf %348, %352 : vector<8x32xf32>
    %354 = vector.broadcast %316 : i32 to vector<8x1xi32>
    %355 = arith.cmpi slt, %354, %19 : vector<8x1xi32>
    %356 = vector.shape_cast %355 : vector<8x1xi1> to vector<8x1xi1>
    %357 = vector.broadcast %356 : vector<8x1xi1> to vector<8x32xi1>
    %c0_187 = arith.constant 0 : index
    %c0_188 = arith.constant 0 : index
    %358 = vector.load %arg16[%c0_187, %c0_188] : memref<8x32xf32, #tpu.memory_space<vmem>>, vector<8x32xf32>
    %359 = arith.select %357, %353, %358 : vector<8x32xi1>, vector<8x32xf32>
    %c0_189 = arith.constant 0 : index
    %c0_190 = arith.constant 0 : index
    %360 = vector.load %arg16[%c0_189, %c0_190] : memref<8x32xf32, #tpu.memory_space<vmem>>, vector<8x32xf32>
    tpu.vector_store %arg16[%c0_189, %c0_190], %359 {strides = array<i32>} : memref<8x32xf32, #tpu.memory_space<vmem>>, vector<8x32xf32>,
    %c0_191 = arith.constant 0 : index
    %c0_192 = arith.constant 0 : index
    %361 = vector.load %arg17[%c0_191, %c0_192] : memref<8x32xf32, #tpu.memory_space<vmem>>, vector<8x32xf32>
    %362 = arith.select %357, %351, %361 : vector<8x32xi1>, vector<8x32xf32>
    %c0_193 = arith.constant 0 : index
    %c0_194 = arith.constant 0 : index
    %363 = vector.load %arg17[%c0_193, %c0_194] : memref<8x32xf32, #tpu.memory_space<vmem>>, vector<8x32xf32>
    tpu.vector_store %arg17[%c0_193, %c0_194], %362 {strides = array<i32>} : memref<8x32xf32, #tpu.memory_space<vmem>>, vector<8x32xf32>,
    %cst_195 = arith.constant 0.000000e+00 : f32
    %364 = vector.broadcast %cst_195 : f32 to vector<8x32xf32>
    %365 = arith.select %357, %353, %364 : vector<8x32xi1>, vector<8x32xf32>
    %c0_196 = arith.constant 0 : index
    %366 = arith.index_cast %313 : i32 to index
    %c0_197 = arith.constant 0 : index
    %367 = vector.load %arg11[%c0_196, %366, %c0_197] : memref<1x64x32xf32, #tpu.memory_space<vmem>>, vector<1x8x32xf32>
    %368 = vector.shape_cast %367 : vector<1x8x32xf32> to vector<8x32xf32>
    %369 = vector.shape_cast %365 : vector<8x32xf32> to vector<1x8x32xf32>
    tpu.vector_store %arg11[%c0_196, %366, %c0_197], %369 {strides = array<i32>} : memref<1x64x32xf32, #tpu.memory_space<vmem>>, vector<1x8x32xf32>,
    %c3_i32 = arith.constant 3 : i32
    %c8_i32_198 = arith.constant 8 : i32
    %370 = arith.muli %c3_i32, %c8_i32_198 : i32
    %371 = tpu.assume_multiple %370, 8 : i32
    %c8_i32_199 = arith.constant 8 : i32
    %372 = arith.muli %arg0, %c8_i32_199 : i32
    %373 = arith.addi %372, %c3_i32 : i32
    %374 = arith.index_cast %371 : i32 to index
    %c0_200 = arith.constant 0 : index
    %375 = vector.load %arg12[%374, %c0_200] : memref<64x128xf32, #tpu.memory_space<vmem>>, vector<8x128xf32>
    %c0_201 = arith.constant 0 : index
    %c0_202 = arith.constant 0 : index
    %376 = vector.load %arg14[%c0_201, %c0_202] : memref<8x32xf32, #tpu.memory_space<vmem>>, vector<8x32xf32>
    %c0_203 = arith.constant 0 : index
    %c0_204 = arith.constant 0 : index
    %377 = vector.load %arg15[%c0_203, %c0_204] : memref<8x32xf32, #tpu.memory_space<vmem>>, vector<8x32xf32>
    %cst_205 = arith.constant dense<0.000000e+00> : vector<8x128xf32>
    %378 = tpu.matmul %376, %20, %cst_205 {dimension_numbers = #tpu.dot_dimension_numbers<[1], [0], [0], [1], [0, 0, 1, 1], [], []>} : vector<8x32xf32>, vector<32x128xf32>, vector<8x128xf32> -> vector<8x128xf32>
    %379 = arith.addf %375, %378 : vector<8x128xf32>
    %380 = vector.extract_strided_slice %379 {offsets = [0, 0], sizes = [8, 32], strides = [1, 1]} : vector<8x128xf32> to vector<8x32xf32>
    %cst_206 = arith.constant 5.000000e-01 : f32
    %381 = vector.broadcast %cst_206 : f32 to vector<8x32xf32>
    %382 = arith.mulf %381, %380 : vector<8x32xf32>
    %383 = math.tanh %382 : vector<8x32xf32>
    %cst_207 = arith.constant 5.000000e-01 : f32
    %384 = vector.broadcast %cst_207 : f32 to vector<8x32xf32>
    %385 = arith.mulf %384, %383 : vector<8x32xf32>
    %cst_208 = arith.constant 5.000000e-01 : f32
    %386 = vector.broadcast %cst_208 : f32 to vector<8x32xf32>
    %387 = arith.addf %385, %386 : vector<8x32xf32>
    %388 = vector.extract_strided_slice %379 {offsets = [0, 32], sizes = [8, 32], strides = [1, 1]} : vector<8x128xf32> to vector<8x32xf32>
    %cst_209 = arith.constant 5.000000e-01 : f32
    %389 = vector.broadcast %cst_209 : f32 to vector<8x32xf32>
    %390 = arith.mulf %389, %388 : vector<8x32xf32>
    %391 = math.tanh %390 : vector<8x32xf32>
    %cst_210 = arith.constant 5.000000e-01 : f32
    %392 = vector.broadcast %cst_210 : f32 to vector<8x32xf32>
    %393 = arith.mulf %392, %391 : vector<8x32xf32>
    %cst_211 = arith.constant 5.000000e-01 : f32
    %394 = vector.broadcast %cst_211 : f32 to vector<8x32xf32>
    %395 = arith.addf %393, %394 : vector<8x32xf32>
    %396 = vector.extract_strided_slice %379 {offsets = [0, 64], sizes = [8, 32], strides = [1, 1]} : vector<8x128xf32> to vector<8x32xf32>
    %397 = math.tanh %396 : vector<8x32xf32>
    %398 = vector.extract_strided_slice %379 {offsets = [0, 96], sizes = [8, 32], strides = [1, 1]} : vector<8x128xf32> to vector<8x32xf32>
    %cst_212 = arith.constant 5.000000e-01 : f32
    %399 = vector.broadcast %cst_212 : f32 to vector<8x32xf32>
    %400 = arith.mulf %399, %398 : vector<8x32xf32>
    %401 = math.tanh %400 : vector<8x32xf32>
    %cst_213 = arith.constant 5.000000e-01 : f32
    %402 = vector.broadcast %cst_213 : f32 to vector<8x32xf32>
    %403 = arith.mulf %402, %401 : vector<8x32xf32>
    %cst_214 = arith.constant 5.000000e-01 : f32
    %404 = vector.broadcast %cst_214 : f32 to vector<8x32xf32>
    %405 = arith.addf %403, %404 : vector<8x32xf32>
    %406 = arith.mulf %395, %377 : vector<8x32xf32>
    %407 = arith.mulf %387, %397 : vector<8x32xf32>
    %408 = arith.addf %406, %407 : vector<8x32xf32>
    %409 = math.tanh %408 : vector<8x32xf32>
    %410 = arith.mulf %405, %409 : vector<8x32xf32>
    %411 = vector.broadcast %373 : i32 to vector<8x1xi32>
    %412 = arith.cmpi slt, %411, %19 : vector<8x1xi32>
    %413 = vector.shape_cast %412 : vector<8x1xi1> to vector<8x1xi1>
    %414 = vector.broadcast %413 : vector<8x1xi1> to vector<8x32xi1>
    %c0_215 = arith.constant 0 : index
    %c0_216 = arith.constant 0 : index
    %415 = vector.load %arg14[%c0_215, %c0_216] : memref<8x32xf32, #tpu.memory_space<vmem>>, vector<8x32xf32>
    %416 = arith.select %414, %410, %415 : vector<8x32xi1>, vector<8x32xf32>
    %c0_217 = arith.constant 0 : index
    %c0_218 = arith.constant 0 : index
    %417 = vector.load %arg14[%c0_217, %c0_218] : memref<8x32xf32, #tpu.memory_space<vmem>>, vector<8x32xf32>
    tpu.vector_store %arg14[%c0_217, %c0_218], %416 {strides = array<i32>} : memref<8x32xf32, #tpu.memory_space<vmem>>, vector<8x32xf32>,
    %c0_219 = arith.constant 0 : index
    %c0_220 = arith.constant 0 : index
    %418 = vector.load %arg15[%c0_219, %c0_220] : memref<8x32xf32, #tpu.memory_space<vmem>>, vector<8x32xf32>
    %419 = arith.select %414, %408, %418 : vector<8x32xi1>, vector<8x32xf32>
    %c0_221 = arith.constant 0 : index
    %c0_222 = arith.constant 0 : index
    %420 = vector.load %arg15[%c0_221, %c0_222] : memref<8x32xf32, #tpu.memory_space<vmem>>, vector<8x32xf32>
    tpu.vector_store %arg15[%c0_221, %c0_222], %419 {strides = array<i32>} : memref<8x32xf32, #tpu.memory_space<vmem>>, vector<8x32xf32>,
    %cst_223 = arith.constant 0.000000e+00 : f32
    %421 = vector.broadcast %cst_223 : f32 to vector<8x32xf32>
    %422 = arith.select %414, %410, %421 : vector<8x32xi1>, vector<8x32xf32>
    %c0_224 = arith.constant 0 : index
    %423 = arith.index_cast %371 : i32 to index
    %c0_225 = arith.constant 0 : index
    %424 = vector.load %arg10[%c0_224, %423, %c0_225] : memref<1x64x32xf32, #tpu.memory_space<vmem>>, vector<1x8x32xf32>
    %425 = vector.shape_cast %424 : vector<1x8x32xf32> to vector<8x32xf32>
    %426 = vector.shape_cast %422 : vector<8x32xf32> to vector<1x8x32xf32>
    tpu.vector_store %arg10[%c0_224, %423, %c0_225], %426 {strides = array<i32>} : memref<1x64x32xf32, #tpu.memory_space<vmem>>, vector<1x8x32xf32>,
    %c7_i32_226 = arith.constant 7 : i32
    %427 = arith.subi %c7_i32_226, %c3_i32 : i32
    %c8_i32_227 = arith.constant 8 : i32
    %428 = arith.muli %427, %c8_i32_227 : i32
    %429 = tpu.assume_multiple %428, 8 : i32
    %c0_i32_228 = arith.constant 0 : i32
    %430 = arith.subi %c0_i32_228, %arg0 : i32
    %c8_i32_229 = arith.constant 8 : i32
    %431 = arith.muli %430, %c8_i32_229 : i32
    %432 = arith.addi %431, %427 : i32
    %433 = arith.index_cast %429 : i32 to index
    %c0_230 = arith.constant 0 : index
    %434 = vector.load %arg13[%433, %c0_230] : memref<64x128xf32, #tpu.memory_space<vmem>>, vector<8x128xf32>
    %c0_231 = arith.constant 0 : index
    %c0_232 = arith.constant 0 : index
    %435 = vector.load %arg16[%c0_231, %c0_232] : memref<8x32xf32, #tpu.memory_space<vmem>>, vector<8x32xf32>
    %c0_233 = arith.constant 0 : index
    %c0_234 = arith.constant 0 : index
    %436 = vector.load %arg17[%c0_233, %c0_234] : memref<8x32xf32, #tpu.memory_space<vmem>>, vector<8x32xf32>
    %cst_235 = arith.constant dense<0.000000e+00> : vector<8x128xf32>
    %437 = tpu.matmul %435, %21, %cst_235 {dimension_numbers = #tpu.dot_dimension_numbers<[1], [0], [0], [1], [0, 0, 1, 1], [], []>} : vector<8x32xf32>, vector<32x128xf32>, vector<8x128xf32> -> vector<8x128xf32>
    %438 = arith.addf %434, %437 : vector<8x128xf32>
    %439 = vector.extract_strided_slice %438 {offsets = [0, 0], sizes = [8, 32], strides = [1, 1]} : vector<8x128xf32> to vector<8x32xf32>
    %cst_236 = arith.constant 5.000000e-01 : f32
    %440 = vector.broadcast %cst_236 : f32 to vector<8x32xf32>
    %441 = arith.mulf %440, %439 : vector<8x32xf32>
    %442 = math.tanh %441 : vector<8x32xf32>
    %cst_237 = arith.constant 5.000000e-01 : f32
    %443 = vector.broadcast %cst_237 : f32 to vector<8x32xf32>
    %444 = arith.mulf %443, %442 : vector<8x32xf32>
    %cst_238 = arith.constant 5.000000e-01 : f32
    %445 = vector.broadcast %cst_238 : f32 to vector<8x32xf32>
    %446 = arith.addf %444, %445 : vector<8x32xf32>
    %447 = vector.extract_strided_slice %438 {offsets = [0, 32], sizes = [8, 32], strides = [1, 1]} : vector<8x128xf32> to vector<8x32xf32>
    %cst_239 = arith.constant 5.000000e-01 : f32
    %448 = vector.broadcast %cst_239 : f32 to vector<8x32xf32>
    %449 = arith.mulf %448, %447 : vector<8x32xf32>
    %450 = math.tanh %449 : vector<8x32xf32>
    %cst_240 = arith.constant 5.000000e-01 : f32
    %451 = vector.broadcast %cst_240 : f32 to vector<8x32xf32>
    %452 = arith.mulf %451, %450 : vector<8x32xf32>
    %cst_241 = arith.constant 5.000000e-01 : f32
    %453 = vector.broadcast %cst_241 : f32 to vector<8x32xf32>
    %454 = arith.addf %452, %453 : vector<8x32xf32>
    %455 = vector.extract_strided_slice %438 {offsets = [0, 64], sizes = [8, 32], strides = [1, 1]} : vector<8x128xf32> to vector<8x32xf32>
    %456 = math.tanh %455 : vector<8x32xf32>
    %457 = vector.extract_strided_slice %438 {offsets = [0, 96], sizes = [8, 32], strides = [1, 1]} : vector<8x128xf32> to vector<8x32xf32>
    %cst_242 = arith.constant 5.000000e-01 : f32
    %458 = vector.broadcast %cst_242 : f32 to vector<8x32xf32>
    %459 = arith.mulf %458, %457 : vector<8x32xf32>
    %460 = math.tanh %459 : vector<8x32xf32>
    %cst_243 = arith.constant 5.000000e-01 : f32
    %461 = vector.broadcast %cst_243 : f32 to vector<8x32xf32>
    %462 = arith.mulf %461, %460 : vector<8x32xf32>
    %cst_244 = arith.constant 5.000000e-01 : f32
    %463 = vector.broadcast %cst_244 : f32 to vector<8x32xf32>
    %464 = arith.addf %462, %463 : vector<8x32xf32>
    %465 = arith.mulf %454, %436 : vector<8x32xf32>
    %466 = arith.mulf %446, %456 : vector<8x32xf32>
    %467 = arith.addf %465, %466 : vector<8x32xf32>
    %468 = math.tanh %467 : vector<8x32xf32>
    %469 = arith.mulf %464, %468 : vector<8x32xf32>
    %470 = vector.broadcast %432 : i32 to vector<8x1xi32>
    %471 = arith.cmpi slt, %470, %19 : vector<8x1xi32>
    %472 = vector.shape_cast %471 : vector<8x1xi1> to vector<8x1xi1>
    %473 = vector.broadcast %472 : vector<8x1xi1> to vector<8x32xi1>
    %c0_245 = arith.constant 0 : index
    %c0_246 = arith.constant 0 : index
    %474 = vector.load %arg16[%c0_245, %c0_246] : memref<8x32xf32, #tpu.memory_space<vmem>>, vector<8x32xf32>
    %475 = arith.select %473, %469, %474 : vector<8x32xi1>, vector<8x32xf32>
    %c0_247 = arith.constant 0 : index
    %c0_248 = arith.constant 0 : index
    %476 = vector.load %arg16[%c0_247, %c0_248] : memref<8x32xf32, #tpu.memory_space<vmem>>, vector<8x32xf32>
    tpu.vector_store %arg16[%c0_247, %c0_248], %475 {strides = array<i32>} : memref<8x32xf32, #tpu.memory_space<vmem>>, vector<8x32xf32>,
    %c0_249 = arith.constant 0 : index
    %c0_250 = arith.constant 0 : index
    %477 = vector.load %arg17[%c0_249, %c0_250] : memref<8x32xf32, #tpu.memory_space<vmem>>, vector<8x32xf32>
    %478 = arith.select %473, %467, %477 : vector<8x32xi1>, vector<8x32xf32>
    %c0_251 = arith.constant 0 : index
    %c0_252 = arith.constant 0 : index
    %479 = vector.load %arg17[%c0_251, %c0_252] : memref<8x32xf32, #tpu.memory_space<vmem>>, vector<8x32xf32>
    tpu.vector_store %arg17[%c0_251, %c0_252], %478 {strides = array<i32>} : memref<8x32xf32, #tpu.memory_space<vmem>>, vector<8x32xf32>,
    %cst_253 = arith.constant 0.000000e+00 : f32
    %480 = vector.broadcast %cst_253 : f32 to vector<8x32xf32>
    %481 = arith.select %473, %469, %480 : vector<8x32xi1>, vector<8x32xf32>
    %c0_254 = arith.constant 0 : index
    %482 = arith.index_cast %429 : i32 to index
    %c0_255 = arith.constant 0 : index
    %483 = vector.load %arg11[%c0_254, %482, %c0_255] : memref<1x64x32xf32, #tpu.memory_space<vmem>>, vector<1x8x32xf32>
    %484 = vector.shape_cast %483 : vector<1x8x32xf32> to vector<8x32xf32>
    %485 = vector.shape_cast %481 : vector<8x32xf32> to vector<1x8x32xf32>
    tpu.vector_store %arg11[%c0_254, %482, %c0_255], %485 {strides = array<i32>} : memref<1x64x32xf32, #tpu.memory_space<vmem>>, vector<1x8x32xf32>,
    %c4_i32 = arith.constant 4 : i32
    %c8_i32_256 = arith.constant 8 : i32
    %486 = arith.muli %c4_i32, %c8_i32_256 : i32
    %487 = tpu.assume_multiple %486, 8 : i32
    %c8_i32_257 = arith.constant 8 : i32
    %488 = arith.muli %arg0, %c8_i32_257 : i32
    %489 = arith.addi %488, %c4_i32 : i32
    %490 = arith.index_cast %487 : i32 to index
    %c0_258 = arith.constant 0 : index
    %491 = vector.load %arg12[%490, %c0_258] : memref<64x128xf32, #tpu.memory_space<vmem>>, vector<8x128xf32>
    %c0_259 = arith.constant 0 : index
    %c0_260 = arith.constant 0 : index
    %492 = vector.load %arg14[%c0_259, %c0_260] : memref<8x32xf32, #tpu.memory_space<vmem>>, vector<8x32xf32>
    %c0_261 = arith.constant 0 : index
    %c0_262 = arith.constant 0 : index
    %493 = vector.load %arg15[%c0_261, %c0_262] : memref<8x32xf32, #tpu.memory_space<vmem>>, vector<8x32xf32>
    %cst_263 = arith.constant dense<0.000000e+00> : vector<8x128xf32>
    %494 = tpu.matmul %492, %20, %cst_263 {dimension_numbers = #tpu.dot_dimension_numbers<[1], [0], [0], [1], [0, 0, 1, 1], [], []>} : vector<8x32xf32>, vector<32x128xf32>, vector<8x128xf32> -> vector<8x128xf32>
    %495 = arith.addf %491, %494 : vector<8x128xf32>
    %496 = vector.extract_strided_slice %495 {offsets = [0, 0], sizes = [8, 32], strides = [1, 1]} : vector<8x128xf32> to vector<8x32xf32>
    %cst_264 = arith.constant 5.000000e-01 : f32
    %497 = vector.broadcast %cst_264 : f32 to vector<8x32xf32>
    %498 = arith.mulf %497, %496 : vector<8x32xf32>
    %499 = math.tanh %498 : vector<8x32xf32>
    %cst_265 = arith.constant 5.000000e-01 : f32
    %500 = vector.broadcast %cst_265 : f32 to vector<8x32xf32>
    %501 = arith.mulf %500, %499 : vector<8x32xf32>
    %cst_266 = arith.constant 5.000000e-01 : f32
    %502 = vector.broadcast %cst_266 : f32 to vector<8x32xf32>
    %503 = arith.addf %501, %502 : vector<8x32xf32>
    %504 = vector.extract_strided_slice %495 {offsets = [0, 32], sizes = [8, 32], strides = [1, 1]} : vector<8x128xf32> to vector<8x32xf32>
    %cst_267 = arith.constant 5.000000e-01 : f32
    %505 = vector.broadcast %cst_267 : f32 to vector<8x32xf32>
    %506 = arith.mulf %505, %504 : vector<8x32xf32>
    %507 = math.tanh %506 : vector<8x32xf32>
    %cst_268 = arith.constant 5.000000e-01 : f32
    %508 = vector.broadcast %cst_268 : f32 to vector<8x32xf32>
    %509 = arith.mulf %508, %507 : vector<8x32xf32>
    %cst_269 = arith.constant 5.000000e-01 : f32
    %510 = vector.broadcast %cst_269 : f32 to vector<8x32xf32>
    %511 = arith.addf %509, %510 : vector<8x32xf32>
    %512 = vector.extract_strided_slice %495 {offsets = [0, 64], sizes = [8, 32], strides = [1, 1]} : vector<8x128xf32> to vector<8x32xf32>
    %513 = math.tanh %512 : vector<8x32xf32>
    %514 = vector.extract_strided_slice %495 {offsets = [0, 96], sizes = [8, 32], strides = [1, 1]} : vector<8x128xf32> to vector<8x32xf32>
    %cst_270 = arith.constant 5.000000e-01 : f32
    %515 = vector.broadcast %cst_270 : f32 to vector<8x32xf32>
    %516 = arith.mulf %515, %514 : vector<8x32xf32>
    %517 = math.tanh %516 : vector<8x32xf32>
    %cst_271 = arith.constant 5.000000e-01 : f32
    %518 = vector.broadcast %cst_271 : f32 to vector<8x32xf32>
    %519 = arith.mulf %518, %517 : vector<8x32xf32>
    %cst_272 = arith.constant 5.000000e-01 : f32
    %520 = vector.broadcast %cst_272 : f32 to vector<8x32xf32>
    %521 = arith.addf %519, %520 : vector<8x32xf32>
    %522 = arith.mulf %511, %493 : vector<8x32xf32>
    %523 = arith.mulf %503, %513 : vector<8x32xf32>
    %524 = arith.addf %522, %523 : vector<8x32xf32>
    %525 = math.tanh %524 : vector<8x32xf32>
    %526 = arith.mulf %521, %525 : vector<8x32xf32>
    %527 = vector.broadcast %489 : i32 to vector<8x1xi32>
    %528 = arith.cmpi slt, %527, %19 : vector<8x1xi32>
    %529 = vector.shape_cast %528 : vector<8x1xi1> to vector<8x1xi1>
    %530 = vector.broadcast %529 : vector<8x1xi1> to vector<8x32xi1>
    %c0_273 = arith.constant 0 : index
    %c0_274 = arith.constant 0 : index
    %531 = vector.load %arg14[%c0_273, %c0_274] : memref<8x32xf32, #tpu.memory_space<vmem>>, vector<8x32xf32>
    %532 = arith.select %530, %526, %531 : vector<8x32xi1>, vector<8x32xf32>
    %c0_275 = arith.constant 0 : index
    %c0_276 = arith.constant 0 : index
    %533 = vector.load %arg14[%c0_275, %c0_276] : memref<8x32xf32, #tpu.memory_space<vmem>>, vector<8x32xf32>
    tpu.vector_store %arg14[%c0_275, %c0_276], %532 {strides = array<i32>} : memref<8x32xf32, #tpu.memory_space<vmem>>, vector<8x32xf32>,
    %c0_277 = arith.constant 0 : index
    %c0_278 = arith.constant 0 : index
    %534 = vector.load %arg15[%c0_277, %c0_278] : memref<8x32xf32, #tpu.memory_space<vmem>>, vector<8x32xf32>
    %535 = arith.select %530, %524, %534 : vector<8x32xi1>, vector<8x32xf32>
    %c0_279 = arith.constant 0 : index
    %c0_280 = arith.constant 0 : index
    %536 = vector.load %arg15[%c0_279, %c0_280] : memref<8x32xf32, #tpu.memory_space<vmem>>, vector<8x32xf32>
    tpu.vector_store %arg15[%c0_279, %c0_280], %535 {strides = array<i32>} : memref<8x32xf32, #tpu.memory_space<vmem>>, vector<8x32xf32>,
    %cst_281 = arith.constant 0.000000e+00 : f32
    %537 = vector.broadcast %cst_281 : f32 to vector<8x32xf32>
    %538 = arith.select %530, %526, %537 : vector<8x32xi1>, vector<8x32xf32>
    %c0_282 = arith.constant 0 : index
    %539 = arith.index_cast %487 : i32 to index
    %c0_283 = arith.constant 0 : index
    %540 = vector.load %arg10[%c0_282, %539, %c0_283] : memref<1x64x32xf32, #tpu.memory_space<vmem>>, vector<1x8x32xf32>
    %541 = vector.shape_cast %540 : vector<1x8x32xf32> to vector<8x32xf32>
    %542 = vector.shape_cast %538 : vector<8x32xf32> to vector<1x8x32xf32>
    tpu.vector_store %arg10[%c0_282, %539, %c0_283], %542 {strides = array<i32>} : memref<1x64x32xf32, #tpu.memory_space<vmem>>, vector<1x8x32xf32>,
    %c7_i32_284 = arith.constant 7 : i32
    %543 = arith.subi %c7_i32_284, %c4_i32 : i32
    %c8_i32_285 = arith.constant 8 : i32
    %544 = arith.muli %543, %c8_i32_285 : i32
    %545 = tpu.assume_multiple %544, 8 : i32
    %c0_i32_286 = arith.constant 0 : i32
    %546 = arith.subi %c0_i32_286, %arg0 : i32
    %c8_i32_287 = arith.constant 8 : i32
    %547 = arith.muli %546, %c8_i32_287 : i32
    %548 = arith.addi %547, %543 : i32
    %549 = arith.index_cast %545 : i32 to index
    %c0_288 = arith.constant 0 : index
    %550 = vector.load %arg13[%549, %c0_288] : memref<64x128xf32, #tpu.memory_space<vmem>>, vector<8x128xf32>
    %c0_289 = arith.constant 0 : index
    %c0_290 = arith.constant 0 : index
    %551 = vector.load %arg16[%c0_289, %c0_290] : memref<8x32xf32, #tpu.memory_space<vmem>>, vector<8x32xf32>
    %c0_291 = arith.constant 0 : index
    %c0_292 = arith.constant 0 : index
    %552 = vector.load %arg17[%c0_291, %c0_292] : memref<8x32xf32, #tpu.memory_space<vmem>>, vector<8x32xf32>
    %cst_293 = arith.constant dense<0.000000e+00> : vector<8x128xf32>
    %553 = tpu.matmul %551, %21, %cst_293 {dimension_numbers = #tpu.dot_dimension_numbers<[1], [0], [0], [1], [0, 0, 1, 1], [], []>} : vector<8x32xf32>, vector<32x128xf32>, vector<8x128xf32> -> vector<8x128xf32>
    %554 = arith.addf %550, %553 : vector<8x128xf32>
    %555 = vector.extract_strided_slice %554 {offsets = [0, 0], sizes = [8, 32], strides = [1, 1]} : vector<8x128xf32> to vector<8x32xf32>
    %cst_294 = arith.constant 5.000000e-01 : f32
    %556 = vector.broadcast %cst_294 : f32 to vector<8x32xf32>
    %557 = arith.mulf %556, %555 : vector<8x32xf32>
    %558 = math.tanh %557 : vector<8x32xf32>
    %cst_295 = arith.constant 5.000000e-01 : f32
    %559 = vector.broadcast %cst_295 : f32 to vector<8x32xf32>
    %560 = arith.mulf %559, %558 : vector<8x32xf32>
    %cst_296 = arith.constant 5.000000e-01 : f32
    %561 = vector.broadcast %cst_296 : f32 to vector<8x32xf32>
    %562 = arith.addf %560, %561 : vector<8x32xf32>
    %563 = vector.extract_strided_slice %554 {offsets = [0, 32], sizes = [8, 32], strides = [1, 1]} : vector<8x128xf32> to vector<8x32xf32>
    %cst_297 = arith.constant 5.000000e-01 : f32
    %564 = vector.broadcast %cst_297 : f32 to vector<8x32xf32>
    %565 = arith.mulf %564, %563 : vector<8x32xf32>
    %566 = math.tanh %565 : vector<8x32xf32>
    %cst_298 = arith.constant 5.000000e-01 : f32
    %567 = vector.broadcast %cst_298 : f32 to vector<8x32xf32>
    %568 = arith.mulf %567, %566 : vector<8x32xf32>
    %cst_299 = arith.constant 5.000000e-01 : f32
    %569 = vector.broadcast %cst_299 : f32 to vector<8x32xf32>
    %570 = arith.addf %568, %569 : vector<8x32xf32>
    %571 = vector.extract_strided_slice %554 {offsets = [0, 64], sizes = [8, 32], strides = [1, 1]} : vector<8x128xf32> to vector<8x32xf32>
    %572 = math.tanh %571 : vector<8x32xf32>
    %573 = vector.extract_strided_slice %554 {offsets = [0, 96], sizes = [8, 32], strides = [1, 1]} : vector<8x128xf32> to vector<8x32xf32>
    %cst_300 = arith.constant 5.000000e-01 : f32
    %574 = vector.broadcast %cst_300 : f32 to vector<8x32xf32>
    %575 = arith.mulf %574, %573 : vector<8x32xf32>
    %576 = math.tanh %575 : vector<8x32xf32>
    %cst_301 = arith.constant 5.000000e-01 : f32
    %577 = vector.broadcast %cst_301 : f32 to vector<8x32xf32>
    %578 = arith.mulf %577, %576 : vector<8x32xf32>
    %cst_302 = arith.constant 5.000000e-01 : f32
    %579 = vector.broadcast %cst_302 : f32 to vector<8x32xf32>
    %580 = arith.addf %578, %579 : vector<8x32xf32>
    %581 = arith.mulf %570, %552 : vector<8x32xf32>
    %582 = arith.mulf %562, %572 : vector<8x32xf32>
    %583 = arith.addf %581, %582 : vector<8x32xf32>
    %584 = math.tanh %583 : vector<8x32xf32>
    %585 = arith.mulf %580, %584 : vector<8x32xf32>
    %586 = vector.broadcast %548 : i32 to vector<8x1xi32>
    %587 = arith.cmpi slt, %586, %19 : vector<8x1xi32>
    %588 = vector.shape_cast %587 : vector<8x1xi1> to vector<8x1xi1>
    %589 = vector.broadcast %588 : vector<8x1xi1> to vector<8x32xi1>
    %c0_303 = arith.constant 0 : index
    %c0_304 = arith.constant 0 : index
    %590 = vector.load %arg16[%c0_303, %c0_304] : memref<8x32xf32, #tpu.memory_space<vmem>>, vector<8x32xf32>
    %591 = arith.select %589, %585, %590 : vector<8x32xi1>, vector<8x32xf32>
    %c0_305 = arith.constant 0 : index
    %c0_306 = arith.constant 0 : index
    %592 = vector.load %arg16[%c0_305, %c0_306] : memref<8x32xf32, #tpu.memory_space<vmem>>, vector<8x32xf32>
    tpu.vector_store %arg16[%c0_305, %c0_306], %591 {strides = array<i32>} : memref<8x32xf32, #tpu.memory_space<vmem>>, vector<8x32xf32>,
    %c0_307 = arith.constant 0 : index
    %c0_308 = arith.constant 0 : index
    %593 = vector.load %arg17[%c0_307, %c0_308] : memref<8x32xf32, #tpu.memory_space<vmem>>, vector<8x32xf32>
    %594 = arith.select %589, %583, %593 : vector<8x32xi1>, vector<8x32xf32>
    %c0_309 = arith.constant 0 : index
    %c0_310 = arith.constant 0 : index
    %595 = vector.load %arg17[%c0_309, %c0_310] : memref<8x32xf32, #tpu.memory_space<vmem>>, vector<8x32xf32>
    tpu.vector_store %arg17[%c0_309, %c0_310], %594 {strides = array<i32>} : memref<8x32xf32, #tpu.memory_space<vmem>>, vector<8x32xf32>,
    %cst_311 = arith.constant 0.000000e+00 : f32
    %596 = vector.broadcast %cst_311 : f32 to vector<8x32xf32>
    %597 = arith.select %589, %585, %596 : vector<8x32xi1>, vector<8x32xf32>
    %c0_312 = arith.constant 0 : index
    %598 = arith.index_cast %545 : i32 to index
    %c0_313 = arith.constant 0 : index
    %599 = vector.load %arg11[%c0_312, %598, %c0_313] : memref<1x64x32xf32, #tpu.memory_space<vmem>>, vector<1x8x32xf32>
    %600 = vector.shape_cast %599 : vector<1x8x32xf32> to vector<8x32xf32>
    %601 = vector.shape_cast %597 : vector<8x32xf32> to vector<1x8x32xf32>
    tpu.vector_store %arg11[%c0_312, %598, %c0_313], %601 {strides = array<i32>} : memref<1x64x32xf32, #tpu.memory_space<vmem>>, vector<1x8x32xf32>,
    %c5_i32 = arith.constant 5 : i32
    %c8_i32_314 = arith.constant 8 : i32
    %602 = arith.muli %c5_i32, %c8_i32_314 : i32
    %603 = tpu.assume_multiple %602, 8 : i32
    %c8_i32_315 = arith.constant 8 : i32
    %604 = arith.muli %arg0, %c8_i32_315 : i32
    %605 = arith.addi %604, %c5_i32 : i32
    %606 = arith.index_cast %603 : i32 to index
    %c0_316 = arith.constant 0 : index
    %607 = vector.load %arg12[%606, %c0_316] : memref<64x128xf32, #tpu.memory_space<vmem>>, vector<8x128xf32>
    %c0_317 = arith.constant 0 : index
    %c0_318 = arith.constant 0 : index
    %608 = vector.load %arg14[%c0_317, %c0_318] : memref<8x32xf32, #tpu.memory_space<vmem>>, vector<8x32xf32>
    %c0_319 = arith.constant 0 : index
    %c0_320 = arith.constant 0 : index
    %609 = vector.load %arg15[%c0_319, %c0_320] : memref<8x32xf32, #tpu.memory_space<vmem>>, vector<8x32xf32>
    %cst_321 = arith.constant dense<0.000000e+00> : vector<8x128xf32>
    %610 = tpu.matmul %608, %20, %cst_321 {dimension_numbers = #tpu.dot_dimension_numbers<[1], [0], [0], [1], [0, 0, 1, 1], [], []>} : vector<8x32xf32>, vector<32x128xf32>, vector<8x128xf32> -> vector<8x128xf32>
    %611 = arith.addf %607, %610 : vector<8x128xf32>
    %612 = vector.extract_strided_slice %611 {offsets = [0, 0], sizes = [8, 32], strides = [1, 1]} : vector<8x128xf32> to vector<8x32xf32>
    %cst_322 = arith.constant 5.000000e-01 : f32
    %613 = vector.broadcast %cst_322 : f32 to vector<8x32xf32>
    %614 = arith.mulf %613, %612 : vector<8x32xf32>
    %615 = math.tanh %614 : vector<8x32xf32>
    %cst_323 = arith.constant 5.000000e-01 : f32
    %616 = vector.broadcast %cst_323 : f32 to vector<8x32xf32>
    %617 = arith.mulf %616, %615 : vector<8x32xf32>
    %cst_324 = arith.constant 5.000000e-01 : f32
    %618 = vector.broadcast %cst_324 : f32 to vector<8x32xf32>
    %619 = arith.addf %617, %618 : vector<8x32xf32>
    %620 = vector.extract_strided_slice %611 {offsets = [0, 32], sizes = [8, 32], strides = [1, 1]} : vector<8x128xf32> to vector<8x32xf32>
    %cst_325 = arith.constant 5.000000e-01 : f32
    %621 = vector.broadcast %cst_325 : f32 to vector<8x32xf32>
    %622 = arith.mulf %621, %620 : vector<8x32xf32>
    %623 = math.tanh %622 : vector<8x32xf32>
    %cst_326 = arith.constant 5.000000e-01 : f32
    %624 = vector.broadcast %cst_326 : f32 to vector<8x32xf32>
    %625 = arith.mulf %624, %623 : vector<8x32xf32>
    %cst_327 = arith.constant 5.000000e-01 : f32
    %626 = vector.broadcast %cst_327 : f32 to vector<8x32xf32>
    %627 = arith.addf %625, %626 : vector<8x32xf32>
    %628 = vector.extract_strided_slice %611 {offsets = [0, 64], sizes = [8, 32], strides = [1, 1]} : vector<8x128xf32> to vector<8x32xf32>
    %629 = math.tanh %628 : vector<8x32xf32>
    %630 = vector.extract_strided_slice %611 {offsets = [0, 96], sizes = [8, 32], strides = [1, 1]} : vector<8x128xf32> to vector<8x32xf32>
    %cst_328 = arith.constant 5.000000e-01 : f32
    %631 = vector.broadcast %cst_328 : f32 to vector<8x32xf32>
    %632 = arith.mulf %631, %630 : vector<8x32xf32>
    %633 = math.tanh %632 : vector<8x32xf32>
    %cst_329 = arith.constant 5.000000e-01 : f32
    %634 = vector.broadcast %cst_329 : f32 to vector<8x32xf32>
    %635 = arith.mulf %634, %633 : vector<8x32xf32>
    %cst_330 = arith.constant 5.000000e-01 : f32
    %636 = vector.broadcast %cst_330 : f32 to vector<8x32xf32>
    %637 = arith.addf %635, %636 : vector<8x32xf32>
    %638 = arith.mulf %627, %609 : vector<8x32xf32>
    %639 = arith.mulf %619, %629 : vector<8x32xf32>
    %640 = arith.addf %638, %639 : vector<8x32xf32>
    %641 = math.tanh %640 : vector<8x32xf32>
    %642 = arith.mulf %637, %641 : vector<8x32xf32>
    %643 = vector.broadcast %605 : i32 to vector<8x1xi32>
    %644 = arith.cmpi slt, %643, %19 : vector<8x1xi32>
    %645 = vector.shape_cast %644 : vector<8x1xi1> to vector<8x1xi1>
    %646 = vector.broadcast %645 : vector<8x1xi1> to vector<8x32xi1>
    %c0_331 = arith.constant 0 : index
    %c0_332 = arith.constant 0 : index
    %647 = vector.load %arg14[%c0_331, %c0_332] : memref<8x32xf32, #tpu.memory_space<vmem>>, vector<8x32xf32>
    %648 = arith.select %646, %642, %647 : vector<8x32xi1>, vector<8x32xf32>
    %c0_333 = arith.constant 0 : index
    %c0_334 = arith.constant 0 : index
    %649 = vector.load %arg14[%c0_333, %c0_334] : memref<8x32xf32, #tpu.memory_space<vmem>>, vector<8x32xf32>
    tpu.vector_store %arg14[%c0_333, %c0_334], %648 {strides = array<i32>} : memref<8x32xf32, #tpu.memory_space<vmem>>, vector<8x32xf32>,
    %c0_335 = arith.constant 0 : index
    %c0_336 = arith.constant 0 : index
    %650 = vector.load %arg15[%c0_335, %c0_336] : memref<8x32xf32, #tpu.memory_space<vmem>>, vector<8x32xf32>
    %651 = arith.select %646, %640, %650 : vector<8x32xi1>, vector<8x32xf32>
    %c0_337 = arith.constant 0 : index
    %c0_338 = arith.constant 0 : index
    %652 = vector.load %arg15[%c0_337, %c0_338] : memref<8x32xf32, #tpu.memory_space<vmem>>, vector<8x32xf32>
    tpu.vector_store %arg15[%c0_337, %c0_338], %651 {strides = array<i32>} : memref<8x32xf32, #tpu.memory_space<vmem>>, vector<8x32xf32>,
    %cst_339 = arith.constant 0.000000e+00 : f32
    %653 = vector.broadcast %cst_339 : f32 to vector<8x32xf32>
    %654 = arith.select %646, %642, %653 : vector<8x32xi1>, vector<8x32xf32>
    %c0_340 = arith.constant 0 : index
    %655 = arith.index_cast %603 : i32 to index
    %c0_341 = arith.constant 0 : index
    %656 = vector.load %arg10[%c0_340, %655, %c0_341] : memref<1x64x32xf32, #tpu.memory_space<vmem>>, vector<1x8x32xf32>
    %657 = vector.shape_cast %656 : vector<1x8x32xf32> to vector<8x32xf32>
    %658 = vector.shape_cast %654 : vector<8x32xf32> to vector<1x8x32xf32>
    tpu.vector_store %arg10[%c0_340, %655, %c0_341], %658 {strides = array<i32>} : memref<1x64x32xf32, #tpu.memory_space<vmem>>, vector<1x8x32xf32>,
    %c7_i32_342 = arith.constant 7 : i32
    %659 = arith.subi %c7_i32_342, %c5_i32 : i32
    %c8_i32_343 = arith.constant 8 : i32
    %660 = arith.muli %659, %c8_i32_343 : i32
    %661 = tpu.assume_multiple %660, 8 : i32
    %c0_i32_344 = arith.constant 0 : i32
    %662 = arith.subi %c0_i32_344, %arg0 : i32
    %c8_i32_345 = arith.constant 8 : i32
    %663 = arith.muli %662, %c8_i32_345 : i32
    %664 = arith.addi %663, %659 : i32
    %665 = arith.index_cast %661 : i32 to index
    %c0_346 = arith.constant 0 : index
    %666 = vector.load %arg13[%665, %c0_346] : memref<64x128xf32, #tpu.memory_space<vmem>>, vector<8x128xf32>
    %c0_347 = arith.constant 0 : index
    %c0_348 = arith.constant 0 : index
    %667 = vector.load %arg16[%c0_347, %c0_348] : memref<8x32xf32, #tpu.memory_space<vmem>>, vector<8x32xf32>
    %c0_349 = arith.constant 0 : index
    %c0_350 = arith.constant 0 : index
    %668 = vector.load %arg17[%c0_349, %c0_350] : memref<8x32xf32, #tpu.memory_space<vmem>>, vector<8x32xf32>
    %cst_351 = arith.constant dense<0.000000e+00> : vector<8x128xf32>
    %669 = tpu.matmul %667, %21, %cst_351 {dimension_numbers = #tpu.dot_dimension_numbers<[1], [0], [0], [1], [0, 0, 1, 1], [], []>} : vector<8x32xf32>, vector<32x128xf32>, vector<8x128xf32> -> vector<8x128xf32>
    %670 = arith.addf %666, %669 : vector<8x128xf32>
    %671 = vector.extract_strided_slice %670 {offsets = [0, 0], sizes = [8, 32], strides = [1, 1]} : vector<8x128xf32> to vector<8x32xf32>
    %cst_352 = arith.constant 5.000000e-01 : f32
    %672 = vector.broadcast %cst_352 : f32 to vector<8x32xf32>
    %673 = arith.mulf %672, %671 : vector<8x32xf32>
    %674 = math.tanh %673 : vector<8x32xf32>
    %cst_353 = arith.constant 5.000000e-01 : f32
    %675 = vector.broadcast %cst_353 : f32 to vector<8x32xf32>
    %676 = arith.mulf %675, %674 : vector<8x32xf32>
    %cst_354 = arith.constant 5.000000e-01 : f32
    %677 = vector.broadcast %cst_354 : f32 to vector<8x32xf32>
    %678 = arith.addf %676, %677 : vector<8x32xf32>
    %679 = vector.extract_strided_slice %670 {offsets = [0, 32], sizes = [8, 32], strides = [1, 1]} : vector<8x128xf32> to vector<8x32xf32>
    %cst_355 = arith.constant 5.000000e-01 : f32
    %680 = vector.broadcast %cst_355 : f32 to vector<8x32xf32>
    %681 = arith.mulf %680, %679 : vector<8x32xf32>
    %682 = math.tanh %681 : vector<8x32xf32>
    %cst_356 = arith.constant 5.000000e-01 : f32
    %683 = vector.broadcast %cst_356 : f32 to vector<8x32xf32>
    %684 = arith.mulf %683, %682 : vector<8x32xf32>
    %cst_357 = arith.constant 5.000000e-01 : f32
    %685 = vector.broadcast %cst_357 : f32 to vector<8x32xf32>
    %686 = arith.addf %684, %685 : vector<8x32xf32>
    %687 = vector.extract_strided_slice %670 {offsets = [0, 64], sizes = [8, 32], strides = [1, 1]} : vector<8x128xf32> to vector<8x32xf32>
    %688 = math.tanh %687 : vector<8x32xf32>
    %689 = vector.extract_strided_slice %670 {offsets = [0, 96], sizes = [8, 32], strides = [1, 1]} : vector<8x128xf32> to vector<8x32xf32>
    %cst_358 = arith.constant 5.000000e-01 : f32
    %690 = vector.broadcast %cst_358 : f32 to vector<8x32xf32>
    %691 = arith.mulf %690, %689 : vector<8x32xf32>
    %692 = math.tanh %691 : vector<8x32xf32>
    %cst_359 = arith.constant 5.000000e-01 : f32
    %693 = vector.broadcast %cst_359 : f32 to vector<8x32xf32>
    %694 = arith.mulf %693, %692 : vector<8x32xf32>
    %cst_360 = arith.constant 5.000000e-01 : f32
    %695 = vector.broadcast %cst_360 : f32 to vector<8x32xf32>
    %696 = arith.addf %694, %695 : vector<8x32xf32>
    %697 = arith.mulf %686, %668 : vector<8x32xf32>
    %698 = arith.mulf %678, %688 : vector<8x32xf32>
    %699 = arith.addf %697, %698 : vector<8x32xf32>
    %700 = math.tanh %699 : vector<8x32xf32>
    %701 = arith.mulf %696, %700 : vector<8x32xf32>
    %702 = vector.broadcast %664 : i32 to vector<8x1xi32>
    %703 = arith.cmpi slt, %702, %19 : vector<8x1xi32>
    %704 = vector.shape_cast %703 : vector<8x1xi1> to vector<8x1xi1>
    %705 = vector.broadcast %704 : vector<8x1xi1> to vector<8x32xi1>
    %c0_361 = arith.constant 0 : index
    %c0_362 = arith.constant 0 : index
    %706 = vector.load %arg16[%c0_361, %c0_362] : memref<8x32xf32, #tpu.memory_space<vmem>>, vector<8x32xf32>
    %707 = arith.select %705, %701, %706 : vector<8x32xi1>, vector<8x32xf32>
    %c0_363 = arith.constant 0 : index
    %c0_364 = arith.constant 0 : index
    %708 = vector.load %arg16[%c0_363, %c0_364] : memref<8x32xf32, #tpu.memory_space<vmem>>, vector<8x32xf32>
    tpu.vector_store %arg16[%c0_363, %c0_364], %707 {strides = array<i32>} : memref<8x32xf32, #tpu.memory_space<vmem>>, vector<8x32xf32>,
    %c0_365 = arith.constant 0 : index
    %c0_366 = arith.constant 0 : index
    %709 = vector.load %arg17[%c0_365, %c0_366] : memref<8x32xf32, #tpu.memory_space<vmem>>, vector<8x32xf32>
    %710 = arith.select %705, %699, %709 : vector<8x32xi1>, vector<8x32xf32>
    %c0_367 = arith.constant 0 : index
    %c0_368 = arith.constant 0 : index
    %711 = vector.load %arg17[%c0_367, %c0_368] : memref<8x32xf32, #tpu.memory_space<vmem>>, vector<8x32xf32>
    tpu.vector_store %arg17[%c0_367, %c0_368], %710 {strides = array<i32>} : memref<8x32xf32, #tpu.memory_space<vmem>>, vector<8x32xf32>,
    %cst_369 = arith.constant 0.000000e+00 : f32
    %712 = vector.broadcast %cst_369 : f32 to vector<8x32xf32>
    %713 = arith.select %705, %701, %712 : vector<8x32xi1>, vector<8x32xf32>
    %c0_370 = arith.constant 0 : index
    %714 = arith.index_cast %661 : i32 to index
    %c0_371 = arith.constant 0 : index
    %715 = vector.load %arg11[%c0_370, %714, %c0_371] : memref<1x64x32xf32, #tpu.memory_space<vmem>>, vector<1x8x32xf32>
    %716 = vector.shape_cast %715 : vector<1x8x32xf32> to vector<8x32xf32>
    %717 = vector.shape_cast %713 : vector<8x32xf32> to vector<1x8x32xf32>
    tpu.vector_store %arg11[%c0_370, %714, %c0_371], %717 {strides = array<i32>} : memref<1x64x32xf32, #tpu.memory_space<vmem>>, vector<1x8x32xf32>,
    %c6_i32 = arith.constant 6 : i32
    %c8_i32_372 = arith.constant 8 : i32
    %718 = arith.muli %c6_i32, %c8_i32_372 : i32
    %719 = tpu.assume_multiple %718, 8 : i32
    %c8_i32_373 = arith.constant 8 : i32
    %720 = arith.muli %arg0, %c8_i32_373 : i32
    %721 = arith.addi %720, %c6_i32 : i32
    %722 = arith.index_cast %719 : i32 to index
    %c0_374 = arith.constant 0 : index
    %723 = vector.load %arg12[%722, %c0_374] : memref<64x128xf32, #tpu.memory_space<vmem>>, vector<8x128xf32>
    %c0_375 = arith.constant 0 : index
    %c0_376 = arith.constant 0 : index
    %724 = vector.load %arg14[%c0_375, %c0_376] : memref<8x32xf32, #tpu.memory_space<vmem>>, vector<8x32xf32>
    %c0_377 = arith.constant 0 : index
    %c0_378 = arith.constant 0 : index
    %725 = vector.load %arg15[%c0_377, %c0_378] : memref<8x32xf32, #tpu.memory_space<vmem>>, vector<8x32xf32>
    %cst_379 = arith.constant dense<0.000000e+00> : vector<8x128xf32>
    %726 = tpu.matmul %724, %20, %cst_379 {dimension_numbers = #tpu.dot_dimension_numbers<[1], [0], [0], [1], [0, 0, 1, 1], [], []>} : vector<8x32xf32>, vector<32x128xf32>, vector<8x128xf32> -> vector<8x128xf32>
    %727 = arith.addf %723, %726 : vector<8x128xf32>
    %728 = vector.extract_strided_slice %727 {offsets = [0, 0], sizes = [8, 32], strides = [1, 1]} : vector<8x128xf32> to vector<8x32xf32>
    %cst_380 = arith.constant 5.000000e-01 : f32
    %729 = vector.broadcast %cst_380 : f32 to vector<8x32xf32>
    %730 = arith.mulf %729, %728 : vector<8x32xf32>
    %731 = math.tanh %730 : vector<8x32xf32>
    %cst_381 = arith.constant 5.000000e-01 : f32
    %732 = vector.broadcast %cst_381 : f32 to vector<8x32xf32>
    %733 = arith.mulf %732, %731 : vector<8x32xf32>
    %cst_382 = arith.constant 5.000000e-01 : f32
    %734 = vector.broadcast %cst_382 : f32 to vector<8x32xf32>
    %735 = arith.addf %733, %734 : vector<8x32xf32>
    %736 = vector.extract_strided_slice %727 {offsets = [0, 32], sizes = [8, 32], strides = [1, 1]} : vector<8x128xf32> to vector<8x32xf32>
    %cst_383 = arith.constant 5.000000e-01 : f32
    %737 = vector.broadcast %cst_383 : f32 to vector<8x32xf32>
    %738 = arith.mulf %737, %736 : vector<8x32xf32>
    %739 = math.tanh %738 : vector<8x32xf32>
    %cst_384 = arith.constant 5.000000e-01 : f32
    %740 = vector.broadcast %cst_384 : f32 to vector<8x32xf32>
    %741 = arith.mulf %740, %739 : vector<8x32xf32>
    %cst_385 = arith.constant 5.000000e-01 : f32
    %742 = vector.broadcast %cst_385 : f32 to vector<8x32xf32>
    %743 = arith.addf %741, %742 : vector<8x32xf32>
    %744 = vector.extract_strided_slice %727 {offsets = [0, 64], sizes = [8, 32], strides = [1, 1]} : vector<8x128xf32> to vector<8x32xf32>
    %745 = math.tanh %744 : vector<8x32xf32>
    %746 = vector.extract_strided_slice %727 {offsets = [0, 96], sizes = [8, 32], strides = [1, 1]} : vector<8x128xf32> to vector<8x32xf32>
    %cst_386 = arith.constant 5.000000e-01 : f32
    %747 = vector.broadcast %cst_386 : f32 to vector<8x32xf32>
    %748 = arith.mulf %747, %746 : vector<8x32xf32>
    %749 = math.tanh %748 : vector<8x32xf32>
    %cst_387 = arith.constant 5.000000e-01 : f32
    %750 = vector.broadcast %cst_387 : f32 to vector<8x32xf32>
    %751 = arith.mulf %750, %749 : vector<8x32xf32>
    %cst_388 = arith.constant 5.000000e-01 : f32
    %752 = vector.broadcast %cst_388 : f32 to vector<8x32xf32>
    %753 = arith.addf %751, %752 : vector<8x32xf32>
    %754 = arith.mulf %743, %725 : vector<8x32xf32>
    %755 = arith.mulf %735, %745 : vector<8x32xf32>
    %756 = arith.addf %754, %755 : vector<8x32xf32>
    %757 = math.tanh %756 : vector<8x32xf32>
    %758 = arith.mulf %753, %757 : vector<8x32xf32>
    %759 = vector.broadcast %721 : i32 to vector<8x1xi32>
    %760 = arith.cmpi slt, %759, %19 : vector<8x1xi32>
    %761 = vector.shape_cast %760 : vector<8x1xi1> to vector<8x1xi1>
    %762 = vector.broadcast %761 : vector<8x1xi1> to vector<8x32xi1>
    %c0_389 = arith.constant 0 : index
    %c0_390 = arith.constant 0 : index
    %763 = vector.load %arg14[%c0_389, %c0_390] : memref<8x32xf32, #tpu.memory_space<vmem>>, vector<8x32xf32>
    %764 = arith.select %762, %758, %763 : vector<8x32xi1>, vector<8x32xf32>
    %c0_391 = arith.constant 0 : index
    %c0_392 = arith.constant 0 : index
    %765 = vector.load %arg14[%c0_391, %c0_392] : memref<8x32xf32, #tpu.memory_space<vmem>>, vector<8x32xf32>
    tpu.vector_store %arg14[%c0_391, %c0_392], %764 {strides = array<i32>} : memref<8x32xf32, #tpu.memory_space<vmem>>, vector<8x32xf32>,
    %c0_393 = arith.constant 0 : index
    %c0_394 = arith.constant 0 : index
    %766 = vector.load %arg15[%c0_393, %c0_394] : memref<8x32xf32, #tpu.memory_space<vmem>>, vector<8x32xf32>
    %767 = arith.select %762, %756, %766 : vector<8x32xi1>, vector<8x32xf32>
    %c0_395 = arith.constant 0 : index
    %c0_396 = arith.constant 0 : index
    %768 = vector.load %arg15[%c0_395, %c0_396] : memref<8x32xf32, #tpu.memory_space<vmem>>, vector<8x32xf32>
    tpu.vector_store %arg15[%c0_395, %c0_396], %767 {strides = array<i32>} : memref<8x32xf32, #tpu.memory_space<vmem>>, vector<8x32xf32>,
    %cst_397 = arith.constant 0.000000e+00 : f32
    %769 = vector.broadcast %cst_397 : f32 to vector<8x32xf32>
    %770 = arith.select %762, %758, %769 : vector<8x32xi1>, vector<8x32xf32>
    %c0_398 = arith.constant 0 : index
    %771 = arith.index_cast %719 : i32 to index
    %c0_399 = arith.constant 0 : index
    %772 = vector.load %arg10[%c0_398, %771, %c0_399] : memref<1x64x32xf32, #tpu.memory_space<vmem>>, vector<1x8x32xf32>
    %773 = vector.shape_cast %772 : vector<1x8x32xf32> to vector<8x32xf32>
    %774 = vector.shape_cast %770 : vector<8x32xf32> to vector<1x8x32xf32>
    tpu.vector_store %arg10[%c0_398, %771, %c0_399], %774 {strides = array<i32>} : memref<1x64x32xf32, #tpu.memory_space<vmem>>, vector<1x8x32xf32>,
    %c7_i32_400 = arith.constant 7 : i32
    %775 = arith.subi %c7_i32_400, %c6_i32 : i32
    %c8_i32_401 = arith.constant 8 : i32
    %776 = arith.muli %775, %c8_i32_401 : i32
    %777 = tpu.assume_multiple %776, 8 : i32
    %c0_i32_402 = arith.constant 0 : i32
    %778 = arith.subi %c0_i32_402, %arg0 : i32
    %c8_i32_403 = arith.constant 8 : i32
    %779 = arith.muli %778, %c8_i32_403 : i32
    %780 = arith.addi %779, %775 : i32
    %781 = arith.index_cast %777 : i32 to index
    %c0_404 = arith.constant 0 : index
    %782 = vector.load %arg13[%781, %c0_404] : memref<64x128xf32, #tpu.memory_space<vmem>>, vector<8x128xf32>
    %c0_405 = arith.constant 0 : index
    %c0_406 = arith.constant 0 : index
    %783 = vector.load %arg16[%c0_405, %c0_406] : memref<8x32xf32, #tpu.memory_space<vmem>>, vector<8x32xf32>
    %c0_407 = arith.constant 0 : index
    %c0_408 = arith.constant 0 : index
    %784 = vector.load %arg17[%c0_407, %c0_408] : memref<8x32xf32, #tpu.memory_space<vmem>>, vector<8x32xf32>
    %cst_409 = arith.constant dense<0.000000e+00> : vector<8x128xf32>
    %785 = tpu.matmul %783, %21, %cst_409 {dimension_numbers = #tpu.dot_dimension_numbers<[1], [0], [0], [1], [0, 0, 1, 1], [], []>} : vector<8x32xf32>, vector<32x128xf32>, vector<8x128xf32> -> vector<8x128xf32>
    %786 = arith.addf %782, %785 : vector<8x128xf32>
    %787 = vector.extract_strided_slice %786 {offsets = [0, 0], sizes = [8, 32], strides = [1, 1]} : vector<8x128xf32> to vector<8x32xf32>
    %cst_410 = arith.constant 5.000000e-01 : f32
    %788 = vector.broadcast %cst_410 : f32 to vector<8x32xf32>
    %789 = arith.mulf %788, %787 : vector<8x32xf32>
    %790 = math.tanh %789 : vector<8x32xf32>
    %cst_411 = arith.constant 5.000000e-01 : f32
    %791 = vector.broadcast %cst_411 : f32 to vector<8x32xf32>
    %792 = arith.mulf %791, %790 : vector<8x32xf32>
    %cst_412 = arith.constant 5.000000e-01 : f32
    %793 = vector.broadcast %cst_412 : f32 to vector<8x32xf32>
    %794 = arith.addf %792, %793 : vector<8x32xf32>
    %795 = vector.extract_strided_slice %786 {offsets = [0, 32], sizes = [8, 32], strides = [1, 1]} : vector<8x128xf32> to vector<8x32xf32>
    %cst_413 = arith.constant 5.000000e-01 : f32
    %796 = vector.broadcast %cst_413 : f32 to vector<8x32xf32>
    %797 = arith.mulf %796, %795 : vector<8x32xf32>
    %798 = math.tanh %797 : vector<8x32xf32>
    %cst_414 = arith.constant 5.000000e-01 : f32
    %799 = vector.broadcast %cst_414 : f32 to vector<8x32xf32>
    %800 = arith.mulf %799, %798 : vector<8x32xf32>
    %cst_415 = arith.constant 5.000000e-01 : f32
    %801 = vector.broadcast %cst_415 : f32 to vector<8x32xf32>
    %802 = arith.addf %800, %801 : vector<8x32xf32>
    %803 = vector.extract_strided_slice %786 {offsets = [0, 64], sizes = [8, 32], strides = [1, 1]} : vector<8x128xf32> to vector<8x32xf32>
    %804 = math.tanh %803 : vector<8x32xf32>
    %805 = vector.extract_strided_slice %786 {offsets = [0, 96], sizes = [8, 32], strides = [1, 1]} : vector<8x128xf32> to vector<8x32xf32>
    %cst_416 = arith.constant 5.000000e-01 : f32
    %806 = vector.broadcast %cst_416 : f32 to vector<8x32xf32>
    %807 = arith.mulf %806, %805 : vector<8x32xf32>
    %808 = math.tanh %807 : vector<8x32xf32>
    %cst_417 = arith.constant 5.000000e-01 : f32
    %809 = vector.broadcast %cst_417 : f32 to vector<8x32xf32>
    %810 = arith.mulf %809, %808 : vector<8x32xf32>
    %cst_418 = arith.constant 5.000000e-01 : f32
    %811 = vector.broadcast %cst_418 : f32 to vector<8x32xf32>
    %812 = arith.addf %810, %811 : vector<8x32xf32>
    %813 = arith.mulf %802, %784 : vector<8x32xf32>
    %814 = arith.mulf %794, %804 : vector<8x32xf32>
    %815 = arith.addf %813, %814 : vector<8x32xf32>
    %816 = math.tanh %815 : vector<8x32xf32>
    %817 = arith.mulf %812, %816 : vector<8x32xf32>
    %818 = vector.broadcast %780 : i32 to vector<8x1xi32>
    %819 = arith.cmpi slt, %818, %19 : vector<8x1xi32>
    %820 = vector.shape_cast %819 : vector<8x1xi1> to vector<8x1xi1>
    %821 = vector.broadcast %820 : vector<8x1xi1> to vector<8x32xi1>
    %c0_419 = arith.constant 0 : index
    %c0_420 = arith.constant 0 : index
    %822 = vector.load %arg16[%c0_419, %c0_420] : memref<8x32xf32, #tpu.memory_space<vmem>>, vector<8x32xf32>
    %823 = arith.select %821, %817, %822 : vector<8x32xi1>, vector<8x32xf32>
    %c0_421 = arith.constant 0 : index
    %c0_422 = arith.constant 0 : index
    %824 = vector.load %arg16[%c0_421, %c0_422] : memref<8x32xf32, #tpu.memory_space<vmem>>, vector<8x32xf32>
    tpu.vector_store %arg16[%c0_421, %c0_422], %823 {strides = array<i32>} : memref<8x32xf32, #tpu.memory_space<vmem>>, vector<8x32xf32>,
    %c0_423 = arith.constant 0 : index
    %c0_424 = arith.constant 0 : index
    %825 = vector.load %arg17[%c0_423, %c0_424] : memref<8x32xf32, #tpu.memory_space<vmem>>, vector<8x32xf32>
    %826 = arith.select %821, %815, %825 : vector<8x32xi1>, vector<8x32xf32>
    %c0_425 = arith.constant 0 : index
    %c0_426 = arith.constant 0 : index
    %827 = vector.load %arg17[%c0_425, %c0_426] : memref<8x32xf32, #tpu.memory_space<vmem>>, vector<8x32xf32>
    tpu.vector_store %arg17[%c0_425, %c0_426], %826 {strides = array<i32>} : memref<8x32xf32, #tpu.memory_space<vmem>>, vector<8x32xf32>,
    %cst_427 = arith.constant 0.000000e+00 : f32
    %828 = vector.broadcast %cst_427 : f32 to vector<8x32xf32>
    %829 = arith.select %821, %817, %828 : vector<8x32xi1>, vector<8x32xf32>
    %c0_428 = arith.constant 0 : index
    %830 = arith.index_cast %777 : i32 to index
    %c0_429 = arith.constant 0 : index
    %831 = vector.load %arg11[%c0_428, %830, %c0_429] : memref<1x64x32xf32, #tpu.memory_space<vmem>>, vector<1x8x32xf32>
    %832 = vector.shape_cast %831 : vector<1x8x32xf32> to vector<8x32xf32>
    %833 = vector.shape_cast %829 : vector<8x32xf32> to vector<1x8x32xf32>
    tpu.vector_store %arg11[%c0_428, %830, %c0_429], %833 {strides = array<i32>} : memref<1x64x32xf32, #tpu.memory_space<vmem>>, vector<1x8x32xf32>,
    %c7_i32_430 = arith.constant 7 : i32
    %c8_i32_431 = arith.constant 8 : i32
    %834 = arith.muli %c7_i32_430, %c8_i32_431 : i32
    %835 = tpu.assume_multiple %834, 8 : i32
    %c8_i32_432 = arith.constant 8 : i32
    %836 = arith.muli %arg0, %c8_i32_432 : i32
    %837 = arith.addi %836, %c7_i32_430 : i32
    %838 = arith.index_cast %835 : i32 to index
    %c0_433 = arith.constant 0 : index
    %839 = vector.load %arg12[%838, %c0_433] : memref<64x128xf32, #tpu.memory_space<vmem>>, vector<8x128xf32>
    %c0_434 = arith.constant 0 : index
    %c0_435 = arith.constant 0 : index
    %840 = vector.load %arg14[%c0_434, %c0_435] : memref<8x32xf32, #tpu.memory_space<vmem>>, vector<8x32xf32>
    %c0_436 = arith.constant 0 : index
    %c0_437 = arith.constant 0 : index
    %841 = vector.load %arg15[%c0_436, %c0_437] : memref<8x32xf32, #tpu.memory_space<vmem>>, vector<8x32xf32>
    %cst_438 = arith.constant dense<0.000000e+00> : vector<8x128xf32>
    %842 = tpu.matmul %840, %20, %cst_438 {dimension_numbers = #tpu.dot_dimension_numbers<[1], [0], [0], [1], [0, 0, 1, 1], [], []>} : vector<8x32xf32>, vector<32x128xf32>, vector<8x128xf32> -> vector<8x128xf32>
    %843 = arith.addf %839, %842 : vector<8x128xf32>
    %844 = vector.extract_strided_slice %843 {offsets = [0, 0], sizes = [8, 32], strides = [1, 1]} : vector<8x128xf32> to vector<8x32xf32>
    %cst_439 = arith.constant 5.000000e-01 : f32
    %845 = vector.broadcast %cst_439 : f32 to vector<8x32xf32>
    %846 = arith.mulf %845, %844 : vector<8x32xf32>
    %847 = math.tanh %846 : vector<8x32xf32>
    %cst_440 = arith.constant 5.000000e-01 : f32
    %848 = vector.broadcast %cst_440 : f32 to vector<8x32xf32>
    %849 = arith.mulf %848, %847 : vector<8x32xf32>
    %cst_441 = arith.constant 5.000000e-01 : f32
    %850 = vector.broadcast %cst_441 : f32 to vector<8x32xf32>
    %851 = arith.addf %849, %850 : vector<8x32xf32>
    %852 = vector.extract_strided_slice %843 {offsets = [0, 32], sizes = [8, 32], strides = [1, 1]} : vector<8x128xf32> to vector<8x32xf32>
    %cst_442 = arith.constant 5.000000e-01 : f32
    %853 = vector.broadcast %cst_442 : f32 to vector<8x32xf32>
    %854 = arith.mulf %853, %852 : vector<8x32xf32>
    %855 = math.tanh %854 : vector<8x32xf32>
    %cst_443 = arith.constant 5.000000e-01 : f32
    %856 = vector.broadcast %cst_443 : f32 to vector<8x32xf32>
    %857 = arith.mulf %856, %855 : vector<8x32xf32>
    %cst_444 = arith.constant 5.000000e-01 : f32
    %858 = vector.broadcast %cst_444 : f32 to vector<8x32xf32>
    %859 = arith.addf %857, %858 : vector<8x32xf32>
    %860 = vector.extract_strided_slice %843 {offsets = [0, 64], sizes = [8, 32], strides = [1, 1]} : vector<8x128xf32> to vector<8x32xf32>
    %861 = math.tanh %860 : vector<8x32xf32>
    %862 = vector.extract_strided_slice %843 {offsets = [0, 96], sizes = [8, 32], strides = [1, 1]} : vector<8x128xf32> to vector<8x32xf32>
    %cst_445 = arith.constant 5.000000e-01 : f32
    %863 = vector.broadcast %cst_445 : f32 to vector<8x32xf32>
    %864 = arith.mulf %863, %862 : vector<8x32xf32>
    %865 = math.tanh %864 : vector<8x32xf32>
    %cst_446 = arith.constant 5.000000e-01 : f32
    %866 = vector.broadcast %cst_446 : f32 to vector<8x32xf32>
    %867 = arith.mulf %866, %865 : vector<8x32xf32>
    %cst_447 = arith.constant 5.000000e-01 : f32
    %868 = vector.broadcast %cst_447 : f32 to vector<8x32xf32>
    %869 = arith.addf %867, %868 : vector<8x32xf32>
    %870 = arith.mulf %859, %841 : vector<8x32xf32>
    %871 = arith.mulf %851, %861 : vector<8x32xf32>
    %872 = arith.addf %870, %871 : vector<8x32xf32>
    %873 = math.tanh %872 : vector<8x32xf32>
    %874 = arith.mulf %869, %873 : vector<8x32xf32>
    %875 = vector.broadcast %837 : i32 to vector<8x1xi32>
    %876 = arith.cmpi slt, %875, %19 : vector<8x1xi32>
    %877 = vector.shape_cast %876 : vector<8x1xi1> to vector<8x1xi1>
    %878 = vector.broadcast %877 : vector<8x1xi1> to vector<8x32xi1>
    %c0_448 = arith.constant 0 : index
    %c0_449 = arith.constant 0 : index
    %879 = vector.load %arg14[%c0_448, %c0_449] : memref<8x32xf32, #tpu.memory_space<vmem>>, vector<8x32xf32>
    %880 = arith.select %878, %874, %879 : vector<8x32xi1>, vector<8x32xf32>
    %c0_450 = arith.constant 0 : index
    %c0_451 = arith.constant 0 : index
    %881 = vector.load %arg14[%c0_450, %c0_451] : memref<8x32xf32, #tpu.memory_space<vmem>>, vector<8x32xf32>
    tpu.vector_store %arg14[%c0_450, %c0_451], %880 {strides = array<i32>} : memref<8x32xf32, #tpu.memory_space<vmem>>, vector<8x32xf32>,
    %c0_452 = arith.constant 0 : index
    %c0_453 = arith.constant 0 : index
    %882 = vector.load %arg15[%c0_452, %c0_453] : memref<8x32xf32, #tpu.memory_space<vmem>>, vector<8x32xf32>
    %883 = arith.select %878, %872, %882 : vector<8x32xi1>, vector<8x32xf32>
    %c0_454 = arith.constant 0 : index
    %c0_455 = arith.constant 0 : index
    %884 = vector.load %arg15[%c0_454, %c0_455] : memref<8x32xf32, #tpu.memory_space<vmem>>, vector<8x32xf32>
    tpu.vector_store %arg15[%c0_454, %c0_455], %883 {strides = array<i32>} : memref<8x32xf32, #tpu.memory_space<vmem>>, vector<8x32xf32>,
    %cst_456 = arith.constant 0.000000e+00 : f32
    %885 = vector.broadcast %cst_456 : f32 to vector<8x32xf32>
    %886 = arith.select %878, %874, %885 : vector<8x32xi1>, vector<8x32xf32>
    %c0_457 = arith.constant 0 : index
    %887 = arith.index_cast %835 : i32 to index
    %c0_458 = arith.constant 0 : index
    %888 = vector.load %arg10[%c0_457, %887, %c0_458] : memref<1x64x32xf32, #tpu.memory_space<vmem>>, vector<1x8x32xf32>
    %889 = vector.shape_cast %888 : vector<1x8x32xf32> to vector<8x32xf32>
    %890 = vector.shape_cast %886 : vector<8x32xf32> to vector<1x8x32xf32>
    tpu.vector_store %arg10[%c0_457, %887, %c0_458], %890 {strides = array<i32>} : memref<1x64x32xf32, #tpu.memory_space<vmem>>, vector<1x8x32xf32>,
    %c7_i32_459 = arith.constant 7 : i32
    %891 = arith.subi %c7_i32_459, %c7_i32_430 : i32
    %c8_i32_460 = arith.constant 8 : i32
    %892 = arith.muli %891, %c8_i32_460 : i32
    %893 = tpu.assume_multiple %892, 8 : i32
    %c0_i32_461 = arith.constant 0 : i32
    %894 = arith.subi %c0_i32_461, %arg0 : i32
    %c8_i32_462 = arith.constant 8 : i32
    %895 = arith.muli %894, %c8_i32_462 : i32
    %896 = arith.addi %895, %891 : i32
    %897 = arith.index_cast %893 : i32 to index
    %c0_463 = arith.constant 0 : index
    %898 = vector.load %arg13[%897, %c0_463] : memref<64x128xf32, #tpu.memory_space<vmem>>, vector<8x128xf32>
    %c0_464 = arith.constant 0 : index
    %c0_465 = arith.constant 0 : index
    %899 = vector.load %arg16[%c0_464, %c0_465] : memref<8x32xf32, #tpu.memory_space<vmem>>, vector<8x32xf32>
    %c0_466 = arith.constant 0 : index
    %c0_467 = arith.constant 0 : index
    %900 = vector.load %arg17[%c0_466, %c0_467] : memref<8x32xf32, #tpu.memory_space<vmem>>, vector<8x32xf32>
    %cst_468 = arith.constant dense<0.000000e+00> : vector<8x128xf32>
    %901 = tpu.matmul %899, %21, %cst_468 {dimension_numbers = #tpu.dot_dimension_numbers<[1], [0], [0], [1], [0, 0, 1, 1], [], []>} : vector<8x32xf32>, vector<32x128xf32>, vector<8x128xf32> -> vector<8x128xf32>
    %902 = arith.addf %898, %901 : vector<8x128xf32>
    %903 = vector.extract_strided_slice %902 {offsets = [0, 0], sizes = [8, 32], strides = [1, 1]} : vector<8x128xf32> to vector<8x32xf32>
    %cst_469 = arith.constant 5.000000e-01 : f32
    %904 = vector.broadcast %cst_469 : f32 to vector<8x32xf32>
    %905 = arith.mulf %904, %903 : vector<8x32xf32>
    %906 = math.tanh %905 : vector<8x32xf32>
    %cst_470 = arith.constant 5.000000e-01 : f32
    %907 = vector.broadcast %cst_470 : f32 to vector<8x32xf32>
    %908 = arith.mulf %907, %906 : vector<8x32xf32>
    %cst_471 = arith.constant 5.000000e-01 : f32
    %909 = vector.broadcast %cst_471 : f32 to vector<8x32xf32>
    %910 = arith.addf %908, %909 : vector<8x32xf32>
    %911 = vector.extract_strided_slice %902 {offsets = [0, 32], sizes = [8, 32], strides = [1, 1]} : vector<8x128xf32> to vector<8x32xf32>
    %cst_472 = arith.constant 5.000000e-01 : f32
    %912 = vector.broadcast %cst_472 : f32 to vector<8x32xf32>
    %913 = arith.mulf %912, %911 : vector<8x32xf32>
    %914 = math.tanh %913 : vector<8x32xf32>
    %cst_473 = arith.constant 5.000000e-01 : f32
    %915 = vector.broadcast %cst_473 : f32 to vector<8x32xf32>
    %916 = arith.mulf %915, %914 : vector<8x32xf32>
    %cst_474 = arith.constant 5.000000e-01 : f32
    %917 = vector.broadcast %cst_474 : f32 to vector<8x32xf32>
    %918 = arith.addf %916, %917 : vector<8x32xf32>
    %919 = vector.extract_strided_slice %902 {offsets = [0, 64], sizes = [8, 32], strides = [1, 1]} : vector<8x128xf32> to vector<8x32xf32>
    %920 = math.tanh %919 : vector<8x32xf32>
    %921 = vector.extract_strided_slice %902 {offsets = [0, 96], sizes = [8, 32], strides = [1, 1]} : vector<8x128xf32> to vector<8x32xf32>
    %cst_475 = arith.constant 5.000000e-01 : f32
    %922 = vector.broadcast %cst_475 : f32 to vector<8x32xf32>
    %923 = arith.mulf %922, %921 : vector<8x32xf32>
    %924 = math.tanh %923 : vector<8x32xf32>
    %cst_476 = arith.constant 5.000000e-01 : f32
    %925 = vector.broadcast %cst_476 : f32 to vector<8x32xf32>
    %926 = arith.mulf %925, %924 : vector<8x32xf32>
    %cst_477 = arith.constant 5.000000e-01 : f32
    %927 = vector.broadcast %cst_477 : f32 to vector<8x32xf32>
    %928 = arith.addf %926, %927 : vector<8x32xf32>
    %929 = arith.mulf %918, %900 : vector<8x32xf32>
    %930 = arith.mulf %910, %920 : vector<8x32xf32>
    %931 = arith.addf %929, %930 : vector<8x32xf32>
    %932 = math.tanh %931 : vector<8x32xf32>
    %933 = arith.mulf %928, %932 : vector<8x32xf32>
    %934 = vector.broadcast %896 : i32 to vector<8x1xi32>
    %935 = arith.cmpi slt, %934, %19 : vector<8x1xi32>
    %936 = vector.shape_cast %935 : vector<8x1xi1> to vector<8x1xi1>
    %937 = vector.broadcast %936 : vector<8x1xi1> to vector<8x32xi1>
    %c0_478 = arith.constant 0 : index
    %c0_479 = arith.constant 0 : index
    %938 = vector.load %arg16[%c0_478, %c0_479] : memref<8x32xf32, #tpu.memory_space<vmem>>, vector<8x32xf32>
    %939 = arith.select %937, %933, %938 : vector<8x32xi1>, vector<8x32xf32>
    %c0_480 = arith.constant 0 : index
    %c0_481 = arith.constant 0 : index
    %940 = vector.load %arg16[%c0_480, %c0_481] : memref<8x32xf32, #tpu.memory_space<vmem>>, vector<8x32xf32>
    tpu.vector_store %arg16[%c0_480, %c0_481], %939 {strides = array<i32>} : memref<8x32xf32, #tpu.memory_space<vmem>>, vector<8x32xf32>,
    %c0_482 = arith.constant 0 : index
    %c0_483 = arith.constant 0 : index
    %941 = vector.load %arg17[%c0_482, %c0_483] : memref<8x32xf32, #tpu.memory_space<vmem>>, vector<8x32xf32>
    %942 = arith.select %937, %931, %941 : vector<8x32xi1>, vector<8x32xf32>
    %c0_484 = arith.constant 0 : index
    %c0_485 = arith.constant 0 : index
    %943 = vector.load %arg17[%c0_484, %c0_485] : memref<8x32xf32, #tpu.memory_space<vmem>>, vector<8x32xf32>
    tpu.vector_store %arg17[%c0_484, %c0_485], %942 {strides = array<i32>} : memref<8x32xf32, #tpu.memory_space<vmem>>, vector<8x32xf32>,
    %cst_486 = arith.constant 0.000000e+00 : f32
    %944 = vector.broadcast %cst_486 : f32 to vector<8x32xf32>
    %945 = arith.select %937, %933, %944 : vector<8x32xi1>, vector<8x32xf32>
    %c0_487 = arith.constant 0 : index
    %946 = arith.index_cast %893 : i32 to index
    %c0_488 = arith.constant 0 : index
    %947 = vector.load %arg11[%c0_487, %946, %c0_488] : memref<1x64x32xf32, #tpu.memory_space<vmem>>, vector<1x8x32xf32>
    %948 = vector.shape_cast %947 : vector<1x8x32xf32> to vector<8x32xf32>
    %949 = vector.shape_cast %945 : vector<8x32xf32> to vector<1x8x32xf32>
    tpu.vector_store %arg11[%c0_487, %946, %c0_488], %949 {strides = array<i32>} : memref<1x64x32xf32, #tpu.memory_space<vmem>>, vector<1x8x32xf32>,
    %c8_i32_489 = arith.constant 8 : i32
    return
  }
  func.func @transform_0(%arg0: i32) -> (i32, i32) {
    %c0_i32 = arith.constant 0 : i32
    %c0_i32_0 = arith.constant 0 : i32
    %c0_i32_1 = arith.constant 0 : i32
    return %c0_i32, %c0_i32_0 : i32, i32
  }
  func.func @transform_1(%arg0: i32) -> (i32, i32, i32) {
    %c0_i32 = arith.constant 0 : i32
    %c0_i32_0 = arith.constant 0 : i32
    %c0_i32_1 = arith.constant 0 : i32
    return %arg0, %c0_i32, %c0_i32_0 : i32, i32, i32
  }
  func.func @transform_2(%arg0: i32) -> (i32, i32, i32) {
    %c0_i32 = arith.constant 0 : i32
    %0 = arith.subi %c0_i32, %arg0 : i32
    %c0_i32_0 = arith.constant 0 : i32
    %c0_i32_1 = arith.constant 0 : i32
    %c0_i32_2 = arith.constant 0 : i32
    return %0, %c0_i32_0, %c0_i32_1 : i32, i32, i32
  }
  func.func @transform_3(%arg0: i32) -> (i32, i32) {
    %c0_i32 = arith.constant 0 : i32
    %c0_i32_0 = arith.constant 0 : i32
    %c0_i32_1 = arith.constant 0 : i32
    return %c0_i32, %c0_i32_0 : i32, i32
  }
  func.func @transform_4(%arg0: i32) -> (i32, i32) {
    %c0_i32 = arith.constant 0 : i32
    %c0_i32_0 = arith.constant 0 : i32
    %c0_i32_1 = arith.constant 0 : i32
    return %c0_i32, %c0_i32_0 : i32, i32
  }
  func.func @transform_5(%arg0: i32) -> (i32, i32) {
    %c0_i32 = arith.constant 0 : i32
    %c0_i32_0 = arith.constant 0 : i32
    %c0_i32_1 = arith.constant 0 : i32
    return %c0_i32, %c0_i32_0 : i32, i32
  }
  func.func @transform_6(%arg0: i32) -> (i32, i32) {
    %c0_i32 = arith.constant 0 : i32
    %c0_i32_0 = arith.constant 0 : i32
    %c0_i32_1 = arith.constant 0 : i32
    return %c0_i32, %c0_i32_0 : i32, i32
  }
  func.func @transform_7(%arg0: i32) -> (i32, i32) {
    %c0_i32 = arith.constant 0 : i32
    %c0_i32_0 = arith.constant 0 : i32
    %c0_i32_1 = arith.constant 0 : i32
    return %c0_i32, %c0_i32_0 : i32, i32
  }
  func.func @transform_8(%arg0: i32) -> (i32, i32) {
    %c0_i32 = arith.constant 0 : i32
    %c0_i32_0 = arith.constant 0 : i32
    %c0_i32_1 = arith.constant 0 : i32
    return %c0_i32, %c0_i32_0 : i32, i32
  }
  func.func @transform_9(%arg0: i32) -> (i32, i32, i32) {
    %c0_i32 = arith.constant 0 : i32
    %c0_i32_0 = arith.constant 0 : i32
    %c0_i32_1 = arith.constant 0 : i32
    return %arg0, %c0_i32, %c0_i32_0 : i32, i32, i32
  }
  func.func @transform_10(%arg0: i32) -> (i32, i32, i32) {
    %c0_i32 = arith.constant 0 : i32
    %0 = arith.subi %c0_i32, %arg0 : i32
    %c0_i32_0 = arith.constant 0 : i32
    %c0_i32_1 = arith.constant 0 : i32
    %c0_i32_2 = arith.constant 0 : i32
    return %0, %c0_i32_0, %c0_i32_1 : i32, i32, i32
  }
}

</mosaic_0001>

<llo_original>
// kernel: augmented_lstm_crf_forward.2
$region0: #{augmented_lstm_crf_forward.2}
  #allocation0 [shape = 'u32[]', space=smem, size = 0x4, offset = 0x4, fixed_abs, tag = 'smem constant byte address 0x4 - core index']
  #allocation1 [shape = 'u32[72,128]{1,0:T(1,128)}', space=vmem, size = 0x9000, scoped, tag = 'internal scratch']
  #allocation2 [shape = 'f32[64,128]{1,0:T(8,128)}', space=vmem, size = 0x8000, scoped, tag = 'scratch operand']
  #allocation3 [shape = 'f32[64,128]{1,0:T(8,128)}', space=vmem, size = 0x8000, scoped, tag = 'scratch operand']
  #allocation4 [shape = 'f32[8,32]{1,0:T(8,128)}', space=vmem, size = 0x1000, scoped, tag = 'scratch operand']
  #allocation5 [shape = 'f32[8,32]{1,0:T(8,128)}', space=vmem, size = 0x1000, scoped, tag = 'scratch operand']
  #allocation6 [shape = 'f32[8,32]{1,0:T(8,128)}', space=vmem, size = 0x1000, scoped, tag = 'scratch operand']
  #allocation7 [shape = 'f32[8,32]{1,0:T(8,128)}', space=vmem, size = 0x1000, scoped, tag = 'scratch operand']
  %s0 = inlined_call_operand.vmem [shape: s32[8,1], index: 0, kind: input, shape index: {}]
  %s1 = inlined_call_operand.vmem [shape: f32[1,64,32], index: 1, kind: input, shape index: {}, may-alias: {1,2}]
  %s2 = inlined_call_operand.vmem [shape: f32[1,64,32], index: 2, kind: input, shape index: {}, may-alias: {1,2}]
  %s3 = inlined_call_operand.vmem [shape: f32[32,128], index: 3, kind: input, shape index: {}]
  %s4 = inlined_call_operand.vmem [shape: f32[32,128], index: 4, kind: input, shape index: {}]
  %s5 = inlined_call_operand.vmem [shape: f32[32,128], index: 5, kind: input, shape index: {}]
  %s6 = inlined_call_operand.hbm [shape: f32[32,128], index: 6, kind: input, shape index: {}]
  %s7 = inlined_call_operand.vmem [shape: f32[1,128], index: 7, kind: input, shape index: {}]
  %s8 = inlined_call_operand.vmem [shape: f32[1,128], index: 8, kind: input, shape index: {}]
  %s9 = inlined_call_operand.vmem [shape: f32[1,64,32], index: 9, kind: output, shape index: {0}]
  %s10 = inlined_call_operand.vmem [shape: f32[1,64,32], index: 10, kind: output, shape index: {1}]
  %11 = xla_tuple %s9, %s10
  %s12 = sld [smem:[#allocation0]]
  $region62: #{augmented_lstm_crf_forward.2} parent=0
    _
  %s14 = ssub.s32 1, %s12
  %s15 = scalar_select 0, %s14, %s12
  $region1: #{augmented_lstm_crf_forward.2} parent=0
    #allocation8 [shape = 'u8[16384]{0}', space=vmem, size = 0x4000, scoped, tag = 'input window, operand 6, single buffered']
    #allocation9 [shape = 's32[1]{0}', space=sflag, size = 0x4, scoped, tag = 'scoped memory for augmented_lstm_crf_forward.2']
    %16 = vsyncpa [#allocation9], 0
    // Predicated region
    $region2: #{augmented_lstm_crf_forward.2} parent=1 // pred_check
      _
    $region3: #{augmented_lstm_crf_forward.2} parent=1 // pred_check_branch
      %18 = sbr.rel (0) target = $region5
    $region4: #{augmented_lstm_crf_forward.2} parent=1 // pred_region
      _
    $region5: #{augmented_lstm_crf_forward.2} parent=1 // pred_fallthru
      _
    // Predicated region
    $region6: #{augmented_lstm_crf_forward.2} parent=1 // pred_check
      _
    $region7: #{augmented_lstm_crf_forward.2} parent=1 // pred_check_branch
      %20 = sbr.rel (0) target = $region9
    $region8: #{augmented_lstm_crf_forward.2} parent=1 // pred_region
      _
    $region9: #{augmented_lstm_crf_forward.2} parent=1 // pred_fallthru
      _
    // Predicated region
    $region10: #{augmented_lstm_crf_forward.2} parent=1 // pred_check
      _
    $region11: #{augmented_lstm_crf_forward.2} parent=1 // pred_check_branch
      %22 = sbr.rel (0) target = $region13
    $region12: #{augmented_lstm_crf_forward.2} parent=1 // pred_region
      %s23 = ssub.s32 0, 0
      %p24 = scmp.lt.s32.totalorder %s23, 0
      %s25 = scalar_select %p24, %s23, 0
      %s26 = smul.addr %s25, 8
      %s27 = smul.addr %s26, 8
      %s28 = scalar_lea.vmem %s2, %s27
      %s29 = ssub.s32 0, 0
    $region13: #{augmented_lstm_crf_forward.2} parent=1 // pred_fallthru
      _
    // Predicated region
    $region14: #{augmented_lstm_crf_forward.2} parent=1 // pred_check
      _
    $region15: #{augmented_lstm_crf_forward.2} parent=1 // pred_check_branch
      %31 = sbr.rel (0) target = $region17
    $region16: #{augmented_lstm_crf_forward.2} parent=1 // pred_region
      _
    $region17: #{augmented_lstm_crf_forward.2} parent=1 // pred_fallthru
      _
    // Predicated region
    $region18: #{augmented_lstm_crf_forward.2} parent=1 // pred_check
      _
    $region19: #{augmented_lstm_crf_forward.2} parent=1 // pred_check_branch
      %33 = sbr.rel (0) target = $region21
    $region20: #{augmented_lstm_crf_forward.2} parent=1 // pred_region
      _
    $region21: #{augmented_lstm_crf_forward.2} parent=1 // pred_fallthru
      _
    // Predicated region
    $region22: #{augmented_lstm_crf_forward.2} parent=1 // pred_check
      _
    $region23: #{augmented_lstm_crf_forward.2} parent=1 // pred_check_branch
      %35 = sbr.rel (0) target = $region25
    $region24: #{augmented_lstm_crf_forward.2} parent=1 // pred_region
      _
    $region25: #{augmented_lstm_crf_forward.2} parent=1 // pred_fallthru
      _
    // Predicated region
    $region26: #{augmented_lstm_crf_forward.2} parent=1 // pred_check
      _
    $region27: #{augmented_lstm_crf_forward.2} parent=1 // pred_check_branch
      %37 = sbr.rel (0) target = $region29
    $region28: #{augmented_lstm_crf_forward.2} parent=1 // pred_region
      %39 = vsyncadd [#allocation9], 0
      %s40 = sshll.u32 %s6, 4
      %s41 = int_to_ptr.hbm [resolvable:$true] %s40
      %s42 = sshll.u32 [#allocation8], 4
      %s43 = int_to_ptr.vmem [resolvable:$true] %s42
      %48 = dma.hbm_to_vmem [thread:$0]  %s41, 512, %s43, [#allocation9], 128, 128, 8
    $region29: #{augmented_lstm_crf_forward.2} parent=1 // pred_fallthru
      _
    // Predicated region
    $region30: #{augmented_lstm_crf_forward.2} parent=1 // pred_check
      _
    $region31: #{augmented_lstm_crf_forward.2} parent=1 // pred_check_branch
      %50 = sbr.rel (0) target = $region33
    $region32: #{augmented_lstm_crf_forward.2} parent=1 // pred_region
      _
    $region33: #{augmented_lstm_crf_forward.2} parent=1 // pred_fallthru
      _
    // Predicated region
    $region34: #{augmented_lstm_crf_forward.2} parent=1 // pred_check
      _
    $region35: #{augmented_lstm_crf_forward.2} parent=1 // pred_check_branch
      %52 = sbr.rel (0) target = $region37
    $region36: #{augmented_lstm_crf_forward.2} parent=1 // pred_region
      _
    $region37: #{augmented_lstm_crf_forward.2} parent=1 // pred_fallthru
      _
    // Predicated region
    $region38: #{augmented_lstm_crf_forward.2} parent=1 // pred_check
      _
    $region39: #{augmented_lstm_crf_forward.2} parent=1 // pred_check_branch
      %54 = sbr.rel (0) target = $region41
    $region40: #{augmented_lstm_crf_forward.2} parent=1 // pred_region
      %56 = dma.done [#allocation9], 512
    $region41: #{augmented_lstm_crf_forward.2} parent=1 // pred_fallthru
      _
    %s57 = ssub.s32 0, 0
    %p58 = scmp.lt.s32.totalorder %s57, 0
    %s59 = scalar_select %p58, %s57, 0
    %s60 = smul.addr %s59, 8
    %s61 = smul.addr %s60, 8
    %s62 = scalar_lea.vmem %s2, %s61
    %s63 = ssub.s32 0, 0
    %p64 = scmp.lt.s32.totalorder %s63, 0
    %s65 = scalar_select %p64, %s63, 0
    %s66 = smul.addr %s65, 8
    %s67 = smul.addr %s66, 8
    %s68 = scalar_lea.vmem %s10, %s67
    %s69 = ssub.s32 0, 0
    %p70 = scmp.lt.s32.totalorder %s69, 0
    %s71 = scalar_select %p70, %s69, 0
    %s72 = smul.addr %s71, 8
    %s73 = smul.addr %s72, 8
    %s74 = scalar_lea.vmem %s2, %s73
    %s75 = ssub.s32 0, 0
    %s76 = ssub.s32 0, 0
    %p77 = scmp.lt.s32.totalorder %s76, 0
    %s78 = scalar_select %p77, %s76, 0
    %s79 = smul.addr %s78, 8
    %s80 = smul.addr %s79, 8
    %s81 = scalar_lea.vmem %s10, %s80
    %s82 = ssub.s32 0, 0
    %p83 = scmp.eq.s32.totalorder 0, 0
    // Predicated region
    $region42: #{augmented_lstm_crf_forward.2} parent=1 // pred_check
      %p84 = pneg %p83
    $region43: #{augmented_lstm_crf_forward.2} parent=1 // pred_check_branch
      %86 = sbr.rel (%p84) target = $region45
    $region44: #{augmented_lstm_crf_forward.2} parent=1 // pred_region
      %vm87 = vcmask 261120
      %88 = vst.msk [vmem:[#allocation4] sm:$0xff] %vm87, 0.0
      %89 = vst.msk [vmem:[#allocation5] sm:$0xff] %vm87, 0.0
      %90 = vst.msk [vmem:[#allocation6] sm:$0xff] %vm87, 0.0
      %91 = vst.msk [vmem:[#allocation7] sm:$0xff] %vm87, 0.0
    $region45: #{augmented_lstm_crf_forward.2} parent=1 // pred_fallthru
      _
    %v92 = vld [vmem:[%s1] sm:$0xff]
    %v93 = vld [vmem:[%s1 + $0x8] sm:$0xff]
    %v94 = vld [vmem:[%s1 + $0x10] sm:$0xff]
    %v95 = vld [vmem:[%s1 + $0x18] sm:$0xff]
    %v96 = vld [vmem:[%s1 + $0x20] sm:$0xff]
    %v97 = vld [vmem:[%s1 + $0x28] sm:$0xff]
    %v98 = vld [vmem:[%s1 + $0x30] sm:$0xff]
    %v99 = vld [vmem:[%s1 + $0x38] sm:$0xff]
    %v100 = vld [vmem:[%s3] sm:$0xff]
    %v101 = vld [vmem:[%s3 + $0x8] sm:$0xff]
    %v102 = vld [vmem:[%s3 + $0x10] sm:$0xff]
    %v103 = vld [vmem:[%s3 + $0x18] sm:$0xff]
    %v104 = vld [vmem:[%s7] sm:$0x1]
    %v106 = vperm.slane %v104, 0
    %vm108 = vcmask 261120
    %v110 = vsel %vm108, %v92, 0
    %v113 = vsel %vm108, %v93, 0
    %v116 = vsel %vm108, %v94, 0
    %v119 = vsel %vm108, %v95, 0
    %v122 = vsel %vm108, %v96, 0
    %v125 = vsel %vm108, %v97, 0
    %v128 = vsel %vm108, %v98, 0
    %v131 = vsel %vm108, %v99, 0
    %133 = vmatpush.msra.mxu0 0.0
    %134 = vmatpush.msra.mxu0 0.0
    %135 = vmatpush.msra.mxu0 0.0
    %136 = vmatpush.msra.mxu0 0.0
    %137 = vmatpush.msra.mxu0 0.0
    %138 = vmatpush.msra.mxu0 0.0
    %139 = vmatpush.msra.mxu0 0.0
    %140 = vmatpush.msra.mxu0 0.0
    %141 = vmatpush.msra.mxu0 0.0
    %142 = vmatpush.msra.mxu0 0.0
    %143 = vmatpush.msra.mxu0 0.0
    %144 = vmatpush.msra.mxu0 0.0
    %145 = vmatpush.msra.mxu0 %v103
    %146 = vmatpush.msra.mxu0 %v102
    %147 = vmatpush.msra.mxu0 %v101
    %148 = vmatpush.msra.mxu0 %v100
    %149 = vmatmul.f32.gmra.mxu0 %v110
    %v150 = vpop.f32.mrf.mxu0
    %v151 = vadd.f32 %v106, %v150
    %152 = vmatmul.f32.gmra.mxu0 %v113
    %v153 = vpop.f32.mrf.mxu0
    %v154 = vadd.f32 %v106, %v153
    %155 = vmatmul.f32.gmra.mxu0 %v116
    %v156 = vpop.f32.mrf.mxu0
    %v157 = vadd.f32 %v106, %v156
    %158 = vmatmul.f32.gmra.mxu0 %v119
    %v159 = vpop.f32.mrf.mxu0
    %v160 = vadd.f32 %v106, %v159
    %161 = vmatmul.f32.gmra.mxu0 %v122
    %v162 = vpop.f32.mrf.mxu0
    %v163 = vadd.f32 %v106, %v162
    %164 = vmatmul.f32.gmra.mxu0 %v125
    %v165 = vpop.f32.mrf.mxu0
    %v166 = vadd.f32 %v106, %v165
    %167 = vmatmul.f32.gmra.mxu0 %v128
    %v168 = vpop.f32.mrf.mxu0
    %v169 = vadd.f32 %v106, %v168
    %170 = vmatmul.f32.gmra.mxu0 %v131
    %v171 = vpop.f32.mrf.mxu0
    %v172 = vadd.f32 %v106, %v171
    %173 = vdwg.mxu0
    %174 = vst [vmem:[#allocation2] sm:$0xff] %v151
    %175 = vst [vmem:[#allocation2 + $0x8] sm:$0xff] %v154
    %176 = vst [vmem:[#allocation2 + $0x10] sm:$0xff] %v157
    %177 = vst [vmem:[#allocation2 + $0x18] sm:$0xff] %v160
    %178 = vst [vmem:[#allocation2 + $0x20] sm:$0xff] %v163
    %179 = vst [vmem:[#allocation2 + $0x28] sm:$0xff] %v166
    %180 = vst [vmem:[#allocation2 + $0x30] sm:$0xff] %v169
    %181 = vst [vmem:[#allocation2 + $0x38] sm:$0xff] %v172
    %v182 = vld [vmem:[%s74] sm:$0xff]
    %v183 = vld [vmem:[%s74 + $0x8] sm:$0xff]
    %v184 = vld [vmem:[%s74 + $0x10] sm:$0xff]
    %v185 = vld [vmem:[%s74 + $0x18] sm:$0xff]
    %v186 = vld [vmem:[%s74 + $0x20] sm:$0xff]
    %v187 = vld [vmem:[%s74 + $0x28] sm:$0xff]
    %v188 = vld [vmem:[%s74 + $0x30] sm:$0xff]
    %v189 = vld [vmem:[%s74 + $0x38] sm:$0xff]
    %v190 = vld [vmem:[%s4] sm:$0xff]
    %v191 = vld [vmem:[%s4 + $0x8] sm:$0xff]
    %v192 = vld [vmem:[%s4 + $0x10] sm:$0xff]
    %v193 = vld [vmem:[%s4 + $0x18] sm:$0xff]
    %v194 = vld [vmem:[%s8] sm:$0x1]
    %v196 = vperm.slane %v194, 0
    %v199 = vsel %vm108, %v182, 0
    %v202 = vsel %vm108, %v183, 0
    %v205 = vsel %vm108, %v184, 0
    %v208 = vsel %vm108, %v185, 0
    %v211 = vsel %vm108, %v186, 0
    %v214 = vsel %vm108, %v187, 0
    %v217 = vsel %vm108, %v188, 0
    %v220 = vsel %vm108, %v189, 0
    %222 = vmatpush.msra.mxu0 0.0
    %223 = vmatpush.msra.mxu0 0.0
    %224 = vmatpush.msra.mxu0 0.0
    %225 = vmatpush.msra.mxu0 0.0
    %226 = vmatpush.msra.mxu0 0.0
    %227 = vmatpush.msra.mxu0 0.0
    %228 = vmatpush.msra.mxu0 0.0
    %229 = vmatpush.msra.mxu0 0.0
    %230 = vmatpush.msra.mxu0 0.0
    %231 = vmatpush.msra.mxu0 0.0
    %232 = vmatpush.msra.mxu0 0.0
    %233 = vmatpush.msra.mxu0 0.0
    %234 = vmatpush.msra.mxu0 %v193
    %235 = vmatpush.msra.mxu0 %v192
    %236 = vmatpush.msra.mxu0 %v191
    %237 = vmatpush.msra.mxu0 %v190
    %238 = vmatmul.f32.gmra.mxu0 %v199
    %v239 = vpop.f32.mrf.mxu0
    %v240 = vadd.f32 %v196, %v239
    %241 = vmatmul.f32.gmra.mxu0 %v202
    %v242 = vpop.f32.mrf.mxu0
    %v243 = vadd.f32 %v196, %v242
    %244 = vmatmul.f32.gmra.mxu0 %v205
    %v245 = vpop.f32.mrf.mxu0
    %v246 = vadd.f32 %v196, %v245
    %247 = vmatmul.f32.gmra.mxu0 %v208
    %v248 = vpop.f32.mrf.mxu0
    %v249 = vadd.f32 %v196, %v248
    %250 = vmatmul.f32.gmra.mxu0 %v211
    %v251 = vpop.f32.mrf.mxu0
    %v252 = vadd.f32 %v196, %v251
    %253 = vmatmul.f32.gmra.mxu0 %v214
    %v254 = vpop.f32.mrf.mxu0
    %v255 = vadd.f32 %v196, %v254
    %256 = vmatmul.f32.gmra.mxu0 %v217
    %v257 = vpop.f32.mrf.mxu0
    %v258 = vadd.f32 %v196, %v257
    %259 = vmatmul.f32.gmra.mxu0 %v220
    %v260 = vpop.f32.mrf.mxu0
    %v261 = vadd.f32 %v196, %v260
    %262 = vdwg.mxu0
    %263 = vst [vmem:[#allocation3] sm:$0xff] %v240
    %264 = vst [vmem:[#allocation3 + $0x8] sm:$0xff] %v243
    %265 = vst [vmem:[#allocation3 + $0x10] sm:$0xff] %v246
    %266 = vst [vmem:[#allocation3 + $0x18] sm:$0xff] %v249
    %267 = vst [vmem:[#allocation3 + $0x20] sm:$0xff] %v252
    %268 = vst [vmem:[#allocation3 + $0x28] sm:$0xff] %v255
    %269 = vst [vmem:[#allocation3 + $0x30] sm:$0xff] %v258
    %270 = vst [vmem:[#allocation3 + $0x38] sm:$0xff] %v261
    %v271 = vld [vmem:[%s0] sm:$0xff]
    %v272 = vld [vmem:[%s5] sm:$0xff]
    %v273 = vld [vmem:[%s5 + $0x8] sm:$0xff]
    %v274 = vld [vmem:[%s5 + $0x10] sm:$0xff]
    %v275 = vld [vmem:[%s5 + $0x18] sm:$0xff]
    %v276 = vld [vmem:[#allocation8] sm:$0xff]
    %v277 = vld [vmem:[#allocation8 + $0x8] sm:$0xff]
    %v278 = vld [vmem:[#allocation8 + $0x10] sm:$0xff]
    %v279 = vld [vmem:[#allocation8 + $0x18] sm:$0xff]
    %s280 = smul.u32 0, 8
    %v281 = vld [vmem:[#allocation2] sm:$0xff]
    %v282 = vld [vmem:[#allocation4] sm:$0xff]
    %v283 = vld [vmem:[#allocation5] sm:$0xff]
    %v285 = vsel %vm108, %v282, 0
    %287 = vmatpush.msra.mxu0 0.0
    %288 = vmatpush.msra.mxu0 0.0
    %289 = vmatpush.msra.mxu0 0.0
    %290 = vmatpush.msra.mxu0 0.0
    %291 = vmatpush.msra.mxu0 0.0
    %292 = vmatpush.msra.mxu0 0.0
    %293 = vmatpush.msra.mxu0 0.0
    %294 = vmatpush.msra.mxu0 0.0
    %295 = vmatpush.msra.mxu0 0.0
    %296 = vmatpush.msra.mxu0 0.0
    %297 = vmatpush.msra.mxu0 0.0
    %298 = vmatpush.msra.mxu0 0.0
    %299 = vmatpush.msra.mxu0 %v275
    %300 = vmatpush.msra.mxu0 %v274
    %301 = vmatpush.msra.mxu0 %v273
    %302 = vmatpush.msra.mxu0 %v272
    %303 = vmatmul.f32.gmra.mxu0 %v285
    %v304 = vpop.f32.mrf.mxu0
    %v305 = vadd.f32 0.0, %v304
    %306 = vdwg.mxu0
    %v307 = vadd.f32 %v281, %v305
    %v308 = vmul.f32 %v307, 0.5
    %v309 = vtanh.pop %v308
    %v310 = vmul.f32 %v309, 0.5
    %v311 = vadd.f32 %v310, 0.5
    %v312 = vtanh.pop %v307
    %314 = vrot.lane.b32.xlu0 %v283, 32
    %v315 = vpop.permute.xlu0 %314
    %v317 = vmul.f32 %v311, %v315
    %319 = vrot.lane.b32.xlu0 %v312, 64
    %v320 = vpop.permute.xlu0 %319
    %v322 = vmul.f32 %v311, %v320
    %324 = vrot.lane.b32.xlu0 %v322, 32
    %v325 = vpop.permute.xlu0 %324
    %v327 = vadd.f32 %v317, %v325
    %v328 = vtanh.pop %v327
    %330 = vrot.lane.b32.xlu0 %v328, 64
    %v331 = vpop.permute.xlu0 %330
    %v333 = vmul.f32 %v311, %v331
    %v334 = vstv %s280
    %vm335 = vcmp.lt.s32.totalorder %v334, %v271
    %v336 = vsel %vm335, 1, 0
    %337 = vset.pattern.permute.xlu0 0
    %338 = vperm.xlu0 %337, %v336
    %v339 = vpop.permute.xlu0 %338
    %vm340 = vcmp.eq.s32.totalorder %v339, 1
    %341 = vrot.lane.b32.xlu0 %v282, 96
    %v342 = vpop.permute.xlu0 %341
    %v344 = vsel %vm340, %v333, %v342
    %346 = vrot.lane.b32.xlu0 %v344, 32
    %v347 = vpop.permute.xlu0 %346
    %349 = vst.msk [vmem:[#allocation4] sm:$0xff] %vm108, %v347
    %v350 = vld [vmem:[#allocation5] sm:$0xff]
    %352 = vrot.lane.b32.xlu0 %v350, 32
    %v353 = vpop.permute.xlu0 %352
    %v355 = vsel %vm340, %v327, %v353
    %357 = vrot.lane.b32.xlu0 %v355, 96
    %v358 = vpop.permute.xlu0 %357
    %360 = vst.msk [vmem:[#allocation5] sm:$0xff] %vm108, %v358
    %v361 = vsel %vm340, %v333, 0.0
    %363 = vrot.lane.b32.xlu0 %v361, 32
    %v364 = vpop.permute.xlu0 %363
    %366 = vst.msk [vmem:[%s9] sm:$0xff] %vm108, %v364
    %s367 = ssub.s32 0, 0
    %s368 = smul.u32 %s367, 8
    %s369 = sadd.s32 %s368, 7
    %s370 = scalar_lea.vmem [#allocation3], 56
    %v371 = vld [vmem:[%s370] sm:$0xff]
    %v372 = vld [vmem:[#allocation6] sm:$0xff]
    %v373 = vld [vmem:[#allocation7] sm:$0xff]
    %v375 = vsel %vm108, %v372, 0
    %377 = vmatpush.msra.mxu0 0.0
    %378 = vmatpush.msra.mxu0 0.0
    %379 = vmatpush.msra.mxu0 0.0
    %380 = vmatpush.msra.mxu0 0.0
    %381 = vmatpush.msra.mxu0 0.0
    %382 = vmatpush.msra.mxu0 0.0
    %383 = vmatpush.msra.mxu0 0.0
    %384 = vmatpush.msra.mxu0 0.0
    %385 = vmatpush.msra.mxu0 0.0
    %386 = vmatpush.msra.mxu0 0.0
    %387 = vmatpush.msra.mxu0 0.0
    %388 = vmatpush.msra.mxu0 0.0
    %389 = vmatpush.msra.mxu0 %v279
    %390 = vmatpush.msra.mxu0 %v278
    %391 = vmatpush.msra.mxu0 %v277
    %392 = vmatpush.msra.mxu0 %v276
    %393 = vmatmul.f32.gmra.mxu0 %v375
    %v394 = vpop.f32.mrf.mxu0
    %v395 = vadd.f32 0.0, %v394
    %396 = vdwg.mxu0
    %v397 = vadd.f32 %v371, %v395
    %v398 = vmul.f32 %v397, 0.5
    %v399 = vtanh.pop %v398
    %v400 = vmul.f32 %v399, 0.5
    %v401 = vadd.f32 %v400, 0.5
    %v402 = vtanh.pop %v397
    %404 = vrot.lane.b32.xlu0 %v373, 32
    %v405 = vpop.permute.xlu0 %404
    %v407 = vmul.f32 %v401, %v405
    %409 = vrot.lane.b32.xlu0 %v402, 64
    %v410 = vpop.permute.xlu0 %409
    %v412 = vmul.f32 %v401, %v410
    %414 = vrot.lane.b32.xlu0 %v412, 32
    %v415 = vpop.permute.xlu0 %414
    %v417 = vadd.f32 %v407, %v415
    %v418 = vtanh.pop %v417
    %420 = vrot.lane.b32.xlu0 %v418, 64
    %v421 = vpop.permute.xlu0 %420
    %v423 = vmul.f32 %v401, %v421
    %v424 = vstv %s369
    %vm425 = vcmp.lt.s32.totalorder %v424, %v271
    %v426 = vsel %vm425, 1, 0
    %427 = vset.pattern.permute.xlu0 0
    %428 = vperm.xlu0 %427, %v426
    %v429 = vpop.permute.xlu0 %428
    %vm430 = vcmp.eq.s32.totalorder %v429, 1
    %431 = vrot.lane.b32.xlu0 %v372, 96
    %v432 = vpop.permute.xlu0 %431
    %v434 = vsel %vm430, %v423, %v432
    %436 = vrot.lane.b32.xlu0 %v434, 32
    %v437 = vpop.permute.xlu0 %436
    %439 = vst.msk [vmem:[#allocation6] sm:$0xff] %vm108, %v437
    %v440 = vld [vmem:[#allocation7] sm:$0xff]
    %442 = vrot.lane.b32.xlu0 %v440, 32
    %v443 = vpop.permute.xlu0 %442
    %v445 = vsel %vm430, %v417, %v443
    %447 = vrot.lane.b32.xlu0 %v445, 96
    %v448 = vpop.permute.xlu0 %447
    %450 = vst.msk [vmem:[#allocation7] sm:$0xff] %vm108, %v448
    %v451 = vsel %vm430, %v423, 0.0
    %453 = vrot.lane.b32.xlu0 %v451, 32
    %v454 = vpop.permute.xlu0 %453
    %s456 = scalar_lea.vmem %s81, 56
    %457 = vst.msk [vmem:[%s456] sm:$0xff] %vm108, %v454
    %s458 = sadd.s32 %s280, 1
    %s459 = scalar_lea.vmem [#allocation2], 8
    %v460 = vld [vmem:[%s459] sm:$0xff]
    %v461 = vld [vmem:[#allocation4] sm:$0xff]
    %v462 = vld [vmem:[#allocation5] sm:$0xff]
    %v464 = vsel %vm108, %v461, 0
    %466 = vmatpush.msra.mxu0 0.0
    %467 = vmatpush.msra.mxu0 0.0
    %468 = vmatpush.msra.mxu0 0.0
    %469 = vmatpush.msra.mxu0 0.0
    %470 = vmatpush.msra.mxu0 0.0
    %471 = vmatpush.msra.mxu0 0.0
    %472 = vmatpush.msra.mxu0 0.0
    %473 = vmatpush.msra.mxu0 0.0
    %474 = vmatpush.msra.mxu0 0.0
    %475 = vmatpush.msra.mxu0 0.0
    %476 = vmatpush.msra.mxu0 0.0
    %477 = vmatpush.msra.mxu0 0.0
    %478 = vmatpush.msra.mxu0 %v275
    %479 = vmatpush.msra.mxu0 %v274
    %480 = vmatpush.msra.mxu0 %v273
    %481 = vmatpush.msra.mxu0 %v272
    %482 = vmatmul.f32.gmra.mxu0 %v464
    %v483 = vpop.f32.mrf.mxu0
    %v484 = vadd.f32 0.0, %v483
    %485 = vdwg.mxu0
    %v486 = vadd.f32 %v460, %v484
    %v487 = vmul.f32 %v486, 0.5
    %v488 = vtanh.pop %v487
    %v489 = vmul.f32 %v488, 0.5
    %v490 = vadd.f32 %v489, 0.5
    %v491 = vtanh.pop %v486
    %493 = vrot.lane.b32.xlu0 %v462, 32
    %v494 = vpop.permute.xlu0 %493
    %v496 = vmul.f32 %v490, %v494
    %498 = vrot.lane.b32.xlu0 %v491, 64
    %v499 = vpop.permute.xlu0 %498
    %v501 = vmul.f32 %v490, %v499
    %503 = vrot.lane.b32.xlu0 %v501, 32
    %v504 = vpop.permute.xlu0 %503
    %v506 = vadd.f32 %v496, %v504
    %v507 = vtanh.pop %v506
    %509 = vrot.lane.b32.xlu0 %v507, 64
    %v510 = vpop.permute.xlu0 %509
    %v512 = vmul.f32 %v490, %v510
    %v513 = vstv %s458
    %vm514 = vcmp.lt.s32.totalorder %v513, %v271
    %v515 = vsel %vm514, 1, 0
    %516 = vset.pattern.permute.xlu0 0
    %517 = vperm.xlu0 %516, %v515
    %v518 = vpop.permute.xlu0 %517
    %vm519 = vcmp.eq.s32.totalorder %v518, 1
    %520 = vrot.lane.b32.xlu0 %v461, 96
    %v521 = vpop.permute.xlu0 %520
    %v523 = vsel %vm519, %v512, %v521
    %525 = vrot.lane.b32.xlu0 %v523, 32
    %v526 = vpop.permute.xlu0 %525
    %528 = vst.msk [vmem:[#allocation4] sm:$0xff] %vm108, %v526
    %v529 = vld [vmem:[#allocation5] sm:$0xff]
    %531 = vrot.lane.b32.xlu0 %v529, 32
    %v532 = vpop.permute.xlu0 %531
    %v534 = vsel %vm519, %v506, %v532
    %536 = vrot.lane.b32.xlu0 %v534, 96
    %v537 = vpop.permute.xlu0 %536
    %539 = vst.msk [vmem:[#allocation5] sm:$0xff] %vm108, %v537
    %v540 = vsel %vm519, %v512, 0.0
    %542 = vrot.lane.b32.xlu0 %v540, 32
    %v543 = vpop.permute.xlu0 %542
    %s545 = scalar_lea.vmem %s9, 8
    %546 = vst.msk [vmem:[%s545] sm:$0xff] %vm108, %v543
    %s547 = sadd.s32 %s368, 6
    %s548 = scalar_lea.vmem [#allocation3], 48
    %v549 = vld [vmem:[%s548] sm:$0xff]
    %v550 = vld [vmem:[#allocation6] sm:$0xff]
    %v551 = vld [vmem:[#allocation7] sm:$0xff]
    %v553 = vsel %vm108, %v550, 0
    %555 = vmatpush.msra.mxu0 0.0
    %556 = vmatpush.msra.mxu0 0.0
    %557 = vmatpush.msra.mxu0 0.0
    %558 = vmatpush.msra.mxu0 0.0
    %559 = vmatpush.msra.mxu0 0.0
    %560 = vmatpush.msra.mxu0 0.0
    %561 = vmatpush.msra.mxu0 0.0
    %562 = vmatpush.msra.mxu0 0.0
    %563 = vmatpush.msra.mxu0 0.0
    %564 = vmatpush.msra.mxu0 0.0
    %565 = vmatpush.msra.mxu0 0.0
    %566 = vmatpush.msra.mxu0 0.0
    %567 = vmatpush.msra.mxu0 %v279
    %568 = vmatpush.msra.mxu0 %v278
    %569 = vmatpush.msra.mxu0 %v277
    %570 = vmatpush.msra.mxu0 %v276
    %571 = vmatmul.f32.gmra.mxu0 %v553
    %v572 = vpop.f32.mrf.mxu0
    %v573 = vadd.f32 0.0, %v572
    %574 = vdwg.mxu0
    %v575 = vadd.f32 %v549, %v573
    %v576 = vmul.f32 %v575, 0.5
    %v577 = vtanh.pop %v576
    %v578 = vmul.f32 %v577, 0.5
    %v579 = vadd.f32 %v578, 0.5
    %v580 = vtanh.pop %v575
    %582 = vrot.lane.b32.xlu0 %v551, 32
    %v583 = vpop.permute.xlu0 %582
    %v585 = vmul.f32 %v579, %v583
    %587 = vrot.lane.b32.xlu0 %v580, 64
    %v588 = vpop.permute.xlu0 %587
    %v590 = vmul.f32 %v579, %v588
    %592 = vrot.lane.b32.xlu0 %v590, 32
    %v593 = vpop.permute.xlu0 %592
    %v595 = vadd.f32 %v585, %v593
    %v596 = vtanh.pop %v595
    %598 = vrot.lane.b32.xlu0 %v596, 64
    %v599 = vpop.permute.xlu0 %598
    %v601 = vmul.f32 %v579, %v599
    %v602 = vstv %s547
    %vm603 = vcmp.lt.s32.totalorder %v602, %v271
    %v604 = vsel %vm603, 1, 0
    %605 = vset.pattern.permute.xlu0 0
    %606 = vperm.xlu0 %605, %v604
    %v607 = vpop.permute.xlu0 %606
    %vm608 = vcmp.eq.s32.totalorder %v607, 1
    %609 = vrot.lane.b32.xlu0 %v550, 96
    %v610 = vpop.permute.xlu0 %609
    %v612 = vsel %vm608, %v601, %v610
    %614 = vrot.lane.b32.xlu0 %v612, 32
    %v615 = vpop.permute.xlu0 %614
    %617 = vst.msk [vmem:[#allocation6] sm:$0xff] %vm108, %v615
    %v618 = vld [vmem:[#allocation7] sm:$0xff]
    %620 = vrot.lane.b32.xlu0 %v618, 32
    %v621 = vpop.permute.xlu0 %620
    %v623 = vsel %vm608, %v595, %v621
    %625 = vrot.lane.b32.xlu0 %v623, 96
    %v626 = vpop.permute.xlu0 %625
    %628 = vst.msk [vmem:[#allocation7] sm:$0xff] %vm108, %v626
    %v629 = vsel %vm608, %v601, 0.0
    %631 = vrot.lane.b32.xlu0 %v629, 32
    %v632 = vpop.permute.xlu0 %631
    %s634 = scalar_lea.vmem %s81, 48
    %635 = vst.msk [vmem:[%s634] sm:$0xff] %vm108, %v632
    %s636 = sadd.s32 %s280, 2
    %s637 = scalar_lea.vmem [#allocation2], 16
    %v638 = vld [vmem:[%s637] sm:$0xff]
    %v639 = vld [vmem:[#allocation4] sm:$0xff]
    %v640 = vld [vmem:[#allocation5] sm:$0xff]
    %v642 = vsel %vm108, %v639, 0
    %644 = vmatpush.msra.mxu0 0.0
    %645 = vmatpush.msra.mxu0 0.0
    %646 = vmatpush.msra.mxu0 0.0
    %647 = vmatpush.msra.mxu0 0.0
    %648 = vmatpush.msra.mxu0 0.0
    %649 = vmatpush.msra.mxu0 0.0
    %650 = vmatpush.msra.mxu0 0.0
    %651 = vmatpush.msra.mxu0 0.0
    %652 = vmatpush.msra.mxu0 0.0
    %653 = vmatpush.msra.mxu0 0.0
    %654 = vmatpush.msra.mxu0 0.0
    %655 = vmatpush.msra.mxu0 0.0
    %656 = vmatpush.msra.mxu0 %v275
    %657 = vmatpush.msra.mxu0 %v274
    %658 = vmatpush.msra.mxu0 %v273
    %659 = vmatpush.msra.mxu0 %v272
    %660 = vmatmul.f32.gmra.mxu0 %v642
    %v661 = vpop.f32.mrf.mxu0
    %v662 = vadd.f32 0.0, %v661
    %663 = vdwg.mxu0
    %v664 = vadd.f32 %v638, %v662
    %v665 = vmul.f32 %v664, 0.5
    %v666 = vtanh.pop %v665
    %v667 = vmul.f32 %v666, 0.5
    %v668 = vadd.f32 %v667, 0.5
    %v669 = vtanh.pop %v664
    %671 = vrot.lane.b32.xlu0 %v640, 32
    %v672 = vpop.permute.xlu0 %671
    %v674 = vmul.f32 %v668, %v672
    %676 = vrot.lane.b32.xlu0 %v669, 64
    %v677 = vpop.permute.xlu0 %676
    %v679 = vmul.f32 %v668, %v677
    %681 = vrot.lane.b32.xlu0 %v679, 32
    %v682 = vpop.permute.xlu0 %681
    %v684 = vadd.f32 %v674, %v682
    %v685 = vtanh.pop %v684
    %687 = vrot.lane.b32.xlu0 %v685, 64
    %v688 = vpop.permute.xlu0 %687
    %v690 = vmul.f32 %v668, %v688
    %v691 = vstv %s636
    %vm692 = vcmp.lt.s32.totalorder %v691, %v271
    %v693 = vsel %vm692, 1, 0
    %694 = vset.pattern.permute.xlu0 0
    %695 = vperm.xlu0 %694, %v693
    %v696 = vpop.permute.xlu0 %695
    %vm697 = vcmp.eq.s32.totalorder %v696, 1
    %698 = vrot.lane.b32.xlu0 %v639, 96
    %v699 = vpop.permute.xlu0 %698
    %v701 = vsel %vm697, %v690, %v699
    %703 = vrot.lane.b32.xlu0 %v701, 32
    %v704 = vpop.permute.xlu0 %703
    %706 = vst.msk [vmem:[#allocation4] sm:$0xff] %vm108, %v704
    %v707 = vld [vmem:[#allocation5] sm:$0xff]
    %709 = vrot.lane.b32.xlu0 %v707, 32
    %v710 = vpop.permute.xlu0 %709
    %v712 = vsel %vm697, %v684, %v710
    %714 = vrot.lane.b32.xlu0 %v712, 96
    %v715 = vpop.permute.xlu0 %714
    %717 = vst.msk [vmem:[#allocation5] sm:$0xff] %vm108, %v715
    %v718 = vsel %vm697, %v690, 0.0
    %720 = vrot.lane.b32.xlu0 %v718, 32
    %v721 = vpop.permute.xlu0 %720
    %s723 = scalar_lea.vmem %s9, 16
    %724 = vst.msk [vmem:[%s723] sm:$0xff] %vm108, %v721
    %s725 = sadd.s32 %s368, 5
    %s726 = scalar_lea.vmem [#allocation3], 40
    %v727 = vld [vmem:[%s726] sm:$0xff]
    %v728 = vld [vmem:[#allocation6] sm:$0xff]
    %v729 = vld [vmem:[#allocation7] sm:$0xff]
    %v731 = vsel %vm108, %v728, 0
    %733 = vmatpush.msra.mxu0 0.0
    %734 = vmatpush.msra.mxu0 0.0
    %735 = vmatpush.msra.mxu0 0.0
    %736 = vmatpush.msra.mxu0 0.0
    %737 = vmatpush.msra.mxu0 0.0
    %738 = vmatpush.msra.mxu0 0.0
    %739 = vmatpush.msra.mxu0 0.0
    %740 = vmatpush.msra.mxu0 0.0
    %741 = vmatpush.msra.mxu0 0.0
    %742 = vmatpush.msra.mxu0 0.0
    %743 = vmatpush.msra.mxu0 0.0
    %744 = vmatpush.msra.mxu0 0.0
    %745 = vmatpush.msra.mxu0 %v279
    %746 = vmatpush.msra.mxu0 %v278
    %747 = vmatpush.msra.mxu0 %v277
    %748 = vmatpush.msra.mxu0 %v276
    %749 = vmatmul.f32.gmra.mxu0 %v731
    %v750 = vpop.f32.mrf.mxu0
    %v751 = vadd.f32 0.0, %v750
    %752 = vdwg.mxu0
    %v753 = vadd.f32 %v727, %v751
    %v754 = vmul.f32 %v753, 0.5
    %v755 = vtanh.pop %v754
    %v756 = vmul.f32 %v755, 0.5
    %v757 = vadd.f32 %v756, 0.5
    %v758 = vtanh.pop %v753
    %760 = vrot.lane.b32.xlu0 %v729, 32
    %v761 = vpop.permute.xlu0 %760
    %v763 = vmul.f32 %v757, %v761
    %765 = vrot.lane.b32.xlu0 %v758, 64
    %v766 = vpop.permute.xlu0 %765
    %v768 = vmul.f32 %v757, %v766
    %770 = vrot.lane.b32.xlu0 %v768, 32
    %v771 = vpop.permute.xlu0 %770
    %v773 = vadd.f32 %v763, %v771
    %v774 = vtanh.pop %v773
    %776 = vrot.lane.b32.xlu0 %v774, 64
    %v777 = vpop.permute.xlu0 %776
    %v779 = vmul.f32 %v757, %v777
    %v780 = vstv %s725
    %vm781 = vcmp.lt.s32.totalorder %v780, %v271
    %v782 = vsel %vm781, 1, 0
    %783 = vset.pattern.permute.xlu0 0
    %784 = vperm.xlu0 %783, %v782
    %v785 = vpop.permute.xlu0 %784
    %vm786 = vcmp.eq.s32.totalorder %v785, 1
    %787 = vrot.lane.b32.xlu0 %v728, 96
    %v788 = vpop.permute.xlu0 %787
    %v790 = vsel %vm786, %v779, %v788
    %792 = vrot.lane.b32.xlu0 %v790, 32
    %v793 = vpop.permute.xlu0 %792
    %795 = vst.msk [vmem:[#allocation6] sm:$0xff] %vm108, %v793
    %v796 = vld [vmem:[#allocation7] sm:$0xff]
    %798 = vrot.lane.b32.xlu0 %v796, 32
    %v799 = vpop.permute.xlu0 %798
    %v801 = vsel %vm786, %v773, %v799
    %803 = vrot.lane.b32.xlu0 %v801, 96
    %v804 = vpop.permute.xlu0 %803
    %806 = vst.msk [vmem:[#allocation7] sm:$0xff] %vm108, %v804
    %v807 = vsel %vm786, %v779, 0.0
    %809 = vrot.lane.b32.xlu0 %v807, 32
    %v810 = vpop.permute.xlu0 %809
    %s812 = scalar_lea.vmem %s81, 40
    %813 = vst.msk [vmem:[%s812] sm:$0xff] %vm108, %v810
    %s814 = sadd.s32 %s280, 3
    %s815 = scalar_lea.vmem [#allocation2], 24
    %v816 = vld [vmem:[%s815] sm:$0xff]
    %v817 = vld [vmem:[#allocation4] sm:$0xff]
    %v818 = vld [vmem:[#allocation5] sm:$0xff]
    %v820 = vsel %vm108, %v817, 0
    %822 = vmatpush.msra.mxu0 0.0
    %823 = vmatpush.msra.mxu0 0.0
    %824 = vmatpush.msra.mxu0 0.0
    %825 = vmatpush.msra.mxu0 0.0
    %826 = vmatpush.msra.mxu0 0.0
    %827 = vmatpush.msra.mxu0 0.0
    %828 = vmatpush.msra.mxu0 0.0
    %829 = vmatpush.msra.mxu0 0.0
    %830 = vmatpush.msra.mxu0 0.0
    %831 = vmatpush.msra.mxu0 0.0
    %832 = vmatpush.msra.mxu0 0.0
    %833 = vmatpush.msra.mxu0 0.0
    %834 = vmatpush.msra.mxu0 %v275
    %835 = vmatpush.msra.mxu0 %v274
    %836 = vmatpush.msra.mxu0 %v273
    %837 = vmatpush.msra.mxu0 %v272
    %838 = vmatmul.f32.gmra.mxu0 %v820
    %v839 = vpop.f32.mrf.mxu0
    %v840 = vadd.f32 0.0, %v839
    %841 = vdwg.mxu0
    %v842 = vadd.f32 %v816, %v840
    %v843 = vmul.f32 %v842, 0.5
    %v844 = vtanh.pop %v843
    %v845 = vmul.f32 %v844, 0.5
    %v846 = vadd.f32 %v845, 0.5
    %v847 = vtanh.pop %v842
    %849 = vrot.lane.b32.xlu0 %v818, 32
    %v850 = vpop.permute.xlu0 %849
    %v852 = vmul.f32 %v846, %v850
    %854 = vrot.lane.b32.xlu0 %v847, 64
    %v855 = vpop.permute.xlu0 %854
    %v857 = vmul.f32 %v846, %v855
    %859 = vrot.lane.b32.xlu0 %v857, 32
    %v860 = vpop.permute.xlu0 %859
    %v862 = vadd.f32 %v852, %v860
    %v863 = vtanh.pop %v862
    %865 = vrot.lane.b32.xlu0 %v863, 64
    %v866 = vpop.permute.xlu0 %865
    %v868 = vmul.f32 %v846, %v866
    %v869 = vstv %s814
    %vm870 = vcmp.lt.s32.totalorder %v869, %v271
    %v871 = vsel %vm870, 1, 0
    %872 = vset.pattern.permute.xlu0 0
    %873 = vperm.xlu0 %872, %v871
    %v874 = vpop.permute.xlu0 %873
    %vm875 = vcmp.eq.s32.totalorder %v874, 1
    %876 = vrot.lane.b32.xlu0 %v817, 96
    %v877 = vpop.permute.xlu0 %876
    %v879 = vsel %vm875, %v868, %v877
    %881 = vrot.lane.b32.xlu0 %v879, 32
    %v882 = vpop.permute.xlu0 %881
    %884 = vst.msk [vmem:[#allocation4] sm:$0xff] %vm108, %v882
    %v885 = vld [vmem:[#allocation5] sm:$0xff]
    %887 = vrot.lane.b32.xlu0 %v885, 32
    %v888 = vpop.permute.xlu0 %887
    %v890 = vsel %vm875, %v862, %v888
    %892 = vrot.lane.b32.xlu0 %v890, 96
    %v893 = vpop.permute.xlu0 %892
    %895 = vst.msk [vmem:[#allocation5] sm:$0xff] %vm108, %v893
    %v896 = vsel %vm875, %v868, 0.0
    %898 = vrot.lane.b32.xlu0 %v896, 32
    %v899 = vpop.permute.xlu0 %898
    %s901 = scalar_lea.vmem %s9, 24
    %902 = vst.msk [vmem:[%s901] sm:$0xff] %vm108, %v899
    %s903 = sadd.s32 %s368, 4
    %s904 = scalar_lea.vmem [#allocation3], 32
    %v905 = vld [vmem:[%s904] sm:$0xff]
    %v906 = vld [vmem:[#allocation6] sm:$0xff]
    %v907 = vld [vmem:[#allocation7] sm:$0xff]
    %v909 = vsel %vm108, %v906, 0
    %911 = vmatpush.msra.mxu0 0.0
    %912 = vmatpush.msra.mxu0 0.0
    %913 = vmatpush.msra.mxu0 0.0
    %914 = vmatpush.msra.mxu0 0.0
    %915 = vmatpush.msra.mxu0 0.0
    %916 = vmatpush.msra.mxu0 0.0
    %917 = vmatpush.msra.mxu0 0.0
    %918 = vmatpush.msra.mxu0 0.0
    %919 = vmatpush.msra.mxu0 0.0
    %920 = vmatpush.msra.mxu0 0.0
    %921 = vmatpush.msra.mxu0 0.0
    %922 = vmatpush.msra.mxu0 0.0
    %923 = vmatpush.msra.mxu0 %v279
    %924 = vmatpush.msra.mxu0 %v278
    %925 = vmatpush.msra.mxu0 %v277
    %926 = vmatpush.msra.mxu0 %v276
    %927 = vmatmul.f32.gmra.mxu0 %v909
    %v928 = vpop.f32.mrf.mxu0
    %v929 = vadd.f32 0.0, %v928
    %930 = vdwg.mxu0
    %v931 = vadd.f32 %v905, %v929
    %v932 = vmul.f32 %v931, 0.5
    %v933 = vtanh.pop %v932
    %v934 = vmul.f32 %v933, 0.5
    %v935 = vadd.f32 %v934, 0.5
    %v936 = vtanh.pop %v931
    %938 = vrot.lane.b32.xlu0 %v907, 32
    %v939 = vpop.permute.xlu0 %938
    %v941 = vmul.f32 %v935, %v939
    %943 = vrot.lane.b32.xlu0 %v936, 64
    %v944 = vpop.permute.xlu0 %943
    %v946 = vmul.f32 %v935, %v944
    %948 = vrot.lane.b32.xlu0 %v946, 32
    %v949 = vpop.permute.xlu0 %948
    %v951 = vadd.f32 %v941, %v949
    %v952 = vtanh.pop %v951
    %954 = vrot.lane.b32.xlu0 %v952, 64
    %v955 = vpop.permute.xlu0 %954
    %v957 = vmul.f32 %v935, %v955
    %v958 = vstv %s903
    %vm959 = vcmp.lt.s32.totalorder %v958, %v271
    %v960 = vsel %vm959, 1, 0
    %961 = vset.pattern.permute.xlu0 0
    %962 = vperm.xlu0 %961, %v960
    %v963 = vpop.permute.xlu0 %962
    %vm964 = vcmp.eq.s32.totalorder %v963, 1
    %965 = vrot.lane.b32.xlu0 %v906, 96
    %v966 = vpop.permute.xlu0 %965
    %v968 = vsel %vm964, %v957, %v966
    %970 = vrot.lane.b32.xlu0 %v968, 32
    %v971 = vpop.permute.xlu0 %970
    %973 = vst.msk [vmem:[#allocation6] sm:$0xff] %vm108, %v971
    %v974 = vld [vmem:[#allocation7] sm:$0xff]
    %976 = vrot.lane.b32.xlu0 %v974, 32
    %v977 = vpop.permute.xlu0 %976
    %v979 = vsel %vm964, %v951, %v977
    %981 = vrot.lane.b32.xlu0 %v979, 96
    %v982 = vpop.permute.xlu0 %981
    %984 = vst.msk [vmem:[#allocation7] sm:$0xff] %vm108, %v982
    %v985 = vsel %vm964, %v957, 0.0
    %987 = vrot.lane.b32.xlu0 %v985, 32
    %v988 = vpop.permute.xlu0 %987
    %s990 = scalar_lea.vmem %s81, 32
    %991 = vst.msk [vmem:[%s990] sm:$0xff] %vm108, %v988
    %s992 = sadd.s32 %s280, 4
    %s993 = scalar_lea.vmem [#allocation2], 32
    %v994 = vld [vmem:[%s993] sm:$0xff]
    %v995 = vld [vmem:[#allocation4] sm:$0xff]
    %v996 = vld [vmem:[#allocation5] sm:$0xff]
    %v998 = vsel %vm108, %v995, 0
    %1000 = vmatpush.msra.mxu0 0.0
    %1001 = vmatpush.msra.mxu0 0.0
    %1002 = vmatpush.msra.mxu0 0.0
    %1003 = vmatpush.msra.mxu0 0.0
    %1004 = vmatpush.msra.mxu0 0.0
    %1005 = vmatpush.msra.mxu0 0.0
    %1006 = vmatpush.msra.mxu0 0.0
    %1007 = vmatpush.msra.mxu0 0.0
    %1008 = vmatpush.msra.mxu0 0.0
    %1009 = vmatpush.msra.mxu0 0.0
    %1010 = vmatpush.msra.mxu0 0.0
    %1011 = vmatpush.msra.mxu0 0.0
    %1012 = vmatpush.msra.mxu0 %v275
    %1013 = vmatpush.msra.mxu0 %v274
    %1014 = vmatpush.msra.mxu0 %v273
    %1015 = vmatpush.msra.mxu0 %v272
    %1016 = vmatmul.f32.gmra.mxu0 %v998
    %v1017 = vpop.f32.mrf.mxu0
    %v1018 = vadd.f32 0.0, %v1017
    %1019 = vdwg.mxu0
    %v1020 = vadd.f32 %v994, %v1018
    %v1021 = vmul.f32 %v1020, 0.5
    %v1022 = vtanh.pop %v1021
    %v1023 = vmul.f32 %v1022, 0.5
    %v1024 = vadd.f32 %v1023, 0.5
    %v1025 = vtanh.pop %v1020
    %1027 = vrot.lane.b32.xlu0 %v996, 32
    %v1028 = vpop.permute.xlu0 %1027
    %v1030 = vmul.f32 %v1024, %v1028
    %1032 = vrot.lane.b32.xlu0 %v1025, 64
    %v1033 = vpop.permute.xlu0 %1032
    %v1035 = vmul.f32 %v1024, %v1033
    %1037 = vrot.lane.b32.xlu0 %v1035, 32
    %v1038 = vpop.permute.xlu0 %1037
    %v1040 = vadd.f32 %v1030, %v1038
    %v1041 = vtanh.pop %v1040
    %1043 = vrot.lane.b32.xlu0 %v1041, 64
    %v1044 = vpop.permute.xlu0 %1043
    %v1046 = vmul.f32 %v1024, %v1044
    %v1047 = vstv %s992
    %vm1048 = vcmp.lt.s32.totalorder %v1047, %v271
    %v1049 = vsel %vm1048, 1, 0
    %1050 = vset.pattern.permute.xlu0 0
    %1051 = vperm.xlu0 %1050, %v1049
    %v1052 = vpop.permute.xlu0 %1051
    %vm1053 = vcmp.eq.s32.totalorder %v1052, 1
    %1054 = vrot.lane.b32.xlu0 %v995, 96
    %v1055 = vpop.permute.xlu0 %1054
    %v1057 = vsel %vm1053, %v1046, %v1055
    %1059 = vrot.lane.b32.xlu0 %v1057, 32
    %v1060 = vpop.permute.xlu0 %1059
    %1062 = vst.msk [vmem:[#allocation4] sm:$0xff] %vm108, %v1060
    %v1063 = vld [vmem:[#allocation5] sm:$0xff]
    %1065 = vrot.lane.b32.xlu0 %v1063, 32
    %v1066 = vpop.permute.xlu0 %1065
    %v1068 = vsel %vm1053, %v1040, %v1066
    %1070 = vrot.lane.b32.xlu0 %v1068, 96
    %v1071 = vpop.permute.xlu0 %1070
    %1073 = vst.msk [vmem:[#allocation5] sm:$0xff] %vm108, %v1071
    %v1074 = vsel %vm1053, %v1046, 0.0
    %1076 = vrot.lane.b32.xlu0 %v1074, 32
    %v1077 = vpop.permute.xlu0 %1076
    %s1079 = scalar_lea.vmem %s9, 32
    %1080 = vst.msk [vmem:[%s1079] sm:$0xff] %vm108, %v1077
    %s1081 = sadd.s32 %s368, 3
    %s1082 = scalar_lea.vmem [#allocation3], 24
    %v1083 = vld [vmem:[%s1082] sm:$0xff]
    %v1084 = vld [vmem:[#allocation6] sm:$0xff]
    %v1085 = vld [vmem:[#allocation7] sm:$0xff]
    %v1087 = vsel %vm108, %v1084, 0
    %1089 = vmatpush.msra.mxu0 0.0
    %1090 = vmatpush.msra.mxu0 0.0
    %1091 = vmatpush.msra.mxu0 0.0
    %1092 = vmatpush.msra.mxu0 0.0
    %1093 = vmatpush.msra.mxu0 0.0
    %1094 = vmatpush.msra.mxu0 0.0
    %1095 = vmatpush.msra.mxu0 0.0
    %1096 = vmatpush.msra.mxu0 0.0
    %1097 = vmatpush.msra.mxu0 0.0
    %1098 = vmatpush.msra.mxu0 0.0
    %1099 = vmatpush.msra.mxu0 0.0
    %1100 = vmatpush.msra.mxu0 0.0
    %1101 = vmatpush.msra.mxu0 %v279
    %1102 = vmatpush.msra.mxu0 %v278
    %1103 = vmatpush.msra.mxu0 %v277
    %1104 = vmatpush.msra.mxu0 %v276
    %1105 = vmatmul.f32.gmra.mxu0 %v1087
    %v1106 = vpop.f32.mrf.mxu0
    %v1107 = vadd.f32 0.0, %v1106
    %1108 = vdwg.mxu0
    %v1109 = vadd.f32 %v1083, %v1107
    %v1110 = vmul.f32 %v1109, 0.5
    %v1111 = vtanh.pop %v1110
    %v1112 = vmul.f32 %v1111, 0.5
    %v1113 = vadd.f32 %v1112, 0.5
    %v1114 = vtanh.pop %v1109
    %1116 = vrot.lane.b32.xlu0 %v1085, 32
    %v1117 = vpop.permute.xlu0 %1116
    %v1119 = vmul.f32 %v1113, %v1117
    %1121 = vrot.lane.b32.xlu0 %v1114, 64
    %v1122 = vpop.permute.xlu0 %1121
    %v1124 = vmul.f32 %v1113, %v1122
    %1126 = vrot.lane.b32.xlu0 %v1124, 32
    %v1127 = vpop.permute.xlu0 %1126
    %v1129 = vadd.f32 %v1119, %v1127
    %v1130 = vtanh.pop %v1129
    %1132 = vrot.lane.b32.xlu0 %v1130, 64
    %v1133 = vpop.permute.xlu0 %1132
    %v1135 = vmul.f32 %v1113, %v1133
    %v1136 = vstv %s1081
    %vm1137 = vcmp.lt.s32.totalorder %v1136, %v271
    %v1138 = vsel %vm1137, 1, 0
    %1139 = vset.pattern.permute.xlu0 0
    %1140 = vperm.xlu0 %1139, %v1138
    %v1141 = vpop.permute.xlu0 %1140
    %vm1142 = vcmp.eq.s32.totalorder %v1141, 1
    %1143 = vrot.lane.b32.xlu0 %v1084, 96
    %v1144 = vpop.permute.xlu0 %1143
    %v1146 = vsel %vm1142, %v1135, %v1144
    %1148 = vrot.lane.b32.xlu0 %v1146, 32
    %v1149 = vpop.permute.xlu0 %1148
    %1151 = vst.msk [vmem:[#allocation6] sm:$0xff] %vm108, %v1149
    %v1152 = vld [vmem:[#allocation7] sm:$0xff]
    %1154 = vrot.lane.b32.xlu0 %v1152, 32
    %v1155 = vpop.permute.xlu0 %1154
    %v1157 = vsel %vm1142, %v1129, %v1155
    %1159 = vrot.lane.b32.xlu0 %v1157, 96
    %v1160 = vpop.permute.xlu0 %1159
    %1162 = vst.msk [vmem:[#allocation7] sm:$0xff] %vm108, %v1160
    %v1163 = vsel %vm1142, %v1135, 0.0
    %1165 = vrot.lane.b32.xlu0 %v1163, 32
    %v1166 = vpop.permute.xlu0 %1165
    %s1168 = scalar_lea.vmem %s81, 24
    %1169 = vst.msk [vmem:[%s1168] sm:$0xff] %vm108, %v1166
    %s1170 = sadd.s32 %s280, 5
    %s1171 = scalar_lea.vmem [#allocation2], 40
    %v1172 = vld [vmem:[%s1171] sm:$0xff]
    %v1173 = vld [vmem:[#allocation4] sm:$0xff]
    %v1174 = vld [vmem:[#allocation5] sm:$0xff]
    %v1176 = vsel %vm108, %v1173, 0
    %1178 = vmatpush.msra.mxu0 0.0
    %1179 = vmatpush.msra.mxu0 0.0
    %1180 = vmatpush.msra.mxu0 0.0
    %1181 = vmatpush.msra.mxu0 0.0
    %1182 = vmatpush.msra.mxu0 0.0
    %1183 = vmatpush.msra.mxu0 0.0
    %1184 = vmatpush.msra.mxu0 0.0
    %1185 = vmatpush.msra.mxu0 0.0
    %1186 = vmatpush.msra.mxu0 0.0
    %1187 = vmatpush.msra.mxu0 0.0
    %1188 = vmatpush.msra.mxu0 0.0
    %1189 = vmatpush.msra.mxu0 0.0
    %1190 = vmatpush.msra.mxu0 %v275
    %1191 = vmatpush.msra.mxu0 %v274
    %1192 = vmatpush.msra.mxu0 %v273
    %1193 = vmatpush.msra.mxu0 %v272
    %1194 = vmatmul.f32.gmra.mxu0 %v1176
    %v1195 = vpop.f32.mrf.mxu0
    %v1196 = vadd.f32 0.0, %v1195
    %1197 = vdwg.mxu0
    %v1198 = vadd.f32 %v1172, %v1196
    %v1199 = vmul.f32 %v1198, 0.5
    %v1200 = vtanh.pop %v1199
    %v1201 = vmul.f32 %v1200, 0.5
    %v1202 = vadd.f32 %v1201, 0.5
    %v1203 = vtanh.pop %v1198
    %1205 = vrot.lane.b32.xlu0 %v1174, 32
    %v1206 = vpop.permute.xlu0 %1205
    %v1208 = vmul.f32 %v1202, %v1206
    %1210 = vrot.lane.b32.xlu0 %v1203, 64
    %v1211 = vpop.permute.xlu0 %1210
    %v1213 = vmul.f32 %v1202, %v1211
    %1215 = vrot.lane.b32.xlu0 %v1213, 32
    %v1216 = vpop.permute.xlu0 %1215
    %v1218 = vadd.f32 %v1208, %v1216
    %v1219 = vtanh.pop %v1218
    %1221 = vrot.lane.b32.xlu0 %v1219, 64
    %v1222 = vpop.permute.xlu0 %1221
    %v1224 = vmul.f32 %v1202, %v1222
    %v1225 = vstv %s1170
    %vm1226 = vcmp.lt.s32.totalorder %v1225, %v271
    %v1227 = vsel %vm1226, 1, 0
    %1228 = vset.pattern.permute.xlu0 0
    %1229 = vperm.xlu0 %1228, %v1227
    %v1230 = vpop.permute.xlu0 %1229
    %vm1231 = vcmp.eq.s32.totalorder %v1230, 1
    %1232 = vrot.lane.b32.xlu0 %v1173, 96
    %v1233 = vpop.permute.xlu0 %1232
    %v1235 = vsel %vm1231, %v1224, %v1233
    %1237 = vrot.lane.b32.xlu0 %v1235, 32
    %v1238 = vpop.permute.xlu0 %1237
    %1240 = vst.msk [vmem:[#allocation4] sm:$0xff] %vm108, %v1238
    %v1241 = vld [vmem:[#allocation5] sm:$0xff]
    %1243 = vrot.lane.b32.xlu0 %v1241, 32
    %v1244 = vpop.permute.xlu0 %1243
    %v1246 = vsel %vm1231, %v1218, %v1244
    %1248 = vrot.lane.b32.xlu0 %v1246, 96
    %v1249 = vpop.permute.xlu0 %1248
    %1251 = vst.msk [vmem:[#allocation5] sm:$0xff] %vm108, %v1249
    %v1252 = vsel %vm1231, %v1224, 0.0
    %1254 = vrot.lane.b32.xlu0 %v1252, 32
    %v1255 = vpop.permute.xlu0 %1254
    %s1257 = scalar_lea.vmem %s9, 40
    %1258 = vst.msk [vmem:[%s1257] sm:$0xff] %vm108, %v1255
    %s1259 = sadd.s32 %s368, 2
    %s1260 = scalar_lea.vmem [#allocation3], 16
    %v1261 = vld [vmem:[%s1260] sm:$0xff]
    %v1262 = vld [vmem:[#allocation6] sm:$0xff]
    %v1263 = vld [vmem:[#allocation7] sm:$0xff]
    %v1265 = vsel %vm108, %v1262, 0
    %1267 = vmatpush.msra.mxu0 0.0
    %1268 = vmatpush.msra.mxu0 0.0
    %1269 = vmatpush.msra.mxu0 0.0
    %1270 = vmatpush.msra.mxu0 0.0
    %1271 = vmatpush.msra.mxu0 0.0
    %1272 = vmatpush.msra.mxu0 0.0
    %1273 = vmatpush.msra.mxu0 0.0
    %1274 = vmatpush.msra.mxu0 0.0
    %1275 = vmatpush.msra.mxu0 0.0
    %1276 = vmatpush.msra.mxu0 0.0
    %1277 = vmatpush.msra.mxu0 0.0
    %1278 = vmatpush.msra.mxu0 0.0
    %1279 = vmatpush.msra.mxu0 %v279
    %1280 = vmatpush.msra.mxu0 %v278
    %1281 = vmatpush.msra.mxu0 %v277
    %1282 = vmatpush.msra.mxu0 %v276
    %1283 = vmatmul.f32.gmra.mxu0 %v1265
    %v1284 = vpop.f32.mrf.mxu0
    %v1285 = vadd.f32 0.0, %v1284
    %1286 = vdwg.mxu0
    %v1287 = vadd.f32 %v1261, %v1285
    %v1288 = vmul.f32 %v1287, 0.5
    %v1289 = vtanh.pop %v1288
    %v1290 = vmul.f32 %v1289, 0.5
    %v1291 = vadd.f32 %v1290, 0.5
    %v1292 = vtanh.pop %v1287
    %1294 = vrot.lane.b32.xlu0 %v1263, 32
    %v1295 = vpop.permute.xlu0 %1294
    %v1297 = vmul.f32 %v1291, %v1295
    %1299 = vrot.lane.b32.xlu0 %v1292, 64
    %v1300 = vpop.permute.xlu0 %1299
    %v1302 = vmul.f32 %v1291, %v1300
    %1304 = vrot.lane.b32.xlu0 %v1302, 32
    %v1305 = vpop.permute.xlu0 %1304
    %v1307 = vadd.f32 %v1297, %v1305
    %v1308 = vtanh.pop %v1307
    %1310 = vrot.lane.b32.xlu0 %v1308, 64
    %v1311 = vpop.permute.xlu0 %1310
    %v1313 = vmul.f32 %v1291, %v1311
    %v1314 = vstv %s1259
    %vm1315 = vcmp.lt.s32.totalorder %v1314, %v271
    %v1316 = vsel %vm1315, 1, 0
    %1317 = vset.pattern.permute.xlu0 0
    %1318 = vperm.xlu0 %1317, %v1316
    %v1319 = vpop.permute.xlu0 %1318
    %vm1320 = vcmp.eq.s32.totalorder %v1319, 1
    %1321 = vrot.lane.b32.xlu0 %v1262, 96
    %v1322 = vpop.permute.xlu0 %1321
    %v1324 = vsel %vm1320, %v1313, %v1322
    %1326 = vrot.lane.b32.xlu0 %v1324, 32
    %v1327 = vpop.permute.xlu0 %1326
    %1329 = vst.msk [vmem:[#allocation6] sm:$0xff] %vm108, %v1327
    %v1330 = vld [vmem:[#allocation7] sm:$0xff]
    %1332 = vrot.lane.b32.xlu0 %v1330, 32
    %v1333 = vpop.permute.xlu0 %1332
    %v1335 = vsel %vm1320, %v1307, %v1333
    %1337 = vrot.lane.b32.xlu0 %v1335, 96
    %v1338 = vpop.permute.xlu0 %1337
    %1340 = vst.msk [vmem:[#allocation7] sm:$0xff] %vm108, %v1338
    %v1341 = vsel %vm1320, %v1313, 0.0
    %1343 = vrot.lane.b32.xlu0 %v1341, 32
    %v1344 = vpop.permute.xlu0 %1343
    %s1346 = scalar_lea.vmem %s81, 16
    %1347 = vst.msk [vmem:[%s1346] sm:$0xff] %vm108, %v1344
    %s1348 = sadd.s32 %s280, 6
    %s1349 = scalar_lea.vmem [#allocation2], 48
    %v1350 = vld [vmem:[%s1349] sm:$0xff]
    %v1351 = vld [vmem:[#allocation4] sm:$0xff]
    %v1352 = vld [vmem:[#allocation5] sm:$0xff]
    %v1354 = vsel %vm108, %v1351, 0
    %1356 = vmatpush.msra.mxu0 0.0
    %1357 = vmatpush.msra.mxu0 0.0
    %1358 = vmatpush.msra.mxu0 0.0
    %1359 = vmatpush.msra.mxu0 0.0
    %1360 = vmatpush.msra.mxu0 0.0
    %1361 = vmatpush.msra.mxu0 0.0
    %1362 = vmatpush.msra.mxu0 0.0
    %1363 = vmatpush.msra.mxu0 0.0
    %1364 = vmatpush.msra.mxu0 0.0
    %1365 = vmatpush.msra.mxu0 0.0
    %1366 = vmatpush.msra.mxu0 0.0
    %1367 = vmatpush.msra.mxu0 0.0
    %1368 = vmatpush.msra.mxu0 %v275
    %1369 = vmatpush.msra.mxu0 %v274
    %1370 = vmatpush.msra.mxu0 %v273
    %1371 = vmatpush.msra.mxu0 %v272
    %1372 = vmatmul.f32.gmra.mxu0 %v1354
    %v1373 = vpop.f32.mrf.mxu0
    %v1374 = vadd.f32 0.0, %v1373
    %1375 = vdwg.mxu0
    %v1376 = vadd.f32 %v1350, %v1374
    %v1377 = vmul.f32 %v1376, 0.5
    %v1378 = vtanh.pop %v1377
    %v1379 = vmul.f32 %v1378, 0.5
    %v1380 = vadd.f32 %v1379, 0.5
    %v1381 = vtanh.pop %v1376
    %1383 = vrot.lane.b32.xlu0 %v1352, 32
    %v1384 = vpop.permute.xlu0 %1383
    %v1386 = vmul.f32 %v1380, %v1384
    %1388 = vrot.lane.b32.xlu0 %v1381, 64
    %v1389 = vpop.permute.xlu0 %1388
    %v1391 = vmul.f32 %v1380, %v1389
    %1393 = vrot.lane.b32.xlu0 %v1391, 32
    %v1394 = vpop.permute.xlu0 %1393
    %v1396 = vadd.f32 %v1386, %v1394
    %v1397 = vtanh.pop %v1396
    %1399 = vrot.lane.b32.xlu0 %v1397, 64
    %v1400 = vpop.permute.xlu0 %1399
    %v1402 = vmul.f32 %v1380, %v1400
    %v1403 = vstv %s1348
    %vm1404 = vcmp.lt.s32.totalorder %v1403, %v271
    %v1405 = vsel %vm1404, 1, 0
    %1406 = vset.pattern.permute.xlu0 0
    %1407 = vperm.xlu0 %1406, %v1405
    %v1408 = vpop.permute.xlu0 %1407
    %vm1409 = vcmp.eq.s32.totalorder %v1408, 1
    %1410 = vrot.lane.b32.xlu0 %v1351, 96
    %v1411 = vpop.permute.xlu0 %1410
    %v1413 = vsel %vm1409, %v1402, %v1411
    %1415 = vrot.lane.b32.xlu0 %v1413, 32
    %v1416 = vpop.permute.xlu0 %1415
    %1418 = vst.msk [vmem:[#allocation4] sm:$0xff] %vm108, %v1416
    %v1419 = vld [vmem:[#allocation5] sm:$0xff]
    %1421 = vrot.lane.b32.xlu0 %v1419, 32
    %v1422 = vpop.permute.xlu0 %1421
    %v1424 = vsel %vm1409, %v1396, %v1422
    %1426 = vrot.lane.b32.xlu0 %v1424, 96
    %v1427 = vpop.permute.xlu0 %1426
    %1429 = vst.msk [vmem:[#allocation5] sm:$0xff] %vm108, %v1427
    %v1430 = vsel %vm1409, %v1402, 0.0
    %1432 = vrot.lane.b32.xlu0 %v1430, 32
    %v1433 = vpop.permute.xlu0 %1432
    %s1435 = scalar_lea.vmem %s9, 48
    %1436 = vst.msk [vmem:[%s1435] sm:$0xff] %vm108, %v1433
    %s1437 = sadd.s32 %s368, 1
    %s1438 = scalar_lea.vmem [#allocation3], 8
    %v1439 = vld [vmem:[%s1438] sm:$0xff]
    %v1440 = vld [vmem:[#allocation6] sm:$0xff]
    %v1441 = vld [vmem:[#allocation7] sm:$0xff]
    %v1443 = vsel %vm108, %v1440, 0
    %1445 = vmatpush.msra.mxu0 0.0
    %1446 = vmatpush.msra.mxu0 0.0
    %1447 = vmatpush.msra.mxu0 0.0
    %1448 = vmatpush.msra.mxu0 0.0
    %1449 = vmatpush.msra.mxu0 0.0
    %1450 = vmatpush.msra.mxu0 0.0
    %1451 = vmatpush.msra.mxu0 0.0
    %1452 = vmatpush.msra.mxu0 0.0
    %1453 = vmatpush.msra.mxu0 0.0
    %1454 = vmatpush.msra.mxu0 0.0
    %1455 = vmatpush.msra.mxu0 0.0
    %1456 = vmatpush.msra.mxu0 0.0
    %1457 = vmatpush.msra.mxu0 %v279
    %1458 = vmatpush.msra.mxu0 %v278
    %1459 = vmatpush.msra.mxu0 %v277
    %1460 = vmatpush.msra.mxu0 %v276
    %1461 = vmatmul.f32.gmra.mxu0 %v1443
    %v1462 = vpop.f32.mrf.mxu0
    %v1463 = vadd.f32 0.0, %v1462
    %1464 = vdwg.mxu0
    %v1465 = vadd.f32 %v1439, %v1463
    %v1466 = vmul.f32 %v1465, 0.5
    %v1467 = vtanh.pop %v1466
    %v1468 = vmul.f32 %v1467, 0.5
    %v1469 = vadd.f32 %v1468, 0.5
    %v1470 = vtanh.pop %v1465
    %1472 = vrot.lane.b32.xlu0 %v1441, 32
    %v1473 = vpop.permute.xlu0 %1472
    %v1475 = vmul.f32 %v1469, %v1473
    %1477 = vrot.lane.b32.xlu0 %v1470, 64
    %v1478 = vpop.permute.xlu0 %1477
    %v1480 = vmul.f32 %v1469, %v1478
    %1482 = vrot.lane.b32.xlu0 %v1480, 32
    %v1483 = vpop.permute.xlu0 %1482
    %v1485 = vadd.f32 %v1475, %v1483
    %v1486 = vtanh.pop %v1485
    %1488 = vrot.lane.b32.xlu0 %v1486, 64
    %v1489 = vpop.permute.xlu0 %1488
    %v1491 = vmul.f32 %v1469, %v1489
    %v1492 = vstv %s1437
    %vm1493 = vcmp.lt.s32.totalorder %v1492, %v271
    %v1494 = vsel %vm1493, 1, 0
    %1495 = vset.pattern.permute.xlu0 0
    %1496 = vperm.xlu0 %1495, %v1494
    %v1497 = vpop.permute.xlu0 %1496
    %vm1498 = vcmp.eq.s32.totalorder %v1497, 1
    %1499 = vrot.lane.b32.xlu0 %v1440, 96
    %v1500 = vpop.permute.xlu0 %1499
    %v1502 = vsel %vm1498, %v1491, %v1500
    %1504 = vrot.lane.b32.xlu0 %v1502, 32
    %v1505 = vpop.permute.xlu0 %1504
    %1507 = vst.msk [vmem:[#allocation6] sm:$0xff] %vm108, %v1505
    %v1508 = vld [vmem:[#allocation7] sm:$0xff]
    %1510 = vrot.lane.b32.xlu0 %v1508, 32
    %v1511 = vpop.permute.xlu0 %1510
    %v1513 = vsel %vm1498, %v1485, %v1511
    %1515 = vrot.lane.b32.xlu0 %v1513, 96
    %v1516 = vpop.permute.xlu0 %1515
    %1518 = vst.msk [vmem:[#allocation7] sm:$0xff] %vm108, %v1516
    %v1519 = vsel %vm1498, %v1491, 0.0
    %1521 = vrot.lane.b32.xlu0 %v1519, 32
    %v1522 = vpop.permute.xlu0 %1521
    %s1524 = scalar_lea.vmem %s81, 8
    %1525 = vst.msk [vmem:[%s1524] sm:$0xff] %vm108, %v1522
    %s1526 = sadd.s32 %s280, 7
    %s1527 = scalar_lea.vmem [#allocation2], 56
    %v1528 = vld [vmem:[%s1527] sm:$0xff]
    %v1529 = vld [vmem:[#allocation4] sm:$0xff]
    %v1530 = vld [vmem:[#allocation5] sm:$0xff]
    %v1532 = vsel %vm108, %v1529, 0
    %1534 = vmatpush.msra.mxu0 0.0
    %1535 = vmatpush.msra.mxu0 0.0
    %1536 = vmatpush.msra.mxu0 0.0
    %1537 = vmatpush.msra.mxu0 0.0
    %1538 = vmatpush.msra.mxu0 0.0
    %1539 = vmatpush.msra.mxu0 0.0
    %1540 = vmatpush.msra.mxu0 0.0
    %1541 = vmatpush.msra.mxu0 0.0
    %1542 = vmatpush.msra.mxu0 0.0
    %1543 = vmatpush.msra.mxu0 0.0
    %1544 = vmatpush.msra.mxu0 0.0
    %1545 = vmatpush.msra.mxu0 0.0
    %1546 = vmatpush.msra.mxu0 %v275
    %1547 = vmatpush.msra.mxu0 %v274
    %1548 = vmatpush.msra.mxu0 %v273
    %1549 = vmatpush.msra.mxu0 %v272
    %1550 = vmatmul.f32.gmra.mxu0 %v1532
    %v1551 = vpop.f32.mrf.mxu0
    %v1552 = vadd.f32 0.0, %v1551
    %1553 = vdwg.mxu0
    %v1554 = vadd.f32 %v1528, %v1552
    %v1555 = vmul.f32 %v1554, 0.5
    %v1556 = vtanh.pop %v1555
    %v1557 = vmul.f32 %v1556, 0.5
    %v1558 = vadd.f32 %v1557, 0.5
    %v1559 = vtanh.pop %v1554
    %1561 = vrot.lane.b32.xlu0 %v1530, 32
    %v1562 = vpop.permute.xlu0 %1561
    %v1564 = vmul.f32 %v1558, %v1562
    %1566 = vrot.lane.b32.xlu0 %v1559, 64
    %v1567 = vpop.permute.xlu0 %1566
    %v1569 = vmul.f32 %v1558, %v1567
    %1571 = vrot.lane.b32.xlu0 %v1569, 32
    %v1572 = vpop.permute.xlu0 %1571
    %v1574 = vadd.f32 %v1564, %v1572
    %v1575 = vtanh.pop %v1574
    %1577 = vrot.lane.b32.xlu0 %v1575, 64
    %v1578 = vpop.permute.xlu0 %1577
    %v1580 = vmul.f32 %v1558, %v1578
    %v1581 = vstv %s1526
    %vm1582 = vcmp.lt.s32.totalorder %v1581, %v271
    %v1583 = vsel %vm1582, 1, 0
    %1584 = vset.pattern.permute.xlu0 0
    %1585 = vperm.xlu0 %1584, %v1583
    %v1586 = vpop.permute.xlu0 %1585
    %vm1587 = vcmp.eq.s32.totalorder %v1586, 1
    %1588 = vrot.lane.b32.xlu0 %v1529, 96
    %v1589 = vpop.permute.xlu0 %1588
    %v1591 = vsel %vm1587, %v1580, %v1589
    %1593 = vrot.lane.b32.xlu0 %v1591, 32
    %v1594 = vpop.permute.xlu0 %1593
    %1596 = vst.msk [vmem:[#allocation4] sm:$0xff] %vm108, %v1594
    %v1597 = vld [vmem:[#allocation5] sm:$0xff]
    %1599 = vrot.lane.b32.xlu0 %v1597, 32
    %v1600 = vpop.permute.xlu0 %1599
    %v1602 = vsel %vm1587, %v1574, %v1600
    %1604 = vrot.lane.b32.xlu0 %v1602, 96
    %v1605 = vpop.permute.xlu0 %1604
    %1607 = vst.msk [vmem:[#allocation5] sm:$0xff] %vm108, %v1605
    %v1608 = vsel %vm1587, %v1580, 0.0
    %1610 = vrot.lane.b32.xlu0 %v1608, 32
    %v1611 = vpop.permute.xlu0 %1610
    %s1613 = scalar_lea.vmem %s9, 56
    %1614 = vst.msk [vmem:[%s1613] sm:$0xff] %vm108, %v1611
    %v1615 = vld [vmem:[#allocation3] sm:$0xff]
    %v1616 = vld [vmem:[#allocation6] sm:$0xff]
    %v1617 = vld [vmem:[#allocation7] sm:$0xff]
    %v1619 = vsel %vm108, %v1616, 0
    %1621 = vmatpush.msra.mxu0 0.0
    %1622 = vmatpush.msra.mxu0 0.0
    %1623 = vmatpush.msra.mxu0 0.0
    %1624 = vmatpush.msra.mxu0 0.0
    %1625 = vmatpush.msra.mxu0 0.0
    %1626 = vmatpush.msra.mxu0 0.0
    %1627 = vmatpush.msra.mxu0 0.0
    %1628 = vmatpush.msra.mxu0 0.0
    %1629 = vmatpush.msra.mxu0 0.0
    %1630 = vmatpush.msra.mxu0 0.0
    %1631 = vmatpush.msra.mxu0 0.0
    %1632 = vmatpush.msra.mxu0 0.0
    %1633 = vmatpush.msra.mxu0 %v279
    %1634 = vmatpush.msra.mxu0 %v278
    %1635 = vmatpush.msra.mxu0 %v277
    %1636 = vmatpush.msra.mxu0 %v276
    %1637 = vmatmul.f32.gmra.mxu0 %v1619
    %v1638 = vpop.f32.mrf.mxu0
    %v1639 = vadd.f32 0.0, %v1638
    %1640 = vdwg.mxu0
    %v1641 = vadd.f32 %v1615, %v1639
    %v1642 = vmul.f32 %v1641, 0.5
    %v1643 = vtanh.pop %v1642
    %v1644 = vmul.f32 %v1643, 0.5
    %v1645 = vadd.f32 %v1644, 0.5
    %v1646 = vtanh.pop %v1641
    %1648 = vrot.lane.b32.xlu0 %v1617, 32
    %v1649 = vpop.permute.xlu0 %1648
    %v1651 = vmul.f32 %v1645, %v1649
    %1653 = vrot.lane.b32.xlu0 %v1646, 64
    %v1654 = vpop.permute.xlu0 %1653
    %v1656 = vmul.f32 %v1645, %v1654
    %1658 = vrot.lane.b32.xlu0 %v1656, 32
    %v1659 = vpop.permute.xlu0 %1658
    %v1661 = vadd.f32 %v1651, %v1659
    %v1662 = vtanh.pop %v1661
    %1664 = vrot.lane.b32.xlu0 %v1662, 64
    %v1665 = vpop.permute.xlu0 %1664
    %v1667 = vmul.f32 %v1645, %v1665
    %v1668 = vstv %s368
    %vm1669 = vcmp.lt.s32.totalorder %v1668, %v271
    %v1670 = vsel %vm1669, 1, 0
    %1671 = vset.pattern.permute.xlu0 0
    %1672 = vperm.xlu0 %1671, %v1670
    %v1673 = vpop.permute.xlu0 %1672
    %vm1674 = vcmp.eq.s32.totalorder %v1673, 1
    %1675 = vrot.lane.b32.xlu0 %v1616, 96
    %v1676 = vpop.permute.xlu0 %1675
    %v1678 = vsel %vm1674, %v1667, %v1676
    %1680 = vrot.lane.b32.xlu0 %v1678, 32
    %v1681 = vpop.permute.xlu0 %1680
    %1683 = vst.msk [vmem:[#allocation6] sm:$0xff] %vm108, %v1681
    %v1684 = vld [vmem:[#allocation7] sm:$0xff]
    %1686 = vrot.lane.b32.xlu0 %v1684, 32
    %v1687 = vpop.permute.xlu0 %1686
    %v1689 = vsel %vm1674, %v1661, %v1687
    %1691 = vrot.lane.b32.xlu0 %v1689, 96
    %v1692 = vpop.permute.xlu0 %1691
    %1694 = vst.msk [vmem:[#allocation7] sm:$0xff] %vm108, %v1692
    %v1695 = vsel %vm1674, %v1667, 0.0
    %1697 = vrot.lane.b32.xlu0 %v1695, 32
    %v1698 = vpop.permute.xlu0 %1697
    %1700 = vst.msk [vmem:[%s81] sm:$0xff] %vm108, %v1698
    %s1701 = ssub.s32 0, 0
    %p1702 = scmp.lt.s32.totalorder %s1701, 0
    %s1703 = scalar_select %p1702, %s1701, 0
    %s1704 = smul.addr %s1703, 8
    %s1705 = smul.addr %s1704, 8
    %s1706 = scalar_lea.vmem %s10, %s1705
    // Predicated region
    $region46: #{augmented_lstm_crf_forward.2} parent=1 // pred_check
      _
    $region47: #{augmented_lstm_crf_forward.2} parent=1 // pred_check_branch
      %1708 = sbr.rel (0) target = $region49
    $region48: #{augmented_lstm_crf_forward.2} parent=1 // pred_region
      _
    $region49: #{augmented_lstm_crf_forward.2} parent=1 // pred_fallthru
      _
    // Predicated region
    $region50: #{augmented_lstm_crf_forward.2} parent=1 // pred_check
      _
    $region51: #{augmented_lstm_crf_forward.2} parent=1 // pred_check_branch
      %1710 = sbr.rel (0) target = $region53
    $region52: #{augmented_lstm_crf_forward.2} parent=1 // pred_region
      %s1711 = ssub.s32 0, 0
    $region53: #{augmented_lstm_crf_forward.2} parent=1 // pred_fallthru
      _
    // Predicated region
    $region54: #{augmented_lstm_crf_forward.2} parent=1 // pred_check
      _
    $region55: #{augmented_lstm_crf_forward.2} parent=1 // pred_check_branch
      %1713 = sbr.rel (0) target = $region57
    $region56: #{augmented_lstm_crf_forward.2} parent=1 // pred_region
      _
    $region57: #{augmented_lstm_crf_forward.2} parent=1 // pred_fallthru
      _
    // Predicated region
    $region58: #{augmented_lstm_crf_forward.2} parent=1 // pred_check
      _
    $region59: #{augmented_lstm_crf_forward.2} parent=1 // pred_check_branch
      %1715 = sbr.rel (0) target = $region61
    $region60: #{augmented_lstm_crf_forward.2} parent=1 // pred_region
      %s1716 = ssub.s32 0, 0
      %p1717 = scmp.lt.s32.totalorder %s1716, 0
      %s1718 = scalar_select %p1717, %s1716, 0
      %s1719 = smul.addr %s1718, 8
      %s1720 = smul.addr %s1719, 8
      %s1721 = scalar_lea.vmem %s10, %s1720
    $region61: #{augmented_lstm_crf_forward.2} parent=1 // pred_fallthru
      _
    %1722 = vsyncpa [#allocation9], 1

// kernel: augmented_lstm_crf_forward.3
$region0: #{augmented_lstm_crf_forward.3}
  #allocation0 [shape = 'u32[]', space=smem, size = 0x4, offset = 0x4, fixed_abs, tag = 'smem constant byte address 0x4 - core index']
  #allocation1 [shape = 'u32[72,128]{1,0:T(1,128)}', space=vmem, size = 0x9000, scoped, tag = 'internal scratch']
  #allocation2 [shape = 'f32[64,128]{1,0:T(8,128)}', space=vmem, size = 0x8000, scoped, tag = 'scratch operand']
  #allocation3 [shape = 'f32[64,128]{1,0:T(8,128)}', space=vmem, size = 0x8000, scoped, tag = 'scratch operand']
  #allocation4 [shape = 'f32[8,32]{1,0:T(8,128)}', space=vmem, size = 0x1000, scoped, tag = 'scratch operand']
  #allocation5 [shape = 'f32[8,32]{1,0:T(8,128)}', space=vmem, size = 0x1000, scoped, tag = 'scratch operand']
  #allocation6 [shape = 'f32[8,32]{1,0:T(8,128)}', space=vmem, size = 0x1000, scoped, tag = 'scratch operand']
  #allocation7 [shape = 'f32[8,32]{1,0:T(8,128)}', space=vmem, size = 0x1000, scoped, tag = 'scratch operand']
  %s0 = inlined_call_operand.vmem [shape: s32[8,1], index: 0, kind: input, shape index: {}]
  %s1 = inlined_call_operand.vmem [shape: f32[1,64,64], index: 1, kind: input, shape index: {}, may-alias: {1,2}]
  %s2 = inlined_call_operand.vmem [shape: f32[1,64,64], index: 2, kind: input, shape index: {}, may-alias: {1,2}]
  %s3 = inlined_call_operand.vmem [shape: f32[64,128], index: 3, kind: input, shape index: {}]
  %s4 = inlined_call_operand.vmem [shape: f32[64,128], index: 4, kind: input, shape index: {}]
  %s5 = inlined_call_operand.vmem [shape: f32[32,128], index: 5, kind: input, shape index: {}]
  %s6 = inlined_call_operand.vmem [shape: f32[32,128], index: 6, kind: input, shape index: {}]
  %s7 = inlined_call_operand.vmem [shape: f32[1,128], index: 7, kind: input, shape index: {}]
  %s8 = inlined_call_operand.vmem [shape: f32[1,128], index: 8, kind: input, shape index: {}]
  %s9 = inlined_call_operand.vmem [shape: f32[1,64,32], index: 9, kind: output, shape index: {0}]
  %s10 = inlined_call_operand.vmem [shape: f32[1,64,32], index: 10, kind: output, shape index: {1}]
  %11 = xla_tuple %s9, %s10
  %s12 = sld [smem:[#allocation0]]
  $region58: #{augmented_lstm_crf_forward.3} parent=0
    _
  %s14 = ssub.s32 1, %s12
  %s15 = scalar_select 0, %s14, %s12
  // Predicated region
  $region2: #{augmented_lstm_crf_forward.3} parent=0 // pred_check
    _
  $region3: #{augmented_lstm_crf_forward.3} parent=0 // pred_check_branch
    %17 = sbr.rel (0) target = $region5
  $region4: #{augmented_lstm_crf_forward.3} parent=0 // pred_region
    _
  $region5: #{augmented_lstm_crf_forward.3} parent=0 // pred_fallthru
    _
  // Predicated region
  $region6: #{augmented_lstm_crf_forward.3} parent=0 // pred_check
    _
  $region7: #{augmented_lstm_crf_forward.3} parent=0 // pred_check_branch
    %19 = sbr.rel (0) target = $region9
  $region8: #{augmented_lstm_crf_forward.3} parent=0 // pred_region
    _
  $region9: #{augmented_lstm_crf_forward.3} parent=0 // pred_fallthru
    _
  // Predicated region
  $region10: #{augmented_lstm_crf_forward.3} parent=0 // pred_check
    _
  $region11: #{augmented_lstm_crf_forward.3} parent=0 // pred_check_branch
    %21 = sbr.rel (0) target = $region13
  $region12: #{augmented_lstm_crf_forward.3} parent=0 // pred_region
    %s22 = ssub.s32 0, 0
    %p23 = scmp.lt.s32.totalorder %s22, 0
    %s24 = scalar_select %p23, %s22, 0
    %s25 = smul.addr %s24, 8
    %s26 = smul.addr %s25, 8
    %s27 = scalar_lea.vmem %s2, %s26
    %s28 = ssub.s32 0, 0
  $region13: #{augmented_lstm_crf_forward.3} parent=0 // pred_fallthru
    _
  // Predicated region
  $region14: #{augmented_lstm_crf_forward.3} parent=0 // pred_check
    _
  $region15: #{augmented_lstm_crf_forward.3} parent=0 // pred_check_branch
    %30 = sbr.rel (0) target = $region17
  $region16: #{augmented_lstm_crf_forward.3} parent=0 // pred_region
    _
  $region17: #{augmented_lstm_crf_forward.3} parent=0 // pred_fallthru
    _
  // Predicated region
  $region18: #{augmented_lstm_crf_forward.3} parent=0 // pred_check
    _
  $region19: #{augmented_lstm_crf_forward.3} parent=0 // pred_check_branch
    %32 = sbr.rel (0) target = $region21
  $region20: #{augmented_lstm_crf_forward.3} parent=0 // pred_region
    _
  $region21: #{augmented_lstm_crf_forward.3} parent=0 // pred_fallthru
    _
  // Predicated region
  $region22: #{augmented_lstm_crf_forward.3} parent=0 // pred_check
    _
  $region23: #{augmented_lstm_crf_forward.3} parent=0 // pred_check_branch
    %34 = sbr.rel (0) target = $region25
  $region24: #{augmented_lstm_crf_forward.3} parent=0 // pred_region
    _
  $region25: #{augmented_lstm_crf_forward.3} parent=0 // pred_fallthru
    _
  // Predicated region
  $region26: #{augmented_lstm_crf_forward.3} parent=0 // pred_check
    _
  $region27: #{augmented_lstm_crf_forward.3} parent=0 // pred_check_branch
    %36 = sbr.rel (0) target = $region29
  $region28: #{augmented_lstm_crf_forward.3} parent=0 // pred_region
    _
  $region29: #{augmented_lstm_crf_forward.3} parent=0 // pred_fallthru
    _
  // Predicated region
  $region30: #{augmented_lstm_crf_forward.3} parent=0 // pred_check
    _
  $region31: #{augmented_lstm_crf_forward.3} parent=0 // pred_check_branch
    %38 = sbr.rel (0) target = $region33
  $region32: #{augmented_lstm_crf_forward.3} parent=0 // pred_region
    _
  $region33: #{augmented_lstm_crf_forward.3} parent=0 // pred_fallthru
    _
  // Predicated region
  $region34: #{augmented_lstm_crf_forward.3} parent=0 // pred_check
    _
  $region35: #{augmented_lstm_crf_forward.3} parent=0 // pred_check_branch
    %40 = sbr.rel (0) target = $region37
  $region36: #{augmented_lstm_crf_forward.3} parent=0 // pred_region
    _
  $region37: #{augmented_lstm_crf_forward.3} parent=0 // pred_fallthru
    _
  %s41 = ssub.s32 0, 0
  %p42 = scmp.lt.s32.totalorder %s41, 0
  %s43 = scalar_select %p42, %s41, 0
  %s44 = smul.addr %s43, 8
  %s45 = smul.addr %s44, 8
  %s46 = scalar_lea.vmem %s2, %s45
  %s47 = ssub.s32 0, 0
  %p48 = scmp.lt.s32.totalorder %s47, 0
  %s49 = scalar_select %p48, %s47, 0
  %s50 = smul.addr %s49, 8
  %s51 = smul.addr %s50, 8
  %s52 = scalar_lea.vmem %s10, %s51
  %s53 = ssub.s32 0, 0
  %p54 = scmp.lt.s32.totalorder %s53, 0
  %s55 = scalar_select %p54, %s53, 0
  %s56 = smul.addr %s55, 8
  %s57 = smul.addr %s56, 8
  %s58 = scalar_lea.vmem %s2, %s57
  %s59 = ssub.s32 0, 0
  %s60 = ssub.s32 0, 0
  %p61 = scmp.lt.s32.totalorder %s60, 0
  %s62 = scalar_select %p61, %s60, 0
  %s63 = smul.addr %s62, 8
  %s64 = smul.addr %s63, 8
  %s65 = scalar_lea.vmem %s10, %s64
  %s66 = ssub.s32 0, 0
  %p67 = scmp.eq.s32.totalorder 0, 0
  // Predicated region
  $region38: #{augmented_lstm_crf_forward.3} parent=0 // pred_check
    %p68 = pneg %p67
  $region39: #{augmented_lstm_crf_forward.3} parent=0 // pred_check_branch
    %70 = sbr.rel (%p68) target = $region41
  $region40: #{augmented_lstm_crf_forward.3} parent=0 // pred_region
    %vm71 = vcmask 261120
    %72 = vst.msk [vmem:[#allocation4] sm:$0xff] %vm71, 0.0
    %73 = vst.msk [vmem:[#allocation5] sm:$0xff] %vm71, 0.0
    %74 = vst.msk [vmem:[#allocation6] sm:$0xff] %vm71, 0.0
    %75 = vst.msk [vmem:[#allocation7] sm:$0xff] %vm71, 0.0
  $region41: #{augmented_lstm_crf_forward.3} parent=0 // pred_fallthru
    _
  %v76 = vld [vmem:[%s1] sm:$0xff]
  %v77 = vld [vmem:[%s1 + $0x8] sm:$0xff]
  %v78 = vld [vmem:[%s1 + $0x10] sm:$0xff]
  %v79 = vld [vmem:[%s1 + $0x18] sm:$0xff]
  %v80 = vld [vmem:[%s1 + $0x20] sm:$0xff]
  %v81 = vld [vmem:[%s1 + $0x28] sm:$0xff]
  %v82 = vld [vmem:[%s1 + $0x30] sm:$0xff]
  %v83 = vld [vmem:[%s1 + $0x38] sm:$0xff]
  %v84 = vld [vmem:[%s3] sm:$0xff]
  %v85 = vld [vmem:[%s3 + $0x8] sm:$0xff]
  %v86 = vld [vmem:[%s3 + $0x10] sm:$0xff]
  %v87 = vld [vmem:[%s3 + $0x18] sm:$0xff]
  %v88 = vld [vmem:[%s3 + $0x20] sm:$0xff]
  %v89 = vld [vmem:[%s3 + $0x28] sm:$0xff]
  %v90 = vld [vmem:[%s3 + $0x30] sm:$0xff]
  %v91 = vld [vmem:[%s3 + $0x38] sm:$0xff]
  %v92 = vld [vmem:[%s7] sm:$0x1]
  %v94 = vperm.slane %v92, 0
  %vm96 = vcmask 523264
  %v98 = vsel %vm96, %v76, 0
  %v101 = vsel %vm96, %v77, 0
  %v104 = vsel %vm96, %v78, 0
  %v107 = vsel %vm96, %v79, 0
  %v110 = vsel %vm96, %v80, 0
  %v113 = vsel %vm96, %v81, 0
  %v116 = vsel %vm96, %v82, 0
  %v119 = vsel %vm96, %v83, 0
  %121 = vmatpush.msra.mxu0 0.0
  %122 = vmatpush.msra.mxu0 0.0
  %123 = vmatpush.msra.mxu0 0.0
  %124 = vmatpush.msra.mxu0 0.0
  %125 = vmatpush.msra.mxu0 0.0
  %126 = vmatpush.msra.mxu0 0.0
  %127 = vmatpush.msra.mxu0 0.0
  %128 = vmatpush.msra.mxu0 0.0
  %129 = vmatpush.msra.mxu0 %v91
  %130 = vmatpush.msra.mxu0 %v90
  %131 = vmatpush.msra.mxu0 %v89
  %132 = vmatpush.msra.mxu0 %v88
  %133 = vmatpush.msra.mxu0 %v87
  %134 = vmatpush.msra.mxu0 %v86
  %135 = vmatpush.msra.mxu0 %v85
  %136 = vmatpush.msra.mxu0 %v84
  %137 = vmatmul.f32.gmra.mxu0 %v98
  %v138 = vpop.f32.mrf.mxu0
  %v139 = vadd.f32 %v94, %v138
  %140 = vmatmul.f32.gmra.mxu0 %v101
  %v141 = vpop.f32.mrf.mxu0
  %v142 = vadd.f32 %v94, %v141
  %143 = vmatmul.f32.gmra.mxu0 %v104
  %v144 = vpop.f32.mrf.mxu0
  %v145 = vadd.f32 %v94, %v144
  %146 = vmatmul.f32.gmra.mxu0 %v107
  %v147 = vpop.f32.mrf.mxu0
  %v148 = vadd.f32 %v94, %v147
  %149 = vmatmul.f32.gmra.mxu0 %v110
  %v150 = vpop.f32.mrf.mxu0
  %v151 = vadd.f32 %v94, %v150
  %152 = vmatmul.f32.gmra.mxu0 %v113
  %v153 = vpop.f32.mrf.mxu0
  %v154 = vadd.f32 %v94, %v153
  %155 = vmatmul.f32.gmra.mxu0 %v116
  %v156 = vpop.f32.mrf.mxu0
  %v157 = vadd.f32 %v94, %v156
  %158 = vmatmul.f32.gmra.mxu0 %v119
  %v159 = vpop.f32.mrf.mxu0
  %v160 = vadd.f32 %v94, %v159
  %161 = vdwg.mxu0
  %162 = vst [vmem:[#allocation2] sm:$0xff] %v139
  %163 = vst [vmem:[#allocation2 + $0x8] sm:$0xff] %v142
  %164 = vst [vmem:[#allocation2 + $0x10] sm:$0xff] %v145
  %165 = vst [vmem:[#allocation2 + $0x18] sm:$0xff] %v148
  %166 = vst [vmem:[#allocation2 + $0x20] sm:$0xff] %v151
  %167 = vst [vmem:[#allocation2 + $0x28] sm:$0xff] %v154
  %168 = vst [vmem:[#allocation2 + $0x30] sm:$0xff] %v157
  %169 = vst [vmem:[#allocation2 + $0x38] sm:$0xff] %v160
  %v170 = vld [vmem:[%s58] sm:$0xff]
  %v171 = vld [vmem:[%s58 + $0x8] sm:$0xff]
  %v172 = vld [vmem:[%s58 + $0x10] sm:$0xff]
  %v173 = vld [vmem:[%s58 + $0x18] sm:$0xff]
  %v174 = vld [vmem:[%s58 + $0x20] sm:$0xff]
  %v175 = vld [vmem:[%s58 + $0x28] sm:$0xff]
  %v176 = vld [vmem:[%s58 + $0x30] sm:$0xff]
  %v177 = vld [vmem:[%s58 + $0x38] sm:$0xff]
  %v178 = vld [vmem:[%s4] sm:$0xff]
  %v179 = vld [vmem:[%s4 + $0x8] sm:$0xff]
  %v180 = vld [vmem:[%s4 + $0x10] sm:$0xff]
  %v181 = vld [vmem:[%s4 + $0x18] sm:$0xff]
  %v182 = vld [vmem:[%s4 + $0x20] sm:$0xff]
  %v183 = vld [vmem:[%s4 + $0x28] sm:$0xff]
  %v184 = vld [vmem:[%s4 + $0x30] sm:$0xff]
  %v185 = vld [vmem:[%s4 + $0x38] sm:$0xff]
  %v186 = vld [vmem:[%s8] sm:$0x1]
  %v188 = vperm.slane %v186, 0
  %v191 = vsel %vm96, %v170, 0
  %v194 = vsel %vm96, %v171, 0
  %v197 = vsel %vm96, %v172, 0
  %v200 = vsel %vm96, %v173, 0
  %v203 = vsel %vm96, %v174, 0
  %v206 = vsel %vm96, %v175, 0
  %v209 = vsel %vm96, %v176, 0
  %v212 = vsel %vm96, %v177, 0
  %214 = vmatpush.msra.mxu0 0.0
  %215 = vmatpush.msra.mxu0 0.0
  %216 = vmatpush.msra.mxu0 0.0
  %217 = vmatpush.msra.mxu0 0.0
  %218 = vmatpush.msra.mxu0 0.0
  %219 = vmatpush.msra.mxu0 0.0
  %220 = vmatpush.msra.mxu0 0.0
  %221 = vmatpush.msra.mxu0 0.0
  %222 = vmatpush.msra.mxu0 %v185
  %223 = vmatpush.msra.mxu0 %v184
  %224 = vmatpush.msra.mxu0 %v183
  %225 = vmatpush.msra.mxu0 %v182
  %226 = vmatpush.msra.mxu0 %v181
  %227 = vmatpush.msra.mxu0 %v180
  %228 = vmatpush.msra.mxu0 %v179
  %229 = vmatpush.msra.mxu0 %v178
  %230 = vmatmul.f32.gmra.mxu0 %v191
  %v231 = vpop.f32.mrf.mxu0
  %v232 = vadd.f32 %v188, %v231
  %233 = vmatmul.f32.gmra.mxu0 %v194
  %v234 = vpop.f32.mrf.mxu0
  %v235 = vadd.f32 %v188, %v234
  %236 = vmatmul.f32.gmra.mxu0 %v197
  %v237 = vpop.f32.mrf.mxu0
  %v238 = vadd.f32 %v188, %v237
  %239 = vmatmul.f32.gmra.mxu0 %v200
  %v240 = vpop.f32.mrf.mxu0
  %v241 = vadd.f32 %v188, %v240
  %242 = vmatmul.f32.gmra.mxu0 %v203
  %v243 = vpop.f32.mrf.mxu0
  %v244 = vadd.f32 %v188, %v243
  %245 = vmatmul.f32.gmra.mxu0 %v206
  %v246 = vpop.f32.mrf.mxu0
  %v247 = vadd.f32 %v188, %v246
  %248 = vmatmul.f32.gmra.mxu0 %v209
  %v249 = vpop.f32.mrf.mxu0
  %v250 = vadd.f32 %v188, %v249
  %251 = vmatmul.f32.gmra.mxu0 %v212
  %v252 = vpop.f32.mrf.mxu0
  %v253 = vadd.f32 %v188, %v252
  %254 = vdwg.mxu0
  %255 = vst [vmem:[#allocation3] sm:$0xff] %v232
  %256 = vst [vmem:[#allocation3 + $0x8] sm:$0xff] %v235
  %257 = vst [vmem:[#allocation3 + $0x10] sm:$0xff] %v238
  %258 = vst [vmem:[#allocation3 + $0x18] sm:$0xff] %v241
  %259 = vst [vmem:[#allocation3 + $0x20] sm:$0xff] %v244
  %260 = vst [vmem:[#allocation3 + $0x28] sm:$0xff] %v247
  %261 = vst [vmem:[#allocation3 + $0x30] sm:$0xff] %v250
  %262 = vst [vmem:[#allocation3 + $0x38] sm:$0xff] %v253
  %v263 = vld [vmem:[%s0] sm:$0xff]
  %v264 = vld [vmem:[%s5] sm:$0xff]
  %v265 = vld [vmem:[%s5 + $0x8] sm:$0xff]
  %v266 = vld [vmem:[%s5 + $0x10] sm:$0xff]
  %v267 = vld [vmem:[%s5 + $0x18] sm:$0xff]
  %v268 = vld [vmem:[%s6] sm:$0xff]
  %v269 = vld [vmem:[%s6 + $0x8] sm:$0xff]
  %v270 = vld [vmem:[%s6 + $0x10] sm:$0xff]
  %v271 = vld [vmem:[%s6 + $0x18] sm:$0xff]
  %s272 = smul.u32 0, 8
  %v273 = vld [vmem:[#allocation2] sm:$0xff]
  %v274 = vld [vmem:[#allocation4] sm:$0xff]
  %v275 = vld [vmem:[#allocation5] sm:$0xff]
  %vm276 = vcmask 261120
  %v278 = vsel %vm276, %v274, 0
  %280 = vmatpush.msra.mxu0 0.0
  %281 = vmatpush.msra.mxu0 0.0
  %282 = vmatpush.msra.mxu0 0.0
  %283 = vmatpush.msra.mxu0 0.0
  %284 = vmatpush.msra.mxu0 0.0
  %285 = vmatpush.msra.mxu0 0.0
  %286 = vmatpush.msra.mxu0 0.0
  %287 = vmatpush.msra.mxu0 0.0
  %288 = vmatpush.msra.mxu0 0.0
  %289 = vmatpush.msra.mxu0 0.0
  %290 = vmatpush.msra.mxu0 0.0
  %291 = vmatpush.msra.mxu0 0.0
  %292 = vmatpush.msra.mxu0 %v267
  %293 = vmatpush.msra.mxu0 %v266
  %294 = vmatpush.msra.mxu0 %v265
  %295 = vmatpush.msra.mxu0 %v264
  %296 = vmatmul.f32.gmra.mxu0 %v278
  %v297 = vpop.f32.mrf.mxu0
  %v298 = vadd.f32 0.0, %v297
  %299 = vdwg.mxu0
  %v300 = vadd.f32 %v273, %v298
  %v301 = vmul.f32 %v300, 0.5
  %v302 = vtanh.pop %v301
  %v303 = vmul.f32 %v302, 0.5
  %v304 = vadd.f32 %v303, 0.5
  %v305 = vtanh.pop %v300
  %307 = vrot.lane.b32.xlu0 %v275, 32
  %v308 = vpop.permute.xlu0 %307
  %v310 = vmul.f32 %v304, %v308
  %312 = vrot.lane.b32.xlu0 %v305, 64
  %v313 = vpop.permute.xlu0 %312
  %v315 = vmul.f32 %v304, %v313
  %317 = vrot.lane.b32.xlu0 %v315, 32
  %v318 = vpop.permute.xlu0 %317
  %v320 = vadd.f32 %v310, %v318
  %v321 = vtanh.pop %v320
  %323 = vrot.lane.b32.xlu0 %v321, 64
  %v324 = vpop.permute.xlu0 %323
  %v326 = vmul.f32 %v304, %v324
  %v327 = vstv %s272
  %vm328 = vcmp.lt.s32.totalorder %v327, %v263
  %v329 = vsel %vm328, 1, 0
  %330 = vset.pattern.permute.xlu0 0
  %331 = vperm.xlu0 %330, %v329
  %v332 = vpop.permute.xlu0 %331
  %vm333 = vcmp.eq.s32.totalorder %v332, 1
  %334 = vrot.lane.b32.xlu0 %v274, 96
  %v335 = vpop.permute.xlu0 %334
  %v337 = vsel %vm333, %v326, %v335
  %339 = vrot.lane.b32.xlu0 %v337, 32
  %v340 = vpop.permute.xlu0 %339
  %342 = vst.msk [vmem:[#allocation4] sm:$0xff] %vm276, %v340
  %v343 = vld [vmem:[#allocation5] sm:$0xff]
  %345 = vrot.lane.b32.xlu0 %v343, 32
  %v346 = vpop.permute.xlu0 %345
  %v348 = vsel %vm333, %v320, %v346
  %350 = vrot.lane.b32.xlu0 %v348, 96
  %v351 = vpop.permute.xlu0 %350
  %353 = vst.msk [vmem:[#allocation5] sm:$0xff] %vm276, %v351
  %v354 = vsel %vm333, %v326, 0.0
  %356 = vrot.lane.b32.xlu0 %v354, 32
  %v357 = vpop.permute.xlu0 %356
  %359 = vst.msk [vmem:[%s9] sm:$0xff] %vm276, %v357
  %s360 = ssub.s32 0, 0
  %s361 = smul.u32 %s360, 8
  %s362 = sadd.s32 %s361, 7
  %s363 = scalar_lea.vmem [#allocation3], 56
  %v364 = vld [vmem:[%s363] sm:$0xff]
  %v365 = vld [vmem:[#allocation6] sm:$0xff]
  %v366 = vld [vmem:[#allocation7] sm:$0xff]
  %v368 = vsel %vm276, %v365, 0
  %370 = vmatpush.msra.mxu0 0.0
  %371 = vmatpush.msra.mxu0 0.0
  %372 = vmatpush.msra.mxu0 0.0
  %373 = vmatpush.msra.mxu0 0.0
  %374 = vmatpush.msra.mxu0 0.0
  %375 = vmatpush.msra.mxu0 0.0
  %376 = vmatpush.msra.mxu0 0.0
  %377 = vmatpush.msra.mxu0 0.0
  %378 = vmatpush.msra.mxu0 0.0
  %379 = vmatpush.msra.mxu0 0.0
  %380 = vmatpush.msra.mxu0 0.0
  %381 = vmatpush.msra.mxu0 0.0
  %382 = vmatpush.msra.mxu0 %v271
  %383 = vmatpush.msra.mxu0 %v270
  %384 = vmatpush.msra.mxu0 %v269
  %385 = vmatpush.msra.mxu0 %v268
  %386 = vmatmul.f32.gmra.mxu0 %v368
  %v387 = vpop.f32.mrf.mxu0
  %v388 = vadd.f32 0.0, %v387
  %389 = vdwg.mxu0
  %v390 = vadd.f32 %v364, %v388
  %v391 = vmul.f32 %v390, 0.5
  %v392 = vtanh.pop %v391
  %v393 = vmul.f32 %v392, 0.5
  %v394 = vadd.f32 %v393, 0.5
  %v395 = vtanh.pop %v390
  %397 = vrot.lane.b32.xlu0 %v366, 32
  %v398 = vpop.permute.xlu0 %397
  %v400 = vmul.f32 %v394, %v398
  %402 = vrot.lane.b32.xlu0 %v395, 64
  %v403 = vpop.permute.xlu0 %402
  %v405 = vmul.f32 %v394, %v403
  %407 = vrot.lane.b32.xlu0 %v405, 32
  %v408 = vpop.permute.xlu0 %407
  %v410 = vadd.f32 %v400, %v408
  %v411 = vtanh.pop %v410
  %413 = vrot.lane.b32.xlu0 %v411, 64
  %v414 = vpop.permute.xlu0 %413
  %v416 = vmul.f32 %v394, %v414
  %v417 = vstv %s362
  %vm418 = vcmp.lt.s32.totalorder %v417, %v263
  %v419 = vsel %vm418, 1, 0
  %420 = vset.pattern.permute.xlu0 0
  %421 = vperm.xlu0 %420, %v419
  %v422 = vpop.permute.xlu0 %421
  %vm423 = vcmp.eq.s32.totalorder %v422, 1
  %424 = vrot.lane.b32.xlu0 %v365, 96
  %v425 = vpop.permute.xlu0 %424
  %v427 = vsel %vm423, %v416, %v425
  %429 = vrot.lane.b32.xlu0 %v427, 32
  %v430 = vpop.permute.xlu0 %429
  %432 = vst.msk [vmem:[#allocation6] sm:$0xff] %vm276, %v430
  %v433 = vld [vmem:[#allocation7] sm:$0xff]
  %435 = vrot.lane.b32.xlu0 %v433, 32
  %v436 = vpop.permute.xlu0 %435
  %v438 = vsel %vm423, %v410, %v436
  %440 = vrot.lane.b32.xlu0 %v438, 96
  %v441 = vpop.permute.xlu0 %440
  %443 = vst.msk [vmem:[#allocation7] sm:$0xff] %vm276, %v441
  %v444 = vsel %vm423, %v416, 0.0
  %446 = vrot.lane.b32.xlu0 %v444, 32
  %v447 = vpop.permute.xlu0 %446
  %s449 = scalar_lea.vmem %s65, 56
  %450 = vst.msk [vmem:[%s449] sm:$0xff] %vm276, %v447
  %s451 = sadd.s32 %s272, 1
  %s452 = scalar_lea.vmem [#allocation2], 8
  %v453 = vld [vmem:[%s452] sm:$0xff]
  %v454 = vld [vmem:[#allocation4] sm:$0xff]
  %v455 = vld [vmem:[#allocation5] sm:$0xff]
  %v457 = vsel %vm276, %v454, 0
  %459 = vmatpush.msra.mxu0 0.0
  %460 = vmatpush.msra.mxu0 0.0
  %461 = vmatpush.msra.mxu0 0.0
  %462 = vmatpush.msra.mxu0 0.0
  %463 = vmatpush.msra.mxu0 0.0
  %464 = vmatpush.msra.mxu0 0.0
  %465 = vmatpush.msra.mxu0 0.0
  %466 = vmatpush.msra.mxu0 0.0
  %467 = vmatpush.msra.mxu0 0.0
  %468 = vmatpush.msra.mxu0 0.0
  %469 = vmatpush.msra.mxu0 0.0
  %470 = vmatpush.msra.mxu0 0.0
  %471 = vmatpush.msra.mxu0 %v267
  %472 = vmatpush.msra.mxu0 %v266
  %473 = vmatpush.msra.mxu0 %v265
  %474 = vmatpush.msra.mxu0 %v264
  %475 = vmatmul.f32.gmra.mxu0 %v457
  %v476 = vpop.f32.mrf.mxu0
  %v477 = vadd.f32 0.0, %v476
  %478 = vdwg.mxu0
  %v479 = vadd.f32 %v453, %v477
  %v480 = vmul.f32 %v479, 0.5
  %v481 = vtanh.pop %v480
  %v482 = vmul.f32 %v481, 0.5
  %v483 = vadd.f32 %v482, 0.5
  %v484 = vtanh.pop %v479
  %486 = vrot.lane.b32.xlu0 %v455, 32
  %v487 = vpop.permute.xlu0 %486
  %v489 = vmul.f32 %v483, %v487
  %491 = vrot.lane.b32.xlu0 %v484, 64
  %v492 = vpop.permute.xlu0 %491
  %v494 = vmul.f32 %v483, %v492
  %496 = vrot.lane.b32.xlu0 %v494, 32
  %v497 = vpop.permute.xlu0 %496
  %v499 = vadd.f32 %v489, %v497
  %v500 = vtanh.pop %v499
  %502 = vrot.lane.b32.xlu0 %v500, 64
  %v503 = vpop.permute.xlu0 %502
  %v505 = vmul.f32 %v483, %v503
  %v506 = vstv %s451
  %vm507 = vcmp.lt.s32.totalorder %v506, %v263
  %v508 = vsel %vm507, 1, 0
  %509 = vset.pattern.permute.xlu0 0
  %510 = vperm.xlu0 %509, %v508
  %v511 = vpop.permute.xlu0 %510
  %vm512 = vcmp.eq.s32.totalorder %v511, 1
  %513 = vrot.lane.b32.xlu0 %v454, 96
  %v514 = vpop.permute.xlu0 %513
  %v516 = vsel %vm512, %v505, %v514
  %518 = vrot.lane.b32.xlu0 %v516, 32
  %v519 = vpop.permute.xlu0 %518
  %521 = vst.msk [vmem:[#allocation4] sm:$0xff] %vm276, %v519
  %v522 = vld [vmem:[#allocation5] sm:$0xff]
  %524 = vrot.lane.b32.xlu0 %v522, 32
  %v525 = vpop.permute.xlu0 %524
  %v527 = vsel %vm512, %v499, %v525
  %529 = vrot.lane.b32.xlu0 %v527, 96
  %v530 = vpop.permute.xlu0 %529
  %532 = vst.msk [vmem:[#allocation5] sm:$0xff] %vm276, %v530
  %v533 = vsel %vm512, %v505, 0.0
  %535 = vrot.lane.b32.xlu0 %v533, 32
  %v536 = vpop.permute.xlu0 %535
  %s538 = scalar_lea.vmem %s9, 8
  %539 = vst.msk [vmem:[%s538] sm:$0xff] %vm276, %v536
  %s540 = sadd.s32 %s361, 6
  %s541 = scalar_lea.vmem [#allocation3], 48
  %v542 = vld [vmem:[%s541] sm:$0xff]
  %v543 = vld [vmem:[#allocation6] sm:$0xff]
  %v544 = vld [vmem:[#allocation7] sm:$0xff]
  %v546 = vsel %vm276, %v543, 0
  %548 = vmatpush.msra.mxu0 0.0
  %549 = vmatpush.msra.mxu0 0.0
  %550 = vmatpush.msra.mxu0 0.0
  %551 = vmatpush.msra.mxu0 0.0
  %552 = vmatpush.msra.mxu0 0.0
  %553 = vmatpush.msra.mxu0 0.0
  %554 = vmatpush.msra.mxu0 0.0
  %555 = vmatpush.msra.mxu0 0.0
  %556 = vmatpush.msra.mxu0 0.0
  %557 = vmatpush.msra.mxu0 0.0
  %558 = vmatpush.msra.mxu0 0.0
  %559 = vmatpush.msra.mxu0 0.0
  %560 = vmatpush.msra.mxu0 %v271
  %561 = vmatpush.msra.mxu0 %v270
  %562 = vmatpush.msra.mxu0 %v269
  %563 = vmatpush.msra.mxu0 %v268
  %564 = vmatmul.f32.gmra.mxu0 %v546
  %v565 = vpop.f32.mrf.mxu0
  %v566 = vadd.f32 0.0, %v565
  %567 = vdwg.mxu0
  %v568 = vadd.f32 %v542, %v566
  %v569 = vmul.f32 %v568, 0.5
  %v570 = vtanh.pop %v569
  %v571 = vmul.f32 %v570, 0.5
  %v572 = vadd.f32 %v571, 0.5
  %v573 = vtanh.pop %v568
  %575 = vrot.lane.b32.xlu0 %v544, 32
  %v576 = vpop.permute.xlu0 %575
  %v578 = vmul.f32 %v572, %v576
  %580 = vrot.lane.b32.xlu0 %v573, 64
  %v581 = vpop.permute.xlu0 %580
  %v583 = vmul.f32 %v572, %v581
  %585 = vrot.lane.b32.xlu0 %v583, 32
  %v586 = vpop.permute.xlu0 %585
  %v588 = vadd.f32 %v578, %v586
  %v589 = vtanh.pop %v588
  %591 = vrot.lane.b32.xlu0 %v589, 64
  %v592 = vpop.permute.xlu0 %591
  %v594 = vmul.f32 %v572, %v592
  %v595 = vstv %s540
  %vm596 = vcmp.lt.s32.totalorder %v595, %v263
  %v597 = vsel %vm596, 1, 0
  %598 = vset.pattern.permute.xlu0 0
  %599 = vperm.xlu0 %598, %v597
  %v600 = vpop.permute.xlu0 %599
  %vm601 = vcmp.eq.s32.totalorder %v600, 1
  %602 = vrot.lane.b32.xlu0 %v543, 96
  %v603 = vpop.permute.xlu0 %602
  %v605 = vsel %vm601, %v594, %v603
  %607 = vrot.lane.b32.xlu0 %v605, 32
  %v608 = vpop.permute.xlu0 %607
  %610 = vst.msk [vmem:[#allocation6] sm:$0xff] %vm276, %v608
  %v611 = vld [vmem:[#allocation7] sm:$0xff]
  %613 = vrot.lane.b32.xlu0 %v611, 32
  %v614 = vpop.permute.xlu0 %613
  %v616 = vsel %vm601, %v588, %v614
  %618 = vrot.lane.b32.xlu0 %v616, 96
  %v619 = vpop.permute.xlu0 %618
  %621 = vst.msk [vmem:[#allocation7] sm:$0xff] %vm276, %v619
  %v622 = vsel %vm601, %v594, 0.0
  %624 = vrot.lane.b32.xlu0 %v622, 32
  %v625 = vpop.permute.xlu0 %624
  %s627 = scalar_lea.vmem %s65, 48
  %628 = vst.msk [vmem:[%s627] sm:$0xff] %vm276, %v625
  %s629 = sadd.s32 %s272, 2
  %s630 = scalar_lea.vmem [#allocation2], 16
  %v631 = vld [vmem:[%s630] sm:$0xff]
  %v632 = vld [vmem:[#allocation4] sm:$0xff]
  %v633 = vld [vmem:[#allocation5] sm:$0xff]
  %v635 = vsel %vm276, %v632, 0
  %637 = vmatpush.msra.mxu0 0.0
  %638 = vmatpush.msra.mxu0 0.0
  %639 = vmatpush.msra.mxu0 0.0
  %640 = vmatpush.msra.mxu0 0.0
  %641 = vmatpush.msra.mxu0 0.0
  %642 = vmatpush.msra.mxu0 0.0
  %643 = vmatpush.msra.mxu0 0.0
  %644 = vmatpush.msra.mxu0 0.0
  %645 = vmatpush.msra.mxu0 0.0
  %646 = vmatpush.msra.mxu0 0.0
  %647 = vmatpush.msra.mxu0 0.0
  %648 = vmatpush.msra.mxu0 0.0
  %649 = vmatpush.msra.mxu0 %v267
  %650 = vmatpush.msra.mxu0 %v266
  %651 = vmatpush.msra.mxu0 %v265
  %652 = vmatpush.msra.mxu0 %v264
  %653 = vmatmul.f32.gmra.mxu0 %v635
  %v654 = vpop.f32.mrf.mxu0
  %v655 = vadd.f32 0.0, %v654
  %656 = vdwg.mxu0
  %v657 = vadd.f32 %v631, %v655
  %v658 = vmul.f32 %v657, 0.5
  %v659 = vtanh.pop %v658
  %v660 = vmul.f32 %v659, 0.5
  %v661 = vadd.f32 %v660, 0.5
  %v662 = vtanh.pop %v657
  %664 = vrot.lane.b32.xlu0 %v633, 32
  %v665 = vpop.permute.xlu0 %664
  %v667 = vmul.f32 %v661, %v665
  %669 = vrot.lane.b32.xlu0 %v662, 64
  %v670 = vpop.permute.xlu0 %669
  %v672 = vmul.f32 %v661, %v670
  %674 = vrot.lane.b32.xlu0 %v672, 32
  %v675 = vpop.permute.xlu0 %674
  %v677 = vadd.f32 %v667, %v675
  %v678 = vtanh.pop %v677
  %680 = vrot.lane.b32.xlu0 %v678, 64
  %v681 = vpop.permute.xlu0 %680
  %v683 = vmul.f32 %v661, %v681
  %v684 = vstv %s629
  %vm685 = vcmp.lt.s32.totalorder %v684, %v263
  %v686 = vsel %vm685, 1, 0
  %687 = vset.pattern.permute.xlu0 0
  %688 = vperm.xlu0 %687, %v686
  %v689 = vpop.permute.xlu0 %688
  %vm690 = vcmp.eq.s32.totalorder %v689, 1
  %691 = vrot.lane.b32.xlu0 %v632, 96
  %v692 = vpop.permute.xlu0 %691
  %v694 = vsel %vm690, %v683, %v692
  %696 = vrot.lane.b32.xlu0 %v694, 32
  %v697 = vpop.permute.xlu0 %696
  %699 = vst.msk [vmem:[#allocation4] sm:$0xff] %vm276, %v697
  %v700 = vld [vmem:[#allocation5] sm:$0xff]
  %702 = vrot.lane.b32.xlu0 %v700, 32
  %v703 = vpop.permute.xlu0 %702
  %v705 = vsel %vm690, %v677, %v703
  %707 = vrot.lane.b32.xlu0 %v705, 96
  %v708 = vpop.permute.xlu0 %707
  %710 = vst.msk [vmem:[#allocation5] sm:$0xff] %vm276, %v708
  %v711 = vsel %vm690, %v683, 0.0
  %713 = vrot.lane.b32.xlu0 %v711, 32
  %v714 = vpop.permute.xlu0 %713
  %s716 = scalar_lea.vmem %s9, 16
  %717 = vst.msk [vmem:[%s716] sm:$0xff] %vm276, %v714
  %s718 = sadd.s32 %s361, 5
  %s719 = scalar_lea.vmem [#allocation3], 40
  %v720 = vld [vmem:[%s719] sm:$0xff]
  %v721 = vld [vmem:[#allocation6] sm:$0xff]
  %v722 = vld [vmem:[#allocation7] sm:$0xff]
  %v724 = vsel %vm276, %v721, 0
  %726 = vmatpush.msra.mxu0 0.0
  %727 = vmatpush.msra.mxu0 0.0
  %728 = vmatpush.msra.mxu0 0.0
  %729 = vmatpush.msra.mxu0 0.0
  %730 = vmatpush.msra.mxu0 0.0
  %731 = vmatpush.msra.mxu0 0.0
  %732 = vmatpush.msra.mxu0 0.0
  %733 = vmatpush.msra.mxu0 0.0
  %734 = vmatpush.msra.mxu0 0.0
  %735 = vmatpush.msra.mxu0 0.0
  %736 = vmatpush.msra.mxu0 0.0
  %737 = vmatpush.msra.mxu0 0.0
  %738 = vmatpush.msra.mxu0 %v271
  %739 = vmatpush.msra.mxu0 %v270
  %740 = vmatpush.msra.mxu0 %v269
  %741 = vmatpush.msra.mxu0 %v268
  %742 = vmatmul.f32.gmra.mxu0 %v724
  %v743 = vpop.f32.mrf.mxu0
  %v744 = vadd.f32 0.0, %v743
  %745 = vdwg.mxu0
  %v746 = vadd.f32 %v720, %v744
  %v747 = vmul.f32 %v746, 0.5
  %v748 = vtanh.pop %v747
  %v749 = vmul.f32 %v748, 0.5
  %v750 = vadd.f32 %v749, 0.5
  %v751 = vtanh.pop %v746
  %753 = vrot.lane.b32.xlu0 %v722, 32
  %v754 = vpop.permute.xlu0 %753
  %v756 = vmul.f32 %v750, %v754
  %758 = vrot.lane.b32.xlu0 %v751, 64
  %v759 = vpop.permute.xlu0 %758
  %v761 = vmul.f32 %v750, %v759
  %763 = vrot.lane.b32.xlu0 %v761, 32
  %v764 = vpop.permute.xlu0 %763
  %v766 = vadd.f32 %v756, %v764
  %v767 = vtanh.pop %v766
  %769 = vrot.lane.b32.xlu0 %v767, 64
  %v770 = vpop.permute.xlu0 %769
  %v772 = vmul.f32 %v750, %v770
  %v773 = vstv %s718
  %vm774 = vcmp.lt.s32.totalorder %v773, %v263
  %v775 = vsel %vm774, 1, 0
  %776 = vset.pattern.permute.xlu0 0
  %777 = vperm.xlu0 %776, %v775
  %v778 = vpop.permute.xlu0 %777
  %vm779 = vcmp.eq.s32.totalorder %v778, 1
  %780 = vrot.lane.b32.xlu0 %v721, 96
  %v781 = vpop.permute.xlu0 %780
  %v783 = vsel %vm779, %v772, %v781
  %785 = vrot.lane.b32.xlu0 %v783, 32
  %v786 = vpop.permute.xlu0 %785
  %788 = vst.msk [vmem:[#allocation6] sm:$0xff] %vm276, %v786
  %v789 = vld [vmem:[#allocation7] sm:$0xff]
  %791 = vrot.lane.b32.xlu0 %v789, 32
  %v792 = vpop.permute.xlu0 %791
  %v794 = vsel %vm779, %v766, %v792
  %796 = vrot.lane.b32.xlu0 %v794, 96
  %v797 = vpop.permute.xlu0 %796
  %799 = vst.msk [vmem:[#allocation7] sm:$0xff] %vm276, %v797
  %v800 = vsel %vm779, %v772, 0.0
  %802 = vrot.lane.b32.xlu0 %v800, 32
  %v803 = vpop.permute.xlu0 %802
  %s805 = scalar_lea.vmem %s65, 40
  %806 = vst.msk [vmem:[%s805] sm:$0xff] %vm276, %v803
  %s807 = sadd.s32 %s272, 3
  %s808 = scalar_lea.vmem [#allocation2], 24
  %v809 = vld [vmem:[%s808] sm:$0xff]
  %v810 = vld [vmem:[#allocation4] sm:$0xff]
  %v811 = vld [vmem:[#allocation5] sm:$0xff]
  %v813 = vsel %vm276, %v810, 0
  %815 = vmatpush.msra.mxu0 0.0
  %816 = vmatpush.msra.mxu0 0.0
  %817 = vmatpush.msra.mxu0 0.0
  %818 = vmatpush.msra.mxu0 0.0
  %819 = vmatpush.msra.mxu0 0.0
  %820 = vmatpush.msra.mxu0 0.0
  %821 = vmatpush.msra.mxu0 0.0
  %822 = vmatpush.msra.mxu0 0.0
  %823 = vmatpush.msra.mxu0 0.0
  %824 = vmatpush.msra.mxu0 0.0
  %825 = vmatpush.msra.mxu0 0.0
  %826 = vmatpush.msra.mxu0 0.0
  %827 = vmatpush.msra.mxu0 %v267
  %828 = vmatpush.msra.mxu0 %v266
  %829 = vmatpush.msra.mxu0 %v265
  %830 = vmatpush.msra.mxu0 %v264
  %831 = vmatmul.f32.gmra.mxu0 %v813
  %v832 = vpop.f32.mrf.mxu0
  %v833 = vadd.f32 0.0, %v832
  %834 = vdwg.mxu0
  %v835 = vadd.f32 %v809, %v833
  %v836 = vmul.f32 %v835, 0.5
  %v837 = vtanh.pop %v836
  %v838 = vmul.f32 %v837, 0.5
  %v839 = vadd.f32 %v838, 0.5
  %v840 = vtanh.pop %v835
  %842 = vrot.lane.b32.xlu0 %v811, 32
  %v843 = vpop.permute.xlu0 %842
  %v845 = vmul.f32 %v839, %v843
  %847 = vrot.lane.b32.xlu0 %v840, 64
  %v848 = vpop.permute.xlu0 %847
  %v850 = vmul.f32 %v839, %v848
  %852 = vrot.lane.b32.xlu0 %v850, 32
  %v853 = vpop.permute.xlu0 %852
  %v855 = vadd.f32 %v845, %v853
  %v856 = vtanh.pop %v855
  %858 = vrot.lane.b32.xlu0 %v856, 64
  %v859 = vpop.permute.xlu0 %858
  %v861 = vmul.f32 %v839, %v859
  %v862 = vstv %s807
  %vm863 = vcmp.lt.s32.totalorder %v862, %v263
  %v864 = vsel %vm863, 1, 0
  %865 = vset.pattern.permute.xlu0 0
  %866 = vperm.xlu0 %865, %v864
  %v867 = vpop.permute.xlu0 %866
  %vm868 = vcmp.eq.s32.totalorder %v867, 1
  %869 = vrot.lane.b32.xlu0 %v810, 96
  %v870 = vpop.permute.xlu0 %869
  %v872 = vsel %vm868, %v861, %v870
  %874 = vrot.lane.b32.xlu0 %v872, 32
  %v875 = vpop.permute.xlu0 %874
  %877 = vst.msk [vmem:[#allocation4] sm:$0xff] %vm276, %v875
  %v878 = vld [vmem:[#allocation5] sm:$0xff]
  %880 = vrot.lane.b32.xlu0 %v878, 32
  %v881 = vpop.permute.xlu0 %880
  %v883 = vsel %vm868, %v855, %v881
  %885 = vrot.lane.b32.xlu0 %v883, 96
  %v886 = vpop.permute.xlu0 %885
  %888 = vst.msk [vmem:[#allocation5] sm:$0xff] %vm276, %v886
  %v889 = vsel %vm868, %v861, 0.0
  %891 = vrot.lane.b32.xlu0 %v889, 32
  %v892 = vpop.permute.xlu0 %891
  %s894 = scalar_lea.vmem %s9, 24
  %895 = vst.msk [vmem:[%s894] sm:$0xff] %vm276, %v892
  %s896 = sadd.s32 %s361, 4
  %s897 = scalar_lea.vmem [#allocation3], 32
  %v898 = vld [vmem:[%s897] sm:$0xff]
  %v899 = vld [vmem:[#allocation6] sm:$0xff]
  %v900 = vld [vmem:[#allocation7] sm:$0xff]
  %v902 = vsel %vm276, %v899, 0
  %904 = vmatpush.msra.mxu0 0.0
  %905 = vmatpush.msra.mxu0 0.0
  %906 = vmatpush.msra.mxu0 0.0
  %907 = vmatpush.msra.mxu0 0.0
  %908 = vmatpush.msra.mxu0 0.0
  %909 = vmatpush.msra.mxu0 0.0
  %910 = vmatpush.msra.mxu0 0.0
  %911 = vmatpush.msra.mxu0 0.0
  %912 = vmatpush.msra.mxu0 0.0
  %913 = vmatpush.msra.mxu0 0.0
  %914 = vmatpush.msra.mxu0 0.0
  %915 = vmatpush.msra.mxu0 0.0
  %916 = vmatpush.msra.mxu0 %v271
  %917 = vmatpush.msra.mxu0 %v270
  %918 = vmatpush.msra.mxu0 %v269
  %919 = vmatpush.msra.mxu0 %v268
  %920 = vmatmul.f32.gmra.mxu0 %v902
  %v921 = vpop.f32.mrf.mxu0
  %v922 = vadd.f32 0.0, %v921
  %923 = vdwg.mxu0
  %v924 = vadd.f32 %v898, %v922
  %v925 = vmul.f32 %v924, 0.5
  %v926 = vtanh.pop %v925
  %v927 = vmul.f32 %v926, 0.5
  %v928 = vadd.f32 %v927, 0.5
  %v929 = vtanh.pop %v924
  %931 = vrot.lane.b32.xlu0 %v900, 32
  %v932 = vpop.permute.xlu0 %931
  %v934 = vmul.f32 %v928, %v932
  %936 = vrot.lane.b32.xlu0 %v929, 64
  %v937 = vpop.permute.xlu0 %936
  %v939 = vmul.f32 %v928, %v937
  %941 = vrot.lane.b32.xlu0 %v939, 32
  %v942 = vpop.permute.xlu0 %941
  %v944 = vadd.f32 %v934, %v942
  %v945 = vtanh.pop %v944
  %947 = vrot.lane.b32.xlu0 %v945, 64
  %v948 = vpop.permute.xlu0 %947
  %v950 = vmul.f32 %v928, %v948
  %v951 = vstv %s896
  %vm952 = vcmp.lt.s32.totalorder %v951, %v263
  %v953 = vsel %vm952, 1, 0
  %954 = vset.pattern.permute.xlu0 0
  %955 = vperm.xlu0 %954, %v953
  %v956 = vpop.permute.xlu0 %955
  %vm957 = vcmp.eq.s32.totalorder %v956, 1
  %958 = vrot.lane.b32.xlu0 %v899, 96
  %v959 = vpop.permute.xlu0 %958
  %v961 = vsel %vm957, %v950, %v959
  %963 = vrot.lane.b32.xlu0 %v961, 32
  %v964 = vpop.permute.xlu0 %963
  %966 = vst.msk [vmem:[#allocation6] sm:$0xff] %vm276, %v964
  %v967 = vld [vmem:[#allocation7] sm:$0xff]
  %969 = vrot.lane.b32.xlu0 %v967, 32
  %v970 = vpop.permute.xlu0 %969
  %v972 = vsel %vm957, %v944, %v970
  %974 = vrot.lane.b32.xlu0 %v972, 96
  %v975 = vpop.permute.xlu0 %974
  %977 = vst.msk [vmem:[#allocation7] sm:$0xff] %vm276, %v975
  %v978 = vsel %vm957, %v950, 0.0
  %980 = vrot.lane.b32.xlu0 %v978, 32
  %v981 = vpop.permute.xlu0 %980
  %s983 = scalar_lea.vmem %s65, 32
  %984 = vst.msk [vmem:[%s983] sm:$0xff] %vm276, %v981
  %s985 = sadd.s32 %s272, 4
  %s986 = scalar_lea.vmem [#allocation2], 32
  %v987 = vld [vmem:[%s986] sm:$0xff]
  %v988 = vld [vmem:[#allocation4] sm:$0xff]
  %v989 = vld [vmem:[#allocation5] sm:$0xff]
  %v991 = vsel %vm276, %v988, 0
  %993 = vmatpush.msra.mxu0 0.0
  %994 = vmatpush.msra.mxu0 0.0
  %995 = vmatpush.msra.mxu0 0.0
  %996 = vmatpush.msra.mxu0 0.0
  %997 = vmatpush.msra.mxu0 0.0
  %998 = vmatpush.msra.mxu0 0.0
  %999 = vmatpush.msra.mxu0 0.0
  %1000 = vmatpush.msra.mxu0 0.0
  %1001 = vmatpush.msra.mxu0 0.0
  %1002 = vmatpush.msra.mxu0 0.0
  %1003 = vmatpush.msra.mxu0 0.0
  %1004 = vmatpush.msra.mxu0 0.0
  %1005 = vmatpush.msra.mxu0 %v267
  %1006 = vmatpush.msra.mxu0 %v266
  %1007 = vmatpush.msra.mxu0 %v265
  %1008 = vmatpush.msra.mxu0 %v264
  %1009 = vmatmul.f32.gmra.mxu0 %v991
  %v1010 = vpop.f32.mrf.mxu0
  %v1011 = vadd.f32 0.0, %v1010
  %1012 = vdwg.mxu0
  %v1013 = vadd.f32 %v987, %v1011
  %v1014 = vmul.f32 %v1013, 0.5
  %v1015 = vtanh.pop %v1014
  %v1016 = vmul.f32 %v1015, 0.5
  %v1017 = vadd.f32 %v1016, 0.5
  %v1018 = vtanh.pop %v1013
  %1020 = vrot.lane.b32.xlu0 %v989, 32
  %v1021 = vpop.permute.xlu0 %1020
  %v1023 = vmul.f32 %v1017, %v1021
  %1025 = vrot.lane.b32.xlu0 %v1018, 64
  %v1026 = vpop.permute.xlu0 %1025
  %v1028 = vmul.f32 %v1017, %v1026
  %1030 = vrot.lane.b32.xlu0 %v1028, 32
  %v1031 = vpop.permute.xlu0 %1030
  %v1033 = vadd.f32 %v1023, %v1031
  %v1034 = vtanh.pop %v1033
  %1036 = vrot.lane.b32.xlu0 %v1034, 64
  %v1037 = vpop.permute.xlu0 %1036
  %v1039 = vmul.f32 %v1017, %v1037
  %v1040 = vstv %s985
  %vm1041 = vcmp.lt.s32.totalorder %v1040, %v263
  %v1042 = vsel %vm1041, 1, 0
  %1043 = vset.pattern.permute.xlu0 0
  %1044 = vperm.xlu0 %1043, %v1042
  %v1045 = vpop.permute.xlu0 %1044
  %vm1046 = vcmp.eq.s32.totalorder %v1045, 1
  %1047 = vrot.lane.b32.xlu0 %v988, 96
  %v1048 = vpop.permute.xlu0 %1047
  %v1050 = vsel %vm1046, %v1039, %v1048
  %1052 = vrot.lane.b32.xlu0 %v1050, 32
  %v1053 = vpop.permute.xlu0 %1052
  %1055 = vst.msk [vmem:[#allocation4] sm:$0xff] %vm276, %v1053
  %v1056 = vld [vmem:[#allocation5] sm:$0xff]
  %1058 = vrot.lane.b32.xlu0 %v1056, 32
  %v1059 = vpop.permute.xlu0 %1058
  %v1061 = vsel %vm1046, %v1033, %v1059
  %1063 = vrot.lane.b32.xlu0 %v1061, 96
  %v1064 = vpop.permute.xlu0 %1063
  %1066 = vst.msk [vmem:[#allocation5] sm:$0xff] %vm276, %v1064
  %v1067 = vsel %vm1046, %v1039, 0.0
  %1069 = vrot.lane.b32.xlu0 %v1067, 32
  %v1070 = vpop.permute.xlu0 %1069
  %s1072 = scalar_lea.vmem %s9, 32
  %1073 = vst.msk [vmem:[%s1072] sm:$0xff] %vm276, %v1070
  %s1074 = sadd.s32 %s361, 3
  %s1075 = scalar_lea.vmem [#allocation3], 24
  %v1076 = vld [vmem:[%s1075] sm:$0xff]
  %v1077 = vld [vmem:[#allocation6] sm:$0xff]
  %v1078 = vld [vmem:[#allocation7] sm:$0xff]
  %v1080 = vsel %vm276, %v1077, 0
  %1082 = vmatpush.msra.mxu0 0.0
  %1083 = vmatpush.msra.mxu0 0.0
  %1084 = vmatpush.msra.mxu0 0.0
  %1085 = vmatpush.msra.mxu0 0.0
  %1086 = vmatpush.msra.mxu0 0.0
  %1087 = vmatpush.msra.mxu0 0.0
  %1088 = vmatpush.msra.mxu0 0.0
  %1089 = vmatpush.msra.mxu0 0.0
  %1090 = vmatpush.msra.mxu0 0.0
  %1091 = vmatpush.msra.mxu0 0.0
  %1092 = vmatpush.msra.mxu0 0.0
  %1093 = vmatpush.msra.mxu0 0.0
  %1094 = vmatpush.msra.mxu0 %v271
  %1095 = vmatpush.msra.mxu0 %v270
  %1096 = vmatpush.msra.mxu0 %v269
  %1097 = vmatpush.msra.mxu0 %v268
  %1098 = vmatmul.f32.gmra.mxu0 %v1080
  %v1099 = vpop.f32.mrf.mxu0
  %v1100 = vadd.f32 0.0, %v1099
  %1101 = vdwg.mxu0
  %v1102 = vadd.f32 %v1076, %v1100
  %v1103 = vmul.f32 %v1102, 0.5
  %v1104 = vtanh.pop %v1103
  %v1105 = vmul.f32 %v1104, 0.5
  %v1106 = vadd.f32 %v1105, 0.5
  %v1107 = vtanh.pop %v1102
  %1109 = vrot.lane.b32.xlu0 %v1078, 32
  %v1110 = vpop.permute.xlu0 %1109
  %v1112 = vmul.f32 %v1106, %v1110
  %1114 = vrot.lane.b32.xlu0 %v1107, 64
  %v1115 = vpop.permute.xlu0 %1114
  %v1117 = vmul.f32 %v1106, %v1115
  %1119 = vrot.lane.b32.xlu0 %v1117, 32
  %v1120 = vpop.permute.xlu0 %1119
  %v1122 = vadd.f32 %v1112, %v1120
  %v1123 = vtanh.pop %v1122
  %1125 = vrot.lane.b32.xlu0 %v1123, 64
  %v1126 = vpop.permute.xlu0 %1125
  %v1128 = vmul.f32 %v1106, %v1126
  %v1129 = vstv %s1074
  %vm1130 = vcmp.lt.s32.totalorder %v1129, %v263
  %v1131 = vsel %vm1130, 1, 0
  %1132 = vset.pattern.permute.xlu0 0
  %1133 = vperm.xlu0 %1132, %v1131
  %v1134 = vpop.permute.xlu0 %1133
  %vm1135 = vcmp.eq.s32.totalorder %v1134, 1
  %1136 = vrot.lane.b32.xlu0 %v1077, 96
  %v1137 = vpop.permute.xlu0 %1136
  %v1139 = vsel %vm1135, %v1128, %v1137
  %1141 = vrot.lane.b32.xlu0 %v1139, 32
  %v1142 = vpop.permute.xlu0 %1141
  %1144 = vst.msk [vmem:[#allocation6] sm:$0xff] %vm276, %v1142
  %v1145 = vld [vmem:[#allocation7] sm:$0xff]
  %1147 = vrot.lane.b32.xlu0 %v1145, 32
  %v1148 = vpop.permute.xlu0 %1147
  %v1150 = vsel %vm1135, %v1122, %v1148
  %1152 = vrot.lane.b32.xlu0 %v1150, 96
  %v1153 = vpop.permute.xlu0 %1152
  %1155 = vst.msk [vmem:[#allocation7] sm:$0xff] %vm276, %v1153
  %v1156 = vsel %vm1135, %v1128, 0.0
  %1158 = vrot.lane.b32.xlu0 %v1156, 32
  %v1159 = vpop.permute.xlu0 %1158
  %s1161 = scalar_lea.vmem %s65, 24
  %1162 = vst.msk [vmem:[%s1161] sm:$0xff] %vm276, %v1159
  %s1163 = sadd.s32 %s272, 5
  %s1164 = scalar_lea.vmem [#allocation2], 40
  %v1165 = vld [vmem:[%s1164] sm:$0xff]
  %v1166 = vld [vmem:[#allocation4] sm:$0xff]
  %v1167 = vld [vmem:[#allocation5] sm:$0xff]
  %v1169 = vsel %vm276, %v1166, 0
  %1171 = vmatpush.msra.mxu0 0.0
  %1172 = vmatpush.msra.mxu0 0.0
  %1173 = vmatpush.msra.mxu0 0.0
  %1174 = vmatpush.msra.mxu0 0.0
  %1175 = vmatpush.msra.mxu0 0.0
  %1176 = vmatpush.msra.mxu0 0.0
  %1177 = vmatpush.msra.mxu0 0.0
  %1178 = vmatpush.msra.mxu0 0.0
  %1179 = vmatpush.msra.mxu0 0.0
  %1180 = vmatpush.msra.mxu0 0.0
  %1181 = vmatpush.msra.mxu0 0.0
  %1182 = vmatpush.msra.mxu0 0.0
  %1183 = vmatpush.msra.mxu0 %v267
  %1184 = vmatpush.msra.mxu0 %v266
  %1185 = vmatpush.msra.mxu0 %v265
  %1186 = vmatpush.msra.mxu0 %v264
  %1187 = vmatmul.f32.gmra.mxu0 %v1169
  %v1188 = vpop.f32.mrf.mxu0
  %v1189 = vadd.f32 0.0, %v1188
  %1190 = vdwg.mxu0
  %v1191 = vadd.f32 %v1165, %v1189
  %v1192 = vmul.f32 %v1191, 0.5
  %v1193 = vtanh.pop %v1192
  %v1194 = vmul.f32 %v1193, 0.5
  %v1195 = vadd.f32 %v1194, 0.5
  %v1196 = vtanh.pop %v1191
  %1198 = vrot.lane.b32.xlu0 %v1167, 32
  %v1199 = vpop.permute.xlu0 %1198
  %v1201 = vmul.f32 %v1195, %v1199
  %1203 = vrot.lane.b32.xlu0 %v1196, 64
  %v1204 = vpop.permute.xlu0 %1203
  %v1206 = vmul.f32 %v1195, %v1204
  %1208 = vrot.lane.b32.xlu0 %v1206, 32
  %v1209 = vpop.permute.xlu0 %1208
  %v1211 = vadd.f32 %v1201, %v1209
  %v1212 = vtanh.pop %v1211
  %1214 = vrot.lane.b32.xlu0 %v1212, 64
  %v1215 = vpop.permute.xlu0 %1214
  %v1217 = vmul.f32 %v1195, %v1215
  %v1218 = vstv %s1163
  %vm1219 = vcmp.lt.s32.totalorder %v1218, %v263
  %v1220 = vsel %vm1219, 1, 0
  %1221 = vset.pattern.permute.xlu0 0
  %1222 = vperm.xlu0 %1221, %v1220
  %v1223 = vpop.permute.xlu0 %1222
  %vm1224 = vcmp.eq.s32.totalorder %v1223, 1
  %1225 = vrot.lane.b32.xlu0 %v1166, 96
  %v1226 = vpop.permute.xlu0 %1225
  %v1228 = vsel %vm1224, %v1217, %v1226
  %1230 = vrot.lane.b32.xlu0 %v1228, 32
  %v1231 = vpop.permute.xlu0 %1230
  %1233 = vst.msk [vmem:[#allocation4] sm:$0xff] %vm276, %v1231
  %v1234 = vld [vmem:[#allocation5] sm:$0xff]
  %1236 = vrot.lane.b32.xlu0 %v1234, 32
  %v1237 = vpop.permute.xlu0 %1236
  %v1239 = vsel %vm1224, %v1211, %v1237
  %1241 = vrot.lane.b32.xlu0 %v1239, 96
  %v1242 = vpop.permute.xlu0 %1241
  %1244 = vst.msk [vmem:[#allocation5] sm:$0xff] %vm276, %v1242
  %v1245 = vsel %vm1224, %v1217, 0.0
  %1247 = vrot.lane.b32.xlu0 %v1245, 32
  %v1248 = vpop.permute.xlu0 %1247
  %s1250 = scalar_lea.vmem %s9, 40
  %1251 = vst.msk [vmem:[%s1250] sm:$0xff] %vm276, %v1248
  %s1252 = sadd.s32 %s361, 2
  %s1253 = scalar_lea.vmem [#allocation3], 16
  %v1254 = vld [vmem:[%s1253] sm:$0xff]
  %v1255 = vld [vmem:[#allocation6] sm:$0xff]
  %v1256 = vld [vmem:[#allocation7] sm:$0xff]
  %v1258 = vsel %vm276, %v1255, 0
  %1260 = vmatpush.msra.mxu0 0.0
  %1261 = vmatpush.msra.mxu0 0.0
  %1262 = vmatpush.msra.mxu0 0.0
  %1263 = vmatpush.msra.mxu0 0.0
  %1264 = vmatpush.msra.mxu0 0.0
  %1265 = vmatpush.msra.mxu0 0.0
  %1266 = vmatpush.msra.mxu0 0.0
  %1267 = vmatpush.msra.mxu0 0.0
  %1268 = vmatpush.msra.mxu0 0.0
  %1269 = vmatpush.msra.mxu0 0.0
  %1270 = vmatpush.msra.mxu0 0.0
  %1271 = vmatpush.msra.mxu0 0.0
  %1272 = vmatpush.msra.mxu0 %v271
  %1273 = vmatpush.msra.mxu0 %v270
  %1274 = vmatpush.msra.mxu0 %v269
  %1275 = vmatpush.msra.mxu0 %v268
  %1276 = vmatmul.f32.gmra.mxu0 %v1258
  %v1277 = vpop.f32.mrf.mxu0
  %v1278 = vadd.f32 0.0, %v1277
  %1279 = vdwg.mxu0
  %v1280 = vadd.f32 %v1254, %v1278
  %v1281 = vmul.f32 %v1280, 0.5
  %v1282 = vtanh.pop %v1281
  %v1283 = vmul.f32 %v1282, 0.5
  %v1284 = vadd.f32 %v1283, 0.5
  %v1285 = vtanh.pop %v1280
  %1287 = vrot.lane.b32.xlu0 %v1256, 32
  %v1288 = vpop.permute.xlu0 %1287
  %v1290 = vmul.f32 %v1284, %v1288
  %1292 = vrot.lane.b32.xlu0 %v1285, 64
  %v1293 = vpop.permute.xlu0 %1292
  %v1295 = vmul.f32 %v1284, %v1293
  %1297 = vrot.lane.b32.xlu0 %v1295, 32
  %v1298 = vpop.permute.xlu0 %1297
  %v1300 = vadd.f32 %v1290, %v1298
  %v1301 = vtanh.pop %v1300
  %1303 = vrot.lane.b32.xlu0 %v1301, 64
  %v1304 = vpop.permute.xlu0 %1303
  %v1306 = vmul.f32 %v1284, %v1304
  %v1307 = vstv %s1252
  %vm1308 = vcmp.lt.s32.totalorder %v1307, %v263
  %v1309 = vsel %vm1308, 1, 0
  %1310 = vset.pattern.permute.xlu0 0
  %1311 = vperm.xlu0 %1310, %v1309
  %v1312 = vpop.permute.xlu0 %1311
  %vm1313 = vcmp.eq.s32.totalorder %v1312, 1
  %1314 = vrot.lane.b32.xlu0 %v1255, 96
  %v1315 = vpop.permute.xlu0 %1314
  %v1317 = vsel %vm1313, %v1306, %v1315
  %1319 = vrot.lane.b32.xlu0 %v1317, 32
  %v1320 = vpop.permute.xlu0 %1319
  %1322 = vst.msk [vmem:[#allocation6] sm:$0xff] %vm276, %v1320
  %v1323 = vld [vmem:[#allocation7] sm:$0xff]
  %1325 = vrot.lane.b32.xlu0 %v1323, 32
  %v1326 = vpop.permute.xlu0 %1325
  %v1328 = vsel %vm1313, %v1300, %v1326
  %1330 = vrot.lane.b32.xlu0 %v1328, 96
  %v1331 = vpop.permute.xlu0 %1330
  %1333 = vst.msk [vmem:[#allocation7] sm:$0xff] %vm276, %v1331
  %v1334 = vsel %vm1313, %v1306, 0.0
  %1336 = vrot.lane.b32.xlu0 %v1334, 32
  %v1337 = vpop.permute.xlu0 %1336
  %s1339 = scalar_lea.vmem %s65, 16
  %1340 = vst.msk [vmem:[%s1339] sm:$0xff] %vm276, %v1337
  %s1341 = sadd.s32 %s272, 6
  %s1342 = scalar_lea.vmem [#allocation2], 48
  %v1343 = vld [vmem:[%s1342] sm:$0xff]
  %v1344 = vld [vmem:[#allocation4] sm:$0xff]
  %v1345 = vld [vmem:[#allocation5] sm:$0xff]
  %v1347 = vsel %vm276, %v1344, 0
  %1349 = vmatpush.msra.mxu0 0.0
  %1350 = vmatpush.msra.mxu0 0.0
  %1351 = vmatpush.msra.mxu0 0.0
  %1352 = vmatpush.msra.mxu0 0.0
  %1353 = vmatpush.msra.mxu0 0.0
  %1354 = vmatpush.msra.mxu0 0.0
  %1355 = vmatpush.msra.mxu0 0.0
  %1356 = vmatpush.msra.mxu0 0.0
  %1357 = vmatpush.msra.mxu0 0.0
  %1358 = vmatpush.msra.mxu0 0.0
  %1359 = vmatpush.msra.mxu0 0.0
  %1360 = vmatpush.msra.mxu0 0.0
  %1361 = vmatpush.msra.mxu0 %v267
  %1362 = vmatpush.msra.mxu0 %v266
  %1363 = vmatpush.msra.mxu0 %v265
  %1364 = vmatpush.msra.mxu0 %v264
  %1365 = vmatmul.f32.gmra.mxu0 %v1347
  %v1366 = vpop.f32.mrf.mxu0
  %v1367 = vadd.f32 0.0, %v1366
  %1368 = vdwg.mxu0
  %v1369 = vadd.f32 %v1343, %v1367
  %v1370 = vmul.f32 %v1369, 0.5
  %v1371 = vtanh.pop %v1370
  %v1372 = vmul.f32 %v1371, 0.5
  %v1373 = vadd.f32 %v1372, 0.5
  %v1374 = vtanh.pop %v1369
  %1376 = vrot.lane.b32.xlu0 %v1345, 32
  %v1377 = vpop.permute.xlu0 %1376
  %v1379 = vmul.f32 %v1373, %v1377
  %1381 = vrot.lane.b32.xlu0 %v1374, 64
  %v1382 = vpop.permute.xlu0 %1381
  %v1384 = vmul.f32 %v1373, %v1382
  %1386 = vrot.lane.b32.xlu0 %v1384, 32
  %v1387 = vpop.permute.xlu0 %1386
  %v1389 = vadd.f32 %v1379, %v1387
  %v1390 = vtanh.pop %v1389
  %1392 = vrot.lane.b32.xlu0 %v1390, 64
  %v1393 = vpop.permute.xlu0 %1392
  %v1395 = vmul.f32 %v1373, %v1393
  %v1396 = vstv %s1341
  %vm1397 = vcmp.lt.s32.totalorder %v1396, %v263
  %v1398 = vsel %vm1397, 1, 0
  %1399 = vset.pattern.permute.xlu0 0
  %1400 = vperm.xlu0 %1399, %v1398
  %v1401 = vpop.permute.xlu0 %1400
  %vm1402 = vcmp.eq.s32.totalorder %v1401, 1
  %1403 = vrot.lane.b32.xlu0 %v1344, 96
  %v1404 = vpop.permute.xlu0 %1403
  %v1406 = vsel %vm1402, %v1395, %v1404
  %1408 = vrot.lane.b32.xlu0 %v1406, 32
  %v1409 = vpop.permute.xlu0 %1408
  %1411 = vst.msk [vmem:[#allocation4] sm:$0xff] %vm276, %v1409
  %v1412 = vld [vmem:[#allocation5] sm:$0xff]
  %1414 = vrot.lane.b32.xlu0 %v1412, 32
  %v1415 = vpop.permute.xlu0 %1414
  %v1417 = vsel %vm1402, %v1389, %v1415
  %1419 = vrot.lane.b32.xlu0 %v1417, 96
  %v1420 = vpop.permute.xlu0 %1419
  %1422 = vst.msk [vmem:[#allocation5] sm:$0xff] %vm276, %v1420
  %v1423 = vsel %vm1402, %v1395, 0.0
  %1425 = vrot.lane.b32.xlu0 %v1423, 32
  %v1426 = vpop.permute.xlu0 %1425
  %s1428 = scalar_lea.vmem %s9, 48
  %1429 = vst.msk [vmem:[%s1428] sm:$0xff] %vm276, %v1426
  %s1430 = sadd.s32 %s361, 1
  %s1431 = scalar_lea.vmem [#allocation3], 8
  %v1432 = vld [vmem:[%s1431] sm:$0xff]
  %v1433 = vld [vmem:[#allocation6] sm:$0xff]
  %v1434 = vld [vmem:[#allocation7] sm:$0xff]
  %v1436 = vsel %vm276, %v1433, 0
  %1438 = vmatpush.msra.mxu0 0.0
  %1439 = vmatpush.msra.mxu0 0.0
  %1440 = vmatpush.msra.mxu0 0.0
  %1441 = vmatpush.msra.mxu0 0.0
  %1442 = vmatpush.msra.mxu0 0.0
  %1443 = vmatpush.msra.mxu0 0.0
  %1444 = vmatpush.msra.mxu0 0.0
  %1445 = vmatpush.msra.mxu0 0.0
  %1446 = vmatpush.msra.mxu0 0.0
  %1447 = vmatpush.msra.mxu0 0.0
  %1448 = vmatpush.msra.mxu0 0.0
  %1449 = vmatpush.msra.mxu0 0.0
  %1450 = vmatpush.msra.mxu0 %v271
  %1451 = vmatpush.msra.mxu0 %v270
  %1452 = vmatpush.msra.mxu0 %v269
  %1453 = vmatpush.msra.mxu0 %v268
  %1454 = vmatmul.f32.gmra.mxu0 %v1436
  %v1455 = vpop.f32.mrf.mxu0
  %v1456 = vadd.f32 0.0, %v1455
  %1457 = vdwg.mxu0
  %v1458 = vadd.f32 %v1432, %v1456
  %v1459 = vmul.f32 %v1458, 0.5
  %v1460 = vtanh.pop %v1459
  %v1461 = vmul.f32 %v1460, 0.5
  %v1462 = vadd.f32 %v1461, 0.5
  %v1463 = vtanh.pop %v1458
  %1465 = vrot.lane.b32.xlu0 %v1434, 32
  %v1466 = vpop.permute.xlu0 %1465
  %v1468 = vmul.f32 %v1462, %v1466
  %1470 = vrot.lane.b32.xlu0 %v1463, 64
  %v1471 = vpop.permute.xlu0 %1470
  %v1473 = vmul.f32 %v1462, %v1471
  %1475 = vrot.lane.b32.xlu0 %v1473, 32
  %v1476 = vpop.permute.xlu0 %1475
  %v1478 = vadd.f32 %v1468, %v1476
  %v1479 = vtanh.pop %v1478
  %1481 = vrot.lane.b32.xlu0 %v1479, 64
  %v1482 = vpop.permute.xlu0 %1481
  %v1484 = vmul.f32 %v1462, %v1482
  %v1485 = vstv %s1430
  %vm1486 = vcmp.lt.s32.totalorder %v1485, %v263
  %v1487 = vsel %vm1486, 1, 0
  %1488 = vset.pattern.permute.xlu0 0
  %1489 = vperm.xlu0 %1488, %v1487
  %v1490 = vpop.permute.xlu0 %1489
  %vm1491 = vcmp.eq.s32.totalorder %v1490, 1
  %1492 = vrot.lane.b32.xlu0 %v1433, 96
  %v1493 = vpop.permute.xlu0 %1492
  %v1495 = vsel %vm1491, %v1484, %v1493
  %1497 = vrot.lane.b32.xlu0 %v1495, 32
  %v1498 = vpop.permute.xlu0 %1497
  %1500 = vst.msk [vmem:[#allocation6] sm:$0xff] %vm276, %v1498
  %v1501 = vld [vmem:[#allocation7] sm:$0xff]
  %1503 = vrot.lane.b32.xlu0 %v1501, 32
  %v1504 = vpop.permute.xlu0 %1503
  %v1506 = vsel %vm1491, %v1478, %v1504
  %1508 = vrot.lane.b32.xlu0 %v1506, 96
  %v1509 = vpop.permute.xlu0 %1508
  %1511 = vst.msk [vmem:[#allocation7] sm:$0xff] %vm276, %v1509
  %v1512 = vsel %vm1491, %v1484, 0.0
  %1514 = vrot.lane.b32.xlu0 %v1512, 32
  %v1515 = vpop.permute.xlu0 %1514
  %s1517 = scalar_lea.vmem %s65, 8
  %1518 = vst.msk [vmem:[%s1517] sm:$0xff] %vm276, %v1515
  %s1519 = sadd.s32 %s272, 7
  %s1520 = scalar_lea.vmem [#allocation2], 56
  %v1521 = vld [vmem:[%s1520] sm:$0xff]
  %v1522 = vld [vmem:[#allocation4] sm:$0xff]
  %v1523 = vld [vmem:[#allocation5] sm:$0xff]
  %v1525 = vsel %vm276, %v1522, 0
  %1527 = vmatpush.msra.mxu0 0.0
  %1528 = vmatpush.msra.mxu0 0.0
  %1529 = vmatpush.msra.mxu0 0.0
  %1530 = vmatpush.msra.mxu0 0.0
  %1531 = vmatpush.msra.mxu0 0.0
  %1532 = vmatpush.msra.mxu0 0.0
  %1533 = vmatpush.msra.mxu0 0.0
  %1534 = vmatpush.msra.mxu0 0.0
  %1535 = vmatpush.msra.mxu0 0.0
  %1536 = vmatpush.msra.mxu0 0.0
  %1537 = vmatpush.msra.mxu0 0.0
  %1538 = vmatpush.msra.mxu0 0.0
  %1539 = vmatpush.msra.mxu0 %v267
  %1540 = vmatpush.msra.mxu0 %v266
  %1541 = vmatpush.msra.mxu0 %v265
  %1542 = vmatpush.msra.mxu0 %v264
  %1543 = vmatmul.f32.gmra.mxu0 %v1525
  %v1544 = vpop.f32.mrf.mxu0
  %v1545 = vadd.f32 0.0, %v1544
  %1546 = vdwg.mxu0
  %v1547 = vadd.f32 %v1521, %v1545
  %v1548 = vmul.f32 %v1547, 0.5
  %v1549 = vtanh.pop %v1548
  %v1550 = vmul.f32 %v1549, 0.5
  %v1551 = vadd.f32 %v1550, 0.5
  %v1552 = vtanh.pop %v1547
  %1554 = vrot.lane.b32.xlu0 %v1523, 32
  %v1555 = vpop.permute.xlu0 %1554
  %v1557 = vmul.f32 %v1551, %v1555
  %1559 = vrot.lane.b32.xlu0 %v1552, 64
  %v1560 = vpop.permute.xlu0 %1559
  %v1562 = vmul.f32 %v1551, %v1560
  %1564 = vrot.lane.b32.xlu0 %v1562, 32
  %v1565 = vpop.permute.xlu0 %1564
  %v1567 = vadd.f32 %v1557, %v1565
  %v1568 = vtanh.pop %v1567
  %1570 = vrot.lane.b32.xlu0 %v1568, 64
  %v1571 = vpop.permute.xlu0 %1570
  %v1573 = vmul.f32 %v1551, %v1571
  %v1574 = vstv %s1519
  %vm1575 = vcmp.lt.s32.totalorder %v1574, %v263
  %v1576 = vsel %vm1575, 1, 0
  %1577 = vset.pattern.permute.xlu0 0
  %1578 = vperm.xlu0 %1577, %v1576
  %v1579 = vpop.permute.xlu0 %1578
  %vm1580 = vcmp.eq.s32.totalorder %v1579, 1
  %1581 = vrot.lane.b32.xlu0 %v1522, 96
  %v1582 = vpop.permute.xlu0 %1581
  %v1584 = vsel %vm1580, %v1573, %v1582
  %1586 = vrot.lane.b32.xlu0 %v1584, 32
  %v1587 = vpop.permute.xlu0 %1586
  %1589 = vst.msk [vmem:[#allocation4] sm:$0xff] %vm276, %v1587
  %v1590 = vld [vmem:[#allocation5] sm:$0xff]
  %1592 = vrot.lane.b32.xlu0 %v1590, 32
  %v1593 = vpop.permute.xlu0 %1592
  %v1595 = vsel %vm1580, %v1567, %v1593
  %1597 = vrot.lane.b32.xlu0 %v1595, 96
  %v1598 = vpop.permute.xlu0 %1597
  %1600 = vst.msk [vmem:[#allocation5] sm:$0xff] %vm276, %v1598
  %v1601 = vsel %vm1580, %v1573, 0.0
  %1603 = vrot.lane.b32.xlu0 %v1601, 32
  %v1604 = vpop.permute.xlu0 %1603
  %s1606 = scalar_lea.vmem %s9, 56
  %1607 = vst.msk [vmem:[%s1606] sm:$0xff] %vm276, %v1604
  %v1608 = vld [vmem:[#allocation3] sm:$0xff]
  %v1609 = vld [vmem:[#allocation6] sm:$0xff]
  %v1610 = vld [vmem:[#allocation7] sm:$0xff]
  %v1612 = vsel %vm276, %v1609, 0
  %1614 = vmatpush.msra.mxu0 0.0
  %1615 = vmatpush.msra.mxu0 0.0
  %1616 = vmatpush.msra.mxu0 0.0
  %1617 = vmatpush.msra.mxu0 0.0
  %1618 = vmatpush.msra.mxu0 0.0
  %1619 = vmatpush.msra.mxu0 0.0
  %1620 = vmatpush.msra.mxu0 0.0
  %1621 = vmatpush.msra.mxu0 0.0
  %1622 = vmatpush.msra.mxu0 0.0
  %1623 = vmatpush.msra.mxu0 0.0
  %1624 = vmatpush.msra.mxu0 0.0
  %1625 = vmatpush.msra.mxu0 0.0
  %1626 = vmatpush.msra.mxu0 %v271
  %1627 = vmatpush.msra.mxu0 %v270
  %1628 = vmatpush.msra.mxu0 %v269
  %1629 = vmatpush.msra.mxu0 %v268
  %1630 = vmatmul.f32.gmra.mxu0 %v1612
  %v1631 = vpop.f32.mrf.mxu0
  %v1632 = vadd.f32 0.0, %v1631
  %1633 = vdwg.mxu0
  %v1634 = vadd.f32 %v1608, %v1632
  %v1635 = vmul.f32 %v1634, 0.5
  %v1636 = vtanh.pop %v1635
  %v1637 = vmul.f32 %v1636, 0.5
  %v1638 = vadd.f32 %v1637, 0.5
  %v1639 = vtanh.pop %v1634
  %1641 = vrot.lane.b32.xlu0 %v1610, 32
  %v1642 = vpop.permute.xlu0 %1641
  %v1644 = vmul.f32 %v1638, %v1642
  %1646 = vrot.lane.b32.xlu0 %v1639, 64
  %v1647 = vpop.permute.xlu0 %1646
  %v1649 = vmul.f32 %v1638, %v1647
  %1651 = vrot.lane.b32.xlu0 %v1649, 32
  %v1652 = vpop.permute.xlu0 %1651
  %v1654 = vadd.f32 %v1644, %v1652
  %v1655 = vtanh.pop %v1654
  %1657 = vrot.lane.b32.xlu0 %v1655, 64
  %v1658 = vpop.permute.xlu0 %1657
  %v1660 = vmul.f32 %v1638, %v1658
  %v1661 = vstv %s361
  %vm1662 = vcmp.lt.s32.totalorder %v1661, %v263
  %v1663 = vsel %vm1662, 1, 0
  %1664 = vset.pattern.permute.xlu0 0
  %1665 = vperm.xlu0 %1664, %v1663
  %v1666 = vpop.permute.xlu0 %1665
  %vm1667 = vcmp.eq.s32.totalorder %v1666, 1
  %1668 = vrot.lane.b32.xlu0 %v1609, 96
  %v1669 = vpop.permute.xlu0 %1668
  %v1671 = vsel %vm1667, %v1660, %v1669
  %1673 = vrot.lane.b32.xlu0 %v1671, 32
  %v1674 = vpop.permute.xlu0 %1673
  %1676 = vst.msk [vmem:[#allocation6] sm:$0xff] %vm276, %v1674
  %v1677 = vld [vmem:[#allocation7] sm:$0xff]
  %1679 = vrot.lane.b32.xlu0 %v1677, 32
  %v1680 = vpop.permute.xlu0 %1679
  %v1682 = vsel %vm1667, %v1654, %v1680
  %1684 = vrot.lane.b32.xlu0 %v1682, 96
  %v1685 = vpop.permute.xlu0 %1684
  %1687 = vst.msk [vmem:[#allocation7] sm:$0xff] %vm276, %v1685
  %v1688 = vsel %vm1667, %v1660, 0.0
  %1690 = vrot.lane.b32.xlu0 %v1688, 32
  %v1691 = vpop.permute.xlu0 %1690
  %1693 = vst.msk [vmem:[%s65] sm:$0xff] %vm276, %v1691
  %s1694 = ssub.s32 0, 0
  %p1695 = scmp.lt.s32.totalorder %s1694, 0
  %s1696 = scalar_select %p1695, %s1694, 0
  %s1697 = smul.addr %s1696, 8
  %s1698 = smul.addr %s1697, 8
  %s1699 = scalar_lea.vmem %s10, %s1698
  // Predicated region
  $region42: #{augmented_lstm_crf_forward.3} parent=0 // pred_check
    _
  $region43: #{augmented_lstm_crf_forward.3} parent=0 // pred_check_branch
    %1701 = sbr.rel (0) target = $region45
  $region44: #{augmented_lstm_crf_forward.3} parent=0 // pred_region
    _
  $region45: #{augmented_lstm_crf_forward.3} parent=0 // pred_fallthru
    _
  // Predicated region
  $region46: #{augmented_lstm_crf_forward.3} parent=0 // pred_check
    _
  $region47: #{augmented_lstm_crf_forward.3} parent=0 // pred_check_branch
    %1703 = sbr.rel (0) target = $region49
  $region48: #{augmented_lstm_crf_forward.3} parent=0 // pred_region
    %s1704 = ssub.s32 0, 0
  $region49: #{augmented_lstm_crf_forward.3} parent=0 // pred_fallthru
    _
  // Predicated region
  $region50: #{augmented_lstm_crf_forward.3} parent=0 // pred_check
    _
  $region51: #{augmented_lstm_crf_forward.3} parent=0 // pred_check_branch
    %1706 = sbr.rel (0) target = $region53
  $region52: #{augmented_lstm_crf_forward.3} parent=0 // pred_region
    _
  $region53: #{augmented_lstm_crf_forward.3} parent=0 // pred_fallthru
    _
  // Predicated region
  $region54: #{augmented_lstm_crf_forward.3} parent=0 // pred_check
    _
  $region55: #{augmented_lstm_crf_forward.3} parent=0 // pred_check_branch
    %1708 = sbr.rel (0) target = $region57
  $region56: #{augmented_lstm_crf_forward.3} parent=0 // pred_region
    %s1709 = ssub.s32 0, 0
    %p1710 = scmp.lt.s32.totalorder %s1709, 0
    %s1711 = scalar_select %p1710, %s1709, 0
    %s1712 = smul.addr %s1711, 8
    %s1713 = smul.addr %s1712, 8
    %s1714 = scalar_lea.vmem %s10, %s1713
  $region57: #{augmented_lstm_crf_forward.3} parent=0 // pred_fallthru
    _

</llo_original>
